<compile_context>
chip_gen: v5e
topology: v5e:2x2
jax: 0.10.0
libtpu: 0.0.40
codegen_flags: <defaults>
</compile_context>

<pallas_src>
import functools

import jax
import jax.numpy as jnp
from jax import lax
from jax.experimental import pallas as pl
from jax.experimental.pallas import tpu as pltpu

VMEM_LIMIT = 32 * 1024 * 1024  # explicit budget: fits v5e/v6e and v7x's 64 MiB VMEM


# ---------------------------------------------------------------------------
# Pallas kernels
# ---------------------------------------------------------------------------
def matmul_bias_kernel(x_ref, w_ref, b_ref, o_ref, *, relu):
    """Single-pass (full-K) tile: y = [relu](x @ w + b).  No scratch needed."""
    y = jnp.dot(x_ref[...].astype(w_ref.dtype), w_ref[...],
                preferred_element_type=jnp.float32) + b_ref[...]
    if relu:
        y = jnp.maximum(y, 0.0)
    o_ref[...] = y.astype(o_ref.dtype)


def matmul_bias_acc_kernel(x_ref, w_ref, b_ref, o_ref, acc_ref, *, relu):
    """K-tiled fallback: accumulate over the K grid axis in an f32 scratch."""
    @pl.when(pl.program_id(2) == 0)
    def _():
        acc_ref[...] = jnp.zeros_like(acc_ref)

    acc_ref[...] += jnp.dot(x_ref[...].astype(w_ref.dtype), w_ref[...],
                            preferred_element_type=jnp.float32)

    @pl.when(pl.program_id(2) == pl.num_programs(2) - 1)
    def _():
        y = acc_ref[...] + b_ref[...]
        if relu:
            y = jnp.maximum(y, 0.0)
        o_ref[...] = y.astype(o_ref.dtype)


def conv_fused_kernel(x_ref, w_ref, b_ref, o_ref, acc_ref, *, offsets, H, Wp, Wvalid):
    """Batched fused 5x5 'same' conv (tap-folded matmuls) + bias + ReLU + 2x2 maxpool.

    x_ref  : (B, R, K)   row-flattened (rows = h_p*Wp + w), tap-folded activations
    w_ref  : (ntap, K, C) one (K, C) weight slab per remaining tap
    b_ref  : (1, C)
    o_ref  : (B, H//2, Wvalid//2, C)
    acc_ref: (B*H*Wp, C) f32 scratch accumulator
    Columns w >= Wvalid are junk (alignment padding); since Wvalid is even they
    fall into whole discarded W-pool pairs and are dropped after pooling.
    """
    B, R, K = x_ref.shape
    C = w_ref.shape[-1]
    T = H * Wp                      # rows per image in the accumulator
    W2, Wo, Ho = Wp // 2, Wvalid // 2, H // 2

    def tap(i, off):
        # fold batch into M: (B, T, K) -> (B*T, K); T is a multiple of 8 so the
        # merge is sublane-tile aligned.
        xs = x_ref[:, off:off + T, :].reshape(B * T, K)
        return jnp.dot(xs, w_ref[i], preferred_element_type=jnp.float32)

    # tap matmuls accumulate back-to-back into the VMEM scratch (MRB-friendly on v7x)
    acc_ref[...] = tap(0, offsets[0])
    for i, off in enumerate(offsets[1:], start=1):
        acc_ref[...] += tap(i, off)

    bias = b_ref[...]               # (1, C), hoisted out of the epilogue loop
    for b in range(B):              # small static epilogue loop (VPU work only)
        base = b * T
        # W-pool via stride-2 sublane reads (no misaligned reshape); row r = h*W2 + wo
        ev = acc_ref[pl.ds(base, T // 2, 2), :]
        od = acc_ref[pl.ds(base + 1, T // 2, 2), :]
        wmax = jnp.maximum(ev, od).reshape(Ho, Wp, C)      # split at Wp-row groups (8-aligned)
        hmax = jnp.maximum(wmax[:, :W2, :], wmax[:, W2:, :])   # H-pool -> (Ho, W2, C)
        # drop junk pooled columns, then bias + ReLU (max-pool commutes with both)
        y = jnp.maximum(hmax[:, :Wo, :] + bias, 0.0)           # (Ho, Wo, C)
        o_ref[b] = y


# ---------------------------------------------------------------------------
# Pallas wrappers
# ---------------------------------------------------------------------------
def _pick_tile(dim, preferred, quantum):
    """Largest tile <= preferred that divides dim and is a multiple of quantum,
    else the full dim (always legal: block == full array dim)."""
    if dim <= preferred:
        return dim
    t = preferred - (preferred % quantum)
    while t >= quantum:
        if dim % t == 0:
            return t
        t -= quantum
    return dim


def _pick_batch_block(N, target=8):
    """Images folded into each conv grid step.  Amortizes per-step overhead and
    lengthens the matmul M dim, but leaves >=2 grid steps (v7x dual-core)."""
    b = min(target, N if N < 2 else max(1, N // 2))
    while N % b:
        b -= 1
    return b


def linear_pallas(x, w, b2, *, relu):
    """y = [relu](x @ w + b), x:(M,K) w:(K,N) b2:(1,N) -> (M,N)."""
    M, K = x.shape
    Kw, N = w.shape
    assert K == Kw
    tm = _pick_tile(M, 256, 8)
    tn = _pick_tile(N, 256, 128)     # lane-dense output tiles
    tk = _pick_tile(K, 2048, 128)

    if tk == K:
        # full-K single pass: no accumulator scratch, no init/finalize.
        # Grid is N-outer / M-inner so each w column-tile stays VMEM-resident
        # across the whole batch sweep (w index_map independent of i).
        kernel = functools.partial(matmul_bias_kernel, relu=relu)
        return pl.pallas_call(
            kernel,
            out_shape=jax.ShapeDtypeStruct((M, N), jnp.float32),
            grid_spec=pltpu.PrefetchScalarGridSpec(
                num_scalar_prefetch=0,
                grid=(N // tn, M // tm),
                in_specs=[
                    pl.BlockSpec((tm, K), lambda j, i: (i, 0)),
                    pl.BlockSpec((K, tn), lambda j, i: (0, j)),
                    pl.BlockSpec((1, tn), lambda j, i: (0, j)),
                ],
                out_specs=pl.BlockSpec((tm, tn), lambda j, i: (i, j)),
            ),
            compiler_params=pltpu.CompilerParams(
                dimension_semantics=("parallel", "parallel"),
                vmem_limit_bytes=VMEM_LIMIT,
            ),
        )(x, w, b2)

    # generic K-tiled fallback (not hit for these shapes)
    kernel = functools.partial(matmul_bias_acc_kernel, relu=relu)
    return pl.pallas_call(
        kernel,
        out_shape=jax.ShapeDtypeStruct((M, N), jnp.float32),
        grid_spec=pltpu.PrefetchScalarGridSpec(
            num_scalar_prefetch=0,
            grid=(N // tn, M // tm, K // tk),
            in_specs=[
                pl.BlockSpec((tm, tk), lambda j, i, k: (i, k)),
                pl.BlockSpec((tk, tn), lambda j, i, k: (k, j)),
                pl.BlockSpec((1, tn), lambda j, i, k: (0, j)),
            ],
            out_specs=pl.BlockSpec((tm, tn), lambda j, i, k: (i, j)),
            scratch_shapes=[pltpu.VMEM((tm, tn), jnp.float32)],
        ),
        compiler_params=pltpu.CompilerParams(
            dimension_semantics=("parallel", "parallel", "arbitrary"),
            vmem_limit_bytes=VMEM_LIMIT,
        ),
    )(x, w, b2)


def conv_fused_pallas(x3d, w, b2, *, offsets, H, Wp, Wvalid, block_b):
    """Batched fused conv(+bias+relu)+pool.

    x3d:(N, R, K) tap-folded row-flattened activations, w:(ntap, K, C), b2:(1, C)
    -> (N, H//2, Wvalid//2, C)
    """
    N, R, K = x3d.shape
    ntap, Kw, C = w.shape
    assert K == Kw and len(offsets) == ntap
    assert H % 2 == 0 and Wvalid % 2 == 0 and Wp % 2 == 0 and Wp >= Wvalid
    assert max(offsets) + H * Wp <= R
    B = block_b
    assert N % B == 0
    Ho, Wo = H // 2, Wvalid // 2
    kernel = functools.partial(conv_fused_kernel, offsets=tuple(offsets),
                               H=H, Wp=Wp, Wvalid=Wvalid)
    return pl.pallas_call(
        kernel,
        out_shape=jax.ShapeDtypeStruct((N, Ho, Wo, C), jnp.float32),
        grid_spec=pltpu.PrefetchScalarGridSpec(
            num_scalar_prefetch=0,
            grid=(N // B,),
            in_specs=[
                pl.BlockSpec((B, R, K), lambda n: (n, 0, 0)),
                pl.BlockSpec((ntap, K, C), lambda n: (0, 0, 0)),
                pl.BlockSpec((1, C), lambda n: (0, 0)),
            ],
            out_specs=pl.BlockSpec((B, Ho, Wo, C), lambda n: (n, 0, 0, 0)),
            scratch_shapes=[pltpu.VMEM((B * H * Wp, C), jnp.float32)],
        ),
        compiler_params=pltpu.CompilerParams(
            dimension_semantics=("parallel",),
            vmem_limit_bytes=VMEM_LIMIT,
        ),
    )(x3d, w, b2)


# ---------------------------------------------------------------------------
# Wrapper-side activation packing (cheap, done by XLA once per forward)
# ---------------------------------------------------------------------------
def conv1_im2col(img, Wp):
    """Full 25-tap im2col for the 1-channel first conv (tiny; K=25 single dot).
    img:(N,28,28) -> (N, 28*Wp, 25); columns w >= 28 are junk (alignment pad)."""
    N, H, W = img.shape
    xp = jnp.pad(img, ((0, 0), (2, 2), (2, Wp - W + 2)))            # (N, H+4, Wp+4)
    cols = [xp[:, i:i + H, j:j + Wp] for i in range(5) for j in range(5)]
    return jnp.stack(cols, axis=-1).reshape(N, H * Wp, 25)


def conv2_input_pack(h1, Wp):
    """Column-fold the 5 taps of each kernel row into K: (N,14,14,32) NHWC ->
    (N, 18*Wp, 160).  Row r = h_p*Wp + w; tap i (kernel row) offset = i*Wp."""
    N, H, W, Cin = h1.shape
    xp = jnp.pad(h1, ((0, 0), (2, 2), (2, Wp - W + 2), (0, 0)))     # (N, H+4, Wp+4, Cin)
    xj = jnp.concatenate([xp[:, :, j:j + Wp, :] for j in range(5)], axis=-1)
    return xj.reshape(N, (H + 4) * Wp, 5 * Cin)


# ---------------------------------------------------------------------------
# Parameters (PyTorch layout) + one-time layout preparation for the kernels
# ---------------------------------------------------------------------------
def init_params(key):
    ks = jax.random.split(key, 8)

    def rnd(k, shape, scale):
        return scale * jax.random.normal(k, shape, dtype=jnp.float32)

    # PyTorch conventions: conv (Cout,Cin,KH,KW), linear (out,in)
    return {
        "conv1_w": rnd(ks[0], (32, 1, 5, 5), 0.10),
        "conv1_b": rnd(ks[1], (32,), 0.10),
        "conv2_w": rnd(ks[2], (64, 32, 5, 5), 0.05),
        "conv2_b": rnd(ks[3], (64,), 0.05),
        "fc1_w": rnd(ks[4], (1024, 64 * 7 * 7), 0.02),
        "fc1_b": rnd(ks[5], (1024,), 0.02),
        "fc2_w": rnd(ks[6], (10, 1024), 0.05),
        "fc2_b": rnd(ks[7], (10,), 0.05),
    }


def prepare_params(params, dtype=jnp.bfloat16):
    """One-time layout prep (outside the per-step forward):
    - conv1 weights -> (1, 25, 32) for the single 25-tap im2col dot (kept f32: tiny, exact)
    - conv2 weights -> (5, 160, 64): column taps folded into K per kernel row
    - fc weights -> (in, out), stored in `dtype` (default bf16: halves the HBM
      weight stream; MXU accumulation stays f32, biases stay f32)
    - wfc1 rows permuted CHW->HWC so the forward flattens NHWC with a free reshape
    - fc2 output padded 10 -> 128 for lane-dense stores (sliced in the wrapper)."""
    p = {}
    p["w1"] = jnp.transpose(params["conv1_w"], (2, 3, 1, 0)).reshape(1, 25, 32)
    p["b1"] = params["conv1_b"].reshape(1, 32)
    p["w2"] = jnp.transpose(params["conv2_w"], (2, 3, 1, 0)).reshape(5, 5 * 32, 64)
    p["b2"] = params["conv2_b"].reshape(1, 64)
    # gather[h*7*64 + w*64 + c] = c*49 + h*7 + w  (maps HWC-flat row -> CHW-flat row)
    gather = jnp.arange(64 * 7 * 7).reshape(64, 7, 7).transpose(1, 2, 0).reshape(-1)
    p["wfc1"] = jnp.transpose(params["fc1_w"])[gather].astype(dtype)     # (3136, 1024)
    p["bfc1"] = params["fc1_b"].reshape(1, 1024)
    wfc2 = jnp.transpose(params["fc2_w"]).astype(dtype)                  # (1024, 10)
    p["wfc2"] = jnp.pad(wfc2, ((0, 0), (0, 128 - 10)))                   # (1024, 128) lane-dense
    p["bfc2"] = jnp.pad(params["fc2_b"], (0, 128 - 10)).reshape(1, 128)
    return p


# ---------------------------------------------------------------------------
# Model forward
# ---------------------------------------------------------------------------
def cnn_forward(p, x):
    # x: (N, 1, 28, 28) NCHW (PyTorch convention)
    N = x.shape[0]
    assert x.shape[1:] == (1, 28, 28)
    img = x[:, 0, :, :].astype(jnp.float32)                         # (N, 28, 28)
    Bc = _pick_batch_block(N)

    # conv1 (1->32) + ReLU + 2x2 pool (fused): single dot K=25, batch folded into M
    x1 = conv1_im2col(img, Wp=32)                                   # (N, 896, 25)
    h1 = conv_fused_pallas(x1, p["w1"], p["b1"], offsets=(0,),
                           H=28, Wp=32, Wvalid=28, block_b=Bc)      # (N, 14, 14, 32)

    # conv2 (32->64) + ReLU + 2x2 pool (fused): 5 tap dots with K=160 (column-folded)
    x2 = conv2_input_pack(h1, Wp=16)                                # (N, 288, 160)
    h2 = conv_fused_pallas(x2, p["w2"], p["b2"],
                           offsets=tuple(i * 16 for i in range(5)),
                           H=14, Wp=16, Wvalid=14, block_b=Bc)      # (N, 7, 7, 64)

    # flatten NHWC (free reshape); wfc1 rows were permuted once in prepare_params
    flat = h2.reshape(N, 7 * 7 * 64)                                # (N, 3136)

    f1 = linear_pallas(flat, p["wfc1"], p["bfc1"], relu=True)       # (N, 1024)
    # TODO(synk): nn.Dropout(0.2) is identity at inference; training-mode random mask not implemented.
    logits = linear_pallas(f1, p["wfc2"], p["bfc2"], relu=False)    # (N, 128) lane-dense
    return logits[:, :10]


# Pure-JAX reference (PyTorch-layout params) for a correctness cross-check.
def reference_forward(params, x):
    xh = jnp.transpose(x, (0, 2, 3, 1)).astype(jnp.float32)
    w1 = jnp.transpose(params["conv1_w"], (2, 3, 1, 0))
    y = lax.conv_general_dilated(xh, w1, (1, 1), ((2, 2), (2, 2)),
                                 dimension_numbers=("NHWC", "HWIO", "NHWC")) + params["conv1_b"]
    y = jnp.maximum(y, 0.0)
    y = lax.reduce_window(y, -jnp.inf, lax.max, (1, 2, 2, 1), (1, 2, 2, 1), "VALID")
    w2 = jnp.transpose(params["conv2_w"], (2, 3, 1, 0))
    y = lax.conv_general_dilated(y, w2, (1, 1), ((2, 2), (2, 2)),
                                 dimension_numbers=("NHWC", "HWIO", "NHWC")) + params["conv2_b"]
    y = jnp.maximum(y, 0.0)
    y = lax.reduce_window(y, -jnp.inf, lax.max, (1, 2, 2, 1), (1, 2, 2, 1), "VALID")
    flat = jnp.transpose(y, (0, 3, 1, 2)).reshape(x.shape[0], -1)    # torch x.view(B,-1) order
    f1 = jnp.maximum(flat @ params["fc1_w"].T + params["fc1_b"], 0.0)
    return f1 @ params["fc2_w"].T + params["fc2_b"]


if __name__ == "__main__":
    key = jax.random.PRNGKey(0)
    params = init_params(key)
    x = jax.random.normal(jax.random.fold_in(key, 123), (2, 1, 28, 28), dtype=jnp.float32)

    ref = reference_forward(params, x)

    # 1) exact f32 path: strict check against the PyTorch-semantics reference
    p32 = prepare_params(params, dtype=jnp.float32)
    logits32 = jax.block_until_ready(jax.jit(cnn_forward)(p32, x))
    assert logits32.shape == (2, 10) and logits32.dtype == jnp.float32
    assert jnp.allclose(logits32, ref, rtol=1e-3, atol=2e-3), "f32 mismatch vs JAX reference"

    # 2) default path: bf16 fc-weight storage (f32 accumulation); looser tolerance
    pbf = prepare_params(params)
    logits_bf = jax.block_until_ready(jax.jit(cnn_forward)(pbf, x))
    assert logits_bf.shape == (2, 10) and logits_bf.dtype == jnp.float32
    assert jnp.allclose(logits_bf, ref, rtol=5e-2, atol=5e-2), "bf16-weight path deviates too much"

    print("KERNEL_OK")
</pallas_src>

<mosaic_0001>
module attributes {stable_mosaic.version = 11 : i64} {
  func.func @conv_fused_kernel(%arg0: i32, %arg1: memref<1x896x25xf32, #tpu.memory_space<vmem>>, %arg2: memref<1x25x32xf32, #tpu.memory_space<vmem>>, %arg3: memref<1x32xf32, #tpu.memory_space<vmem>>, %arg4: memref<1x14x14x32xf32, #tpu.memory_space<vmem>>, %arg5: memref<896x32xf32, #tpu.memory_space<vmem>>) attributes {dimension_semantics = [#tpu.dimension_semantics<parallel>], iteration_bounds = array<i64: 2>, scalar_prefetch = 0 : i64, scratch_operands = 1 : i64, tpu.core_type = #tpu.core_type<tc>, window_params = [{transform_indices = @transform_0, window_bounds = array<i64: 1, 896, 25>}, {pipeline_mode = #tpu.pipeline_mode<synchronous>, transform_indices = @transform_1, window_bounds = array<i64: 1, 25, 32>}, {pipeline_mode = #tpu.pipeline_mode<synchronous>, transform_indices = @transform_2, window_bounds = array<i64: 1, 32>}, {transform_indices = @transform_3, window_bounds = array<i64: 1, 14, 14, 32>}]} {
    %c0 = arith.constant 0 : index
    %c0_0 = arith.constant 0 : index
    %c0_1 = arith.constant 0 : index
    %0 = vector.load %arg1[%c0, %c0_0, %c0_1] : memref<1x896x25xf32, #tpu.memory_space<vmem>>, vector<1x896x25xf32>
    %1 = vector.shape_cast %0 : vector<1x896x25xf32> to vector<896x25xf32>
    %c0_2 = arith.constant 0 : index
    %c0_3 = arith.constant 0 : index
    %c0_4 = arith.constant 0 : index
    %2 = vector.load %arg2[%c0_2, %c0_3, %c0_4] : memref<1x25x32xf32, #tpu.memory_space<vmem>>, vector<1x25x32xf32>
    %3 = vector.shape_cast %2 : vector<1x25x32xf32> to vector<25x32xf32>
    %cst = arith.constant dense<0.000000e+00> : vector<896x32xf32>
    %4 = tpu.matmul %1, %3, %cst {dimension_numbers = #tpu.dot_dimension_numbers<[1], [0], [0], [1], [0, 0, 1, 1], [], []>} : vector<896x25xf32>, vector<25x32xf32>, vector<896x32xf32> -> vector<896x32xf32>
    %c0_5 = arith.constant 0 : index
    %c0_6 = arith.constant 0 : index
    %5 = vector.load %arg5[%c0_5, %c0_6] : memref<896x32xf32, #tpu.memory_space<vmem>>, vector<896x32xf32>
    tpu.vector_store %arg5[%c0_5, %c0_6], %4 {strides = array<i32>} : memref<896x32xf32, #tpu.memory_space<vmem>>, vector<896x32xf32>,
    %c0_7 = arith.constant 0 : index
    %c0_8 = arith.constant 0 : index
    %6 = vector.load %arg3[%c0_7, %c0_8] : memref<1x32xf32, #tpu.memory_space<vmem>>, vector<1x32xf32>
    %c0_9 = arith.constant 0 : index
    %c0_10 = arith.constant 0 : index
    %7 = tpu.strided_load %arg5[%c0_9, %c0_10] {strides = array<i32: 2, 1>} : memref<896x32xf32, #tpu.memory_space<vmem>>, vector<448x32xf32>
    %c1 = arith.constant 1 : index
    %c0_11 = arith.constant 0 : index
    %8 = tpu.strided_load %arg5[%c1, %c0_11] {strides = array<i32: 2, 1>} : memref<896x32xf32, #tpu.memory_space<vmem>>, vector<448x32xf32>
    %9 = arith.maximumf %7, %8 : vector<448x32xf32>
    %10 = vector.shape_cast %9 : vector<448x32xf32> to vector<14x32x32xf32>
    %11 = vector.extract_strided_slice %10 {offsets = [0, 0, 0], sizes = [14, 16, 32], strides = [1, 1, 1]} : vector<14x32x32xf32> to vector<14x16x32xf32>
    %12 = vector.extract_strided_slice %10 {offsets = [0, 16, 0], sizes = [14, 16, 32], strides = [1, 1, 1]} : vector<14x32x32xf32> to vector<14x16x32xf32>
    %13 = arith.maximumf %11, %12 : vector<14x16x32xf32>
    %14 = vector.extract_strided_slice %13 {offsets = [0, 0, 0], sizes = [14, 14, 32], strides = [1, 1, 1]} : vector<14x16x32xf32> to vector<14x14x32xf32>
    %15 = vector.shape_cast %6 : vector<1x32xf32> to vector<1x1x32xf32>
    %16 = vector.broadcast %15 : vector<1x1x32xf32> to vector<14x14x32xf32>
    %17 = arith.addf %14, %16 : vector<14x14x32xf32>
    %cst_12 = arith.constant 0.000000e+00 : f32
    %18 = vector.broadcast %cst_12 : f32 to vector<14x14x32xf32>
    %19 = arith.maximumf %17, %18 : vector<14x14x32xf32>
    %c0_13 = arith.constant 0 : index
    %c0_14 = arith.constant 0 : index
    %c0_15 = arith.constant 0 : index
    %c0_16 = arith.constant 0 : index
    %20 = vector.load %arg4[%c0_13, %c0_14, %c0_15, %c0_16] : memref<1x14x14x32xf32, #tpu.memory_space<vmem>>, vector<1x14x14x32xf32>
    %21 = vector.shape_cast %20 : vector<1x14x14x32xf32> to vector<14x14x32xf32>
    %22 = vector.shape_cast %19 : vector<14x14x32xf32> to vector<1x14x14x32xf32>
    tpu.vector_store %arg4[%c0_13, %c0_14, %c0_15, %c0_16], %22 {strides = array<i32>} : memref<1x14x14x32xf32, #tpu.memory_space<vmem>>, vector<1x14x14x32xf32>,
    return
  }
  func.func @transform_0(%arg0: i32) -> (i32, i32, i32) {
    %c0_i32 = arith.constant 0 : i32
    %c0_i32_0 = arith.constant 0 : i32
    %c0_i32_1 = arith.constant 0 : i32
    return %arg0, %c0_i32, %c0_i32_0 : i32, i32, i32
  }
  func.func @transform_1(%arg0: i32) -> (i32, i32, i32) {
    %c0_i32 = arith.constant 0 : i32
    %c0_i32_0 = arith.constant 0 : i32
    %c0_i32_1 = arith.constant 0 : i32
    %c0_i32_2 = arith.constant 0 : i32
    return %c0_i32, %c0_i32_0, %c0_i32_1 : i32, i32, i32
  }
  func.func @transform_2(%arg0: i32) -> (i32, i32) {
    %c0_i32 = arith.constant 0 : i32
    %c0_i32_0 = arith.constant 0 : i32
    %c0_i32_1 = arith.constant 0 : i32
    return %c0_i32, %c0_i32_0 : i32, i32
  }
  func.func @transform_3(%arg0: i32) -> (i32, i32, i32, i32) {
    %c0_i32 = arith.constant 0 : i32
    %c0_i32_0 = arith.constant 0 : i32
    %c0_i32_1 = arith.constant 0 : i32
    %c0_i32_2 = arith.constant 0 : i32
    return %arg0, %c0_i32, %c0_i32_0, %c0_i32_1 : i32, i32, i32, i32
  }
}

module attributes {stable_mosaic.version = 11 : i64} {
  func.func @conv_fused_kernel(%arg0: i32, %arg1: memref<1x288x160xf32, #tpu.memory_space<vmem>>, %arg2: memref<5x160x64xf32, #tpu.memory_space<vmem>>, %arg3: memref<1x64xf32, #tpu.memory_space<vmem>>, %arg4: memref<1x7x7x64xf32, #tpu.memory_space<vmem>>, %arg5: memref<224x64xf32, #tpu.memory_space<vmem>>) attributes {dimension_semantics = [#tpu.dimension_semantics<parallel>], iteration_bounds = array<i64: 2>, scalar_prefetch = 0 : i64, scratch_operands = 1 : i64, tpu.core_type = #tpu.core_type<tc>, window_params = [{transform_indices = @transform_0, window_bounds = array<i64: 1, 288, 160>}, {pipeline_mode = #tpu.pipeline_mode<synchronous>, transform_indices = @transform_1, window_bounds = array<i64: 5, 160, 64>}, {pipeline_mode = #tpu.pipeline_mode<synchronous>, transform_indices = @transform_2, window_bounds = array<i64: 1, 64>}, {transform_indices = @transform_3, window_bounds = array<i64: 1, 7, 7, 64>}]} {
    %c0 = arith.constant 0 : index
    %c0_0 = arith.constant 0 : index
    %c0_1 = arith.constant 0 : index
    %0 = vector.load %arg1[%c0, %c0_0, %c0_1] : memref<1x288x160xf32, #tpu.memory_space<vmem>>, vector<1x224x160xf32>
    %1 = vector.shape_cast %0 : vector<1x224x160xf32> to vector<224x160xf32>
    %c0_2 = arith.constant 0 : index
    %c0_3 = arith.constant 0 : index
    %c0_4 = arith.constant 0 : index
    %2 = vector.load %arg2[%c0_2, %c0_3, %c0_4] : memref<5x160x64xf32, #tpu.memory_space<vmem>>, vector<1x160x64xf32>
    %3 = vector.shape_cast %2 : vector<1x160x64xf32> to vector<160x64xf32>
    %cst = arith.constant dense<0.000000e+00> : vector<224x64xf32>
    %4 = tpu.matmul %1, %3, %cst {dimension_numbers = #tpu.dot_dimension_numbers<[1], [0], [0], [1], [0, 0, 1, 1], [], []>} : vector<224x160xf32>, vector<160x64xf32>, vector<224x64xf32> -> vector<224x64xf32>
    %c0_5 = arith.constant 0 : index
    %c0_6 = arith.constant 0 : index
    %5 = vector.load %arg5[%c0_5, %c0_6] : memref<224x64xf32, #tpu.memory_space<vmem>>, vector<224x64xf32>
    tpu.vector_store %arg5[%c0_5, %c0_6], %4 {strides = array<i32>} : memref<224x64xf32, #tpu.memory_space<vmem>>, vector<224x64xf32>,
    %c0_7 = arith.constant 0 : index
    %c0_8 = arith.constant 0 : index
    %6 = vector.load %arg5[%c0_7, %c0_8] : memref<224x64xf32, #tpu.memory_space<vmem>>, vector<224x64xf32>
    %c0_9 = arith.constant 0 : index
    %c16 = arith.constant 16 : index
    %c0_10 = arith.constant 0 : index
    %7 = vector.load %arg1[%c0_9, %c16, %c0_10] : memref<1x288x160xf32, #tpu.memory_space<vmem>>, vector<1x224x160xf32>
    %8 = vector.shape_cast %7 : vector<1x224x160xf32> to vector<224x160xf32>
    %c1 = arith.constant 1 : index
    %c0_11 = arith.constant 0 : index
    %c0_12 = arith.constant 0 : index
    %9 = vector.load %arg2[%c1, %c0_11, %c0_12] : memref<5x160x64xf32, #tpu.memory_space<vmem>>, vector<1x160x64xf32>
    %10 = vector.shape_cast %9 : vector<1x160x64xf32> to vector<160x64xf32>
    %cst_13 = arith.constant dense<0.000000e+00> : vector<224x64xf32>
    %11 = tpu.matmul %8, %10, %cst_13 {dimension_numbers = #tpu.dot_dimension_numbers<[1], [0], [0], [1], [0, 0, 1, 1], [], []>} : vector<224x160xf32>, vector<160x64xf32>, vector<224x64xf32> -> vector<224x64xf32>
    %12 = arith.addf %6, %11 : vector<224x64xf32>
    %c0_14 = arith.constant 0 : index
    %c0_15 = arith.constant 0 : index
    %13 = vector.load %arg5[%c0_14, %c0_15] : memref<224x64xf32, #tpu.memory_space<vmem>>, vector<224x64xf32>
    tpu.vector_store %arg5[%c0_14, %c0_15], %12 {strides = array<i32>} : memref<224x64xf32, #tpu.memory_space<vmem>>, vector<224x64xf32>,
    %c0_16 = arith.constant 0 : index
    %c0_17 = arith.constant 0 : index
    %14 = vector.load %arg5[%c0_16, %c0_17] : memref<224x64xf32, #tpu.memory_space<vmem>>, vector<224x64xf32>
    %c0_18 = arith.constant 0 : index
    %c32 = arith.constant 32 : index
    %c0_19 = arith.constant 0 : index
    %15 = vector.load %arg1[%c0_18, %c32, %c0_19] : memref<1x288x160xf32, #tpu.memory_space<vmem>>, vector<1x224x160xf32>
    %16 = vector.shape_cast %15 : vector<1x224x160xf32> to vector<224x160xf32>
    %c2 = arith.constant 2 : index
    %c0_20 = arith.constant 0 : index
    %c0_21 = arith.constant 0 : index
    %17 = vector.load %arg2[%c2, %c0_20, %c0_21] : memref<5x160x64xf32, #tpu.memory_space<vmem>>, vector<1x160x64xf32>
    %18 = vector.shape_cast %17 : vector<1x160x64xf32> to vector<160x64xf32>
    %cst_22 = arith.constant dense<0.000000e+00> : vector<224x64xf32>
    %19 = tpu.matmul %16, %18, %cst_22 {dimension_numbers = #tpu.dot_dimension_numbers<[1], [0], [0], [1], [0, 0, 1, 1], [], []>} : vector<224x160xf32>, vector<160x64xf32>, vector<224x64xf32> -> vector<224x64xf32>
    %20 = arith.addf %14, %19 : vector<224x64xf32>
    %c0_23 = arith.constant 0 : index
    %c0_24 = arith.constant 0 : index
    %21 = vector.load %arg5[%c0_23, %c0_24] : memref<224x64xf32, #tpu.memory_space<vmem>>, vector<224x64xf32>
    tpu.vector_store %arg5[%c0_23, %c0_24], %20 {strides = array<i32>} : memref<224x64xf32, #tpu.memory_space<vmem>>, vector<224x64xf32>,
    %c0_25 = arith.constant 0 : index
    %c0_26 = arith.constant 0 : index
    %22 = vector.load %arg5[%c0_25, %c0_26] : memref<224x64xf32, #tpu.memory_space<vmem>>, vector<224x64xf32>
    %c0_27 = arith.constant 0 : index
    %c48 = arith.constant 48 : index
    %c0_28 = arith.constant 0 : index
    %23 = vector.load %arg1[%c0_27, %c48, %c0_28] : memref<1x288x160xf32, #tpu.memory_space<vmem>>, vector<1x224x160xf32>
    %24 = vector.shape_cast %23 : vector<1x224x160xf32> to vector<224x160xf32>
    %c3 = arith.constant 3 : index
    %c0_29 = arith.constant 0 : index
    %c0_30 = arith.constant 0 : index
    %25 = vector.load %arg2[%c3, %c0_29, %c0_30] : memref<5x160x64xf32, #tpu.memory_space<vmem>>, vector<1x160x64xf32>
    %26 = vector.shape_cast %25 : vector<1x160x64xf32> to vector<160x64xf32>
    %cst_31 = arith.constant dense<0.000000e+00> : vector<224x64xf32>
    %27 = tpu.matmul %24, %26, %cst_31 {dimension_numbers = #tpu.dot_dimension_numbers<[1], [0], [0], [1], [0, 0, 1, 1], [], []>} : vector<224x160xf32>, vector<160x64xf32>, vector<224x64xf32> -> vector<224x64xf32>
    %28 = arith.addf %22, %27 : vector<224x64xf32>
    %c0_32 = arith.constant 0 : index
    %c0_33 = arith.constant 0 : index
    %29 = vector.load %arg5[%c0_32, %c0_33] : memref<224x64xf32, #tpu.memory_space<vmem>>, vector<224x64xf32>
    tpu.vector_store %arg5[%c0_32, %c0_33], %28 {strides = array<i32>} : memref<224x64xf32, #tpu.memory_space<vmem>>, vector<224x64xf32>,
    %c0_34 = arith.constant 0 : index
    %c0_35 = arith.constant 0 : index
    %30 = vector.load %arg5[%c0_34, %c0_35] : memref<224x64xf32, #tpu.memory_space<vmem>>, vector<224x64xf32>
    %c0_36 = arith.constant 0 : index
    %c64 = arith.constant 64 : index
    %c0_37 = arith.constant 0 : index
    %31 = vector.load %arg1[%c0_36, %c64, %c0_37] : memref<1x288x160xf32, #tpu.memory_space<vmem>>, vector<1x224x160xf32>
    %32 = vector.shape_cast %31 : vector<1x224x160xf32> to vector<224x160xf32>
    %c4 = arith.constant 4 : index
    %c0_38 = arith.constant 0 : index
    %c0_39 = arith.constant 0 : index
    %33 = vector.load %arg2[%c4, %c0_38, %c0_39] : memref<5x160x64xf32, #tpu.memory_space<vmem>>, vector<1x160x64xf32>
    %34 = vector.shape_cast %33 : vector<1x160x64xf32> to vector<160x64xf32>
    %cst_40 = arith.constant dense<0.000000e+00> : vector<224x64xf32>
    %35 = tpu.matmul %32, %34, %cst_40 {dimension_numbers = #tpu.dot_dimension_numbers<[1], [0], [0], [1], [0, 0, 1, 1], [], []>} : vector<224x160xf32>, vector<160x64xf32>, vector<224x64xf32> -> vector<224x64xf32>
    %36 = arith.addf %30, %35 : vector<224x64xf32>
    %c0_41 = arith.constant 0 : index
    %c0_42 = arith.constant 0 : index
    %37 = vector.load %arg5[%c0_41, %c0_42] : memref<224x64xf32, #tpu.memory_space<vmem>>, vector<224x64xf32>
    tpu.vector_store %arg5[%c0_41, %c0_42], %36 {strides = array<i32>} : memref<224x64xf32, #tpu.memory_space<vmem>>, vector<224x64xf32>,
    %c0_43 = arith.constant 0 : index
    %c0_44 = arith.constant 0 : index
    %38 = vector.load %arg3[%c0_43, %c0_44] : memref<1x64xf32, #tpu.memory_space<vmem>>, vector<1x64xf32>
    %c0_45 = arith.constant 0 : index
    %c0_46 = arith.constant 0 : index
    %39 = tpu.strided_load %arg5[%c0_45, %c0_46] {strides = array<i32: 2, 1>} : memref<224x64xf32, #tpu.memory_space<vmem>>, vector<112x64xf32>
    %c1_47 = arith.constant 1 : index
    %c0_48 = arith.constant 0 : index
    %40 = tpu.strided_load %arg5[%c1_47, %c0_48] {strides = array<i32: 2, 1>} : memref<224x64xf32, #tpu.memory_space<vmem>>, vector<112x64xf32>
    %41 = arith.maximumf %39, %40 : vector<112x64xf32>
    %42 = vector.shape_cast %41 : vector<112x64xf32> to vector<7x16x64xf32>
    %43 = vector.extract_strided_slice %42 {offsets = [0, 0, 0], sizes = [7, 8, 64], strides = [1, 1, 1]} : vector<7x16x64xf32> to vector<7x8x64xf32>
    %44 = vector.extract_strided_slice %42 {offsets = [0, 8, 0], sizes = [7, 8, 64], strides = [1, 1, 1]} : vector<7x16x64xf32> to vector<7x8x64xf32>
    %45 = arith.maximumf %43, %44 : vector<7x8x64xf32>
    %46 = vector.extract_strided_slice %45 {offsets = [0, 0, 0], sizes = [7, 7, 64], strides = [1, 1, 1]} : vector<7x8x64xf32> to vector<7x7x64xf32>
    %47 = vector.shape_cast %38 : vector<1x64xf32> to vector<1x1x64xf32>
    %48 = vector.broadcast %47 : vector<1x1x64xf32> to vector<7x7x64xf32>
    %49 = arith.addf %46, %48 : vector<7x7x64xf32>
    %cst_49 = arith.constant 0.000000e+00 : f32
    %50 = vector.broadcast %cst_49 : f32 to vector<7x7x64xf32>
    %51 = arith.maximumf %49, %50 : vector<7x7x64xf32>
    %c0_50 = arith.constant 0 : index
    %c0_51 = arith.constant 0 : index
    %c0_52 = arith.constant 0 : index
    %c0_53 = arith.constant 0 : index
    %52 = vector.load %arg4[%c0_50, %c0_51, %c0_52, %c0_53] : memref<1x7x7x64xf32, #tpu.memory_space<vmem>>, vector<1x7x7x64xf32>
    %53 = vector.shape_cast %52 : vector<1x7x7x64xf32> to vector<7x7x64xf32>
    %54 = vector.shape_cast %51 : vector<7x7x64xf32> to vector<1x7x7x64xf32>
    tpu.vector_store %arg4[%c0_50, %c0_51, %c0_52, %c0_53], %54 {strides = array<i32>} : memref<1x7x7x64xf32, #tpu.memory_space<vmem>>, vector<1x7x7x64xf32>,
    return
  }
  func.func @transform_0(%arg0: i32) -> (i32, i32, i32) {
    %c0_i32 = arith.constant 0 : i32
    %c0_i32_0 = arith.constant 0 : i32
    %c0_i32_1 = arith.constant 0 : i32
    return %arg0, %c0_i32, %c0_i32_0 : i32, i32, i32
  }
  func.func @transform_1(%arg0: i32) -> (i32, i32, i32) {
    %c0_i32 = arith.constant 0 : i32
    %c0_i32_0 = arith.constant 0 : i32
    %c0_i32_1 = arith.constant 0 : i32
    %c0_i32_2 = arith.constant 0 : i32
    return %c0_i32, %c0_i32_0, %c0_i32_1 : i32, i32, i32
  }
  func.func @transform_2(%arg0: i32) -> (i32, i32) {
    %c0_i32 = arith.constant 0 : i32
    %c0_i32_0 = arith.constant 0 : i32
    %c0_i32_1 = arith.constant 0 : i32
    return %c0_i32, %c0_i32_0 : i32, i32
  }
  func.func @transform_3(%arg0: i32) -> (i32, i32, i32, i32) {
    %c0_i32 = arith.constant 0 : i32
    %c0_i32_0 = arith.constant 0 : i32
    %c0_i32_1 = arith.constant 0 : i32
    %c0_i32_2 = arith.constant 0 : i32
    return %arg0, %c0_i32, %c0_i32_0, %c0_i32_1 : i32, i32, i32, i32
  }
}

module attributes {stable_mosaic.version = 11 : i64} {
  func.func @matmul_bias_kernel(%arg0: i32, %arg1: i32, %arg2: memref<2x3136xf32, #tpu.memory_space<vmem>>, %arg3: memref<3136x256xf32, #tpu.memory_space<vmem>>, %arg4: memref<1x256xf32, #tpu.memory_space<vmem>>, %arg5: memref<2x256xf32, #tpu.memory_space<vmem>>) attributes {dimension_semantics = [#tpu.dimension_semantics<parallel>, #tpu.dimension_semantics<parallel>], iteration_bounds = array<i64: 4, 1>, scalar_prefetch = 0 : i64, scratch_operands = 0 : i64, tpu.core_type = #tpu.core_type<tc>, window_params = [{transform_indices = @transform_0, window_bounds = array<i64: 2, 3136>}, {transform_indices = @transform_1, window_bounds = array<i64: 3136, 256>}, {transform_indices = @transform_2, window_bounds = array<i64: 1, 256>}, {transform_indices = @transform_3, window_bounds = array<i64: 2, 256>}]} {
    %c0 = arith.constant 0 : index
    %c0_0 = arith.constant 0 : index
    %0 = vector.load %arg2[%c0, %c0_0] : memref<2x3136xf32, #tpu.memory_space<vmem>>, vector<2x3136xf32>
    %c0_1 = arith.constant 0 : index
    %c0_2 = arith.constant 0 : index
    %1 = vector.load %arg3[%c0_1, %c0_2] : memref<3136x256xf32, #tpu.memory_space<vmem>>, vector<3136x256xf32>
    %cst = arith.constant dense<0.000000e+00> : vector<2x256xf32>
    %2 = tpu.matmul %0, %1, %cst {dimension_numbers = #tpu.dot_dimension_numbers<[1], [0], [0], [1], [0, 0, 1, 1], [], []>} : vector<2x3136xf32>, vector<3136x256xf32>, vector<2x256xf32> -> vector<2x256xf32>
    %c0_3 = arith.constant 0 : index
    %c0_4 = arith.constant 0 : index
    %3 = vector.load %arg4[%c0_3, %c0_4] : memref<1x256xf32, #tpu.memory_space<vmem>>, vector<1x256xf32>
    %4 = vector.broadcast %3 : vector<1x256xf32> to vector<2x256xf32>
    %5 = arith.addf %2, %4 : vector<2x256xf32>
    %cst_5 = arith.constant 0.000000e+00 : f32
    %6 = vector.broadcast %cst_5 : f32 to vector<2x256xf32>
    %7 = arith.maximumf %5, %6 : vector<2x256xf32>
    %c0_6 = arith.constant 0 : index
    %c0_7 = arith.constant 0 : index
    %8 = vector.load %arg5[%c0_6, %c0_7] : memref<2x256xf32, #tpu.memory_space<vmem>>, vector<2x256xf32>
    tpu.vector_store %arg5[%c0_6, %c0_7], %7 {strides = array<i32>} : memref<2x256xf32, #tpu.memory_space<vmem>>, vector<2x256xf32>,
    return
  }
  func.func @transform_0(%arg0: i32, %arg1: i32) -> (i32, i32) {
    %c0_i32 = arith.constant 0 : i32
    %c0_i32_0 = arith.constant 0 : i32
    return %arg1, %c0_i32 : i32, i32
  }
  func.func @transform_1(%arg0: i32, %arg1: i32) -> (i32, i32) {
    %c0_i32 = arith.constant 0 : i32
    %c0_i32_0 = arith.constant 0 : i32
    return %c0_i32, %arg0 : i32, i32
  }
  func.func @transform_2(%arg0: i32, %arg1: i32) -> (i32, i32) {
    %c0_i32 = arith.constant 0 : i32
    %c0_i32_0 = arith.constant 0 : i32
    return %c0_i32, %arg0 : i32, i32
  }
  func.func @transform_3(%arg0: i32, %arg1: i32) -> (i32, i32) {
    %c0_i32 = arith.constant 0 : i32
    return %arg1, %arg0 : i32, i32
  }
}

module attributes {stable_mosaic.version = 11 : i64} {
  func.func @matmul_bias_kernel(%arg0: i32, %arg1: i32, %arg2: memref<2x1024xf32, #tpu.memory_space<vmem>>, %arg3: memref<1024x128xf32, #tpu.memory_space<vmem>>, %arg4: memref<1x128xf32, #tpu.memory_space<vmem>>, %arg5: memref<2x128xf32, #tpu.memory_space<vmem>>) attributes {dimension_semantics = [#tpu.dimension_semantics<parallel>, #tpu.dimension_semantics<parallel>], iteration_bounds = array<i64: 1, 1>, scalar_prefetch = 0 : i64, scratch_operands = 0 : i64, tpu.core_type = #tpu.core_type<tc>, window_params = [{transform_indices = @transform_0, window_bounds = array<i64: 2, 1024>}, {transform_indices = @transform_1, window_bounds = array<i64: 1024, 128>}, {transform_indices = @transform_2, window_bounds = array<i64: 1, 128>}, {transform_indices = @transform_3, window_bounds = array<i64: 2, 128>}]} {
    %c0 = arith.constant 0 : index
    %c0_0 = arith.constant 0 : index
    %0 = vector.load %arg2[%c0, %c0_0] : memref<2x1024xf32, #tpu.memory_space<vmem>>, vector<2x1024xf32>
    %c0_1 = arith.constant 0 : index
    %c0_2 = arith.constant 0 : index
    %1 = vector.load %arg3[%c0_1, %c0_2] : memref<1024x128xf32, #tpu.memory_space<vmem>>, vector<1024x128xf32>
    %cst = arith.constant dense<0.000000e+00> : vector<2x128xf32>
    %2 = tpu.matmul %0, %1, %cst {dimension_numbers = #tpu.dot_dimension_numbers<[1], [0], [0], [1], [0, 0, 1, 1], [], []>} : vector<2x1024xf32>, vector<1024x128xf32>, vector<2x128xf32> -> vector<2x128xf32>
    %c0_3 = arith.constant 0 : index
    %c0_4 = arith.constant 0 : index
    %3 = vector.load %arg4[%c0_3, %c0_4] : memref<1x128xf32, #tpu.memory_space<vmem>>, vector<1x128xf32>
    %4 = vector.broadcast %3 : vector<1x128xf32> to vector<2x128xf32>
    %5 = arith.addf %2, %4 : vector<2x128xf32>
    %c0_5 = arith.constant 0 : index
    %c0_6 = arith.constant 0 : index
    %6 = vector.load %arg5[%c0_5, %c0_6] : memref<2x128xf32, #tpu.memory_space<vmem>>, vector<2x128xf32>
    tpu.vector_store %arg5[%c0_5, %c0_6], %5 {strides = array<i32>} : memref<2x128xf32, #tpu.memory_space<vmem>>, vector<2x128xf32>,
    return
  }
  func.func @transform_0(%arg0: i32, %arg1: i32) -> (i32, i32) {
    %c0_i32 = arith.constant 0 : i32
    %c0_i32_0 = arith.constant 0 : i32
    return %arg1, %c0_i32 : i32, i32
  }
  func.func @transform_1(%arg0: i32, %arg1: i32) -> (i32, i32) {
    %c0_i32 = arith.constant 0 : i32
    %c0_i32_0 = arith.constant 0 : i32
    return %c0_i32, %arg0 : i32, i32
  }
  func.func @transform_2(%arg0: i32, %arg1: i32) -> (i32, i32) {
    %c0_i32 = arith.constant 0 : i32
    %c0_i32_0 = arith.constant 0 : i32
    return %c0_i32, %arg0 : i32, i32
  }
  func.func @transform_3(%arg0: i32, %arg1: i32) -> (i32, i32) {
    %c0_i32 = arith.constant 0 : i32
    return %arg1, %arg0 : i32, i32
  }
}

</mosaic_0001>

<llo_original>
// kernel: cnn_forward.4
$region0: #{cnn_forward.4}
  #allocation0 [shape = 'u32[]', space=smem, size = 0x4, offset = 0x4, fixed_abs, tag = 'smem constant byte address 0x4 - core index']
  #allocation1 [shape = 'u32[72,128]{1,0:T(1,128)}', space=vmem, size = 0x9000, scoped, tag = 'internal scratch']
  #allocation2 [shape = 'f32[896,32]{1,0:T(8,128)}', space=vmem, size = 0x70000, scoped, tag = 'scratch operand']
  %s0 = inlined_call_operand.vmem [shape: f32[2,896,25], index: 0, kind: input, shape index: {}]
  %s1 = inlined_call_operand.vmem [shape: f32[1,25,32], index: 1, kind: input, shape index: {}]
  %s2 = inlined_call_operand.hbm [shape: f32[1,32], index: 2, kind: input, shape index: {}]
  %s3 = inlined_call_operand.vmem [shape: f32[2,14,14,32], index: 3, kind: output, shape index: {}]
  %s4 = sld [smem:[#allocation0]]
  $region49: #{cnn_forward.4} parent=0
    _
  %s6 = ssub.s32 1, %s4
  %s7 = scalar_select 0, %s6, %s4
  $region1: #{cnn_forward.4} parent=0
    #allocation3 [shape = 'u8[512]{0}', space=vmem, size = 0x400, scoped, tag = 'input window, operand 2, single buffered']
    #allocation4 [shape = 's32[2]{0}', space=sflag, size = 0x8, scoped, tag = 'scoped memory for cnn_forward.4']
    %8 = vsyncpa [#allocation4], 0
    loop: start=0, step=1, limit=4
    $region2: #{cnn_forward.4} parent=1 // loop_pre_header
      _
    $region3: #{cnn_forward.4} parent=1 // loop_header
      %s10 = sphi 0, %s14
      %p11 = scmp.ge.s32.totalorder %s10, 4
      %s20 = sphi 0, %s22
      %s23 = sphi 0, %s20
      %s24 = sphi 0, %s23
      %s40 = sphi 0, %s24
      %s44 = sphi 0, %s44
      %s46 = sphi 0, %s44
      %s47 = sphi 0, %s46
      %s61 = sphi 0, %s47
      %s65 = sphi 0, %s65
      %s67 = sphi 0, %s65
      %s68 = sphi 0, %s67
      %s82 = sphi 0, %s68
      %s88 = sphi 0, %s90
      %s91 = sphi 0, %s88
      %s92 = sphi 0, %s91
      %s108 = sphi 0, %s92
    $region4: #{cnn_forward.4} parent=1 // loop_header_branch
      %13 = sbr.rel (%p11) target = $region8
    $region5: #{cnn_forward.4} parent=1 // loop_body
      %s15 = ssub.s32 %s10, 1
      %s16 = ssub.s32 %s10, 2
      %s17 = sadd.s32 %s10, 1
      %s18 = ssub.s32 %s10, %s17
      %p19 = scmp.eq.s32.totalorder %s18, 0
      %s21 = sadd.s32 %s20, 1
      %s22 = scalar_select %p19, %s20, %s21
      %p25 = pneg %p19
      %p26 = scmp.eq.s32.totalorder %s10, 1
      %p27 = por %p25, %p26
      %p28 = scmp.ne.s32.totalorder %s20, %s23
      %p29 = scmp.eq.s32.totalorder %s10, 0
      %p30 = por %p28, %p29
      %p31 = scmp.ne.s32.totalorder %s20, %s23
      %p32 = scmp.eq.s32.totalorder %s15, 1
      %p33 = por %p31, %p32
      %p34 = scmp.ne.s32.totalorder %s23, %s24
      %p35 = scmp.eq.s32.totalorder %s15, 0
      %p36 = por %p34, %p35
      %p37 = scmp.ne.s32.totalorder %s23, %s24
      %p38 = scmp.eq.s32.totalorder %s16, 1
      %p39 = por %p37, %p38
      %p41 = scmp.ne.s32.totalorder %s24, %s40
      %p42 = scmp.eq.s32.totalorder %s16, 0
      %p43 = por %p41, %p42
      %s45 = sadd.s32 %s44, 1
      %p48 = scmp.eq.s32.totalorder %s10, 1
      %p49 = scmp.ne.s32.totalorder %s44, %s46
      %p50 = scmp.eq.s32.totalorder %s10, 0
      %p51 = por %p49, %p50
      %p52 = scmp.ne.s32.totalorder %s44, %s46
      %p53 = scmp.eq.s32.totalorder %s15, 1
      %p54 = por %p52, %p53
      %p55 = scmp.ne.s32.totalorder %s46, %s47
      %p56 = scmp.eq.s32.totalorder %s15, 0
      %p57 = por %p55, %p56
      %p58 = scmp.ne.s32.totalorder %s46, %s47
      %p59 = scmp.eq.s32.totalorder %s16, 1
      %p60 = por %p58, %p59
      %p62 = scmp.ne.s32.totalorder %s47, %s61
      %p63 = scmp.eq.s32.totalorder %s16, 0
      %p64 = por %p62, %p63
      %s66 = sadd.s32 %s65, 1
      %p69 = scmp.eq.s32.totalorder %s10, 1
      %p70 = scmp.ne.s32.totalorder %s65, %s67
      %p71 = scmp.eq.s32.totalorder %s10, 0
      %p72 = por %p70, %p71
      %p73 = scmp.ne.s32.totalorder %s65, %s67
      %p74 = scmp.eq.s32.totalorder %s15, 1
      %p75 = por %p73, %p74
      %p76 = scmp.ne.s32.totalorder %s67, %s68
      %p77 = scmp.eq.s32.totalorder %s15, 0
      %p78 = por %p76, %p77
      %p79 = scmp.ne.s32.totalorder %s67, %s68
      %p80 = scmp.eq.s32.totalorder %s16, 1
      %p81 = por %p79, %p80
      %p83 = scmp.ne.s32.totalorder %s68, %s82
      %p84 = scmp.eq.s32.totalorder %s16, 0
      %p85 = por %p83, %p84
      %s86 = ssub.s32 %s10, %s17
      %p87 = scmp.eq.s32.totalorder %s86, 0
      %s89 = sadd.s32 %s88, 1
      %s90 = scalar_select %p87, %s88, %s89
      %p93 = pneg %p87
      %p94 = scmp.eq.s32.totalorder %s10, 1
      %p95 = por %p93, %p94
      %p96 = scmp.ne.s32.totalorder %s88, %s91
      %p97 = scmp.eq.s32.totalorder %s10, 0
      %p98 = por %p96, %p97
      %p99 = scmp.ne.s32.totalorder %s88, %s91
      %p100 = scmp.eq.s32.totalorder %s15, 1
      %p101 = por %p99, %p100
      %p102 = scmp.ne.s32.totalorder %s91, %s92
      %p103 = scmp.eq.s32.totalorder %s15, 0
      %p104 = por %p102, %p103
      %p105 = scmp.ne.s32.totalorder %s91, %s92
      %p106 = scmp.eq.s32.totalorder %s16, 1
      %p107 = por %p105, %p106
      %p109 = scmp.ne.s32.totalorder %s92, %s108
      %p110 = scmp.eq.s32.totalorder %s16, 0
      %p111 = por %p109, %p110
      %p112 = scmp.le.s32.totalorder 1, %s10
      %p113 = scmp.lt.s32.totalorder %s10, 3
      %p114 = pnand %p112, %p113
      %p115 = pneg %p114
      // Predicated region
      $region9: #{cnn_forward.4} parent=5 // pred_check
        _
      $region10: #{cnn_forward.4} parent=5 // pred_check_branch
        %117 = sbr.rel (%p114) target = $region12
      $region11: #{cnn_forward.4} parent=5 // pred_region
        %s118 = ssub.s32 %s10, 1
        // Predicated region
        $region13: #{cnn_forward.4} parent=11 // pred_check
          %p119 = pneg %p57
        $region14: #{cnn_forward.4} parent=11 // pred_check_branch
          %121 = sbr.rel (%p119) target = $region16
        $region15: #{cnn_forward.4} parent=11 // pred_region
          _
        $region16: #{cnn_forward.4} parent=11 // pred_fallthru
          _
        // Predicated region
        $region17: #{cnn_forward.4} parent=11 // pred_check
          %p122 = pneg %p78
        $region18: #{cnn_forward.4} parent=11 // pred_check_branch
          %124 = sbr.rel (%p122) target = $region20
        $region19: #{cnn_forward.4} parent=11 // pred_region
          %126 = vsyncadd [#allocation4], 0
          %s128 = sshll.u32 %s2, 4
          %s129 = int_to_ptr.hbm [resolvable:$true] %s128
          %s130 = sshll.u32 [#allocation3], 4
          %s131 = int_to_ptr.vmem [resolvable:$true] %s130
          %133 = dma.hbm_to_vmem [thread:$0]  %s129, 16, %s131, [#allocation4]
        $region20: #{cnn_forward.4} parent=11 // pred_fallthru
          _
      $region12: #{cnn_forward.4} parent=5 // pred_fallthru
        _
      %p134 = scmp.lt.s32.totalorder %s10, 2
      // Predicated region
      $region21: #{cnn_forward.4} parent=5 // pred_check
        %p135 = pneg %p134
      $region22: #{cnn_forward.4} parent=5 // pred_check_branch
        %137 = sbr.rel (%p135) target = $region24
      $region23: #{cnn_forward.4} parent=5 // pred_region
        // Predicated region
        $region25: #{cnn_forward.4} parent=23 // pred_check
          %p138 = pneg %p30
        $region26: #{cnn_forward.4} parent=23 // pred_check_branch
          %140 = sbr.rel (%p138) target = $region28
        $region27: #{cnn_forward.4} parent=23 // pred_region
          %p141 = scmp.lt.s32.totalorder %s10, 1
          %s142 = scalar_select %p141, %s10, 1
          %s143 = smul.addr %s142, 112
          %s144 = smul.addr %s143, 8
          %s145 = scalar_lea.vmem %s0, %s144
        $region28: #{cnn_forward.4} parent=23 // pred_fallthru
          _
      $region24: #{cnn_forward.4} parent=5 // pred_fallthru
        _
      %p146 = scmp.le.s32.totalorder 1, %s10
      %p147 = scmp.lt.s32.totalorder %s10, 3
      %p148 = pnand %p146, %p147
      %p149 = pneg %p148
      // Predicated region
      $region29: #{cnn_forward.4} parent=5 // pred_check
        _
      $region30: #{cnn_forward.4} parent=5 // pred_check_branch
        %151 = sbr.rel (%p148) target = $region32
      $region31: #{cnn_forward.4} parent=5 // pred_region
        %s152 = ssub.s32 %s10, 1
        // Predicated region
        $region33: #{cnn_forward.4} parent=31 // pred_check
          %p153 = pneg %p78
        $region34: #{cnn_forward.4} parent=31 // pred_check_branch
          %155 = sbr.rel (%p153) target = $region36
        $region35: #{cnn_forward.4} parent=31 // pred_region
          %157 = dma.done [#allocation4], 16
        $region36: #{cnn_forward.4} parent=31 // pred_fallthru
          _
        %p158 = scmp.lt.s32.totalorder %s15, 1
        %s159 = scalar_select %p158, %s15, 1
        %s160 = smul.addr %s159, 112
        %s161 = smul.addr %s160, 8
        %s162 = scalar_lea.vmem %s0, %s161
        %p163 = pneg %p36
        %p164 = pneg %p33
        %p165 = pneg %p57
        %p166 = pneg %p54
        %p167 = pneg %p78
        %p168 = pneg %p75
        %p169 = pneg %p104
        %p170 = pneg %p101
        %p171 = scmp.lt.s32.totalorder %s15, 1
        %s172 = scalar_select %p171, %s15, 1
        %s173 = smul.addr %s172, 28
        %s174 = smul.addr %s173, 8
        %s175 = scalar_lea.vmem %s3, %s174
        %p176 = scmp.lt.s32.totalorder %s15, 1
        %s177 = scalar_select %p176, %s15, 1
        %s178 = smul.addr %s177, 112
        %s179 = smul.addr %s178, 8
        %s180 = scalar_lea.vmem %s0, %s179
        %p181 = scmp.lt.s32.totalorder %s15, 1
        %s182 = scalar_select %p181, %s15, 1
        %s183 = smul.addr %s182, 28
        %s184 = smul.addr %s183, 8
        %s185 = scalar_lea.vmem %s3, %s184
        %v186 = vld [vmem:[%s180] sm:$0xff]
        %v187 = vld [vmem:[%s180 + $0x8] sm:$0xff]
        %v188 = vld [vmem:[%s180 + $0x10] sm:$0xff]
        %v189 = vld [vmem:[%s180 + $0x18] sm:$0xff]
        %v190 = vld [vmem:[%s180 + $0x20] sm:$0xff]
        %v191 = vld [vmem:[%s180 + $0x28] sm:$0xff]
        %v192 = vld [vmem:[%s180 + $0x30] sm:$0xff]
        %v193 = vld [vmem:[%s180 + $0x38] sm:$0xff]
        %v194 = vld [vmem:[%s180 + $0x40] sm:$0xff]
        %v195 = vld [vmem:[%s180 + $0x48] sm:$0xff]
        %v196 = vld [vmem:[%s180 + $0x50] sm:$0xff]
        %v197 = vld [vmem:[%s180 + $0x58] sm:$0xff]
        %v198 = vld [vmem:[%s180 + $0x60] sm:$0xff]
        %v199 = vld [vmem:[%s180 + $0x68] sm:$0xff]
        %v200 = vld [vmem:[%s180 + $0x70] sm:$0xff]
        %v201 = vld [vmem:[%s180 + $0x78] sm:$0xff]
        %v202 = vld [vmem:[%s180 + $0x80] sm:$0xff]
        %v203 = vld [vmem:[%s180 + $0x88] sm:$0xff]
        %v204 = vld [vmem:[%s180 + $0x90] sm:$0xff]
        %v205 = vld [vmem:[%s180 + $0x98] sm:$0xff]
        %v206 = vld [vmem:[%s180 + $0xa0] sm:$0xff]
        %v207 = vld [vmem:[%s180 + $0xa8] sm:$0xff]
        %v208 = vld [vmem:[%s180 + $0xb0] sm:$0xff]
        %v209 = vld [vmem:[%s180 + $0xb8] sm:$0xff]
        %v210 = vld [vmem:[%s180 + $0xc0] sm:$0xff]
        %v211 = vld [vmem:[%s180 + $0xc8] sm:$0xff]
        %v212 = vld [vmem:[%s180 + $0xd0] sm:$0xff]
        %v213 = vld [vmem:[%s180 + $0xd8] sm:$0xff]
        %v214 = vld [vmem:[%s180 + $0xe0] sm:$0xff]
        %v215 = vld [vmem:[%s180 + $0xe8] sm:$0xff]
        %v216 = vld [vmem:[%s180 + $0xf0] sm:$0xff]
        %v217 = vld [vmem:[%s180 + $0xf8] sm:$0xff]
        %v218 = vld [vmem:[%s180 + $0x100] sm:$0xff]
        %v219 = vld [vmem:[%s180 + $0x108] sm:$0xff]
        %v220 = vld [vmem:[%s180 + $0x110] sm:$0xff]
        %v221 = vld [vmem:[%s180 + $0x118] sm:$0xff]
        %v222 = vld [vmem:[%s180 + $0x120] sm:$0xff]
        %v223 = vld [vmem:[%s180 + $0x128] sm:$0xff]
        %v224 = vld [vmem:[%s180 + $0x130] sm:$0xff]
        %v225 = vld [vmem:[%s180 + $0x138] sm:$0xff]
        %v226 = vld [vmem:[%s180 + $0x140] sm:$0xff]
        %v227 = vld [vmem:[%s180 + $0x148] sm:$0xff]
        %v228 = vld [vmem:[%s180 + $0x150] sm:$0xff]
        %v229 = vld [vmem:[%s180 + $0x158] sm:$0xff]
        %v230 = vld [vmem:[%s180 + $0x160] sm:$0xff]
        %v231 = vld [vmem:[%s180 + $0x168] sm:$0xff]
        %v232 = vld [vmem:[%s180 + $0x170] sm:$0xff]
        %v233 = vld [vmem:[%s180 + $0x178] sm:$0xff]
        %v234 = vld [vmem:[%s180 + $0x180] sm:$0xff]
        %v235 = vld [vmem:[%s180 + $0x188] sm:$0xff]
        %v236 = vld [vmem:[%s180 + $0x190] sm:$0xff]
        %v237 = vld [vmem:[%s180 + $0x198] sm:$0xff]
        %v238 = vld [vmem:[%s180 + $0x1a0] sm:$0xff]
        %v239 = vld [vmem:[%s180 + $0x1a8] sm:$0xff]
        %v240 = vld [vmem:[%s180 + $0x1b0] sm:$0xff]
        %v241 = vld [vmem:[%s180 + $0x1b8] sm:$0xff]
        %v242 = vld [vmem:[%s180 + $0x1c0] sm:$0xff]
        %v243 = vld [vmem:[%s180 + $0x1c8] sm:$0xff]
        %v244 = vld [vmem:[%s180 + $0x1d0] sm:$0xff]
        %v245 = vld [vmem:[%s180 + $0x1d8] sm:$0xff]
        %v246 = vld [vmem:[%s180 + $0x1e0] sm:$0xff]
        %v247 = vld [vmem:[%s180 + $0x1e8] sm:$0xff]
        %v248 = vld [vmem:[%s180 + $0x1f0] sm:$0xff]
        %v249 = vld [vmem:[%s180 + $0x1f8] sm:$0xff]
        %v250 = vld [vmem:[%s180 + $0x200] sm:$0xff]
        %v251 = vld [vmem:[%s180 + $0x208] sm:$0xff]
        %v252 = vld [vmem:[%s180 + $0x210] sm:$0xff]
        %v253 = vld [vmem:[%s180 + $0x218] sm:$0xff]
        %v254 = vld [vmem:[%s180 + $0x220] sm:$0xff]
        %v255 = vld [vmem:[%s180 + $0x228] sm:$0xff]
        %v256 = vld [vmem:[%s180 + $0x230] sm:$0xff]
        %v257 = vld [vmem:[%s180 + $0x238] sm:$0xff]
        %v258 = vld [vmem:[%s180 + $0x240] sm:$0xff]
        %v259 = vld [vmem:[%s180 + $0x248] sm:$0xff]
        %v260 = vld [vmem:[%s180 + $0x250] sm:$0xff]
        %v261 = vld [vmem:[%s180 + $0x258] sm:$0xff]
        %v262 = vld [vmem:[%s180 + $0x260] sm:$0xff]
        %v263 = vld [vmem:[%s180 + $0x268] sm:$0xff]
        %v264 = vld [vmem:[%s180 + $0x270] sm:$0xff]
        %v265 = vld [vmem:[%s180 + $0x278] sm:$0xff]
        %v266 = vld [vmem:[%s180 + $0x280] sm:$0xff]
        %v267 = vld [vmem:[%s180 + $0x288] sm:$0xff]
        %v268 = vld [vmem:[%s180 + $0x290] sm:$0xff]
        %v269 = vld [vmem:[%s180 + $0x298] sm:$0xff]
        %v270 = vld [vmem:[%s180 + $0x2a0] sm:$0xff]
        %v271 = vld [vmem:[%s180 + $0x2a8] sm:$0xff]
        %v272 = vld [vmem:[%s180 + $0x2b0] sm:$0xff]
        %v273 = vld [vmem:[%s180 + $0x2b8] sm:$0xff]
        %v274 = vld [vmem:[%s180 + $0x2c0] sm:$0xff]
        %v275 = vld [vmem:[%s180 + $0x2c8] sm:$0xff]
        %v276 = vld [vmem:[%s180 + $0x2d0] sm:$0xff]
        %v277 = vld [vmem:[%s180 + $0x2d8] sm:$0xff]
        %v278 = vld [vmem:[%s180 + $0x2e0] sm:$0xff]
        %v279 = vld [vmem:[%s180 + $0x2e8] sm:$0xff]
        %v280 = vld [vmem:[%s180 + $0x2f0] sm:$0xff]
        %v281 = vld [vmem:[%s180 + $0x2f8] sm:$0xff]
        %v282 = vld [vmem:[%s180 + $0x300] sm:$0xff]
        %v283 = vld [vmem:[%s180 + $0x308] sm:$0xff]
        %v284 = vld [vmem:[%s180 + $0x310] sm:$0xff]
        %v285 = vld [vmem:[%s180 + $0x318] sm:$0xff]
        %v286 = vld [vmem:[%s180 + $0x320] sm:$0xff]
        %v287 = vld [vmem:[%s180 + $0x328] sm:$0xff]
        %v288 = vld [vmem:[%s180 + $0x330] sm:$0xff]
        %v289 = vld [vmem:[%s180 + $0x338] sm:$0xff]
        %v290 = vld [vmem:[%s180 + $0x340] sm:$0xff]
        %v291 = vld [vmem:[%s180 + $0x348] sm:$0xff]
        %v292 = vld [vmem:[%s180 + $0x350] sm:$0xff]
        %v293 = vld [vmem:[%s180 + $0x358] sm:$0xff]
        %v294 = vld [vmem:[%s180 + $0x360] sm:$0xff]
        %v295 = vld [vmem:[%s180 + $0x368] sm:$0xff]
        %v296 = vld [vmem:[%s180 + $0x370] sm:$0xff]
        %v297 = vld [vmem:[%s180 + $0x378] sm:$0xff]
        %v298 = vld [vmem:[%s1] sm:$0xff]
        %v299 = vld [vmem:[%s1 + $0x8] sm:$0xff]
        %v300 = vld [vmem:[%s1 + $0x10] sm:$0xff]
        %v301 = vld [vmem:[%s1 + $0x18] sm:$0x1]
        %vm302 = vcmask 203776
        %v304 = vsel %vm302, %v186, 0
        %v307 = vsel %vm302, %v187, 0
        %v310 = vsel %vm302, %v188, 0
        %v313 = vsel %vm302, %v189, 0
        %v316 = vsel %vm302, %v190, 0
        %v319 = vsel %vm302, %v191, 0
        %v322 = vsel %vm302, %v192, 0
        %v325 = vsel %vm302, %v193, 0
        %v328 = vsel %vm302, %v194, 0
        %v331 = vsel %vm302, %v195, 0
        %v334 = vsel %vm302, %v196, 0
        %v337 = vsel %vm302, %v197, 0
        %v340 = vsel %vm302, %v198, 0
        %v343 = vsel %vm302, %v199, 0
        %v346 = vsel %vm302, %v200, 0
        %v349 = vsel %vm302, %v201, 0
        %v352 = vsel %vm302, %v202, 0
        %v355 = vsel %vm302, %v203, 0
        %v358 = vsel %vm302, %v204, 0
        %v361 = vsel %vm302, %v205, 0
        %v364 = vsel %vm302, %v206, 0
        %v367 = vsel %vm302, %v207, 0
        %v370 = vsel %vm302, %v208, 0
        %v373 = vsel %vm302, %v209, 0
        %v376 = vsel %vm302, %v210, 0
        %v379 = vsel %vm302, %v211, 0
        %v382 = vsel %vm302, %v212, 0
        %v385 = vsel %vm302, %v213, 0
        %v388 = vsel %vm302, %v214, 0
        %v391 = vsel %vm302, %v215, 0
        %v394 = vsel %vm302, %v216, 0
        %v397 = vsel %vm302, %v217, 0
        %v400 = vsel %vm302, %v218, 0
        %v403 = vsel %vm302, %v219, 0
        %v406 = vsel %vm302, %v220, 0
        %v409 = vsel %vm302, %v221, 0
        %v412 = vsel %vm302, %v222, 0
        %v415 = vsel %vm302, %v223, 0
        %v418 = vsel %vm302, %v224, 0
        %v421 = vsel %vm302, %v225, 0
        %v424 = vsel %vm302, %v226, 0
        %v427 = vsel %vm302, %v227, 0
        %v430 = vsel %vm302, %v228, 0
        %v433 = vsel %vm302, %v229, 0
        %v436 = vsel %vm302, %v230, 0
        %v439 = vsel %vm302, %v231, 0
        %v442 = vsel %vm302, %v232, 0
        %v445 = vsel %vm302, %v233, 0
        %v448 = vsel %vm302, %v234, 0
        %v451 = vsel %vm302, %v235, 0
        %v454 = vsel %vm302, %v236, 0
        %v457 = vsel %vm302, %v237, 0
        %v460 = vsel %vm302, %v238, 0
        %v463 = vsel %vm302, %v239, 0
        %v466 = vsel %vm302, %v240, 0
        %v469 = vsel %vm302, %v241, 0
        %v472 = vsel %vm302, %v242, 0
        %v475 = vsel %vm302, %v243, 0
        %v478 = vsel %vm302, %v244, 0
        %v481 = vsel %vm302, %v245, 0
        %v484 = vsel %vm302, %v246, 0
        %v487 = vsel %vm302, %v247, 0
        %v490 = vsel %vm302, %v248, 0
        %v493 = vsel %vm302, %v249, 0
        %v496 = vsel %vm302, %v250, 0
        %v499 = vsel %vm302, %v251, 0
        %v502 = vsel %vm302, %v252, 0
        %v505 = vsel %vm302, %v253, 0
        %v508 = vsel %vm302, %v254, 0
        %v511 = vsel %vm302, %v255, 0
        %v514 = vsel %vm302, %v256, 0
        %v517 = vsel %vm302, %v257, 0
        %v520 = vsel %vm302, %v258, 0
        %v523 = vsel %vm302, %v259, 0
        %v526 = vsel %vm302, %v260, 0
        %v529 = vsel %vm302, %v261, 0
        %v532 = vsel %vm302, %v262, 0
        %v535 = vsel %vm302, %v263, 0
        %v538 = vsel %vm302, %v264, 0
        %v541 = vsel %vm302, %v265, 0
        %v544 = vsel %vm302, %v266, 0
        %v547 = vsel %vm302, %v267, 0
        %v550 = vsel %vm302, %v268, 0
        %v553 = vsel %vm302, %v269, 0
        %v556 = vsel %vm302, %v270, 0
        %v559 = vsel %vm302, %v271, 0
        %v562 = vsel %vm302, %v272, 0
        %v565 = vsel %vm302, %v273, 0
        %v568 = vsel %vm302, %v274, 0
        %v571 = vsel %vm302, %v275, 0
        %v574 = vsel %vm302, %v276, 0
        %v577 = vsel %vm302, %v277, 0
        %v580 = vsel %vm302, %v278, 0
        %v583 = vsel %vm302, %v279, 0
        %v586 = vsel %vm302, %v280, 0
        %v589 = vsel %vm302, %v281, 0
        %v592 = vsel %vm302, %v282, 0
        %v595 = vsel %vm302, %v283, 0
        %v598 = vsel %vm302, %v284, 0
        %v601 = vsel %vm302, %v285, 0
        %v604 = vsel %vm302, %v286, 0
        %v607 = vsel %vm302, %v287, 0
        %v610 = vsel %vm302, %v288, 0
        %v613 = vsel %vm302, %v289, 0
        %v616 = vsel %vm302, %v290, 0
        %v619 = vsel %vm302, %v291, 0
        %v622 = vsel %vm302, %v292, 0
        %v625 = vsel %vm302, %v293, 0
        %v628 = vsel %vm302, %v294, 0
        %v631 = vsel %vm302, %v295, 0
        %v634 = vsel %vm302, %v296, 0
        %v637 = vsel %vm302, %v297, 0
        %vm639 = vcmask 1040384
        %v641 = vsel %vm639, %v301, 0
        %643 = vmatpush.msra.mxu0 0.0
        %644 = vmatpush.msra.mxu0 0.0
        %645 = vmatpush.msra.mxu0 0.0
        %646 = vmatpush.msra.mxu0 0.0
        %647 = vmatpush.msra.mxu0 0.0
        %648 = vmatpush.msra.mxu0 0.0
        %649 = vmatpush.msra.mxu0 0.0
        %650 = vmatpush.msra.mxu0 0.0
        %651 = vmatpush.msra.mxu0 0.0
        %652 = vmatpush.msra.mxu0 0.0
        %653 = vmatpush.msra.mxu0 0.0
        %654 = vmatpush.msra.mxu0 0.0
        %655 = vmatpush.msra.mxu0 %v641
        %656 = vmatpush.msra.mxu0 %v300
        %657 = vmatpush.msra.mxu0 %v299
        %658 = vmatpush.msra.mxu0 %v298
        %659 = vmatmul.f32.gmra.mxu0 %v304
        %v660 = vpop.f32.mrf.mxu0
        %v661 = vadd.f32 0.0, %v660
        %662 = vmatmul.f32.gmra.mxu0 %v307
        %v663 = vpop.f32.mrf.mxu0
        %v664 = vadd.f32 0.0, %v663
        %665 = vmatmul.f32.gmra.mxu0 %v310
        %v666 = vpop.f32.mrf.mxu0
        %v667 = vadd.f32 0.0, %v666
        %668 = vmatmul.f32.gmra.mxu0 %v313
        %v669 = vpop.f32.mrf.mxu0
        %v670 = vadd.f32 0.0, %v669
        %671 = vmatmul.f32.gmra.mxu0 %v316
        %v672 = vpop.f32.mrf.mxu0
        %v673 = vadd.f32 0.0, %v672
        %674 = vmatmul.f32.gmra.mxu0 %v319
        %v675 = vpop.f32.mrf.mxu0
        %v676 = vadd.f32 0.0, %v675
        %677 = vmatmul.f32.gmra.mxu0 %v322
        %v678 = vpop.f32.mrf.mxu0
        %v679 = vadd.f32 0.0, %v678
        %680 = vmatmul.f32.gmra.mxu0 %v325
        %v681 = vpop.f32.mrf.mxu0
        %v682 = vadd.f32 0.0, %v681
        %683 = vmatmul.f32.gmra.mxu0 %v328
        %v684 = vpop.f32.mrf.mxu0
        %v685 = vadd.f32 0.0, %v684
        %686 = vmatmul.f32.gmra.mxu0 %v331
        %v687 = vpop.f32.mrf.mxu0
        %v688 = vadd.f32 0.0, %v687
        %689 = vmatmul.f32.gmra.mxu0 %v334
        %v690 = vpop.f32.mrf.mxu0
        %v691 = vadd.f32 0.0, %v690
        %692 = vmatmul.f32.gmra.mxu0 %v337
        %v693 = vpop.f32.mrf.mxu0
        %v694 = vadd.f32 0.0, %v693
        %695 = vmatmul.f32.gmra.mxu0 %v340
        %v696 = vpop.f32.mrf.mxu0
        %v697 = vadd.f32 0.0, %v696
        %698 = vmatmul.f32.gmra.mxu0 %v343
        %v699 = vpop.f32.mrf.mxu0
        %v700 = vadd.f32 0.0, %v699
        %701 = vmatmul.f32.gmra.mxu0 %v346
        %v702 = vpop.f32.mrf.mxu0
        %v703 = vadd.f32 0.0, %v702
        %704 = vmatmul.f32.gmra.mxu0 %v349
        %v705 = vpop.f32.mrf.mxu0
        %v706 = vadd.f32 0.0, %v705
        %707 = vmatmul.f32.gmra.mxu0 %v352
        %v708 = vpop.f32.mrf.mxu0
        %v709 = vadd.f32 0.0, %v708
        %710 = vmatmul.f32.gmra.mxu0 %v355
        %v711 = vpop.f32.mrf.mxu0
        %v712 = vadd.f32 0.0, %v711
        %713 = vmatmul.f32.gmra.mxu0 %v358
        %v714 = vpop.f32.mrf.mxu0
        %v715 = vadd.f32 0.0, %v714
        %716 = vmatmul.f32.gmra.mxu0 %v361
        %v717 = vpop.f32.mrf.mxu0
        %v718 = vadd.f32 0.0, %v717
        %719 = vmatmul.f32.gmra.mxu0 %v364
        %v720 = vpop.f32.mrf.mxu0
        %v721 = vadd.f32 0.0, %v720
        %722 = vmatmul.f32.gmra.mxu0 %v367
        %v723 = vpop.f32.mrf.mxu0
        %v724 = vadd.f32 0.0, %v723
        %725 = vmatmul.f32.gmra.mxu0 %v370
        %v726 = vpop.f32.mrf.mxu0
        %v727 = vadd.f32 0.0, %v726
        %728 = vmatmul.f32.gmra.mxu0 %v373
        %v729 = vpop.f32.mrf.mxu0
        %v730 = vadd.f32 0.0, %v729
        %731 = vmatmul.f32.gmra.mxu0 %v376
        %v732 = vpop.f32.mrf.mxu0
        %v733 = vadd.f32 0.0, %v732
        %734 = vmatmul.f32.gmra.mxu0 %v379
        %v735 = vpop.f32.mrf.mxu0
        %v736 = vadd.f32 0.0, %v735
        %737 = vmatmul.f32.gmra.mxu0 %v382
        %v738 = vpop.f32.mrf.mxu0
        %v739 = vadd.f32 0.0, %v738
        %740 = vmatmul.f32.gmra.mxu0 %v385
        %v741 = vpop.f32.mrf.mxu0
        %v742 = vadd.f32 0.0, %v741
        %743 = vmatmul.f32.gmra.mxu0 %v388
        %v744 = vpop.f32.mrf.mxu0
        %v745 = vadd.f32 0.0, %v744
        %746 = vmatmul.f32.gmra.mxu0 %v391
        %v747 = vpop.f32.mrf.mxu0
        %v748 = vadd.f32 0.0, %v747
        %749 = vmatmul.f32.gmra.mxu0 %v394
        %v750 = vpop.f32.mrf.mxu0
        %v751 = vadd.f32 0.0, %v750
        %752 = vmatmul.f32.gmra.mxu0 %v397
        %v753 = vpop.f32.mrf.mxu0
        %v754 = vadd.f32 0.0, %v753
        %755 = vmatmul.f32.gmra.mxu0 %v400
        %v756 = vpop.f32.mrf.mxu0
        %v757 = vadd.f32 0.0, %v756
        %758 = vmatmul.f32.gmra.mxu0 %v403
        %v759 = vpop.f32.mrf.mxu0
        %v760 = vadd.f32 0.0, %v759
        %761 = vmatmul.f32.gmra.mxu0 %v406
        %v762 = vpop.f32.mrf.mxu0
        %v763 = vadd.f32 0.0, %v762
        %764 = vmatmul.f32.gmra.mxu0 %v409
        %v765 = vpop.f32.mrf.mxu0
        %v766 = vadd.f32 0.0, %v765
        %767 = vmatmul.f32.gmra.mxu0 %v412
        %v768 = vpop.f32.mrf.mxu0
        %v769 = vadd.f32 0.0, %v768
        %770 = vmatmul.f32.gmra.mxu0 %v415
        %v771 = vpop.f32.mrf.mxu0
        %v772 = vadd.f32 0.0, %v771
        %773 = vmatmul.f32.gmra.mxu0 %v418
        %v774 = vpop.f32.mrf.mxu0
        %v775 = vadd.f32 0.0, %v774
        %776 = vmatmul.f32.gmra.mxu0 %v421
        %v777 = vpop.f32.mrf.mxu0
        %v778 = vadd.f32 0.0, %v777
        %779 = vmatmul.f32.gmra.mxu0 %v424
        %v780 = vpop.f32.mrf.mxu0
        %v781 = vadd.f32 0.0, %v780
        %782 = vmatmul.f32.gmra.mxu0 %v427
        %v783 = vpop.f32.mrf.mxu0
        %v784 = vadd.f32 0.0, %v783
        %785 = vmatmul.f32.gmra.mxu0 %v430
        %v786 = vpop.f32.mrf.mxu0
        %v787 = vadd.f32 0.0, %v786
        %788 = vmatmul.f32.gmra.mxu0 %v433
        %v789 = vpop.f32.mrf.mxu0
        %v790 = vadd.f32 0.0, %v789
        %791 = vmatmul.f32.gmra.mxu0 %v436
        %v792 = vpop.f32.mrf.mxu0
        %v793 = vadd.f32 0.0, %v792
        %794 = vmatmul.f32.gmra.mxu0 %v439
        %v795 = vpop.f32.mrf.mxu0
        %v796 = vadd.f32 0.0, %v795
        %797 = vmatmul.f32.gmra.mxu0 %v442
        %v798 = vpop.f32.mrf.mxu0
        %v799 = vadd.f32 0.0, %v798
        %800 = vmatmul.f32.gmra.mxu0 %v445
        %v801 = vpop.f32.mrf.mxu0
        %v802 = vadd.f32 0.0, %v801
        %803 = vmatmul.f32.gmra.mxu0 %v448
        %v804 = vpop.f32.mrf.mxu0
        %v805 = vadd.f32 0.0, %v804
        %806 = vmatmul.f32.gmra.mxu0 %v451
        %v807 = vpop.f32.mrf.mxu0
        %v808 = vadd.f32 0.0, %v807
        %809 = vmatmul.f32.gmra.mxu0 %v454
        %v810 = vpop.f32.mrf.mxu0
        %v811 = vadd.f32 0.0, %v810
        %812 = vmatmul.f32.gmra.mxu0 %v457
        %v813 = vpop.f32.mrf.mxu0
        %v814 = vadd.f32 0.0, %v813
        %815 = vmatmul.f32.gmra.mxu0 %v460
        %v816 = vpop.f32.mrf.mxu0
        %v817 = vadd.f32 0.0, %v816
        %818 = vmatmul.f32.gmra.mxu0 %v463
        %v819 = vpop.f32.mrf.mxu0
        %v820 = vadd.f32 0.0, %v819
        %821 = vmatmul.f32.gmra.mxu0 %v466
        %v822 = vpop.f32.mrf.mxu0
        %v823 = vadd.f32 0.0, %v822
        %824 = vmatmul.f32.gmra.mxu0 %v469
        %v825 = vpop.f32.mrf.mxu0
        %v826 = vadd.f32 0.0, %v825
        %827 = vmatmul.f32.gmra.mxu0 %v472
        %v828 = vpop.f32.mrf.mxu0
        %v829 = vadd.f32 0.0, %v828
        %830 = vmatmul.f32.gmra.mxu0 %v475
        %v831 = vpop.f32.mrf.mxu0
        %v832 = vadd.f32 0.0, %v831
        %833 = vmatmul.f32.gmra.mxu0 %v478
        %v834 = vpop.f32.mrf.mxu0
        %v835 = vadd.f32 0.0, %v834
        %836 = vmatmul.f32.gmra.mxu0 %v481
        %v837 = vpop.f32.mrf.mxu0
        %v838 = vadd.f32 0.0, %v837
        %839 = vmatmul.f32.gmra.mxu0 %v484
        %v840 = vpop.f32.mrf.mxu0
        %v841 = vadd.f32 0.0, %v840
        %842 = vmatmul.f32.gmra.mxu0 %v487
        %v843 = vpop.f32.mrf.mxu0
        %v844 = vadd.f32 0.0, %v843
        %845 = vmatmul.f32.gmra.mxu0 %v490
        %v846 = vpop.f32.mrf.mxu0
        %v847 = vadd.f32 0.0, %v846
        %848 = vmatmul.f32.gmra.mxu0 %v493
        %v849 = vpop.f32.mrf.mxu0
        %v850 = vadd.f32 0.0, %v849
        %851 = vmatmul.f32.gmra.mxu0 %v496
        %v852 = vpop.f32.mrf.mxu0
        %v853 = vadd.f32 0.0, %v852
        %854 = vmatmul.f32.gmra.mxu0 %v499
        %v855 = vpop.f32.mrf.mxu0
        %v856 = vadd.f32 0.0, %v855
        %857 = vmatmul.f32.gmra.mxu0 %v502
        %v858 = vpop.f32.mrf.mxu0
        %v859 = vadd.f32 0.0, %v858
        %860 = vmatmul.f32.gmra.mxu0 %v505
        %v861 = vpop.f32.mrf.mxu0
        %v862 = vadd.f32 0.0, %v861
        %863 = vmatmul.f32.gmra.mxu0 %v508
        %v864 = vpop.f32.mrf.mxu0
        %v865 = vadd.f32 0.0, %v864
        %866 = vmatmul.f32.gmra.mxu0 %v511
        %v867 = vpop.f32.mrf.mxu0
        %v868 = vadd.f32 0.0, %v867
        %869 = vmatmul.f32.gmra.mxu0 %v514
        %v870 = vpop.f32.mrf.mxu0
        %v871 = vadd.f32 0.0, %v870
        %872 = vmatmul.f32.gmra.mxu0 %v517
        %v873 = vpop.f32.mrf.mxu0
        %v874 = vadd.f32 0.0, %v873
        %875 = vmatmul.f32.gmra.mxu0 %v520
        %v876 = vpop.f32.mrf.mxu0
        %v877 = vadd.f32 0.0, %v876
        %878 = vmatmul.f32.gmra.mxu0 %v523
        %v879 = vpop.f32.mrf.mxu0
        %v880 = vadd.f32 0.0, %v879
        %881 = vmatmul.f32.gmra.mxu0 %v526
        %v882 = vpop.f32.mrf.mxu0
        %v883 = vadd.f32 0.0, %v882
        %884 = vmatmul.f32.gmra.mxu0 %v529
        %v885 = vpop.f32.mrf.mxu0
        %v886 = vadd.f32 0.0, %v885
        %887 = vmatmul.f32.gmra.mxu0 %v532
        %v888 = vpop.f32.mrf.mxu0
        %v889 = vadd.f32 0.0, %v888
        %890 = vmatmul.f32.gmra.mxu0 %v535
        %v891 = vpop.f32.mrf.mxu0
        %v892 = vadd.f32 0.0, %v891
        %893 = vmatmul.f32.gmra.mxu0 %v538
        %v894 = vpop.f32.mrf.mxu0
        %v895 = vadd.f32 0.0, %v894
        %896 = vmatmul.f32.gmra.mxu0 %v541
        %v897 = vpop.f32.mrf.mxu0
        %v898 = vadd.f32 0.0, %v897
        %899 = vmatmul.f32.gmra.mxu0 %v544
        %v900 = vpop.f32.mrf.mxu0
        %v901 = vadd.f32 0.0, %v900
        %902 = vmatmul.f32.gmra.mxu0 %v547
        %v903 = vpop.f32.mrf.mxu0
        %v904 = vadd.f32 0.0, %v903
        %905 = vmatmul.f32.gmra.mxu0 %v550
        %v906 = vpop.f32.mrf.mxu0
        %v907 = vadd.f32 0.0, %v906
        %908 = vmatmul.f32.gmra.mxu0 %v553
        %v909 = vpop.f32.mrf.mxu0
        %v910 = vadd.f32 0.0, %v909
        %911 = vmatmul.f32.gmra.mxu0 %v556
        %v912 = vpop.f32.mrf.mxu0
        %v913 = vadd.f32 0.0, %v912
        %914 = vmatmul.f32.gmra.mxu0 %v559
        %v915 = vpop.f32.mrf.mxu0
        %v916 = vadd.f32 0.0, %v915
        %917 = vmatmul.f32.gmra.mxu0 %v562
        %v918 = vpop.f32.mrf.mxu0
        %v919 = vadd.f32 0.0, %v918
        %920 = vmatmul.f32.gmra.mxu0 %v565
        %v921 = vpop.f32.mrf.mxu0
        %v922 = vadd.f32 0.0, %v921
        %923 = vmatmul.f32.gmra.mxu0 %v568
        %v924 = vpop.f32.mrf.mxu0
        %v925 = vadd.f32 0.0, %v924
        %926 = vmatmul.f32.gmra.mxu0 %v571
        %v927 = vpop.f32.mrf.mxu0
        %v928 = vadd.f32 0.0, %v927
        %929 = vmatmul.f32.gmra.mxu0 %v574
        %v930 = vpop.f32.mrf.mxu0
        %v931 = vadd.f32 0.0, %v930
        %932 = vmatmul.f32.gmra.mxu0 %v577
        %v933 = vpop.f32.mrf.mxu0
        %v934 = vadd.f32 0.0, %v933
        %935 = vmatmul.f32.gmra.mxu0 %v580
        %v936 = vpop.f32.mrf.mxu0
        %v937 = vadd.f32 0.0, %v936
        %938 = vmatmul.f32.gmra.mxu0 %v583
        %v939 = vpop.f32.mrf.mxu0
        %v940 = vadd.f32 0.0, %v939
        %941 = vmatmul.f32.gmra.mxu0 %v586
        %v942 = vpop.f32.mrf.mxu0
        %v943 = vadd.f32 0.0, %v942
        %944 = vmatmul.f32.gmra.mxu0 %v589
        %v945 = vpop.f32.mrf.mxu0
        %v946 = vadd.f32 0.0, %v945
        %947 = vmatmul.f32.gmra.mxu0 %v592
        %v948 = vpop.f32.mrf.mxu0
        %v949 = vadd.f32 0.0, %v948
        %950 = vmatmul.f32.gmra.mxu0 %v595
        %v951 = vpop.f32.mrf.mxu0
        %v952 = vadd.f32 0.0, %v951
        %953 = vmatmul.f32.gmra.mxu0 %v598
        %v954 = vpop.f32.mrf.mxu0
        %v955 = vadd.f32 0.0, %v954
        %956 = vmatmul.f32.gmra.mxu0 %v601
        %v957 = vpop.f32.mrf.mxu0
        %v958 = vadd.f32 0.0, %v957
        %959 = vmatmul.f32.gmra.mxu0 %v604
        %v960 = vpop.f32.mrf.mxu0
        %v961 = vadd.f32 0.0, %v960
        %962 = vmatmul.f32.gmra.mxu0 %v607
        %v963 = vpop.f32.mrf.mxu0
        %v964 = vadd.f32 0.0, %v963
        %965 = vmatmul.f32.gmra.mxu0 %v610
        %v966 = vpop.f32.mrf.mxu0
        %v967 = vadd.f32 0.0, %v966
        %968 = vmatmul.f32.gmra.mxu0 %v613
        %v969 = vpop.f32.mrf.mxu0
        %v970 = vadd.f32 0.0, %v969
        %971 = vmatmul.f32.gmra.mxu0 %v616
        %v972 = vpop.f32.mrf.mxu0
        %v973 = vadd.f32 0.0, %v972
        %974 = vmatmul.f32.gmra.mxu0 %v619
        %v975 = vpop.f32.mrf.mxu0
        %v976 = vadd.f32 0.0, %v975
        %977 = vmatmul.f32.gmra.mxu0 %v622
        %v978 = vpop.f32.mrf.mxu0
        %v979 = vadd.f32 0.0, %v978
        %980 = vmatmul.f32.gmra.mxu0 %v625
        %v981 = vpop.f32.mrf.mxu0
        %v982 = vadd.f32 0.0, %v981
        %983 = vmatmul.f32.gmra.mxu0 %v628
        %v984 = vpop.f32.mrf.mxu0
        %v985 = vadd.f32 0.0, %v984
        %986 = vmatmul.f32.gmra.mxu0 %v631
        %v987 = vpop.f32.mrf.mxu0
        %v988 = vadd.f32 0.0, %v987
        %989 = vmatmul.f32.gmra.mxu0 %v634
        %v990 = vpop.f32.mrf.mxu0
        %v991 = vadd.f32 0.0, %v990
        %992 = vmatmul.f32.gmra.mxu0 %v637
        %v993 = vpop.f32.mrf.mxu0
        %v994 = vadd.f32 0.0, %v993
        %995 = vdwg.mxu0
        %vm996 = vcmask 261120
        %997 = vst.msk [vmem:[#allocation2] sm:$0xff] %vm996, %v661
        %998 = vst.msk [vmem:[#allocation2 + $0x8] sm:$0xff] %vm996, %v664
        %999 = vst.msk [vmem:[#allocation2 + $0x10] sm:$0xff] %vm996, %v667
        %1000 = vst.msk [vmem:[#allocation2 + $0x18] sm:$0xff] %vm996, %v670
        %1001 = vst.msk [vmem:[#allocation2 + $0x20] sm:$0xff] %vm996, %v673
        %1002 = vst.msk [vmem:[#allocation2 + $0x28] sm:$0xff] %vm996, %v676
        %1003 = vst.msk [vmem:[#allocation2 + $0x30] sm:$0xff] %vm996, %v679
        %1004 = vst.msk [vmem:[#allocation2 + $0x38] sm:$0xff] %vm996, %v682
        %1005 = vst.msk [vmem:[#allocation2 + $0x40] sm:$0xff] %vm996, %v685
        %1006 = vst.msk [vmem:[#allocation2 + $0x48] sm:$0xff] %vm996, %v688
        %1007 = vst.msk [vmem:[#allocation2 + $0x50] sm:$0xff] %vm996, %v691
        %1008 = vst.msk [vmem:[#allocation2 + $0x58] sm:$0xff] %vm996, %v694
        %1009 = vst.msk [vmem:[#allocation2 + $0x60] sm:$0xff] %vm996, %v697
        %1010 = vst.msk [vmem:[#allocation2 + $0x68] sm:$0xff] %vm996, %v700
        %1011 = vst.msk [vmem:[#allocation2 + $0x70] sm:$0xff] %vm996, %v703
        %1012 = vst.msk [vmem:[#allocation2 + $0x78] sm:$0xff] %vm996, %v706
        %1013 = vst.msk [vmem:[#allocation2 + $0x80] sm:$0xff] %vm996, %v709
        %1014 = vst.msk [vmem:[#allocation2 + $0x88] sm:$0xff] %vm996, %v712
        %1015 = vst.msk [vmem:[#allocation2 + $0x90] sm:$0xff] %vm996, %v715
        %1016 = vst.msk [vmem:[#allocation2 + $0x98] sm:$0xff] %vm996, %v718
        %1017 = vst.msk [vmem:[#allocation2 + $0xa0] sm:$0xff] %vm996, %v721
        %1018 = vst.msk [vmem:[#allocation2 + $0xa8] sm:$0xff] %vm996, %v724
        %1019 = vst.msk [vmem:[#allocation2 + $0xb0] sm:$0xff] %vm996, %v727
        %1020 = vst.msk [vmem:[#allocation2 + $0xb8] sm:$0xff] %vm996, %v730
        %1021 = vst.msk [vmem:[#allocation2 + $0xc0] sm:$0xff] %vm996, %v733
        %1022 = vst.msk [vmem:[#allocation2 + $0xc8] sm:$0xff] %vm996, %v736
        %1023 = vst.msk [vmem:[#allocation2 + $0xd0] sm:$0xff] %vm996, %v739
        %1024 = vst.msk [vmem:[#allocation2 + $0xd8] sm:$0xff] %vm996, %v742
        %1025 = vst.msk [vmem:[#allocation2 + $0xe0] sm:$0xff] %vm996, %v745
        %1026 = vst.msk [vmem:[#allocation2 + $0xe8] sm:$0xff] %vm996, %v748
        %1027 = vst.msk [vmem:[#allocation2 + $0xf0] sm:$0xff] %vm996, %v751
        %1028 = vst.msk [vmem:[#allocation2 + $0xf8] sm:$0xff] %vm996, %v754
        %1029 = vst.msk [vmem:[#allocation2 + $0x100] sm:$0xff] %vm996, %v757
        %1030 = vst.msk [vmem:[#allocation2 + $0x108] sm:$0xff] %vm996, %v760
        %1031 = vst.msk [vmem:[#allocation2 + $0x110] sm:$0xff] %vm996, %v763
        %1032 = vst.msk [vmem:[#allocation2 + $0x118] sm:$0xff] %vm996, %v766
        %1033 = vst.msk [vmem:[#allocation2 + $0x120] sm:$0xff] %vm996, %v769
        %1034 = vst.msk [vmem:[#allocation2 + $0x128] sm:$0xff] %vm996, %v772
        %1035 = vst.msk [vmem:[#allocation2 + $0x130] sm:$0xff] %vm996, %v775
        %1036 = vst.msk [vmem:[#allocation2 + $0x138] sm:$0xff] %vm996, %v778
        %1037 = vst.msk [vmem:[#allocation2 + $0x140] sm:$0xff] %vm996, %v781
        %1038 = vst.msk [vmem:[#allocation2 + $0x148] sm:$0xff] %vm996, %v784
        %1039 = vst.msk [vmem:[#allocation2 + $0x150] sm:$0xff] %vm996, %v787
        %1040 = vst.msk [vmem:[#allocation2 + $0x158] sm:$0xff] %vm996, %v790
        %1041 = vst.msk [vmem:[#allocation2 + $0x160] sm:$0xff] %vm996, %v793
        %1042 = vst.msk [vmem:[#allocation2 + $0x168] sm:$0xff] %vm996, %v796
        %1043 = vst.msk [vmem:[#allocation2 + $0x170] sm:$0xff] %vm996, %v799
        %1044 = vst.msk [vmem:[#allocation2 + $0x178] sm:$0xff] %vm996, %v802
        %1045 = vst.msk [vmem:[#allocation2 + $0x180] sm:$0xff] %vm996, %v805
        %1046 = vst.msk [vmem:[#allocation2 + $0x188] sm:$0xff] %vm996, %v808
        %1047 = vst.msk [vmem:[#allocation2 + $0x190] sm:$0xff] %vm996, %v811
        %1048 = vst.msk [vmem:[#allocation2 + $0x198] sm:$0xff] %vm996, %v814
        %1049 = vst.msk [vmem:[#allocation2 + $0x1a0] sm:$0xff] %vm996, %v817
        %1050 = vst.msk [vmem:[#allocation2 + $0x1a8] sm:$0xff] %vm996, %v820
        %1051 = vst.msk [vmem:[#allocation2 + $0x1b0] sm:$0xff] %vm996, %v823
        %1052 = vst.msk [vmem:[#allocation2 + $0x1b8] sm:$0xff] %vm996, %v826
        %1053 = vst.msk [vmem:[#allocation2 + $0x1c0] sm:$0xff] %vm996, %v829
        %1054 = vst.msk [vmem:[#allocation2 + $0x1c8] sm:$0xff] %vm996, %v832
        %1055 = vst.msk [vmem:[#allocation2 + $0x1d0] sm:$0xff] %vm996, %v835
        %1056 = vst.msk [vmem:[#allocation2 + $0x1d8] sm:$0xff] %vm996, %v838
        %1057 = vst.msk [vmem:[#allocation2 + $0x1e0] sm:$0xff] %vm996, %v841
        %1058 = vst.msk [vmem:[#allocation2 + $0x1e8] sm:$0xff] %vm996, %v844
        %1059 = vst.msk [vmem:[#allocation2 + $0x1f0] sm:$0xff] %vm996, %v847
        %1060 = vst.msk [vmem:[#allocation2 + $0x1f8] sm:$0xff] %vm996, %v850
        %1061 = vst.msk [vmem:[#allocation2 + $0x200] sm:$0xff] %vm996, %v853
        %1062 = vst.msk [vmem:[#allocation2 + $0x208] sm:$0xff] %vm996, %v856
        %1063 = vst.msk [vmem:[#allocation2 + $0x210] sm:$0xff] %vm996, %v859
        %1064 = vst.msk [vmem:[#allocation2 + $0x218] sm:$0xff] %vm996, %v862
        %1065 = vst.msk [vmem:[#allocation2 + $0x220] sm:$0xff] %vm996, %v865
        %1066 = vst.msk [vmem:[#allocation2 + $0x228] sm:$0xff] %vm996, %v868
        %1067 = vst.msk [vmem:[#allocation2 + $0x230] sm:$0xff] %vm996, %v871
        %1068 = vst.msk [vmem:[#allocation2 + $0x238] sm:$0xff] %vm996, %v874
        %1069 = vst.msk [vmem:[#allocation2 + $0x240] sm:$0xff] %vm996, %v877
        %1070 = vst.msk [vmem:[#allocation2 + $0x248] sm:$0xff] %vm996, %v880
        %1071 = vst.msk [vmem:[#allocation2 + $0x250] sm:$0xff] %vm996, %v883
        %1072 = vst.msk [vmem:[#allocation2 + $0x258] sm:$0xff] %vm996, %v886
        %1073 = vst.msk [vmem:[#allocation2 + $0x260] sm:$0xff] %vm996, %v889
        %1074 = vst.msk [vmem:[#allocation2 + $0x268] sm:$0xff] %vm996, %v892
        %1075 = vst.msk [vmem:[#allocation2 + $0x270] sm:$0xff] %vm996, %v895
        %1076 = vst.msk [vmem:[#allocation2 + $0x278] sm:$0xff] %vm996, %v898
        %1077 = vst.msk [vmem:[#allocation2 + $0x280] sm:$0xff] %vm996, %v901
        %1078 = vst.msk [vmem:[#allocation2 + $0x288] sm:$0xff] %vm996, %v904
        %1079 = vst.msk [vmem:[#allocation2 + $0x290] sm:$0xff] %vm996, %v907
        %1080 = vst.msk [vmem:[#allocation2 + $0x298] sm:$0xff] %vm996, %v910
        %1081 = vst.msk [vmem:[#allocation2 + $0x2a0] sm:$0xff] %vm996, %v913
        %1082 = vst.msk [vmem:[#allocation2 + $0x2a8] sm:$0xff] %vm996, %v916
        %1083 = vst.msk [vmem:[#allocation2 + $0x2b0] sm:$0xff] %vm996, %v919
        %1084 = vst.msk [vmem:[#allocation2 + $0x2b8] sm:$0xff] %vm996, %v922
        %1085 = vst.msk [vmem:[#allocation2 + $0x2c0] sm:$0xff] %vm996, %v925
        %1086 = vst.msk [vmem:[#allocation2 + $0x2c8] sm:$0xff] %vm996, %v928
        %1087 = vst.msk [vmem:[#allocation2 + $0x2d0] sm:$0xff] %vm996, %v931
        %1088 = vst.msk [vmem:[#allocation2 + $0x2d8] sm:$0xff] %vm996, %v934
        %1089 = vst.msk [vmem:[#allocation2 + $0x2e0] sm:$0xff] %vm996, %v937
        %1090 = vst.msk [vmem:[#allocation2 + $0x2e8] sm:$0xff] %vm996, %v940
        %1091 = vst.msk [vmem:[#allocation2 + $0x2f0] sm:$0xff] %vm996, %v943
        %1092 = vst.msk [vmem:[#allocation2 + $0x2f8] sm:$0xff] %vm996, %v946
        %1093 = vst.msk [vmem:[#allocation2 + $0x300] sm:$0xff] %vm996, %v949
        %1094 = vst.msk [vmem:[#allocation2 + $0x308] sm:$0xff] %vm996, %v952
        %1095 = vst.msk [vmem:[#allocation2 + $0x310] sm:$0xff] %vm996, %v955
        %1096 = vst.msk [vmem:[#allocation2 + $0x318] sm:$0xff] %vm996, %v958
        %1097 = vst.msk [vmem:[#allocation2 + $0x320] sm:$0xff] %vm996, %v961
        %1098 = vst.msk [vmem:[#allocation2 + $0x328] sm:$0xff] %vm996, %v964
        %1099 = vst.msk [vmem:[#allocation2 + $0x330] sm:$0xff] %vm996, %v967
        %1100 = vst.msk [vmem:[#allocation2 + $0x338] sm:$0xff] %vm996, %v970
        %1101 = vst.msk [vmem:[#allocation2 + $0x340] sm:$0xff] %vm996, %v973
        %1102 = vst.msk [vmem:[#allocation2 + $0x348] sm:$0xff] %vm996, %v976
        %1103 = vst.msk [vmem:[#allocation2 + $0x350] sm:$0xff] %vm996, %v979
        %1104 = vst.msk [vmem:[#allocation2 + $0x358] sm:$0xff] %vm996, %v982
        %1105 = vst.msk [vmem:[#allocation2 + $0x360] sm:$0xff] %vm996, %v985
        %1106 = vst.msk [vmem:[#allocation2 + $0x368] sm:$0xff] %vm996, %v988
        %1107 = vst.msk [vmem:[#allocation2 + $0x370] sm:$0xff] %vm996, %v991
        %1108 = vst.msk [vmem:[#allocation2 + $0x378] sm:$0xff] %vm996, %v994
        %v1109 = vld [vmem:[#allocation3] sm:$0x1]
        %v1110 = vld [vmem:[#allocation2] ss:$2 sm:$0xff]
        %s1111 = scalar_lea.vmem [#allocation2], 16
        %v1112 = vld [vmem:[%s1111] ss:$2 sm:$0xff]
        %s1113 = scalar_lea.vmem [#allocation2], 32
        %v1114 = vld [vmem:[%s1113] ss:$2 sm:$0xff]
        %s1115 = scalar_lea.vmem [#allocation2], 48
        %v1116 = vld [vmem:[%s1115] ss:$2 sm:$0xff]
        %s1117 = scalar_lea.vmem [#allocation2], 64
        %v1118 = vld [vmem:[%s1117] ss:$2 sm:$0xff]
        %s1119 = scalar_lea.vmem [#allocation2], 80
        %v1120 = vld [vmem:[%s1119] ss:$2 sm:$0xff]
        %s1121 = scalar_lea.vmem [#allocation2], 96
        %v1122 = vld [vmem:[%s1121] ss:$2 sm:$0xff]
        %s1123 = scalar_lea.vmem [#allocation2], 112
        %v1124 = vld [vmem:[%s1123] ss:$2 sm:$0xff]
        %s1125 = scalar_lea.vmem [#allocation2], 128
        %v1126 = vld [vmem:[%s1125] ss:$2 sm:$0xff]
        %s1127 = scalar_lea.vmem [#allocation2], 144
        %v1128 = vld [vmem:[%s1127] ss:$2 sm:$0xff]
        %s1129 = scalar_lea.vmem [#allocation2], 160
        %v1130 = vld [vmem:[%s1129] ss:$2 sm:$0xff]
        %s1131 = scalar_lea.vmem [#allocation2], 176
        %v1132 = vld [vmem:[%s1131] ss:$2 sm:$0xff]
        %s1133 = scalar_lea.vmem [#allocation2], 192
        %v1134 = vld [vmem:[%s1133] ss:$2 sm:$0xff]
        %s1135 = scalar_lea.vmem [#allocation2], 208
        %v1136 = vld [vmem:[%s1135] ss:$2 sm:$0xff]
        %s1137 = scalar_lea.vmem [#allocation2], 224
        %v1138 = vld [vmem:[%s1137] ss:$2 sm:$0xff]
        %s1139 = scalar_lea.vmem [#allocation2], 240
        %v1140 = vld [vmem:[%s1139] ss:$2 sm:$0xff]
        %s1141 = scalar_lea.vmem [#allocation2], 256
        %v1142 = vld [vmem:[%s1141] ss:$2 sm:$0xff]
        %s1143 = scalar_lea.vmem [#allocation2], 272
        %v1144 = vld [vmem:[%s1143] ss:$2 sm:$0xff]
        %s1145 = scalar_lea.vmem [#allocation2], 288
        %v1146 = vld [vmem:[%s1145] ss:$2 sm:$0xff]
        %s1147 = scalar_lea.vmem [#allocation2], 304
        %v1148 = vld [vmem:[%s1147] ss:$2 sm:$0xff]
        %s1149 = scalar_lea.vmem [#allocation2], 320
        %v1150 = vld [vmem:[%s1149] ss:$2 sm:$0xff]
        %s1151 = scalar_lea.vmem [#allocation2], 336
        %v1152 = vld [vmem:[%s1151] ss:$2 sm:$0xff]
        %s1153 = scalar_lea.vmem [#allocation2], 352
        %v1154 = vld [vmem:[%s1153] ss:$2 sm:$0xff]
        %s1155 = scalar_lea.vmem [#allocation2], 368
        %v1156 = vld [vmem:[%s1155] ss:$2 sm:$0xff]
        %s1157 = scalar_lea.vmem [#allocation2], 384
        %v1158 = vld [vmem:[%s1157] ss:$2 sm:$0xff]
        %s1159 = scalar_lea.vmem [#allocation2], 400
        %v1160 = vld [vmem:[%s1159] ss:$2 sm:$0xff]
        %s1161 = scalar_lea.vmem [#allocation2], 416
        %v1162 = vld [vmem:[%s1161] ss:$2 sm:$0xff]
        %s1163 = scalar_lea.vmem [#allocation2], 432
        %v1164 = vld [vmem:[%s1163] ss:$2 sm:$0xff]
        %s1165 = scalar_lea.vmem [#allocation2], 448
        %v1166 = vld [vmem:[%s1165] ss:$2 sm:$0xff]
        %s1167 = scalar_lea.vmem [#allocation2], 464
        %v1168 = vld [vmem:[%s1167] ss:$2 sm:$0xff]
        %s1169 = scalar_lea.vmem [#allocation2], 480
        %v1170 = vld [vmem:[%s1169] ss:$2 sm:$0xff]
        %s1171 = scalar_lea.vmem [#allocation2], 496
        %v1172 = vld [vmem:[%s1171] ss:$2 sm:$0xff]
        %s1173 = scalar_lea.vmem [#allocation2], 512
        %v1174 = vld [vmem:[%s1173] ss:$2 sm:$0xff]
        %s1175 = scalar_lea.vmem [#allocation2], 528
        %v1176 = vld [vmem:[%s1175] ss:$2 sm:$0xff]
        %s1177 = scalar_lea.vmem [#allocation2], 544
        %v1178 = vld [vmem:[%s1177] ss:$2 sm:$0xff]
        %s1179 = scalar_lea.vmem [#allocation2], 560
        %v1180 = vld [vmem:[%s1179] ss:$2 sm:$0xff]
        %s1181 = scalar_lea.vmem [#allocation2], 576
        %v1182 = vld [vmem:[%s1181] ss:$2 sm:$0xff]
        %s1183 = scalar_lea.vmem [#allocation2], 592
        %v1184 = vld [vmem:[%s1183] ss:$2 sm:$0xff]
        %s1185 = scalar_lea.vmem [#allocation2], 608
        %v1186 = vld [vmem:[%s1185] ss:$2 sm:$0xff]
        %s1187 = scalar_lea.vmem [#allocation2], 624
        %v1188 = vld [vmem:[%s1187] ss:$2 sm:$0xff]
        %s1189 = scalar_lea.vmem [#allocation2], 640
        %v1190 = vld [vmem:[%s1189] ss:$2 sm:$0xff]
        %s1191 = scalar_lea.vmem [#allocation2], 656
        %v1192 = vld [vmem:[%s1191] ss:$2 sm:$0xff]
        %s1193 = scalar_lea.vmem [#allocation2], 672
        %v1194 = vld [vmem:[%s1193] ss:$2 sm:$0xff]
        %s1195 = scalar_lea.vmem [#allocation2], 688
        %v1196 = vld [vmem:[%s1195] ss:$2 sm:$0xff]
        %s1197 = scalar_lea.vmem [#allocation2], 704
        %v1198 = vld [vmem:[%s1197] ss:$2 sm:$0xff]
        %s1199 = scalar_lea.vmem [#allocation2], 720
        %v1200 = vld [vmem:[%s1199] ss:$2 sm:$0xff]
        %s1201 = scalar_lea.vmem [#allocation2], 736
        %v1202 = vld [vmem:[%s1201] ss:$2 sm:$0xff]
        %s1203 = scalar_lea.vmem [#allocation2], 752
        %v1204 = vld [vmem:[%s1203] ss:$2 sm:$0xff]
        %s1205 = scalar_lea.vmem [#allocation2], 768
        %v1206 = vld [vmem:[%s1205] ss:$2 sm:$0xff]
        %s1207 = scalar_lea.vmem [#allocation2], 784
        %v1208 = vld [vmem:[%s1207] ss:$2 sm:$0xff]
        %s1209 = scalar_lea.vmem [#allocation2], 800
        %v1210 = vld [vmem:[%s1209] ss:$2 sm:$0xff]
        %s1211 = scalar_lea.vmem [#allocation2], 816
        %v1212 = vld [vmem:[%s1211] ss:$2 sm:$0xff]
        %s1213 = scalar_lea.vmem [#allocation2], 832
        %v1214 = vld [vmem:[%s1213] ss:$2 sm:$0xff]
        %s1215 = scalar_lea.vmem [#allocation2], 848
        %v1216 = vld [vmem:[%s1215] ss:$2 sm:$0xff]
        %s1217 = scalar_lea.vmem [#allocation2], 864
        %v1218 = vld [vmem:[%s1217] ss:$2 sm:$0xff]
        %s1219 = scalar_lea.vmem [#allocation2], 880
        %v1220 = vld [vmem:[%s1219] ss:$2 sm:$0xff]
        %s1221 = scalar_lea.vmem [#allocation2], 1
        %v1222 = vld [vmem:[%s1221] ss:$2 sm:$0xff]
        %s1223 = scalar_lea.vmem [#allocation2], 17
        %v1224 = vld [vmem:[%s1223] ss:$2 sm:$0xff]
        %s1225 = scalar_lea.vmem [#allocation2], 33
        %v1226 = vld [vmem:[%s1225] ss:$2 sm:$0xff]
        %s1227 = scalar_lea.vmem [#allocation2], 49
        %v1228 = vld [vmem:[%s1227] ss:$2 sm:$0xff]
        %s1229 = scalar_lea.vmem [#allocation2], 65
        %v1230 = vld [vmem:[%s1229] ss:$2 sm:$0xff]
        %s1231 = scalar_lea.vmem [#allocation2], 81
        %v1232 = vld [vmem:[%s1231] ss:$2 sm:$0xff]
        %s1233 = scalar_lea.vmem [#allocation2], 97
        %v1234 = vld [vmem:[%s1233] ss:$2 sm:$0xff]
        %s1235 = scalar_lea.vmem [#allocation2], 113
        %v1236 = vld [vmem:[%s1235] ss:$2 sm:$0xff]
        %s1237 = scalar_lea.vmem [#allocation2], 129
        %v1238 = vld [vmem:[%s1237] ss:$2 sm:$0xff]
        %s1239 = scalar_lea.vmem [#allocation2], 145
        %v1240 = vld [vmem:[%s1239] ss:$2 sm:$0xff]
        %s1241 = scalar_lea.vmem [#allocation2], 161
        %v1242 = vld [vmem:[%s1241] ss:$2 sm:$0xff]
        %s1243 = scalar_lea.vmem [#allocation2], 177
        %v1244 = vld [vmem:[%s1243] ss:$2 sm:$0xff]
        %s1245 = scalar_lea.vmem [#allocation2], 193
        %v1246 = vld [vmem:[%s1245] ss:$2 sm:$0xff]
        %s1247 = scalar_lea.vmem [#allocation2], 209
        %v1248 = vld [vmem:[%s1247] ss:$2 sm:$0xff]
        %s1249 = scalar_lea.vmem [#allocation2], 225
        %v1250 = vld [vmem:[%s1249] ss:$2 sm:$0xff]
        %s1251 = scalar_lea.vmem [#allocation2], 241
        %v1252 = vld [vmem:[%s1251] ss:$2 sm:$0xff]
        %s1253 = scalar_lea.vmem [#allocation2], 257
        %v1254 = vld [vmem:[%s1253] ss:$2 sm:$0xff]
        %s1255 = scalar_lea.vmem [#allocation2], 273
        %v1256 = vld [vmem:[%s1255] ss:$2 sm:$0xff]
        %s1257 = scalar_lea.vmem [#allocation2], 289
        %v1258 = vld [vmem:[%s1257] ss:$2 sm:$0xff]
        %s1259 = scalar_lea.vmem [#allocation2], 305
        %v1260 = vld [vmem:[%s1259] ss:$2 sm:$0xff]
        %s1261 = scalar_lea.vmem [#allocation2], 321
        %v1262 = vld [vmem:[%s1261] ss:$2 sm:$0xff]
        %s1263 = scalar_lea.vmem [#allocation2], 337
        %v1264 = vld [vmem:[%s1263] ss:$2 sm:$0xff]
        %s1265 = scalar_lea.vmem [#allocation2], 353
        %v1266 = vld [vmem:[%s1265] ss:$2 sm:$0xff]
        %s1267 = scalar_lea.vmem [#allocation2], 369
        %v1268 = vld [vmem:[%s1267] ss:$2 sm:$0xff]
        %s1269 = scalar_lea.vmem [#allocation2], 385
        %v1270 = vld [vmem:[%s1269] ss:$2 sm:$0xff]
        %s1271 = scalar_lea.vmem [#allocation2], 401
        %v1272 = vld [vmem:[%s1271] ss:$2 sm:$0xff]
        %s1273 = scalar_lea.vmem [#allocation2], 417
        %v1274 = vld [vmem:[%s1273] ss:$2 sm:$0xff]
        %s1275 = scalar_lea.vmem [#allocation2], 433
        %v1276 = vld [vmem:[%s1275] ss:$2 sm:$0xff]
        %s1277 = scalar_lea.vmem [#allocation2], 449
        %v1278 = vld [vmem:[%s1277] ss:$2 sm:$0xff]
        %s1279 = scalar_lea.vmem [#allocation2], 465
        %v1280 = vld [vmem:[%s1279] ss:$2 sm:$0xff]
        %s1281 = scalar_lea.vmem [#allocation2], 481
        %v1282 = vld [vmem:[%s1281] ss:$2 sm:$0xff]
        %s1283 = scalar_lea.vmem [#allocation2], 497
        %v1284 = vld [vmem:[%s1283] ss:$2 sm:$0xff]
        %s1285 = scalar_lea.vmem [#allocation2], 513
        %v1286 = vld [vmem:[%s1285] ss:$2 sm:$0xff]
        %s1287 = scalar_lea.vmem [#allocation2], 529
        %v1288 = vld [vmem:[%s1287] ss:$2 sm:$0xff]
        %s1289 = scalar_lea.vmem [#allocation2], 545
        %v1290 = vld [vmem:[%s1289] ss:$2 sm:$0xff]
        %s1291 = scalar_lea.vmem [#allocation2], 561
        %v1292 = vld [vmem:[%s1291] ss:$2 sm:$0xff]
        %s1293 = scalar_lea.vmem [#allocation2], 577
        %v1294 = vld [vmem:[%s1293] ss:$2 sm:$0xff]
        %s1295 = scalar_lea.vmem [#allocation2], 593
        %v1296 = vld [vmem:[%s1295] ss:$2 sm:$0xff]
        %s1297 = scalar_lea.vmem [#allocation2], 609
        %v1298 = vld [vmem:[%s1297] ss:$2 sm:$0xff]
        %s1299 = scalar_lea.vmem [#allocation2], 625
        %v1300 = vld [vmem:[%s1299] ss:$2 sm:$0xff]
        %s1301 = scalar_lea.vmem [#allocation2], 641
        %v1302 = vld [vmem:[%s1301] ss:$2 sm:$0xff]
        %s1303 = scalar_lea.vmem [#allocation2], 657
        %v1304 = vld [vmem:[%s1303] ss:$2 sm:$0xff]
        %s1305 = scalar_lea.vmem [#allocation2], 673
        %v1306 = vld [vmem:[%s1305] ss:$2 sm:$0xff]
        %s1307 = scalar_lea.vmem [#allocation2], 689
        %v1308 = vld [vmem:[%s1307] ss:$2 sm:$0xff]
        %s1309 = scalar_lea.vmem [#allocation2], 705
        %v1310 = vld [vmem:[%s1309] ss:$2 sm:$0xff]
        %s1311 = scalar_lea.vmem [#allocation2], 721
        %v1312 = vld [vmem:[%s1311] ss:$2 sm:$0xff]
        %s1313 = scalar_lea.vmem [#allocation2], 737
        %v1314 = vld [vmem:[%s1313] ss:$2 sm:$0xff]
        %s1315 = scalar_lea.vmem [#allocation2], 753
        %v1316 = vld [vmem:[%s1315] ss:$2 sm:$0xff]
        %s1317 = scalar_lea.vmem [#allocation2], 769
        %v1318 = vld [vmem:[%s1317] ss:$2 sm:$0xff]
        %s1319 = scalar_lea.vmem [#allocation2], 785
        %v1320 = vld [vmem:[%s1319] ss:$2 sm:$0xff]
        %s1321 = scalar_lea.vmem [#allocation2], 801
        %v1322 = vld [vmem:[%s1321] ss:$2 sm:$0xff]
        %s1323 = scalar_lea.vmem [#allocation2], 817
        %v1324 = vld [vmem:[%s1323] ss:$2 sm:$0xff]
        %s1325 = scalar_lea.vmem [#allocation2], 833
        %v1326 = vld [vmem:[%s1325] ss:$2 sm:$0xff]
        %s1327 = scalar_lea.vmem [#allocation2], 849
        %v1328 = vld [vmem:[%s1327] ss:$2 sm:$0xff]
        %s1329 = scalar_lea.vmem [#allocation2], 865
        %v1330 = vld [vmem:[%s1329] ss:$2 sm:$0xff]
        %s1331 = scalar_lea.vmem [#allocation2], 881
        %v1332 = vld [vmem:[%s1331] ss:$2 sm:$0xff]
        %v1333 = vmax.f32 %v1110, %v1222
        %v1334 = vmax.f32 %v1112, %v1224
        %v1335 = vmax.f32 %v1114, %v1226
        %v1336 = vmax.f32 %v1116, %v1228
        %v1337 = vmax.f32 %v1118, %v1230
        %v1338 = vmax.f32 %v1120, %v1232
        %v1339 = vmax.f32 %v1122, %v1234
        %v1340 = vmax.f32 %v1124, %v1236
        %v1341 = vmax.f32 %v1126, %v1238
        %v1342 = vmax.f32 %v1128, %v1240
        %v1343 = vmax.f32 %v1130, %v1242
        %v1344 = vmax.f32 %v1132, %v1244
        %v1345 = vmax.f32 %v1134, %v1246
        %v1346 = vmax.f32 %v1136, %v1248
        %v1347 = vmax.f32 %v1138, %v1250
        %v1348 = vmax.f32 %v1140, %v1252
        %v1349 = vmax.f32 %v1142, %v1254
        %v1350 = vmax.f32 %v1144, %v1256
        %v1351 = vmax.f32 %v1146, %v1258
        %v1352 = vmax.f32 %v1148, %v1260
        %v1353 = vmax.f32 %v1150, %v1262
        %v1354 = vmax.f32 %v1152, %v1264
        %v1355 = vmax.f32 %v1154, %v1266
        %v1356 = vmax.f32 %v1156, %v1268
        %v1357 = vmax.f32 %v1158, %v1270
        %v1358 = vmax.f32 %v1160, %v1272
        %v1359 = vmax.f32 %v1162, %v1274
        %v1360 = vmax.f32 %v1164, %v1276
        %v1361 = vmax.f32 %v1166, %v1278
        %v1362 = vmax.f32 %v1168, %v1280
        %v1363 = vmax.f32 %v1170, %v1282
        %v1364 = vmax.f32 %v1172, %v1284
        %v1365 = vmax.f32 %v1174, %v1286
        %v1366 = vmax.f32 %v1176, %v1288
        %v1367 = vmax.f32 %v1178, %v1290
        %v1368 = vmax.f32 %v1180, %v1292
        %v1369 = vmax.f32 %v1182, %v1294
        %v1370 = vmax.f32 %v1184, %v1296
        %v1371 = vmax.f32 %v1186, %v1298
        %v1372 = vmax.f32 %v1188, %v1300
        %v1373 = vmax.f32 %v1190, %v1302
        %v1374 = vmax.f32 %v1192, %v1304
        %v1375 = vmax.f32 %v1194, %v1306
        %v1376 = vmax.f32 %v1196, %v1308
        %v1377 = vmax.f32 %v1198, %v1310
        %v1378 = vmax.f32 %v1200, %v1312
        %v1379 = vmax.f32 %v1202, %v1314
        %v1380 = vmax.f32 %v1204, %v1316
        %v1381 = vmax.f32 %v1206, %v1318
        %v1382 = vmax.f32 %v1208, %v1320
        %v1383 = vmax.f32 %v1210, %v1322
        %v1384 = vmax.f32 %v1212, %v1324
        %v1385 = vmax.f32 %v1214, %v1326
        %v1386 = vmax.f32 %v1216, %v1328
        %v1387 = vmax.f32 %v1218, %v1330
        %v1388 = vmax.f32 %v1220, %v1332
        %v1389 = vmax.f32 %v1333, %v1335
        %v1390 = vmax.f32 %v1334, %v1336
        %v1391 = vmax.f32 %v1337, %v1339
        %v1392 = vmax.f32 %v1338, %v1340
        %v1393 = vmax.f32 %v1341, %v1343
        %v1394 = vmax.f32 %v1342, %v1344
        %v1395 = vmax.f32 %v1345, %v1347
        %v1396 = vmax.f32 %v1346, %v1348
        %v1397 = vmax.f32 %v1349, %v1351
        %v1398 = vmax.f32 %v1350, %v1352
        %v1399 = vmax.f32 %v1353, %v1355
        %v1400 = vmax.f32 %v1354, %v1356
        %v1401 = vmax.f32 %v1357, %v1359
        %v1402 = vmax.f32 %v1358, %v1360
        %v1403 = vmax.f32 %v1361, %v1363
        %v1404 = vmax.f32 %v1362, %v1364
        %v1405 = vmax.f32 %v1365, %v1367
        %v1406 = vmax.f32 %v1366, %v1368
        %v1407 = vmax.f32 %v1369, %v1371
        %v1408 = vmax.f32 %v1370, %v1372
        %v1409 = vmax.f32 %v1373, %v1375
        %v1410 = vmax.f32 %v1374, %v1376
        %v1411 = vmax.f32 %v1377, %v1379
        %v1412 = vmax.f32 %v1378, %v1380
        %v1413 = vmax.f32 %v1381, %v1383
        %v1414 = vmax.f32 %v1382, %v1384
        %v1415 = vmax.f32 %v1385, %v1387
        %v1416 = vmax.f32 %v1386, %v1388
        %v1418 = vperm.slane %v1109, 0
        %v1420 = vadd.f32 %v1389, %v1418
        %v1421 = vadd.f32 %v1390, %v1418
        %v1422 = vadd.f32 %v1391, %v1418
        %v1423 = vadd.f32 %v1392, %v1418
        %v1424 = vadd.f32 %v1393, %v1418
        %v1425 = vadd.f32 %v1394, %v1418
        %v1426 = vadd.f32 %v1395, %v1418
        %v1427 = vadd.f32 %v1396, %v1418
        %v1428 = vadd.f32 %v1397, %v1418
        %v1429 = vadd.f32 %v1398, %v1418
        %v1430 = vadd.f32 %v1399, %v1418
        %v1431 = vadd.f32 %v1400, %v1418
        %v1432 = vadd.f32 %v1401, %v1418
        %v1433 = vadd.f32 %v1402, %v1418
        %v1434 = vadd.f32 %v1403, %v1418
        %v1435 = vadd.f32 %v1404, %v1418
        %v1436 = vadd.f32 %v1405, %v1418
        %v1437 = vadd.f32 %v1406, %v1418
        %v1438 = vadd.f32 %v1407, %v1418
        %v1439 = vadd.f32 %v1408, %v1418
        %v1440 = vadd.f32 %v1409, %v1418
        %v1441 = vadd.f32 %v1410, %v1418
        %v1442 = vadd.f32 %v1411, %v1418
        %v1443 = vadd.f32 %v1412, %v1418
        %v1444 = vadd.f32 %v1413, %v1418
        %v1445 = vadd.f32 %v1414, %v1418
        %v1446 = vadd.f32 %v1415, %v1418
        %v1447 = vadd.f32 %v1416, %v1418
        %v1448 = vmax.f32 %v1420, 0.0
        %v1449 = vmax.f32 %v1421, 0.0
        %v1450 = vmax.f32 %v1422, 0.0
        %v1451 = vmax.f32 %v1423, 0.0
        %v1452 = vmax.f32 %v1424, 0.0
        %v1453 = vmax.f32 %v1425, 0.0
        %v1454 = vmax.f32 %v1426, 0.0
        %v1455 = vmax.f32 %v1427, 0.0
        %v1456 = vmax.f32 %v1428, 0.0
        %v1457 = vmax.f32 %v1429, 0.0
        %v1458 = vmax.f32 %v1430, 0.0
        %v1459 = vmax.f32 %v1431, 0.0
        %v1460 = vmax.f32 %v1432, 0.0
        %v1461 = vmax.f32 %v1433, 0.0
        %v1462 = vmax.f32 %v1434, 0.0
        %v1463 = vmax.f32 %v1435, 0.0
        %v1464 = vmax.f32 %v1436, 0.0
        %v1465 = vmax.f32 %v1437, 0.0
        %v1466 = vmax.f32 %v1438, 0.0
        %v1467 = vmax.f32 %v1439, 0.0
        %v1468 = vmax.f32 %v1440, 0.0
        %v1469 = vmax.f32 %v1441, 0.0
        %v1470 = vmax.f32 %v1442, 0.0
        %v1471 = vmax.f32 %v1443, 0.0
        %v1472 = vmax.f32 %v1444, 0.0
        %v1473 = vmax.f32 %v1445, 0.0
        %v1474 = vmax.f32 %v1446, 0.0
        %v1475 = vmax.f32 %v1447, 0.0
        %1476 = vst.msk [vmem:[%s185] sm:$0xff] %vm996, %v1448
        %vm1477 = vcmask 259072
        %1478 = vst.msk [vmem:[%s185 + $0x8] sm:$0x3f] %vm1477, %v1449
        %1479 = vst.msk [vmem:[%s185 + $0x10] sm:$0xff] %vm996, %v1450
        %1480 = vst.msk [vmem:[%s185 + $0x18] sm:$0x3f] %vm1477, %v1451
        %1481 = vst.msk [vmem:[%s185 + $0x20] sm:$0xff] %vm996, %v1452
        %1482 = vst.msk [vmem:[%s185 + $0x28] sm:$0x3f] %vm1477, %v1453
        %1483 = vst.msk [vmem:[%s185 + $0x30] sm:$0xff] %vm996, %v1454
        %1484 = vst.msk [vmem:[%s185 + $0x38] sm:$0x3f] %vm1477, %v1455
        %1485 = vst.msk [vmem:[%s185 + $0x40] sm:$0xff] %vm996, %v1456
        %1486 = vst.msk [vmem:[%s185 + $0x48] sm:$0x3f] %vm1477, %v1457
        %1487 = vst.msk [vmem:[%s185 + $0x50] sm:$0xff] %vm996, %v1458
        %1488 = vst.msk [vmem:[%s185 + $0x58] sm:$0x3f] %vm1477, %v1459
        %1489 = vst.msk [vmem:[%s185 + $0x60] sm:$0xff] %vm996, %v1460
        %1490 = vst.msk [vmem:[%s185 + $0x68] sm:$0x3f] %vm1477, %v1461
        %1491 = vst.msk [vmem:[%s185 + $0x70] sm:$0xff] %vm996, %v1462
        %1492 = vst.msk [vmem:[%s185 + $0x78] sm:$0x3f] %vm1477, %v1463
        %1493 = vst.msk [vmem:[%s185 + $0x80] sm:$0xff] %vm996, %v1464
        %1494 = vst.msk [vmem:[%s185 + $0x88] sm:$0x3f] %vm1477, %v1465
        %1495 = vst.msk [vmem:[%s185 + $0x90] sm:$0xff] %vm996, %v1466
        %1496 = vst.msk [vmem:[%s185 + $0x98] sm:$0x3f] %vm1477, %v1467
        %1497 = vst.msk [vmem:[%s185 + $0xa0] sm:$0xff] %vm996, %v1468
        %1498 = vst.msk [vmem:[%s185 + $0xa8] sm:$0x3f] %vm1477, %v1469
        %1499 = vst.msk [vmem:[%s185 + $0xb0] sm:$0xff] %vm996, %v1470
        %1500 = vst.msk [vmem:[%s185 + $0xb8] sm:$0x3f] %vm1477, %v1471
        %1501 = vst.msk [vmem:[%s185 + $0xc0] sm:$0xff] %vm996, %v1472
        %1502 = vst.msk [vmem:[%s185 + $0xc8] sm:$0x3f] %vm1477, %v1473
        %1503 = vst.msk [vmem:[%s185 + $0xd0] sm:$0xff] %vm996, %v1474
        %1504 = vst.msk [vmem:[%s185 + $0xd8] sm:$0x3f] %vm1477, %v1475
        %p1505 = scmp.lt.s32.totalorder %s15, 1
        %s1506 = scalar_select %p1505, %s15, 1
        %s1507 = smul.addr %s1506, 28
        %s1508 = smul.addr %s1507, 8
        %s1509 = scalar_lea.vmem %s3, %s1508
        // Predicated region
        $region37: #{cnn_forward.4} parent=31 // pred_check
          %p1510 = pneg %p101
        $region38: #{cnn_forward.4} parent=31 // pred_check_branch
          %1512 = sbr.rel (%p1510) target = $region40
        $region39: #{cnn_forward.4} parent=31 // pred_region
          _
        $region40: #{cnn_forward.4} parent=31 // pred_fallthru
          _
      $region32: #{cnn_forward.4} parent=5 // pred_fallthru
        _
      %p1513 = scmp.le.s32.totalorder 2, %s10
      // Predicated region
      $region41: #{cnn_forward.4} parent=5 // pred_check
        %p1514 = pneg %p1513
      $region42: #{cnn_forward.4} parent=5 // pred_check_branch
        %1516 = sbr.rel (%p1514) target = $region44
      $region43: #{cnn_forward.4} parent=5 // pred_region
        %s1517 = ssub.s32 %s10, 2
        // Predicated region
        $region45: #{cnn_forward.4} parent=43 // pred_check
          %p1518 = pneg %p107
        $region46: #{cnn_forward.4} parent=43 // pred_check_branch
          %1520 = sbr.rel (%p1518) target = $region48
        $region47: #{cnn_forward.4} parent=43 // pred_region
          %p1521 = scmp.lt.s32.totalorder %s16, 1
          %s1522 = scalar_select %p1521, %s16, 1
          %s1523 = smul.addr %s1522, 28
          %s1524 = smul.addr %s1523, 8
          %s1525 = scalar_lea.vmem %s3, %s1524
        $region48: #{cnn_forward.4} parent=43 // pred_fallthru
          _
      $region44: #{cnn_forward.4} parent=5 // pred_fallthru
        _
    $region6: #{cnn_forward.4} parent=1 // loop_footer
      %s14 = sadd.s32 1, %s10
    $region7: #{cnn_forward.4} parent=1 // loop_footer_branch
      %9 = sbr.rel target = $region3
    $region8: #{cnn_forward.4} parent=1 // loop_exit
      _
    %1526 = vsyncpa [#allocation4], 1
    %s1527 = scalar_lea.sflag [#allocation4], 1
    %1528 = vsyncpa %s1527, 1

// kernel: cnn_forward.7
$region0: #{cnn_forward.7}
  #allocation0 [shape = 'u32[]', space=smem, size = 0x4, offset = 0x4, fixed_abs, tag = 'smem constant byte address 0x4 - core index']
  #allocation1 [shape = 'u32[72,128]{1,0:T(1,128)}', space=vmem, size = 0x9000, scoped, tag = 'internal scratch']
  %s0 = inlined_call_operand.vmem [shape: f32[2,1024], index: 0, kind: input, shape index: {}]
  %s1 = inlined_call_operand.hbm [shape: f32[1024,128], index: 1, kind: input, shape index: {}]
  %s2 = inlined_call_operand.hbm [shape: f32[1,128], index: 2, kind: input, shape index: {}]
  %s3 = inlined_call_operand.hbm [shape: f32[2,128], index: 3, kind: output, shape index: {}]
  %s4 = sld [smem:[#allocation0]]
  $region30: #{cnn_forward.7} parent=0
    _
  %s6 = ssub.s32 1, %s4
  %s7 = scalar_select 0, %s6, %s4
  $region1: #{cnn_forward.7} parent=0
    #allocation2 [shape = 'u8[524288]{0}', space=vmem, size = 0x80000, scoped, tag = 'input window, operand 1, single buffered']
    #allocation3 [shape = 's32[1]{0}', space=sflag, size = 0x4, scoped, tag = 'scoped memory for cnn_forward.7']
    #allocation4 [shape = 's32[1]{0}', space=sflag, size = 0x4, scoped, tag = 'scoped memory for cnn_forward.7']
    #allocation5 [shape = 'u8[512]{0}', space=vmem, size = 0x400, scoped, tag = 'input window, operand 2, single buffered']
    #allocation6 [shape = 's32[1]{0}', space=sflag, size = 0x4, scoped, tag = 'scoped memory for cnn_forward.7']
    #allocation7 [shape = 'u8[1024]{0}', space=vmem, size = 0x400, scoped, tag = 'output window, operand 0, single buffered']
    %8 = vsyncpa [#allocation3], 0
    %9 = vsyncpa [#allocation6], 0
    %10 = vsyncpa [#allocation4], 0
    // Predicated region
    $region2: #{cnn_forward.7} parent=1 // pred_check
      _
    $region3: #{cnn_forward.7} parent=1 // pred_check_branch
      %12 = sbr.rel (0) target = $region5
    $region4: #{cnn_forward.7} parent=1 // pred_region
      _
    $region5: #{cnn_forward.7} parent=1 // pred_fallthru
      _
    // Predicated region
    $region6: #{cnn_forward.7} parent=1 // pred_check
      _
    $region7: #{cnn_forward.7} parent=1 // pred_check_branch
      %14 = sbr.rel (0) target = $region9
    $region8: #{cnn_forward.7} parent=1 // pred_region
      %16 = vsyncadd [#allocation3], 0
      %s17 = sshll.u32 %s1, 4
      %s18 = int_to_ptr.hbm [resolvable:$true] %s17
      %s19 = sshll.u32 [#allocation2], 4
      %s20 = int_to_ptr.vmem [resolvable:$true] %s19
      %25 = dma.hbm_to_vmem [thread:$0]  %s18, 16384, %s20, [#allocation3], 128, 128, 8
    $region9: #{cnn_forward.7} parent=1 // pred_fallthru
      _
    // Predicated region
    $region10: #{cnn_forward.7} parent=1 // pred_check
      _
    $region11: #{cnn_forward.7} parent=1 // pred_check_branch
      %27 = sbr.rel (0) target = $region13
    $region12: #{cnn_forward.7} parent=1 // pred_region
      %29 = vsyncadd [#allocation6], 0
      %s31 = sshll.u32 %s2, 4
      %s32 = int_to_ptr.hbm [resolvable:$true] %s31
      %s33 = sshll.u32 [#allocation5], 4
      %s34 = int_to_ptr.vmem [resolvable:$true] %s33
      %36 = dma.hbm_to_vmem [thread:$0]  %s32, 16, %s34, [#allocation6]
    $region13: #{cnn_forward.7} parent=1 // pred_fallthru
      _
    // Predicated region
    $region14: #{cnn_forward.7} parent=1 // pred_check
      _
    $region15: #{cnn_forward.7} parent=1 // pred_check_branch
      %38 = sbr.rel (0) target = $region17
    $region16: #{cnn_forward.7} parent=1 // pred_region
      %40 = dma.done [#allocation3], 16384
    $region17: #{cnn_forward.7} parent=1 // pred_fallthru
      _
    // Predicated region
    $region18: #{cnn_forward.7} parent=1 // pred_check
      _
    $region19: #{cnn_forward.7} parent=1 // pred_check_branch
      %42 = sbr.rel (0) target = $region21
    $region20: #{cnn_forward.7} parent=1 // pred_region
      %44 = dma.done [#allocation6], 16
    $region21: #{cnn_forward.7} parent=1 // pred_fallthru
      _
    %v45 = vld [vmem:[%s0] sm:$0xff]
    %v46 = vld [vmem:[%s0 + $0x8] sm:$0xff]
    %v47 = vld [vmem:[#allocation2] sm:$0xff]
    %v48 = vld [vmem:[#allocation2 + $0x8] sm:$0xff]
    %v49 = vld [vmem:[#allocation2 + $0x10] sm:$0xff]
    %v50 = vld [vmem:[#allocation2 + $0x18] sm:$0xff]
    %v51 = vld [vmem:[#allocation2 + $0x20] sm:$0xff]
    %v52 = vld [vmem:[#allocation2 + $0x28] sm:$0xff]
    %v53 = vld [vmem:[#allocation2 + $0x30] sm:$0xff]
    %v54 = vld [vmem:[#allocation2 + $0x38] sm:$0xff]
    %v55 = vld [vmem:[#allocation2 + $0x40] sm:$0xff]
    %v56 = vld [vmem:[#allocation2 + $0x48] sm:$0xff]
    %v57 = vld [vmem:[#allocation2 + $0x50] sm:$0xff]
    %v58 = vld [vmem:[#allocation2 + $0x58] sm:$0xff]
    %v59 = vld [vmem:[#allocation2 + $0x60] sm:$0xff]
    %v60 = vld [vmem:[#allocation2 + $0x68] sm:$0xff]
    %v61 = vld [vmem:[#allocation2 + $0x70] sm:$0xff]
    %v62 = vld [vmem:[#allocation2 + $0x78] sm:$0xff]
    %v63 = vld [vmem:[#allocation2 + $0x80] sm:$0xff]
    %v64 = vld [vmem:[#allocation2 + $0x88] sm:$0xff]
    %v65 = vld [vmem:[#allocation2 + $0x90] sm:$0xff]
    %v66 = vld [vmem:[#allocation2 + $0x98] sm:$0xff]
    %v67 = vld [vmem:[#allocation2 + $0xa0] sm:$0xff]
    %v68 = vld [vmem:[#allocation2 + $0xa8] sm:$0xff]
    %v69 = vld [vmem:[#allocation2 + $0xb0] sm:$0xff]
    %v70 = vld [vmem:[#allocation2 + $0xb8] sm:$0xff]
    %v71 = vld [vmem:[#allocation2 + $0xc0] sm:$0xff]
    %v72 = vld [vmem:[#allocation2 + $0xc8] sm:$0xff]
    %v73 = vld [vmem:[#allocation2 + $0xd0] sm:$0xff]
    %v74 = vld [vmem:[#allocation2 + $0xd8] sm:$0xff]
    %v75 = vld [vmem:[#allocation2 + $0xe0] sm:$0xff]
    %v76 = vld [vmem:[#allocation2 + $0xe8] sm:$0xff]
    %v77 = vld [vmem:[#allocation2 + $0xf0] sm:$0xff]
    %v78 = vld [vmem:[#allocation2 + $0xf8] sm:$0xff]
    %v79 = vld [vmem:[#allocation2 + $0x100] sm:$0xff]
    %v80 = vld [vmem:[#allocation2 + $0x108] sm:$0xff]
    %v81 = vld [vmem:[#allocation2 + $0x110] sm:$0xff]
    %v82 = vld [vmem:[#allocation2 + $0x118] sm:$0xff]
    %v83 = vld [vmem:[#allocation2 + $0x120] sm:$0xff]
    %v84 = vld [vmem:[#allocation2 + $0x128] sm:$0xff]
    %v85 = vld [vmem:[#allocation2 + $0x130] sm:$0xff]
    %v86 = vld [vmem:[#allocation2 + $0x138] sm:$0xff]
    %v87 = vld [vmem:[#allocation2 + $0x140] sm:$0xff]
    %v88 = vld [vmem:[#allocation2 + $0x148] sm:$0xff]
    %v89 = vld [vmem:[#allocation2 + $0x150] sm:$0xff]
    %v90 = vld [vmem:[#allocation2 + $0x158] sm:$0xff]
    %v91 = vld [vmem:[#allocation2 + $0x160] sm:$0xff]
    %v92 = vld [vmem:[#allocation2 + $0x168] sm:$0xff]
    %v93 = vld [vmem:[#allocation2 + $0x170] sm:$0xff]
    %v94 = vld [vmem:[#allocation2 + $0x178] sm:$0xff]
    %v95 = vld [vmem:[#allocation2 + $0x180] sm:$0xff]
    %v96 = vld [vmem:[#allocation2 + $0x188] sm:$0xff]
    %v97 = vld [vmem:[#allocation2 + $0x190] sm:$0xff]
    %v98 = vld [vmem:[#allocation2 + $0x198] sm:$0xff]
    %v99 = vld [vmem:[#allocation2 + $0x1a0] sm:$0xff]
    %v100 = vld [vmem:[#allocation2 + $0x1a8] sm:$0xff]
    %v101 = vld [vmem:[#allocation2 + $0x1b0] sm:$0xff]
    %v102 = vld [vmem:[#allocation2 + $0x1b8] sm:$0xff]
    %v103 = vld [vmem:[#allocation2 + $0x1c0] sm:$0xff]
    %v104 = vld [vmem:[#allocation2 + $0x1c8] sm:$0xff]
    %v105 = vld [vmem:[#allocation2 + $0x1d0] sm:$0xff]
    %v106 = vld [vmem:[#allocation2 + $0x1d8] sm:$0xff]
    %v107 = vld [vmem:[#allocation2 + $0x1e0] sm:$0xff]
    %v108 = vld [vmem:[#allocation2 + $0x1e8] sm:$0xff]
    %v109 = vld [vmem:[#allocation2 + $0x1f0] sm:$0xff]
    %v110 = vld [vmem:[#allocation2 + $0x1f8] sm:$0xff]
    %v111 = vld [vmem:[#allocation2 + $0x200] sm:$0xff]
    %v112 = vld [vmem:[#allocation2 + $0x208] sm:$0xff]
    %v113 = vld [vmem:[#allocation2 + $0x210] sm:$0xff]
    %v114 = vld [vmem:[#allocation2 + $0x218] sm:$0xff]
    %v115 = vld [vmem:[#allocation2 + $0x220] sm:$0xff]
    %v116 = vld [vmem:[#allocation2 + $0x228] sm:$0xff]
    %v117 = vld [vmem:[#allocation2 + $0x230] sm:$0xff]
    %v118 = vld [vmem:[#allocation2 + $0x238] sm:$0xff]
    %v119 = vld [vmem:[#allocation2 + $0x240] sm:$0xff]
    %v120 = vld [vmem:[#allocation2 + $0x248] sm:$0xff]
    %v121 = vld [vmem:[#allocation2 + $0x250] sm:$0xff]
    %v122 = vld [vmem:[#allocation2 + $0x258] sm:$0xff]
    %v123 = vld [vmem:[#allocation2 + $0x260] sm:$0xff]
    %v124 = vld [vmem:[#allocation2 + $0x268] sm:$0xff]
    %v125 = vld [vmem:[#allocation2 + $0x270] sm:$0xff]
    %v126 = vld [vmem:[#allocation2 + $0x278] sm:$0xff]
    %v127 = vld [vmem:[#allocation2 + $0x280] sm:$0xff]
    %v128 = vld [vmem:[#allocation2 + $0x288] sm:$0xff]
    %v129 = vld [vmem:[#allocation2 + $0x290] sm:$0xff]
    %v130 = vld [vmem:[#allocation2 + $0x298] sm:$0xff]
    %v131 = vld [vmem:[#allocation2 + $0x2a0] sm:$0xff]
    %v132 = vld [vmem:[#allocation2 + $0x2a8] sm:$0xff]
    %v133 = vld [vmem:[#allocation2 + $0x2b0] sm:$0xff]
    %v134 = vld [vmem:[#allocation2 + $0x2b8] sm:$0xff]
    %v135 = vld [vmem:[#allocation2 + $0x2c0] sm:$0xff]
    %v136 = vld [vmem:[#allocation2 + $0x2c8] sm:$0xff]
    %v137 = vld [vmem:[#allocation2 + $0x2d0] sm:$0xff]
    %v138 = vld [vmem:[#allocation2 + $0x2d8] sm:$0xff]
    %v139 = vld [vmem:[#allocation2 + $0x2e0] sm:$0xff]
    %v140 = vld [vmem:[#allocation2 + $0x2e8] sm:$0xff]
    %v141 = vld [vmem:[#allocation2 + $0x2f0] sm:$0xff]
    %v142 = vld [vmem:[#allocation2 + $0x2f8] sm:$0xff]
    %v143 = vld [vmem:[#allocation2 + $0x300] sm:$0xff]
    %v144 = vld [vmem:[#allocation2 + $0x308] sm:$0xff]
    %v145 = vld [vmem:[#allocation2 + $0x310] sm:$0xff]
    %v146 = vld [vmem:[#allocation2 + $0x318] sm:$0xff]
    %v147 = vld [vmem:[#allocation2 + $0x320] sm:$0xff]
    %v148 = vld [vmem:[#allocation2 + $0x328] sm:$0xff]
    %v149 = vld [vmem:[#allocation2 + $0x330] sm:$0xff]
    %v150 = vld [vmem:[#allocation2 + $0x338] sm:$0xff]
    %v151 = vld [vmem:[#allocation2 + $0x340] sm:$0xff]
    %v152 = vld [vmem:[#allocation2 + $0x348] sm:$0xff]
    %v153 = vld [vmem:[#allocation2 + $0x350] sm:$0xff]
    %v154 = vld [vmem:[#allocation2 + $0x358] sm:$0xff]
    %v155 = vld [vmem:[#allocation2 + $0x360] sm:$0xff]
    %v156 = vld [vmem:[#allocation2 + $0x368] sm:$0xff]
    %v157 = vld [vmem:[#allocation2 + $0x370] sm:$0xff]
    %v158 = vld [vmem:[#allocation2 + $0x378] sm:$0xff]
    %v159 = vld [vmem:[#allocation2 + $0x380] sm:$0xff]
    %v160 = vld [vmem:[#allocation2 + $0x388] sm:$0xff]
    %v161 = vld [vmem:[#allocation2 + $0x390] sm:$0xff]
    %v162 = vld [vmem:[#allocation2 + $0x398] sm:$0xff]
    %v163 = vld [vmem:[#allocation2 + $0x3a0] sm:$0xff]
    %v164 = vld [vmem:[#allocation2 + $0x3a8] sm:$0xff]
    %v165 = vld [vmem:[#allocation2 + $0x3b0] sm:$0xff]
    %v166 = vld [vmem:[#allocation2 + $0x3b8] sm:$0xff]
    %v167 = vld [vmem:[#allocation2 + $0x3c0] sm:$0xff]
    %v168 = vld [vmem:[#allocation2 + $0x3c8] sm:$0xff]
    %v169 = vld [vmem:[#allocation2 + $0x3d0] sm:$0xff]
    %v170 = vld [vmem:[#allocation2 + $0x3d8] sm:$0xff]
    %v171 = vld [vmem:[#allocation2 + $0x3e0] sm:$0xff]
    %v172 = vld [vmem:[#allocation2 + $0x3e8] sm:$0xff]
    %v173 = vld [vmem:[#allocation2 + $0x3f0] sm:$0xff]
    %v174 = vld [vmem:[#allocation2 + $0x3f8] sm:$0xff]
    %v175 = vld [vmem:[#allocation5] sm:$0x1]
    %v177 = vperm.slane %v175, 0
    %181 = vst [vmem:[#allocation1] ss:$4 sm:$0xff] %v45
    %s182 = scalar_lea.vmem [#allocation1], 32
    %183 = vst [vmem:[%s182] ss:$4 sm:$0xff] %v46
    %v184 = vld.sshfl [vmem:[#allocation1] sm:$0xff pattern:$0x73625140]
    %v185 = vld.sshfl [vmem:[#allocation1 + $0x8] sm:$0xff pattern:$0x73625140]
    %v186 = vld.sshfl [vmem:[#allocation1 + $0x10] sm:$0xff pattern:$0x73625140]
    %v187 = vld.sshfl [vmem:[#allocation1 + $0x18] sm:$0xff pattern:$0x73625140]
    %v188 = vld.sshfl [vmem:[#allocation1 + $0x20] sm:$0xff pattern:$0x73625140]
    %v189 = vld.sshfl [vmem:[#allocation1 + $0x28] sm:$0xff pattern:$0x73625140]
    %v190 = vld.sshfl [vmem:[#allocation1 + $0x30] sm:$0xff pattern:$0x73625140]
    %v191 = vld.sshfl [vmem:[#allocation1 + $0x38] sm:$0xff pattern:$0x73625140]
    %200 = vmatpush.msra.mxu0 %v62
    %201 = vmatpush.msra.mxu0 %v61
    %202 = vmatpush.msra.mxu0 %v60
    %203 = vmatpush.msra.mxu0 %v59
    %204 = vmatpush.msra.mxu0 %v58
    %205 = vmatpush.msra.mxu0 %v57
    %206 = vmatpush.msra.mxu0 %v56
    %207 = vmatpush.msra.mxu0 %v55
    %208 = vmatpush.msra.mxu0 %v54
    %209 = vmatpush.msra.mxu0 %v53
    %210 = vmatpush.msra.mxu0 %v52
    %211 = vmatpush.msra.mxu0 %v51
    %212 = vmatpush.msra.mxu0 %v50
    %213 = vmatpush.msra.mxu0 %v49
    %214 = vmatpush.msra.mxu0 %v48
    %215 = vmatpush.msra.mxu0 %v47
    %216 = vmatmul.f32.gmra.mxu0 %v184
    %v217 = vpop.f32.mrf.mxu0
    %v218 = vadd.f32 %v177, %v217
    %219 = vdwg.mxu0
    %220 = vmatpush.msra.mxu0 %v78
    %221 = vmatpush.msra.mxu0 %v77
    %222 = vmatpush.msra.mxu0 %v76
    %223 = vmatpush.msra.mxu0 %v75
    %224 = vmatpush.msra.mxu0 %v74
    %225 = vmatpush.msra.mxu0 %v73
    %226 = vmatpush.msra.mxu0 %v72
    %227 = vmatpush.msra.mxu0 %v71
    %228 = vmatpush.msra.mxu0 %v70
    %229 = vmatpush.msra.mxu0 %v69
    %230 = vmatpush.msra.mxu0 %v68
    %231 = vmatpush.msra.mxu0 %v67
    %232 = vmatpush.msra.mxu0 %v66
    %233 = vmatpush.msra.mxu0 %v65
    %234 = vmatpush.msra.mxu0 %v64
    %235 = vmatpush.msra.mxu0 %v63
    %236 = vmatmul.f32.gmra.mxu0 %v185
    %v237 = vpop.f32.mrf.mxu0
    %v238 = vadd.f32 %v218, %v237
    %239 = vdwg.mxu0
    %240 = vmatpush.msra.mxu0 %v94
    %241 = vmatpush.msra.mxu0 %v93
    %242 = vmatpush.msra.mxu0 %v92
    %243 = vmatpush.msra.mxu0 %v91
    %244 = vmatpush.msra.mxu0 %v90
    %245 = vmatpush.msra.mxu0 %v89
    %246 = vmatpush.msra.mxu0 %v88
    %247 = vmatpush.msra.mxu0 %v87
    %248 = vmatpush.msra.mxu0 %v86
    %249 = vmatpush.msra.mxu0 %v85
    %250 = vmatpush.msra.mxu0 %v84
    %251 = vmatpush.msra.mxu0 %v83
    %252 = vmatpush.msra.mxu0 %v82
    %253 = vmatpush.msra.mxu0 %v81
    %254 = vmatpush.msra.mxu0 %v80
    %255 = vmatpush.msra.mxu0 %v79
    %256 = vmatmul.f32.gmra.mxu0 %v186
    %v257 = vpop.f32.mrf.mxu0
    %v258 = vadd.f32 %v238, %v257
    %259 = vdwg.mxu0
    %260 = vmatpush.msra.mxu0 %v110
    %261 = vmatpush.msra.mxu0 %v109
    %262 = vmatpush.msra.mxu0 %v108
    %263 = vmatpush.msra.mxu0 %v107
    %264 = vmatpush.msra.mxu0 %v106
    %265 = vmatpush.msra.mxu0 %v105
    %266 = vmatpush.msra.mxu0 %v104
    %267 = vmatpush.msra.mxu0 %v103
    %268 = vmatpush.msra.mxu0 %v102
    %269 = vmatpush.msra.mxu0 %v101
    %270 = vmatpush.msra.mxu0 %v100
    %271 = vmatpush.msra.mxu0 %v99
    %272 = vmatpush.msra.mxu0 %v98
    %273 = vmatpush.msra.mxu0 %v97
    %274 = vmatpush.msra.mxu0 %v96
    %275 = vmatpush.msra.mxu0 %v95
    %276 = vmatmul.f32.gmra.mxu0 %v187
    %v277 = vpop.f32.mrf.mxu0
    %v278 = vadd.f32 %v258, %v277
    %279 = vdwg.mxu0
    %280 = vmatpush.msra.mxu0 %v126
    %281 = vmatpush.msra.mxu0 %v125
    %282 = vmatpush.msra.mxu0 %v124
    %283 = vmatpush.msra.mxu0 %v123
    %284 = vmatpush.msra.mxu0 %v122
    %285 = vmatpush.msra.mxu0 %v121
    %286 = vmatpush.msra.mxu0 %v120
    %287 = vmatpush.msra.mxu0 %v119
    %288 = vmatpush.msra.mxu0 %v118
    %289 = vmatpush.msra.mxu0 %v117
    %290 = vmatpush.msra.mxu0 %v116
    %291 = vmatpush.msra.mxu0 %v115
    %292 = vmatpush.msra.mxu0 %v114
    %293 = vmatpush.msra.mxu0 %v113
    %294 = vmatpush.msra.mxu0 %v112
    %295 = vmatpush.msra.mxu0 %v111
    %296 = vmatmul.f32.gmra.mxu0 %v188
    %v297 = vpop.f32.mrf.mxu0
    %v298 = vadd.f32 %v278, %v297
    %299 = vdwg.mxu0
    %300 = vmatpush.msra.mxu0 %v142
    %301 = vmatpush.msra.mxu0 %v141
    %302 = vmatpush.msra.mxu0 %v140
    %303 = vmatpush.msra.mxu0 %v139
    %304 = vmatpush.msra.mxu0 %v138
    %305 = vmatpush.msra.mxu0 %v137
    %306 = vmatpush.msra.mxu0 %v136
    %307 = vmatpush.msra.mxu0 %v135
    %308 = vmatpush.msra.mxu0 %v134
    %309 = vmatpush.msra.mxu0 %v133
    %310 = vmatpush.msra.mxu0 %v132
    %311 = vmatpush.msra.mxu0 %v131
    %312 = vmatpush.msra.mxu0 %v130
    %313 = vmatpush.msra.mxu0 %v129
    %314 = vmatpush.msra.mxu0 %v128
    %315 = vmatpush.msra.mxu0 %v127
    %316 = vmatmul.f32.gmra.mxu0 %v189
    %v317 = vpop.f32.mrf.mxu0
    %v318 = vadd.f32 %v298, %v317
    %319 = vdwg.mxu0
    %320 = vmatpush.msra.mxu0 %v158
    %321 = vmatpush.msra.mxu0 %v157
    %322 = vmatpush.msra.mxu0 %v156
    %323 = vmatpush.msra.mxu0 %v155
    %324 = vmatpush.msra.mxu0 %v154
    %325 = vmatpush.msra.mxu0 %v153
    %326 = vmatpush.msra.mxu0 %v152
    %327 = vmatpush.msra.mxu0 %v151
    %328 = vmatpush.msra.mxu0 %v150
    %329 = vmatpush.msra.mxu0 %v149
    %330 = vmatpush.msra.mxu0 %v148
    %331 = vmatpush.msra.mxu0 %v147
    %332 = vmatpush.msra.mxu0 %v146
    %333 = vmatpush.msra.mxu0 %v145
    %334 = vmatpush.msra.mxu0 %v144
    %335 = vmatpush.msra.mxu0 %v143
    %336 = vmatmul.f32.gmra.mxu0 %v190
    %v337 = vpop.f32.mrf.mxu0
    %v338 = vadd.f32 %v318, %v337
    %339 = vdwg.mxu0
    %340 = vmatpush.msra.mxu0 %v174
    %341 = vmatpush.msra.mxu0 %v173
    %342 = vmatpush.msra.mxu0 %v172
    %343 = vmatpush.msra.mxu0 %v171
    %344 = vmatpush.msra.mxu0 %v170
    %345 = vmatpush.msra.mxu0 %v169
    %346 = vmatpush.msra.mxu0 %v168
    %347 = vmatpush.msra.mxu0 %v167
    %348 = vmatpush.msra.mxu0 %v166
    %349 = vmatpush.msra.mxu0 %v165
    %350 = vmatpush.msra.mxu0 %v164
    %351 = vmatpush.msra.mxu0 %v163
    %352 = vmatpush.msra.mxu0 %v162
    %353 = vmatpush.msra.mxu0 %v161
    %354 = vmatpush.msra.mxu0 %v160
    %355 = vmatpush.msra.mxu0 %v159
    %356 = vmatmul.f32.gmra.mxu0 %v191
    %v357 = vpop.f32.mrf.mxu0
    %v358 = vadd.f32 %v338, %v357
    %359 = vdwg.mxu0
    %360 = vst [vmem:[#allocation7] sm:$0x3] %v358
    // Predicated region
    $region22: #{cnn_forward.7} parent=1 // pred_check
      _
    $region23: #{cnn_forward.7} parent=1 // pred_check_branch
      %362 = sbr.rel (0) target = $region25
    $region24: #{cnn_forward.7} parent=1 // pred_region
      %364 = vsyncadd [#allocation4], 0
      %s366 = sshll.u32 [#allocation7], 4
      %s367 = int_to_ptr.vmem [resolvable:$true] %s366
      %s368 = sshll.u32 %s3, 4
      %s369 = int_to_ptr.hbm [resolvable:$true] %s368
      %371 = dma.vmem_to_hbm [thread:$0]  %s367, 32, %s369, [#allocation4]
    $region25: #{cnn_forward.7} parent=1 // pred_fallthru
      _
    // Predicated region
    $region26: #{cnn_forward.7} parent=1 // pred_check
      _
    $region27: #{cnn_forward.7} parent=1 // pred_check_branch
      %373 = sbr.rel (0) target = $region29
    $region28: #{cnn_forward.7} parent=1 // pred_region
      %375 = dma.done [#allocation4], 32
    $region29: #{cnn_forward.7} parent=1 // pred_fallthru
      _
    %376 = vsyncpa [#allocation3], 1
    %377 = vsyncpa [#allocation6], 1
    %378 = vsyncpa [#allocation4], 1

// kernel: cnn_forward.5
$region0: #{cnn_forward.5}
  #allocation0 [shape = 'u32[]', space=smem, size = 0x4, offset = 0x4, fixed_abs, tag = 'smem constant byte address 0x4 - core index']
  #allocation1 [shape = 'u32[72,128]{1,0:T(1,128)}', space=vmem, size = 0x9000, scoped, tag = 'internal scratch']
  #allocation2 [shape = 'f32[224,64]{1,0:T(8,128)}', space=vmem, size = 0x1c000, scoped, tag = 'scratch operand']
  %s0 = inlined_call_operand.vmem [shape: f32[2,288,160], index: 0, kind: input, shape index: {}]
  %s1 = inlined_call_operand.vmem [shape: f32[5,160,64], index: 1, kind: input, shape index: {}]
  %s2 = inlined_call_operand.hbm [shape: f32[1,64], index: 2, kind: input, shape index: {}]
  %s3 = inlined_call_operand.vmem [shape: f32[2,7,7,64], index: 3, kind: output, shape index: {}]
  %s4 = sld [smem:[#allocation0]]
  $region49: #{cnn_forward.5} parent=0
    _
  %s6 = ssub.s32 1, %s4
  %s7 = scalar_select 0, %s6, %s4
  $region1: #{cnn_forward.5} parent=0
    #allocation3 [shape = 'u8[512]{0}', space=vmem, size = 0x400, scoped, tag = 'input window, operand 2, single buffered']
    #allocation4 [shape = 's32[2]{0}', space=sflag, size = 0x8, scoped, tag = 'scoped memory for cnn_forward.5']
    %8 = vsyncpa [#allocation4], 0
    loop: start=0, step=1, limit=4
    $region2: #{cnn_forward.5} parent=1 // loop_pre_header
      _
    $region3: #{cnn_forward.5} parent=1 // loop_header
      %s10 = sphi 0, %s14
      %p11 = scmp.ge.s32.totalorder %s10, 4
      %s20 = sphi 0, %s22
      %s23 = sphi 0, %s20
      %s24 = sphi 0, %s23
      %s40 = sphi 0, %s24
      %s44 = sphi 0, %s44
      %s46 = sphi 0, %s44
      %s47 = sphi 0, %s46
      %s61 = sphi 0, %s47
      %s65 = sphi 0, %s65
      %s67 = sphi 0, %s65
      %s68 = sphi 0, %s67
      %s82 = sphi 0, %s68
      %s88 = sphi 0, %s90
      %s91 = sphi 0, %s88
      %s92 = sphi 0, %s91
      %s108 = sphi 0, %s92
    $region4: #{cnn_forward.5} parent=1 // loop_header_branch
      %13 = sbr.rel (%p11) target = $region8
    $region5: #{cnn_forward.5} parent=1 // loop_body
      %s15 = ssub.s32 %s10, 1
      %s16 = ssub.s32 %s10, 2
      %s17 = sadd.s32 %s10, 1
      %s18 = ssub.s32 %s10, %s17
      %p19 = scmp.eq.s32.totalorder %s18, 0
      %s21 = sadd.s32 %s20, 1
      %s22 = scalar_select %p19, %s20, %s21
      %p25 = pneg %p19
      %p26 = scmp.eq.s32.totalorder %s10, 1
      %p27 = por %p25, %p26
      %p28 = scmp.ne.s32.totalorder %s20, %s23
      %p29 = scmp.eq.s32.totalorder %s10, 0
      %p30 = por %p28, %p29
      %p31 = scmp.ne.s32.totalorder %s20, %s23
      %p32 = scmp.eq.s32.totalorder %s15, 1
      %p33 = por %p31, %p32
      %p34 = scmp.ne.s32.totalorder %s23, %s24
      %p35 = scmp.eq.s32.totalorder %s15, 0
      %p36 = por %p34, %p35
      %p37 = scmp.ne.s32.totalorder %s23, %s24
      %p38 = scmp.eq.s32.totalorder %s16, 1
      %p39 = por %p37, %p38
      %p41 = scmp.ne.s32.totalorder %s24, %s40
      %p42 = scmp.eq.s32.totalorder %s16, 0
      %p43 = por %p41, %p42
      %s45 = sadd.s32 %s44, 1
      %p48 = scmp.eq.s32.totalorder %s10, 1
      %p49 = scmp.ne.s32.totalorder %s44, %s46
      %p50 = scmp.eq.s32.totalorder %s10, 0
      %p51 = por %p49, %p50
      %p52 = scmp.ne.s32.totalorder %s44, %s46
      %p53 = scmp.eq.s32.totalorder %s15, 1
      %p54 = por %p52, %p53
      %p55 = scmp.ne.s32.totalorder %s46, %s47
      %p56 = scmp.eq.s32.totalorder %s15, 0
      %p57 = por %p55, %p56
      %p58 = scmp.ne.s32.totalorder %s46, %s47
      %p59 = scmp.eq.s32.totalorder %s16, 1
      %p60 = por %p58, %p59
      %p62 = scmp.ne.s32.totalorder %s47, %s61
      %p63 = scmp.eq.s32.totalorder %s16, 0
      %p64 = por %p62, %p63
      %s66 = sadd.s32 %s65, 1
      %p69 = scmp.eq.s32.totalorder %s10, 1
      %p70 = scmp.ne.s32.totalorder %s65, %s67
      %p71 = scmp.eq.s32.totalorder %s10, 0
      %p72 = por %p70, %p71
      %p73 = scmp.ne.s32.totalorder %s65, %s67
      %p74 = scmp.eq.s32.totalorder %s15, 1
      %p75 = por %p73, %p74
      %p76 = scmp.ne.s32.totalorder %s67, %s68
      %p77 = scmp.eq.s32.totalorder %s15, 0
      %p78 = por %p76, %p77
      %p79 = scmp.ne.s32.totalorder %s67, %s68
      %p80 = scmp.eq.s32.totalorder %s16, 1
      %p81 = por %p79, %p80
      %p83 = scmp.ne.s32.totalorder %s68, %s82
      %p84 = scmp.eq.s32.totalorder %s16, 0
      %p85 = por %p83, %p84
      %s86 = ssub.s32 %s10, %s17
      %p87 = scmp.eq.s32.totalorder %s86, 0
      %s89 = sadd.s32 %s88, 1
      %s90 = scalar_select %p87, %s88, %s89
      %p93 = pneg %p87
      %p94 = scmp.eq.s32.totalorder %s10, 1
      %p95 = por %p93, %p94
      %p96 = scmp.ne.s32.totalorder %s88, %s91
      %p97 = scmp.eq.s32.totalorder %s10, 0
      %p98 = por %p96, %p97
      %p99 = scmp.ne.s32.totalorder %s88, %s91
      %p100 = scmp.eq.s32.totalorder %s15, 1
      %p101 = por %p99, %p100
      %p102 = scmp.ne.s32.totalorder %s91, %s92
      %p103 = scmp.eq.s32.totalorder %s15, 0
      %p104 = por %p102, %p103
      %p105 = scmp.ne.s32.totalorder %s91, %s92
      %p106 = scmp.eq.s32.totalorder %s16, 1
      %p107 = por %p105, %p106
      %p109 = scmp.ne.s32.totalorder %s92, %s108
      %p110 = scmp.eq.s32.totalorder %s16, 0
      %p111 = por %p109, %p110
      %p112 = scmp.le.s32.totalorder 1, %s10
      %p113 = scmp.lt.s32.totalorder %s10, 3
      %p114 = pnand %p112, %p113
      %p115 = pneg %p114
      // Predicated region
      $region9: #{cnn_forward.5} parent=5 // pred_check
        _
      $region10: #{cnn_forward.5} parent=5 // pred_check_branch
        %117 = sbr.rel (%p114) target = $region12
      $region11: #{cnn_forward.5} parent=5 // pred_region
        %s118 = ssub.s32 %s10, 1
        // Predicated region
        $region13: #{cnn_forward.5} parent=11 // pred_check
          %p119 = pneg %p57
        $region14: #{cnn_forward.5} parent=11 // pred_check_branch
          %121 = sbr.rel (%p119) target = $region16
        $region15: #{cnn_forward.5} parent=11 // pred_region
          _
        $region16: #{cnn_forward.5} parent=11 // pred_fallthru
          _
        // Predicated region
        $region17: #{cnn_forward.5} parent=11 // pred_check
          %p122 = pneg %p78
        $region18: #{cnn_forward.5} parent=11 // pred_check_branch
          %124 = sbr.rel (%p122) target = $region20
        $region19: #{cnn_forward.5} parent=11 // pred_region
          %126 = vsyncadd [#allocation4], 0
          %s128 = sshll.u32 %s2, 4
          %s129 = int_to_ptr.hbm [resolvable:$true] %s128
          %s130 = sshll.u32 [#allocation3], 4
          %s131 = int_to_ptr.vmem [resolvable:$true] %s130
          %133 = dma.hbm_to_vmem [thread:$0]  %s129, 16, %s131, [#allocation4]
        $region20: #{cnn_forward.5} parent=11 // pred_fallthru
          _
      $region12: #{cnn_forward.5} parent=5 // pred_fallthru
        _
      %p134 = scmp.lt.s32.totalorder %s10, 2
      // Predicated region
      $region21: #{cnn_forward.5} parent=5 // pred_check
        %p135 = pneg %p134
      $region22: #{cnn_forward.5} parent=5 // pred_check_branch
        %137 = sbr.rel (%p135) target = $region24
      $region23: #{cnn_forward.5} parent=5 // pred_region
        // Predicated region
        $region25: #{cnn_forward.5} parent=23 // pred_check
          %p138 = pneg %p30
        $region26: #{cnn_forward.5} parent=23 // pred_check_branch
          %140 = sbr.rel (%p138) target = $region28
        $region27: #{cnn_forward.5} parent=23 // pred_region
          %p141 = scmp.lt.s32.totalorder %s10, 1
          %s142 = scalar_select %p141, %s10, 1
          %s143 = smul.addr %s142, 72
          %s144 = smul.addr %s143, 8
          %s145 = scalar_lea.vmem %s0, %s144
        $region28: #{cnn_forward.5} parent=23 // pred_fallthru
          _
      $region24: #{cnn_forward.5} parent=5 // pred_fallthru
        _
      %p146 = scmp.le.s32.totalorder 1, %s10
      %p147 = scmp.lt.s32.totalorder %s10, 3
      %p148 = pnand %p146, %p147
      %p149 = pneg %p148
      // Predicated region
      $region29: #{cnn_forward.5} parent=5 // pred_check
        _
      $region30: #{cnn_forward.5} parent=5 // pred_check_branch
        %151 = sbr.rel (%p148) target = $region32
      $region31: #{cnn_forward.5} parent=5 // pred_region
        %s152 = ssub.s32 %s10, 1
        // Predicated region
        $region33: #{cnn_forward.5} parent=31 // pred_check
          %p153 = pneg %p78
        $region34: #{cnn_forward.5} parent=31 // pred_check_branch
          %155 = sbr.rel (%p153) target = $region36
        $region35: #{cnn_forward.5} parent=31 // pred_region
          %157 = dma.done [#allocation4], 16
        $region36: #{cnn_forward.5} parent=31 // pred_fallthru
          _
        %p158 = scmp.lt.s32.totalorder %s15, 1
        %s159 = scalar_select %p158, %s15, 1
        %s160 = smul.addr %s159, 72
        %s161 = smul.addr %s160, 8
        %s162 = scalar_lea.vmem %s0, %s161
        %p163 = pneg %p36
        %p164 = pneg %p33
        %p165 = pneg %p57
        %p166 = pneg %p54
        %p167 = pneg %p78
        %p168 = pneg %p75
        %p169 = pneg %p104
        %p170 = pneg %p101
        %p171 = scmp.lt.s32.totalorder %s15, 1
        %s172 = scalar_select %p171, %s15, 1
        %s173 = smul.addr %s172, 7
        %s174 = smul.addr %s173, 8
        %s175 = scalar_lea.vmem %s3, %s174
        %p176 = scmp.lt.s32.totalorder %s15, 1
        %s177 = scalar_select %p176, %s15, 1
        %s178 = smul.addr %s177, 72
        %s179 = smul.addr %s178, 8
        %s180 = scalar_lea.vmem %s0, %s179
        %p181 = scmp.lt.s32.totalorder %s15, 1
        %s182 = scalar_select %p181, %s15, 1
        %s183 = smul.addr %s182, 7
        %s184 = smul.addr %s183, 8
        %s185 = scalar_lea.vmem %s3, %s184
        %v186 = vld [vmem:[%s180] sm:$0xff]
        %v187 = vld [vmem:[%s180 + $0x8] sm:$0xff]
        %v188 = vld [vmem:[%s180 + $0x10] sm:$0xff]
        %v189 = vld [vmem:[%s180 + $0x18] sm:$0xff]
        %v190 = vld [vmem:[%s180 + $0x20] sm:$0xff]
        %v191 = vld [vmem:[%s180 + $0x28] sm:$0xff]
        %v192 = vld [vmem:[%s180 + $0x30] sm:$0xff]
        %v193 = vld [vmem:[%s180 + $0x38] sm:$0xff]
        %v194 = vld [vmem:[%s180 + $0x40] sm:$0xff]
        %v195 = vld [vmem:[%s180 + $0x48] sm:$0xff]
        %v196 = vld [vmem:[%s180 + $0x50] sm:$0xff]
        %v197 = vld [vmem:[%s180 + $0x58] sm:$0xff]
        %v198 = vld [vmem:[%s180 + $0x60] sm:$0xff]
        %v199 = vld [vmem:[%s180 + $0x68] sm:$0xff]
        %v200 = vld [vmem:[%s180 + $0x70] sm:$0xff]
        %v201 = vld [vmem:[%s180 + $0x78] sm:$0xff]
        %v202 = vld [vmem:[%s180 + $0x80] sm:$0xff]
        %v203 = vld [vmem:[%s180 + $0x88] sm:$0xff]
        %v204 = vld [vmem:[%s180 + $0x90] sm:$0xff]
        %v205 = vld [vmem:[%s180 + $0x98] sm:$0xff]
        %v206 = vld [vmem:[%s180 + $0xa0] sm:$0xff]
        %v207 = vld [vmem:[%s180 + $0xa8] sm:$0xff]
        %v208 = vld [vmem:[%s180 + $0xb0] sm:$0xff]
        %v209 = vld [vmem:[%s180 + $0xb8] sm:$0xff]
        %v210 = vld [vmem:[%s180 + $0xc0] sm:$0xff]
        %v211 = vld [vmem:[%s180 + $0xc8] sm:$0xff]
        %v212 = vld [vmem:[%s180 + $0xd0] sm:$0xff]
        %v213 = vld [vmem:[%s180 + $0xd8] sm:$0xff]
        %v214 = vld [vmem:[%s180 + $0xe0] sm:$0xff]
        %v215 = vld [vmem:[%s180 + $0xe8] sm:$0xff]
        %v216 = vld [vmem:[%s180 + $0xf0] sm:$0xff]
        %v217 = vld [vmem:[%s180 + $0xf8] sm:$0xff]
        %v218 = vld [vmem:[%s180 + $0x100] sm:$0xff]
        %v219 = vld [vmem:[%s180 + $0x108] sm:$0xff]
        %v220 = vld [vmem:[%s180 + $0x110] sm:$0xff]
        %v221 = vld [vmem:[%s180 + $0x118] sm:$0xff]
        %v222 = vld [vmem:[%s180 + $0x120] sm:$0xff]
        %v223 = vld [vmem:[%s180 + $0x128] sm:$0xff]
        %v224 = vld [vmem:[%s180 + $0x130] sm:$0xff]
        %v225 = vld [vmem:[%s180 + $0x138] sm:$0xff]
        %v226 = vld [vmem:[%s180 + $0x140] sm:$0xff]
        %v227 = vld [vmem:[%s180 + $0x148] sm:$0xff]
        %v228 = vld [vmem:[%s180 + $0x150] sm:$0xff]
        %v229 = vld [vmem:[%s180 + $0x158] sm:$0xff]
        %v230 = vld [vmem:[%s180 + $0x160] sm:$0xff]
        %v231 = vld [vmem:[%s180 + $0x168] sm:$0xff]
        %v232 = vld [vmem:[%s180 + $0x170] sm:$0xff]
        %v233 = vld [vmem:[%s180 + $0x178] sm:$0xff]
        %v234 = vld [vmem:[%s180 + $0x180] sm:$0xff]
        %v235 = vld [vmem:[%s180 + $0x188] sm:$0xff]
        %v236 = vld [vmem:[%s180 + $0x190] sm:$0xff]
        %v237 = vld [vmem:[%s180 + $0x198] sm:$0xff]
        %v238 = vld [vmem:[%s180 + $0x1a0] sm:$0xff]
        %v239 = vld [vmem:[%s180 + $0x1a8] sm:$0xff]
        %v240 = vld [vmem:[%s180 + $0x1b0] sm:$0xff]
        %v241 = vld [vmem:[%s180 + $0x1b8] sm:$0xff]
        %v242 = vld [vmem:[%s1] sm:$0xff]
        %v243 = vld [vmem:[%s1 + $0x8] sm:$0xff]
        %v244 = vld [vmem:[%s1 + $0x10] sm:$0xff]
        %v245 = vld [vmem:[%s1 + $0x18] sm:$0xff]
        %v246 = vld [vmem:[%s1 + $0x20] sm:$0xff]
        %v247 = vld [vmem:[%s1 + $0x28] sm:$0xff]
        %v248 = vld [vmem:[%s1 + $0x30] sm:$0xff]
        %v249 = vld [vmem:[%s1 + $0x38] sm:$0xff]
        %v250 = vld [vmem:[%s1 + $0x40] sm:$0xff]
        %v251 = vld [vmem:[%s1 + $0x48] sm:$0xff]
        %v252 = vld [vmem:[%s1 + $0x50] sm:$0xff]
        %v253 = vld [vmem:[%s1 + $0x58] sm:$0xff]
        %v254 = vld [vmem:[%s1 + $0x60] sm:$0xff]
        %v255 = vld [vmem:[%s1 + $0x68] sm:$0xff]
        %v256 = vld [vmem:[%s1 + $0x70] sm:$0xff]
        %v257 = vld [vmem:[%s1 + $0x78] sm:$0xff]
        %v258 = vld [vmem:[%s1 + $0x80] sm:$0xff]
        %v259 = vld [vmem:[%s1 + $0x88] sm:$0xff]
        %v260 = vld [vmem:[%s1 + $0x90] sm:$0xff]
        %v261 = vld [vmem:[%s1 + $0x98] sm:$0xff]
        %vm262 = vcmask 261120
        %v264 = vsel %vm262, %v187, 0
        %v267 = vsel %vm262, %v189, 0
        %v270 = vsel %vm262, %v191, 0
        %v273 = vsel %vm262, %v193, 0
        %v276 = vsel %vm262, %v195, 0
        %v279 = vsel %vm262, %v197, 0
        %v282 = vsel %vm262, %v199, 0
        %v285 = vsel %vm262, %v201, 0
        %v288 = vsel %vm262, %v203, 0
        %v291 = vsel %vm262, %v205, 0
        %v294 = vsel %vm262, %v207, 0
        %v297 = vsel %vm262, %v209, 0
        %v300 = vsel %vm262, %v211, 0
        %v303 = vsel %vm262, %v213, 0
        %v306 = vsel %vm262, %v215, 0
        %v309 = vsel %vm262, %v217, 0
        %v312 = vsel %vm262, %v219, 0
        %v315 = vsel %vm262, %v221, 0
        %v318 = vsel %vm262, %v223, 0
        %v321 = vsel %vm262, %v225, 0
        %v324 = vsel %vm262, %v227, 0
        %v327 = vsel %vm262, %v229, 0
        %v330 = vsel %vm262, %v231, 0
        %v333 = vsel %vm262, %v233, 0
        %v336 = vsel %vm262, %v235, 0
        %v339 = vsel %vm262, %v237, 0
        %v342 = vsel %vm262, %v239, 0
        %v345 = vsel %vm262, %v241, 0
        %347 = vmatpush.msra.mxu0 %v257
        %348 = vmatpush.msra.mxu0 %v256
        %349 = vmatpush.msra.mxu0 %v255
        %350 = vmatpush.msra.mxu0 %v254
        %351 = vmatpush.msra.mxu0 %v253
        %352 = vmatpush.msra.mxu0 %v252
        %353 = vmatpush.msra.mxu0 %v251
        %354 = vmatpush.msra.mxu0 %v250
        %355 = vmatpush.msra.mxu0 %v249
        %356 = vmatpush.msra.mxu0 %v248
        %357 = vmatpush.msra.mxu0 %v247
        %358 = vmatpush.msra.mxu0 %v246
        %359 = vmatpush.msra.mxu0 %v245
        %360 = vmatpush.msra.mxu0 %v244
        %361 = vmatpush.msra.mxu0 %v243
        %362 = vmatpush.msra.mxu0 %v242
        %363 = vmatmul.f32.gmra.mxu0 %v186
        %v364 = vpop.f32.mrf.mxu0
        %v365 = vadd.f32 0.0, %v364
        %366 = vmatmul.f32.gmra.mxu0 %v188
        %v367 = vpop.f32.mrf.mxu0
        %v368 = vadd.f32 0.0, %v367
        %369 = vmatmul.f32.gmra.mxu0 %v190
        %v370 = vpop.f32.mrf.mxu0
        %v371 = vadd.f32 0.0, %v370
        %372 = vmatmul.f32.gmra.mxu0 %v192
        %v373 = vpop.f32.mrf.mxu0
        %v374 = vadd.f32 0.0, %v373
        %375 = vmatmul.f32.gmra.mxu0 %v194
        %v376 = vpop.f32.mrf.mxu0
        %v377 = vadd.f32 0.0, %v376
        %378 = vmatmul.f32.gmra.mxu0 %v196
        %v379 = vpop.f32.mrf.mxu0
        %v380 = vadd.f32 0.0, %v379
        %381 = vmatmul.f32.gmra.mxu0 %v198
        %v382 = vpop.f32.mrf.mxu0
        %v383 = vadd.f32 0.0, %v382
        %384 = vmatmul.f32.gmra.mxu0 %v200
        %v385 = vpop.f32.mrf.mxu0
        %v386 = vadd.f32 0.0, %v385
        %387 = vmatmul.f32.gmra.mxu0 %v202
        %v388 = vpop.f32.mrf.mxu0
        %v389 = vadd.f32 0.0, %v388
        %390 = vmatmul.f32.gmra.mxu0 %v204
        %v391 = vpop.f32.mrf.mxu0
        %v392 = vadd.f32 0.0, %v391
        %393 = vmatmul.f32.gmra.mxu0 %v206
        %v394 = vpop.f32.mrf.mxu0
        %v395 = vadd.f32 0.0, %v394
        %396 = vmatmul.f32.gmra.mxu0 %v208
        %v397 = vpop.f32.mrf.mxu0
        %v398 = vadd.f32 0.0, %v397
        %399 = vmatmul.f32.gmra.mxu0 %v210
        %v400 = vpop.f32.mrf.mxu0
        %v401 = vadd.f32 0.0, %v400
        %402 = vmatmul.f32.gmra.mxu0 %v212
        %v403 = vpop.f32.mrf.mxu0
        %v404 = vadd.f32 0.0, %v403
        %405 = vmatmul.f32.gmra.mxu0 %v214
        %v406 = vpop.f32.mrf.mxu0
        %v407 = vadd.f32 0.0, %v406
        %408 = vmatmul.f32.gmra.mxu0 %v216
        %v409 = vpop.f32.mrf.mxu0
        %v410 = vadd.f32 0.0, %v409
        %411 = vmatmul.f32.gmra.mxu0 %v218
        %v412 = vpop.f32.mrf.mxu0
        %v413 = vadd.f32 0.0, %v412
        %414 = vmatmul.f32.gmra.mxu0 %v220
        %v415 = vpop.f32.mrf.mxu0
        %v416 = vadd.f32 0.0, %v415
        %417 = vmatmul.f32.gmra.mxu0 %v222
        %v418 = vpop.f32.mrf.mxu0
        %v419 = vadd.f32 0.0, %v418
        %420 = vmatmul.f32.gmra.mxu0 %v224
        %v421 = vpop.f32.mrf.mxu0
        %v422 = vadd.f32 0.0, %v421
        %423 = vmatmul.f32.gmra.mxu0 %v226
        %v424 = vpop.f32.mrf.mxu0
        %v425 = vadd.f32 0.0, %v424
        %426 = vmatmul.f32.gmra.mxu0 %v228
        %v427 = vpop.f32.mrf.mxu0
        %v428 = vadd.f32 0.0, %v427
        %429 = vmatmul.f32.gmra.mxu0 %v230
        %v430 = vpop.f32.mrf.mxu0
        %v431 = vadd.f32 0.0, %v430
        %432 = vmatmul.f32.gmra.mxu0 %v232
        %v433 = vpop.f32.mrf.mxu0
        %v434 = vadd.f32 0.0, %v433
        %435 = vmatmul.f32.gmra.mxu0 %v234
        %v436 = vpop.f32.mrf.mxu0
        %v437 = vadd.f32 0.0, %v436
        %438 = vmatmul.f32.gmra.mxu0 %v236
        %v439 = vpop.f32.mrf.mxu0
        %v440 = vadd.f32 0.0, %v439
        %441 = vmatmul.f32.gmra.mxu0 %v238
        %v442 = vpop.f32.mrf.mxu0
        %v443 = vadd.f32 0.0, %v442
        %444 = vmatmul.f32.gmra.mxu0 %v240
        %v445 = vpop.f32.mrf.mxu0
        %v446 = vadd.f32 0.0, %v445
        %447 = vdwg.mxu0
        %448 = vmatpush.msra.mxu0 0.0
        %449 = vmatpush.msra.mxu0 0.0
        %450 = vmatpush.msra.mxu0 0.0
        %451 = vmatpush.msra.mxu0 0.0
        %452 = vmatpush.msra.mxu0 0.0
        %453 = vmatpush.msra.mxu0 0.0
        %454 = vmatpush.msra.mxu0 0.0
        %455 = vmatpush.msra.mxu0 0.0
        %456 = vmatpush.msra.mxu0 0.0
        %457 = vmatpush.msra.mxu0 0.0
        %458 = vmatpush.msra.mxu0 0.0
        %459 = vmatpush.msra.mxu0 0.0
        %460 = vmatpush.msra.mxu0 %v261
        %461 = vmatpush.msra.mxu0 %v260
        %462 = vmatpush.msra.mxu0 %v259
        %463 = vmatpush.msra.mxu0 %v258
        %464 = vmatmul.f32.gmra.mxu0 %v264
        %v465 = vpop.f32.mrf.mxu0
        %v466 = vadd.f32 %v365, %v465
        %467 = vmatmul.f32.gmra.mxu0 %v267
        %v468 = vpop.f32.mrf.mxu0
        %v469 = vadd.f32 %v368, %v468
        %470 = vmatmul.f32.gmra.mxu0 %v270
        %v471 = vpop.f32.mrf.mxu0
        %v472 = vadd.f32 %v371, %v471
        %473 = vmatmul.f32.gmra.mxu0 %v273
        %v474 = vpop.f32.mrf.mxu0
        %v475 = vadd.f32 %v374, %v474
        %476 = vmatmul.f32.gmra.mxu0 %v276
        %v477 = vpop.f32.mrf.mxu0
        %v478 = vadd.f32 %v377, %v477
        %479 = vmatmul.f32.gmra.mxu0 %v279
        %v480 = vpop.f32.mrf.mxu0
        %v481 = vadd.f32 %v380, %v480
        %482 = vmatmul.f32.gmra.mxu0 %v282
        %v483 = vpop.f32.mrf.mxu0
        %v484 = vadd.f32 %v383, %v483
        %485 = vmatmul.f32.gmra.mxu0 %v285
        %v486 = vpop.f32.mrf.mxu0
        %v487 = vadd.f32 %v386, %v486
        %488 = vmatmul.f32.gmra.mxu0 %v288
        %v489 = vpop.f32.mrf.mxu0
        %v490 = vadd.f32 %v389, %v489
        %491 = vmatmul.f32.gmra.mxu0 %v291
        %v492 = vpop.f32.mrf.mxu0
        %v493 = vadd.f32 %v392, %v492
        %494 = vmatmul.f32.gmra.mxu0 %v294
        %v495 = vpop.f32.mrf.mxu0
        %v496 = vadd.f32 %v395, %v495
        %497 = vmatmul.f32.gmra.mxu0 %v297
        %v498 = vpop.f32.mrf.mxu0
        %v499 = vadd.f32 %v398, %v498
        %500 = vmatmul.f32.gmra.mxu0 %v300
        %v501 = vpop.f32.mrf.mxu0
        %v502 = vadd.f32 %v401, %v501
        %503 = vmatmul.f32.gmra.mxu0 %v303
        %v504 = vpop.f32.mrf.mxu0
        %v505 = vadd.f32 %v404, %v504
        %506 = vmatmul.f32.gmra.mxu0 %v306
        %v507 = vpop.f32.mrf.mxu0
        %v508 = vadd.f32 %v407, %v507
        %509 = vmatmul.f32.gmra.mxu0 %v309
        %v510 = vpop.f32.mrf.mxu0
        %v511 = vadd.f32 %v410, %v510
        %512 = vmatmul.f32.gmra.mxu0 %v312
        %v513 = vpop.f32.mrf.mxu0
        %v514 = vadd.f32 %v413, %v513
        %515 = vmatmul.f32.gmra.mxu0 %v315
        %v516 = vpop.f32.mrf.mxu0
        %v517 = vadd.f32 %v416, %v516
        %518 = vmatmul.f32.gmra.mxu0 %v318
        %v519 = vpop.f32.mrf.mxu0
        %v520 = vadd.f32 %v419, %v519
        %521 = vmatmul.f32.gmra.mxu0 %v321
        %v522 = vpop.f32.mrf.mxu0
        %v523 = vadd.f32 %v422, %v522
        %524 = vmatmul.f32.gmra.mxu0 %v324
        %v525 = vpop.f32.mrf.mxu0
        %v526 = vadd.f32 %v425, %v525
        %527 = vmatmul.f32.gmra.mxu0 %v327
        %v528 = vpop.f32.mrf.mxu0
        %v529 = vadd.f32 %v428, %v528
        %530 = vmatmul.f32.gmra.mxu0 %v330
        %v531 = vpop.f32.mrf.mxu0
        %v532 = vadd.f32 %v431, %v531
        %533 = vmatmul.f32.gmra.mxu0 %v333
        %v534 = vpop.f32.mrf.mxu0
        %v535 = vadd.f32 %v434, %v534
        %536 = vmatmul.f32.gmra.mxu0 %v336
        %v537 = vpop.f32.mrf.mxu0
        %v538 = vadd.f32 %v437, %v537
        %539 = vmatmul.f32.gmra.mxu0 %v339
        %v540 = vpop.f32.mrf.mxu0
        %v541 = vadd.f32 %v440, %v540
        %542 = vmatmul.f32.gmra.mxu0 %v342
        %v543 = vpop.f32.mrf.mxu0
        %v544 = vadd.f32 %v443, %v543
        %545 = vmatmul.f32.gmra.mxu0 %v345
        %v546 = vpop.f32.mrf.mxu0
        %v547 = vadd.f32 %v446, %v546
        %548 = vdwg.mxu0
        %vm549 = vcmask 523264
        %550 = vst.msk [vmem:[#allocation2] sm:$0xff] %vm549, %v466
        %551 = vst.msk [vmem:[#allocation2 + $0x8] sm:$0xff] %vm549, %v469
        %552 = vst.msk [vmem:[#allocation2 + $0x10] sm:$0xff] %vm549, %v472
        %553 = vst.msk [vmem:[#allocation2 + $0x18] sm:$0xff] %vm549, %v475
        %554 = vst.msk [vmem:[#allocation2 + $0x20] sm:$0xff] %vm549, %v478
        %555 = vst.msk [vmem:[#allocation2 + $0x28] sm:$0xff] %vm549, %v481
        %556 = vst.msk [vmem:[#allocation2 + $0x30] sm:$0xff] %vm549, %v484
        %557 = vst.msk [vmem:[#allocation2 + $0x38] sm:$0xff] %vm549, %v487
        %558 = vst.msk [vmem:[#allocation2 + $0x40] sm:$0xff] %vm549, %v490
        %559 = vst.msk [vmem:[#allocation2 + $0x48] sm:$0xff] %vm549, %v493
        %560 = vst.msk [vmem:[#allocation2 + $0x50] sm:$0xff] %vm549, %v496
        %561 = vst.msk [vmem:[#allocation2 + $0x58] sm:$0xff] %vm549, %v499
        %562 = vst.msk [vmem:[#allocation2 + $0x60] sm:$0xff] %vm549, %v502
        %563 = vst.msk [vmem:[#allocation2 + $0x68] sm:$0xff] %vm549, %v505
        %564 = vst.msk [vmem:[#allocation2 + $0x70] sm:$0xff] %vm549, %v508
        %565 = vst.msk [vmem:[#allocation2 + $0x78] sm:$0xff] %vm549, %v511
        %566 = vst.msk [vmem:[#allocation2 + $0x80] sm:$0xff] %vm549, %v514
        %567 = vst.msk [vmem:[#allocation2 + $0x88] sm:$0xff] %vm549, %v517
        %568 = vst.msk [vmem:[#allocation2 + $0x90] sm:$0xff] %vm549, %v520
        %569 = vst.msk [vmem:[#allocation2 + $0x98] sm:$0xff] %vm549, %v523
        %570 = vst.msk [vmem:[#allocation2 + $0xa0] sm:$0xff] %vm549, %v526
        %571 = vst.msk [vmem:[#allocation2 + $0xa8] sm:$0xff] %vm549, %v529
        %572 = vst.msk [vmem:[#allocation2 + $0xb0] sm:$0xff] %vm549, %v532
        %573 = vst.msk [vmem:[#allocation2 + $0xb8] sm:$0xff] %vm549, %v535
        %574 = vst.msk [vmem:[#allocation2 + $0xc0] sm:$0xff] %vm549, %v538
        %575 = vst.msk [vmem:[#allocation2 + $0xc8] sm:$0xff] %vm549, %v541
        %576 = vst.msk [vmem:[#allocation2 + $0xd0] sm:$0xff] %vm549, %v544
        %577 = vst.msk [vmem:[#allocation2 + $0xd8] sm:$0xff] %vm549, %v547
        %v578 = vld [vmem:[#allocation2] sm:$0xff]
        %v579 = vld [vmem:[#allocation2 + $0x8] sm:$0xff]
        %v580 = vld [vmem:[#allocation2 + $0x10] sm:$0xff]
        %v581 = vld [vmem:[#allocation2 + $0x18] sm:$0xff]
        %v582 = vld [vmem:[#allocation2 + $0x20] sm:$0xff]
        %v583 = vld [vmem:[#allocation2 + $0x28] sm:$0xff]
        %v584 = vld [vmem:[#allocation2 + $0x30] sm:$0xff]
        %v585 = vld [vmem:[#allocation2 + $0x38] sm:$0xff]
        %v586 = vld [vmem:[#allocation2 + $0x40] sm:$0xff]
        %v587 = vld [vmem:[#allocation2 + $0x48] sm:$0xff]
        %v588 = vld [vmem:[#allocation2 + $0x50] sm:$0xff]
        %v589 = vld [vmem:[#allocation2 + $0x58] sm:$0xff]
        %v590 = vld [vmem:[#allocation2 + $0x60] sm:$0xff]
        %v591 = vld [vmem:[#allocation2 + $0x68] sm:$0xff]
        %v592 = vld [vmem:[#allocation2 + $0x70] sm:$0xff]
        %v593 = vld [vmem:[#allocation2 + $0x78] sm:$0xff]
        %v594 = vld [vmem:[#allocation2 + $0x80] sm:$0xff]
        %v595 = vld [vmem:[#allocation2 + $0x88] sm:$0xff]
        %v596 = vld [vmem:[#allocation2 + $0x90] sm:$0xff]
        %v597 = vld [vmem:[#allocation2 + $0x98] sm:$0xff]
        %v598 = vld [vmem:[#allocation2 + $0xa0] sm:$0xff]
        %v599 = vld [vmem:[#allocation2 + $0xa8] sm:$0xff]
        %v600 = vld [vmem:[#allocation2 + $0xb0] sm:$0xff]
        %v601 = vld [vmem:[#allocation2 + $0xb8] sm:$0xff]
        %v602 = vld [vmem:[#allocation2 + $0xc0] sm:$0xff]
        %v603 = vld [vmem:[#allocation2 + $0xc8] sm:$0xff]
        %v604 = vld [vmem:[#allocation2 + $0xd0] sm:$0xff]
        %v605 = vld [vmem:[#allocation2 + $0xd8] sm:$0xff]
        %v606 = vld [vmem:[%s180 + $0x20] sm:$0xff]
        %v607 = vld [vmem:[%s180 + $0x28] sm:$0xff]
        %v608 = vld [vmem:[%s180 + $0x30] sm:$0xff]
        %v609 = vld [vmem:[%s180 + $0x38] sm:$0xff]
        %v610 = vld [vmem:[%s180 + $0x40] sm:$0xff]
        %v611 = vld [vmem:[%s180 + $0x48] sm:$0xff]
        %v612 = vld [vmem:[%s180 + $0x50] sm:$0xff]
        %v613 = vld [vmem:[%s180 + $0x58] sm:$0xff]
        %v614 = vld [vmem:[%s180 + $0x60] sm:$0xff]
        %v615 = vld [vmem:[%s180 + $0x68] sm:$0xff]
        %v616 = vld [vmem:[%s180 + $0x70] sm:$0xff]
        %v617 = vld [vmem:[%s180 + $0x78] sm:$0xff]
        %v618 = vld [vmem:[%s180 + $0x80] sm:$0xff]
        %v619 = vld [vmem:[%s180 + $0x88] sm:$0xff]
        %v620 = vld [vmem:[%s180 + $0x90] sm:$0xff]
        %v621 = vld [vmem:[%s180 + $0x98] sm:$0xff]
        %v622 = vld [vmem:[%s180 + $0xa0] sm:$0xff]
        %v623 = vld [vmem:[%s180 + $0xa8] sm:$0xff]
        %v624 = vld [vmem:[%s180 + $0xb0] sm:$0xff]
        %v625 = vld [vmem:[%s180 + $0xb8] sm:$0xff]
        %v626 = vld [vmem:[%s180 + $0xc0] sm:$0xff]
        %v627 = vld [vmem:[%s180 + $0xc8] sm:$0xff]
        %v628 = vld [vmem:[%s180 + $0xd0] sm:$0xff]
        %v629 = vld [vmem:[%s180 + $0xd8] sm:$0xff]
        %v630 = vld [vmem:[%s180 + $0xe0] sm:$0xff]
        %v631 = vld [vmem:[%s180 + $0xe8] sm:$0xff]
        %v632 = vld [vmem:[%s180 + $0xf0] sm:$0xff]
        %v633 = vld [vmem:[%s180 + $0xf8] sm:$0xff]
        %v634 = vld [vmem:[%s180 + $0x100] sm:$0xff]
        %v635 = vld [vmem:[%s180 + $0x108] sm:$0xff]
        %v636 = vld [vmem:[%s180 + $0x110] sm:$0xff]
        %v637 = vld [vmem:[%s180 + $0x118] sm:$0xff]
        %v638 = vld [vmem:[%s180 + $0x120] sm:$0xff]
        %v639 = vld [vmem:[%s180 + $0x128] sm:$0xff]
        %v640 = vld [vmem:[%s180 + $0x130] sm:$0xff]
        %v641 = vld [vmem:[%s180 + $0x138] sm:$0xff]
        %v642 = vld [vmem:[%s180 + $0x140] sm:$0xff]
        %v643 = vld [vmem:[%s180 + $0x148] sm:$0xff]
        %v644 = vld [vmem:[%s180 + $0x150] sm:$0xff]
        %v645 = vld [vmem:[%s180 + $0x158] sm:$0xff]
        %v646 = vld [vmem:[%s180 + $0x160] sm:$0xff]
        %v647 = vld [vmem:[%s180 + $0x168] sm:$0xff]
        %v648 = vld [vmem:[%s180 + $0x170] sm:$0xff]
        %v649 = vld [vmem:[%s180 + $0x178] sm:$0xff]
        %v650 = vld [vmem:[%s180 + $0x180] sm:$0xff]
        %v651 = vld [vmem:[%s180 + $0x188] sm:$0xff]
        %v652 = vld [vmem:[%s180 + $0x190] sm:$0xff]
        %v653 = vld [vmem:[%s180 + $0x198] sm:$0xff]
        %v654 = vld [vmem:[%s180 + $0x1a0] sm:$0xff]
        %v655 = vld [vmem:[%s180 + $0x1a8] sm:$0xff]
        %v656 = vld [vmem:[%s180 + $0x1b0] sm:$0xff]
        %v657 = vld [vmem:[%s180 + $0x1b8] sm:$0xff]
        %v658 = vld [vmem:[%s180 + $0x1c0] sm:$0xff]
        %v659 = vld [vmem:[%s180 + $0x1c8] sm:$0xff]
        %v660 = vld [vmem:[%s180 + $0x1d0] sm:$0xff]
        %v661 = vld [vmem:[%s180 + $0x1d8] sm:$0xff]
        %s662 = scalar_lea.vmem %s1, 160
        %v663 = vld [vmem:[%s662] sm:$0xff]
        %v664 = vld [vmem:[%s662 + $0x8] sm:$0xff]
        %v665 = vld [vmem:[%s662 + $0x10] sm:$0xff]
        %v666 = vld [vmem:[%s662 + $0x18] sm:$0xff]
        %v667 = vld [vmem:[%s662 + $0x20] sm:$0xff]
        %v668 = vld [vmem:[%s662 + $0x28] sm:$0xff]
        %v669 = vld [vmem:[%s662 + $0x30] sm:$0xff]
        %v670 = vld [vmem:[%s662 + $0x38] sm:$0xff]
        %v671 = vld [vmem:[%s662 + $0x40] sm:$0xff]
        %v672 = vld [vmem:[%s662 + $0x48] sm:$0xff]
        %v673 = vld [vmem:[%s662 + $0x50] sm:$0xff]
        %v674 = vld [vmem:[%s662 + $0x58] sm:$0xff]
        %v675 = vld [vmem:[%s662 + $0x60] sm:$0xff]
        %v676 = vld [vmem:[%s662 + $0x68] sm:$0xff]
        %v677 = vld [vmem:[%s662 + $0x70] sm:$0xff]
        %v678 = vld [vmem:[%s662 + $0x78] sm:$0xff]
        %v679 = vld [vmem:[%s662 + $0x80] sm:$0xff]
        %v680 = vld [vmem:[%s662 + $0x88] sm:$0xff]
        %v681 = vld [vmem:[%s662 + $0x90] sm:$0xff]
        %v682 = vld [vmem:[%s662 + $0x98] sm:$0xff]
        %v684 = vsel %vm262, %v607, 0
        %v687 = vsel %vm262, %v609, 0
        %v690 = vsel %vm262, %v611, 0
        %v693 = vsel %vm262, %v613, 0
        %v696 = vsel %vm262, %v615, 0
        %v699 = vsel %vm262, %v617, 0
        %v702 = vsel %vm262, %v619, 0
        %v705 = vsel %vm262, %v621, 0
        %v708 = vsel %vm262, %v623, 0
        %v711 = vsel %vm262, %v625, 0
        %v714 = vsel %vm262, %v627, 0
        %v717 = vsel %vm262, %v629, 0
        %v720 = vsel %vm262, %v631, 0
        %v723 = vsel %vm262, %v633, 0
        %v726 = vsel %vm262, %v635, 0
        %v729 = vsel %vm262, %v637, 0
        %v732 = vsel %vm262, %v639, 0
        %v735 = vsel %vm262, %v641, 0
        %v738 = vsel %vm262, %v643, 0
        %v741 = vsel %vm262, %v645, 0
        %v744 = vsel %vm262, %v647, 0
        %v747 = vsel %vm262, %v649, 0
        %v750 = vsel %vm262, %v651, 0
        %v753 = vsel %vm262, %v653, 0
        %v756 = vsel %vm262, %v655, 0
        %v759 = vsel %vm262, %v657, 0
        %v762 = vsel %vm262, %v659, 0
        %v765 = vsel %vm262, %v661, 0
        %767 = vmatpush.msra.mxu0 %v678
        %768 = vmatpush.msra.mxu0 %v677
        %769 = vmatpush.msra.mxu0 %v676
        %770 = vmatpush.msra.mxu0 %v675
        %771 = vmatpush.msra.mxu0 %v674
        %772 = vmatpush.msra.mxu0 %v673
        %773 = vmatpush.msra.mxu0 %v672
        %774 = vmatpush.msra.mxu0 %v671
        %775 = vmatpush.msra.mxu0 %v670
        %776 = vmatpush.msra.mxu0 %v669
        %777 = vmatpush.msra.mxu0 %v668
        %778 = vmatpush.msra.mxu0 %v667
        %779 = vmatpush.msra.mxu0 %v666
        %780 = vmatpush.msra.mxu0 %v665
        %781 = vmatpush.msra.mxu0 %v664
        %782 = vmatpush.msra.mxu0 %v663
        %783 = vmatmul.f32.gmra.mxu0 %v606
        %v784 = vpop.f32.mrf.mxu0
        %v785 = vadd.f32 0.0, %v784
        %786 = vmatmul.f32.gmra.mxu0 %v608
        %v787 = vpop.f32.mrf.mxu0
        %v788 = vadd.f32 0.0, %v787
        %789 = vmatmul.f32.gmra.mxu0 %v610
        %v790 = vpop.f32.mrf.mxu0
        %v791 = vadd.f32 0.0, %v790
        %792 = vmatmul.f32.gmra.mxu0 %v612
        %v793 = vpop.f32.mrf.mxu0
        %v794 = vadd.f32 0.0, %v793
        %795 = vmatmul.f32.gmra.mxu0 %v614
        %v796 = vpop.f32.mrf.mxu0
        %v797 = vadd.f32 0.0, %v796
        %798 = vmatmul.f32.gmra.mxu0 %v616
        %v799 = vpop.f32.mrf.mxu0
        %v800 = vadd.f32 0.0, %v799
        %801 = vmatmul.f32.gmra.mxu0 %v618
        %v802 = vpop.f32.mrf.mxu0
        %v803 = vadd.f32 0.0, %v802
        %804 = vmatmul.f32.gmra.mxu0 %v620
        %v805 = vpop.f32.mrf.mxu0
        %v806 = vadd.f32 0.0, %v805
        %807 = vmatmul.f32.gmra.mxu0 %v622
        %v808 = vpop.f32.mrf.mxu0
        %v809 = vadd.f32 0.0, %v808
        %810 = vmatmul.f32.gmra.mxu0 %v624
        %v811 = vpop.f32.mrf.mxu0
        %v812 = vadd.f32 0.0, %v811
        %813 = vmatmul.f32.gmra.mxu0 %v626
        %v814 = vpop.f32.mrf.mxu0
        %v815 = vadd.f32 0.0, %v814
        %816 = vmatmul.f32.gmra.mxu0 %v628
        %v817 = vpop.f32.mrf.mxu0
        %v818 = vadd.f32 0.0, %v817
        %819 = vmatmul.f32.gmra.mxu0 %v630
        %v820 = vpop.f32.mrf.mxu0
        %v821 = vadd.f32 0.0, %v820
        %822 = vmatmul.f32.gmra.mxu0 %v632
        %v823 = vpop.f32.mrf.mxu0
        %v824 = vadd.f32 0.0, %v823
        %825 = vmatmul.f32.gmra.mxu0 %v634
        %v826 = vpop.f32.mrf.mxu0
        %v827 = vadd.f32 0.0, %v826
        %828 = vmatmul.f32.gmra.mxu0 %v636
        %v829 = vpop.f32.mrf.mxu0
        %v830 = vadd.f32 0.0, %v829
        %831 = vmatmul.f32.gmra.mxu0 %v638
        %v832 = vpop.f32.mrf.mxu0
        %v833 = vadd.f32 0.0, %v832
        %834 = vmatmul.f32.gmra.mxu0 %v640
        %v835 = vpop.f32.mrf.mxu0
        %v836 = vadd.f32 0.0, %v835
        %837 = vmatmul.f32.gmra.mxu0 %v642
        %v838 = vpop.f32.mrf.mxu0
        %v839 = vadd.f32 0.0, %v838
        %840 = vmatmul.f32.gmra.mxu0 %v644
        %v841 = vpop.f32.mrf.mxu0
        %v842 = vadd.f32 0.0, %v841
        %843 = vmatmul.f32.gmra.mxu0 %v646
        %v844 = vpop.f32.mrf.mxu0
        %v845 = vadd.f32 0.0, %v844
        %846 = vmatmul.f32.gmra.mxu0 %v648
        %v847 = vpop.f32.mrf.mxu0
        %v848 = vadd.f32 0.0, %v847
        %849 = vmatmul.f32.gmra.mxu0 %v650
        %v850 = vpop.f32.mrf.mxu0
        %v851 = vadd.f32 0.0, %v850
        %852 = vmatmul.f32.gmra.mxu0 %v652
        %v853 = vpop.f32.mrf.mxu0
        %v854 = vadd.f32 0.0, %v853
        %855 = vmatmul.f32.gmra.mxu0 %v654
        %v856 = vpop.f32.mrf.mxu0
        %v857 = vadd.f32 0.0, %v856
        %858 = vmatmul.f32.gmra.mxu0 %v656
        %v859 = vpop.f32.mrf.mxu0
        %v860 = vadd.f32 0.0, %v859
        %861 = vmatmul.f32.gmra.mxu0 %v658
        %v862 = vpop.f32.mrf.mxu0
        %v863 = vadd.f32 0.0, %v862
        %864 = vmatmul.f32.gmra.mxu0 %v660
        %v865 = vpop.f32.mrf.mxu0
        %v866 = vadd.f32 0.0, %v865
        %867 = vdwg.mxu0
        %868 = vmatpush.msra.mxu0 0.0
        %869 = vmatpush.msra.mxu0 0.0
        %870 = vmatpush.msra.mxu0 0.0
        %871 = vmatpush.msra.mxu0 0.0
        %872 = vmatpush.msra.mxu0 0.0
        %873 = vmatpush.msra.mxu0 0.0
        %874 = vmatpush.msra.mxu0 0.0
        %875 = vmatpush.msra.mxu0 0.0
        %876 = vmatpush.msra.mxu0 0.0
        %877 = vmatpush.msra.mxu0 0.0
        %878 = vmatpush.msra.mxu0 0.0
        %879 = vmatpush.msra.mxu0 0.0
        %880 = vmatpush.msra.mxu0 %v682
        %881 = vmatpush.msra.mxu0 %v681
        %882 = vmatpush.msra.mxu0 %v680
        %883 = vmatpush.msra.mxu0 %v679
        %884 = vmatmul.f32.gmra.mxu0 %v684
        %v885 = vpop.f32.mrf.mxu0
        %v886 = vadd.f32 %v785, %v885
        %887 = vmatmul.f32.gmra.mxu0 %v687
        %v888 = vpop.f32.mrf.mxu0
        %v889 = vadd.f32 %v788, %v888
        %890 = vmatmul.f32.gmra.mxu0 %v690
        %v891 = vpop.f32.mrf.mxu0
        %v892 = vadd.f32 %v791, %v891
        %893 = vmatmul.f32.gmra.mxu0 %v693
        %v894 = vpop.f32.mrf.mxu0
        %v895 = vadd.f32 %v794, %v894
        %896 = vmatmul.f32.gmra.mxu0 %v696
        %v897 = vpop.f32.mrf.mxu0
        %v898 = vadd.f32 %v797, %v897
        %899 = vmatmul.f32.gmra.mxu0 %v699
        %v900 = vpop.f32.mrf.mxu0
        %v901 = vadd.f32 %v800, %v900
        %902 = vmatmul.f32.gmra.mxu0 %v702
        %v903 = vpop.f32.mrf.mxu0
        %v904 = vadd.f32 %v803, %v903
        %905 = vmatmul.f32.gmra.mxu0 %v705
        %v906 = vpop.f32.mrf.mxu0
        %v907 = vadd.f32 %v806, %v906
        %908 = vmatmul.f32.gmra.mxu0 %v708
        %v909 = vpop.f32.mrf.mxu0
        %v910 = vadd.f32 %v809, %v909
        %911 = vmatmul.f32.gmra.mxu0 %v711
        %v912 = vpop.f32.mrf.mxu0
        %v913 = vadd.f32 %v812, %v912
        %914 = vmatmul.f32.gmra.mxu0 %v714
        %v915 = vpop.f32.mrf.mxu0
        %v916 = vadd.f32 %v815, %v915
        %917 = vmatmul.f32.gmra.mxu0 %v717
        %v918 = vpop.f32.mrf.mxu0
        %v919 = vadd.f32 %v818, %v918
        %920 = vmatmul.f32.gmra.mxu0 %v720
        %v921 = vpop.f32.mrf.mxu0
        %v922 = vadd.f32 %v821, %v921
        %923 = vmatmul.f32.gmra.mxu0 %v723
        %v924 = vpop.f32.mrf.mxu0
        %v925 = vadd.f32 %v824, %v924
        %926 = vmatmul.f32.gmra.mxu0 %v726
        %v927 = vpop.f32.mrf.mxu0
        %v928 = vadd.f32 %v827, %v927
        %929 = vmatmul.f32.gmra.mxu0 %v729
        %v930 = vpop.f32.mrf.mxu0
        %v931 = vadd.f32 %v830, %v930
        %932 = vmatmul.f32.gmra.mxu0 %v732
        %v933 = vpop.f32.mrf.mxu0
        %v934 = vadd.f32 %v833, %v933
        %935 = vmatmul.f32.gmra.mxu0 %v735
        %v936 = vpop.f32.mrf.mxu0
        %v937 = vadd.f32 %v836, %v936
        %938 = vmatmul.f32.gmra.mxu0 %v738
        %v939 = vpop.f32.mrf.mxu0
        %v940 = vadd.f32 %v839, %v939
        %941 = vmatmul.f32.gmra.mxu0 %v741
        %v942 = vpop.f32.mrf.mxu0
        %v943 = vadd.f32 %v842, %v942
        %944 = vmatmul.f32.gmra.mxu0 %v744
        %v945 = vpop.f32.mrf.mxu0
        %v946 = vadd.f32 %v845, %v945
        %947 = vmatmul.f32.gmra.mxu0 %v747
        %v948 = vpop.f32.mrf.mxu0
        %v949 = vadd.f32 %v848, %v948
        %950 = vmatmul.f32.gmra.mxu0 %v750
        %v951 = vpop.f32.mrf.mxu0
        %v952 = vadd.f32 %v851, %v951
        %953 = vmatmul.f32.gmra.mxu0 %v753
        %v954 = vpop.f32.mrf.mxu0
        %v955 = vadd.f32 %v854, %v954
        %956 = vmatmul.f32.gmra.mxu0 %v756
        %v957 = vpop.f32.mrf.mxu0
        %v958 = vadd.f32 %v857, %v957
        %959 = vmatmul.f32.gmra.mxu0 %v759
        %v960 = vpop.f32.mrf.mxu0
        %v961 = vadd.f32 %v860, %v960
        %962 = vmatmul.f32.gmra.mxu0 %v762
        %v963 = vpop.f32.mrf.mxu0
        %v964 = vadd.f32 %v863, %v963
        %965 = vmatmul.f32.gmra.mxu0 %v765
        %v966 = vpop.f32.mrf.mxu0
        %v967 = vadd.f32 %v866, %v966
        %968 = vdwg.mxu0
        %v969 = vadd.f32 %v578, %v886
        %v970 = vadd.f32 %v579, %v889
        %v971 = vadd.f32 %v580, %v892
        %v972 = vadd.f32 %v581, %v895
        %v973 = vadd.f32 %v582, %v898
        %v974 = vadd.f32 %v583, %v901
        %v975 = vadd.f32 %v584, %v904
        %v976 = vadd.f32 %v585, %v907
        %v977 = vadd.f32 %v586, %v910
        %v978 = vadd.f32 %v587, %v913
        %v979 = vadd.f32 %v588, %v916
        %v980 = vadd.f32 %v589, %v919
        %v981 = vadd.f32 %v590, %v922
        %v982 = vadd.f32 %v591, %v925
        %v983 = vadd.f32 %v592, %v928
        %v984 = vadd.f32 %v593, %v931
        %v985 = vadd.f32 %v594, %v934
        %v986 = vadd.f32 %v595, %v937
        %v987 = vadd.f32 %v596, %v940
        %v988 = vadd.f32 %v597, %v943
        %v989 = vadd.f32 %v598, %v946
        %v990 = vadd.f32 %v599, %v949
        %v991 = vadd.f32 %v600, %v952
        %v992 = vadd.f32 %v601, %v955
        %v993 = vadd.f32 %v602, %v958
        %v994 = vadd.f32 %v603, %v961
        %v995 = vadd.f32 %v604, %v964
        %v996 = vadd.f32 %v605, %v967
        %997 = vst.msk [vmem:[#allocation2] sm:$0xff] %vm549, %v969
        %998 = vst.msk [vmem:[#allocation2 + $0x8] sm:$0xff] %vm549, %v970
        %999 = vst.msk [vmem:[#allocation2 + $0x10] sm:$0xff] %vm549, %v971
        %1000 = vst.msk [vmem:[#allocation2 + $0x18] sm:$0xff] %vm549, %v972
        %1001 = vst.msk [vmem:[#allocation2 + $0x20] sm:$0xff] %vm549, %v973
        %1002 = vst.msk [vmem:[#allocation2 + $0x28] sm:$0xff] %vm549, %v974
        %1003 = vst.msk [vmem:[#allocation2 + $0x30] sm:$0xff] %vm549, %v975
        %1004 = vst.msk [vmem:[#allocation2 + $0x38] sm:$0xff] %vm549, %v976
        %1005 = vst.msk [vmem:[#allocation2 + $0x40] sm:$0xff] %vm549, %v977
        %1006 = vst.msk [vmem:[#allocation2 + $0x48] sm:$0xff] %vm549, %v978
        %1007 = vst.msk [vmem:[#allocation2 + $0x50] sm:$0xff] %vm549, %v979
        %1008 = vst.msk [vmem:[#allocation2 + $0x58] sm:$0xff] %vm549, %v980
        %1009 = vst.msk [vmem:[#allocation2 + $0x60] sm:$0xff] %vm549, %v981
        %1010 = vst.msk [vmem:[#allocation2 + $0x68] sm:$0xff] %vm549, %v982
        %1011 = vst.msk [vmem:[#allocation2 + $0x70] sm:$0xff] %vm549, %v983
        %1012 = vst.msk [vmem:[#allocation2 + $0x78] sm:$0xff] %vm549, %v984
        %1013 = vst.msk [vmem:[#allocation2 + $0x80] sm:$0xff] %vm549, %v985
        %1014 = vst.msk [vmem:[#allocation2 + $0x88] sm:$0xff] %vm549, %v986
        %1015 = vst.msk [vmem:[#allocation2 + $0x90] sm:$0xff] %vm549, %v987
        %1016 = vst.msk [vmem:[#allocation2 + $0x98] sm:$0xff] %vm549, %v988
        %1017 = vst.msk [vmem:[#allocation2 + $0xa0] sm:$0xff] %vm549, %v989
        %1018 = vst.msk [vmem:[#allocation2 + $0xa8] sm:$0xff] %vm549, %v990
        %1019 = vst.msk [vmem:[#allocation2 + $0xb0] sm:$0xff] %vm549, %v991
        %1020 = vst.msk [vmem:[#allocation2 + $0xb8] sm:$0xff] %vm549, %v992
        %1021 = vst.msk [vmem:[#allocation2 + $0xc0] sm:$0xff] %vm549, %v993
        %1022 = vst.msk [vmem:[#allocation2 + $0xc8] sm:$0xff] %vm549, %v994
        %1023 = vst.msk [vmem:[#allocation2 + $0xd0] sm:$0xff] %vm549, %v995
        %1024 = vst.msk [vmem:[#allocation2 + $0xd8] sm:$0xff] %vm549, %v996
        %v1025 = vld [vmem:[#allocation2] sm:$0xff]
        %v1026 = vld [vmem:[#allocation2 + $0x8] sm:$0xff]
        %v1027 = vld [vmem:[#allocation2 + $0x10] sm:$0xff]
        %v1028 = vld [vmem:[#allocation2 + $0x18] sm:$0xff]
        %v1029 = vld [vmem:[#allocation2 + $0x20] sm:$0xff]
        %v1030 = vld [vmem:[#allocation2 + $0x28] sm:$0xff]
        %v1031 = vld [vmem:[#allocation2 + $0x30] sm:$0xff]
        %v1032 = vld [vmem:[#allocation2 + $0x38] sm:$0xff]
        %v1033 = vld [vmem:[#allocation2 + $0x40] sm:$0xff]
        %v1034 = vld [vmem:[#allocation2 + $0x48] sm:$0xff]
        %v1035 = vld [vmem:[#allocation2 + $0x50] sm:$0xff]
        %v1036 = vld [vmem:[#allocation2 + $0x58] sm:$0xff]
        %v1037 = vld [vmem:[#allocation2 + $0x60] sm:$0xff]
        %v1038 = vld [vmem:[#allocation2 + $0x68] sm:$0xff]
        %v1039 = vld [vmem:[#allocation2 + $0x70] sm:$0xff]
        %v1040 = vld [vmem:[#allocation2 + $0x78] sm:$0xff]
        %v1041 = vld [vmem:[#allocation2 + $0x80] sm:$0xff]
        %v1042 = vld [vmem:[#allocation2 + $0x88] sm:$0xff]
        %v1043 = vld [vmem:[#allocation2 + $0x90] sm:$0xff]
        %v1044 = vld [vmem:[#allocation2 + $0x98] sm:$0xff]
        %v1045 = vld [vmem:[#allocation2 + $0xa0] sm:$0xff]
        %v1046 = vld [vmem:[#allocation2 + $0xa8] sm:$0xff]
        %v1047 = vld [vmem:[#allocation2 + $0xb0] sm:$0xff]
        %v1048 = vld [vmem:[#allocation2 + $0xb8] sm:$0xff]
        %v1049 = vld [vmem:[#allocation2 + $0xc0] sm:$0xff]
        %v1050 = vld [vmem:[#allocation2 + $0xc8] sm:$0xff]
        %v1051 = vld [vmem:[#allocation2 + $0xd0] sm:$0xff]
        %v1052 = vld [vmem:[#allocation2 + $0xd8] sm:$0xff]
        %v1053 = vld [vmem:[%s180 + $0x40] sm:$0xff]
        %v1054 = vld [vmem:[%s180 + $0x48] sm:$0xff]
        %v1055 = vld [vmem:[%s180 + $0x50] sm:$0xff]
        %v1056 = vld [vmem:[%s180 + $0x58] sm:$0xff]
        %v1057 = vld [vmem:[%s180 + $0x60] sm:$0xff]
        %v1058 = vld [vmem:[%s180 + $0x68] sm:$0xff]
        %v1059 = vld [vmem:[%s180 + $0x70] sm:$0xff]
        %v1060 = vld [vmem:[%s180 + $0x78] sm:$0xff]
        %v1061 = vld [vmem:[%s180 + $0x80] sm:$0xff]
        %v1062 = vld [vmem:[%s180 + $0x88] sm:$0xff]
        %v1063 = vld [vmem:[%s180 + $0x90] sm:$0xff]
        %v1064 = vld [vmem:[%s180 + $0x98] sm:$0xff]
        %v1065 = vld [vmem:[%s180 + $0xa0] sm:$0xff]
        %v1066 = vld [vmem:[%s180 + $0xa8] sm:$0xff]
        %v1067 = vld [vmem:[%s180 + $0xb0] sm:$0xff]
        %v1068 = vld [vmem:[%s180 + $0xb8] sm:$0xff]
        %v1069 = vld [vmem:[%s180 + $0xc0] sm:$0xff]
        %v1070 = vld [vmem:[%s180 + $0xc8] sm:$0xff]
        %v1071 = vld [vmem:[%s180 + $0xd0] sm:$0xff]
        %v1072 = vld [vmem:[%s180 + $0xd8] sm:$0xff]
        %v1073 = vld [vmem:[%s180 + $0xe0] sm:$0xff]
        %v1074 = vld [vmem:[%s180 + $0xe8] sm:$0xff]
        %v1075 = vld [vmem:[%s180 + $0xf0] sm:$0xff]
        %v1076 = vld [vmem:[%s180 + $0xf8] sm:$0xff]
        %v1077 = vld [vmem:[%s180 + $0x100] sm:$0xff]
        %v1078 = vld [vmem:[%s180 + $0x108] sm:$0xff]
        %v1079 = vld [vmem:[%s180 + $0x110] sm:$0xff]
        %v1080 = vld [vmem:[%s180 + $0x118] sm:$0xff]
        %v1081 = vld [vmem:[%s180 + $0x120] sm:$0xff]
        %v1082 = vld [vmem:[%s180 + $0x128] sm:$0xff]
        %v1083 = vld [vmem:[%s180 + $0x130] sm:$0xff]
        %v1084 = vld [vmem:[%s180 + $0x138] sm:$0xff]
        %v1085 = vld [vmem:[%s180 + $0x140] sm:$0xff]
        %v1086 = vld [vmem:[%s180 + $0x148] sm:$0xff]
        %v1087 = vld [vmem:[%s180 + $0x150] sm:$0xff]
        %v1088 = vld [vmem:[%s180 + $0x158] sm:$0xff]
        %v1089 = vld [vmem:[%s180 + $0x160] sm:$0xff]
        %v1090 = vld [vmem:[%s180 + $0x168] sm:$0xff]
        %v1091 = vld [vmem:[%s180 + $0x170] sm:$0xff]
        %v1092 = vld [vmem:[%s180 + $0x178] sm:$0xff]
        %v1093 = vld [vmem:[%s180 + $0x180] sm:$0xff]
        %v1094 = vld [vmem:[%s180 + $0x188] sm:$0xff]
        %v1095 = vld [vmem:[%s180 + $0x190] sm:$0xff]
        %v1096 = vld [vmem:[%s180 + $0x198] sm:$0xff]
        %v1097 = vld [vmem:[%s180 + $0x1a0] sm:$0xff]
        %v1098 = vld [vmem:[%s180 + $0x1a8] sm:$0xff]
        %v1099 = vld [vmem:[%s180 + $0x1b0] sm:$0xff]
        %v1100 = vld [vmem:[%s180 + $0x1b8] sm:$0xff]
        %v1101 = vld [vmem:[%s180 + $0x1c0] sm:$0xff]
        %v1102 = vld [vmem:[%s180 + $0x1c8] sm:$0xff]
        %v1103 = vld [vmem:[%s180 + $0x1d0] sm:$0xff]
        %v1104 = vld [vmem:[%s180 + $0x1d8] sm:$0xff]
        %v1105 = vld [vmem:[%s180 + $0x1e0] sm:$0xff]
        %v1106 = vld [vmem:[%s180 + $0x1e8] sm:$0xff]
        %v1107 = vld [vmem:[%s180 + $0x1f0] sm:$0xff]
        %v1108 = vld [vmem:[%s180 + $0x1f8] sm:$0xff]
        %s1109 = scalar_lea.vmem %s1, 320
        %v1110 = vld [vmem:[%s1109] sm:$0xff]
        %v1111 = vld [vmem:[%s1109 + $0x8] sm:$0xff]
        %v1112 = vld [vmem:[%s1109 + $0x10] sm:$0xff]
        %v1113 = vld [vmem:[%s1109 + $0x18] sm:$0xff]
        %v1114 = vld [vmem:[%s1109 + $0x20] sm:$0xff]
        %v1115 = vld [vmem:[%s1109 + $0x28] sm:$0xff]
        %v1116 = vld [vmem:[%s1109 + $0x30] sm:$0xff]
        %v1117 = vld [vmem:[%s1109 + $0x38] sm:$0xff]
        %v1118 = vld [vmem:[%s1109 + $0x40] sm:$0xff]
        %v1119 = vld [vmem:[%s1109 + $0x48] sm:$0xff]
        %v1120 = vld [vmem:[%s1109 + $0x50] sm:$0xff]
        %v1121 = vld [vmem:[%s1109 + $0x58] sm:$0xff]
        %v1122 = vld [vmem:[%s1109 + $0x60] sm:$0xff]
        %v1123 = vld [vmem:[%s1109 + $0x68] sm:$0xff]
        %v1124 = vld [vmem:[%s1109 + $0x70] sm:$0xff]
        %v1125 = vld [vmem:[%s1109 + $0x78] sm:$0xff]
        %v1126 = vld [vmem:[%s1109 + $0x80] sm:$0xff]
        %v1127 = vld [vmem:[%s1109 + $0x88] sm:$0xff]
        %v1128 = vld [vmem:[%s1109 + $0x90] sm:$0xff]
        %v1129 = vld [vmem:[%s1109 + $0x98] sm:$0xff]
        %v1131 = vsel %vm262, %v1054, 0
        %v1134 = vsel %vm262, %v1056, 0
        %v1137 = vsel %vm262, %v1058, 0
        %v1140 = vsel %vm262, %v1060, 0
        %v1143 = vsel %vm262, %v1062, 0
        %v1146 = vsel %vm262, %v1064, 0
        %v1149 = vsel %vm262, %v1066, 0
        %v1152 = vsel %vm262, %v1068, 0
        %v1155 = vsel %vm262, %v1070, 0
        %v1158 = vsel %vm262, %v1072, 0
        %v1161 = vsel %vm262, %v1074, 0
        %v1164 = vsel %vm262, %v1076, 0
        %v1167 = vsel %vm262, %v1078, 0
        %v1170 = vsel %vm262, %v1080, 0
        %v1173 = vsel %vm262, %v1082, 0
        %v1176 = vsel %vm262, %v1084, 0
        %v1179 = vsel %vm262, %v1086, 0
        %v1182 = vsel %vm262, %v1088, 0
        %v1185 = vsel %vm262, %v1090, 0
        %v1188 = vsel %vm262, %v1092, 0
        %v1191 = vsel %vm262, %v1094, 0
        %v1194 = vsel %vm262, %v1096, 0
        %v1197 = vsel %vm262, %v1098, 0
        %v1200 = vsel %vm262, %v1100, 0
        %v1203 = vsel %vm262, %v1102, 0
        %v1206 = vsel %vm262, %v1104, 0
        %v1209 = vsel %vm262, %v1106, 0
        %v1212 = vsel %vm262, %v1108, 0
        %1214 = vmatpush.msra.mxu0 %v1125
        %1215 = vmatpush.msra.mxu0 %v1124
        %1216 = vmatpush.msra.mxu0 %v1123
        %1217 = vmatpush.msra.mxu0 %v1122
        %1218 = vmatpush.msra.mxu0 %v1121
        %1219 = vmatpush.msra.mxu0 %v1120
        %1220 = vmatpush.msra.mxu0 %v1119
        %1221 = vmatpush.msra.mxu0 %v1118
        %1222 = vmatpush.msra.mxu0 %v1117
        %1223 = vmatpush.msra.mxu0 %v1116
        %1224 = vmatpush.msra.mxu0 %v1115
        %1225 = vmatpush.msra.mxu0 %v1114
        %1226 = vmatpush.msra.mxu0 %v1113
        %1227 = vmatpush.msra.mxu0 %v1112
        %1228 = vmatpush.msra.mxu0 %v1111
        %1229 = vmatpush.msra.mxu0 %v1110
        %1230 = vmatmul.f32.gmra.mxu0 %v1053
        %v1231 = vpop.f32.mrf.mxu0
        %v1232 = vadd.f32 0.0, %v1231
        %1233 = vmatmul.f32.gmra.mxu0 %v1055
        %v1234 = vpop.f32.mrf.mxu0
        %v1235 = vadd.f32 0.0, %v1234
        %1236 = vmatmul.f32.gmra.mxu0 %v1057
        %v1237 = vpop.f32.mrf.mxu0
        %v1238 = vadd.f32 0.0, %v1237
        %1239 = vmatmul.f32.gmra.mxu0 %v1059
        %v1240 = vpop.f32.mrf.mxu0
        %v1241 = vadd.f32 0.0, %v1240
        %1242 = vmatmul.f32.gmra.mxu0 %v1061
        %v1243 = vpop.f32.mrf.mxu0
        %v1244 = vadd.f32 0.0, %v1243
        %1245 = vmatmul.f32.gmra.mxu0 %v1063
        %v1246 = vpop.f32.mrf.mxu0
        %v1247 = vadd.f32 0.0, %v1246
        %1248 = vmatmul.f32.gmra.mxu0 %v1065
        %v1249 = vpop.f32.mrf.mxu0
        %v1250 = vadd.f32 0.0, %v1249
        %1251 = vmatmul.f32.gmra.mxu0 %v1067
        %v1252 = vpop.f32.mrf.mxu0
        %v1253 = vadd.f32 0.0, %v1252
        %1254 = vmatmul.f32.gmra.mxu0 %v1069
        %v1255 = vpop.f32.mrf.mxu0
        %v1256 = vadd.f32 0.0, %v1255
        %1257 = vmatmul.f32.gmra.mxu0 %v1071
        %v1258 = vpop.f32.mrf.mxu0
        %v1259 = vadd.f32 0.0, %v1258
        %1260 = vmatmul.f32.gmra.mxu0 %v1073
        %v1261 = vpop.f32.mrf.mxu0
        %v1262 = vadd.f32 0.0, %v1261
        %1263 = vmatmul.f32.gmra.mxu0 %v1075
        %v1264 = vpop.f32.mrf.mxu0
        %v1265 = vadd.f32 0.0, %v1264
        %1266 = vmatmul.f32.gmra.mxu0 %v1077
        %v1267 = vpop.f32.mrf.mxu0
        %v1268 = vadd.f32 0.0, %v1267
        %1269 = vmatmul.f32.gmra.mxu0 %v1079
        %v1270 = vpop.f32.mrf.mxu0
        %v1271 = vadd.f32 0.0, %v1270
        %1272 = vmatmul.f32.gmra.mxu0 %v1081
        %v1273 = vpop.f32.mrf.mxu0
        %v1274 = vadd.f32 0.0, %v1273
        %1275 = vmatmul.f32.gmra.mxu0 %v1083
        %v1276 = vpop.f32.mrf.mxu0
        %v1277 = vadd.f32 0.0, %v1276
        %1278 = vmatmul.f32.gmra.mxu0 %v1085
        %v1279 = vpop.f32.mrf.mxu0
        %v1280 = vadd.f32 0.0, %v1279
        %1281 = vmatmul.f32.gmra.mxu0 %v1087
        %v1282 = vpop.f32.mrf.mxu0
        %v1283 = vadd.f32 0.0, %v1282
        %1284 = vmatmul.f32.gmra.mxu0 %v1089
        %v1285 = vpop.f32.mrf.mxu0
        %v1286 = vadd.f32 0.0, %v1285
        %1287 = vmatmul.f32.gmra.mxu0 %v1091
        %v1288 = vpop.f32.mrf.mxu0
        %v1289 = vadd.f32 0.0, %v1288
        %1290 = vmatmul.f32.gmra.mxu0 %v1093
        %v1291 = vpop.f32.mrf.mxu0
        %v1292 = vadd.f32 0.0, %v1291
        %1293 = vmatmul.f32.gmra.mxu0 %v1095
        %v1294 = vpop.f32.mrf.mxu0
        %v1295 = vadd.f32 0.0, %v1294
        %1296 = vmatmul.f32.gmra.mxu0 %v1097
        %v1297 = vpop.f32.mrf.mxu0
        %v1298 = vadd.f32 0.0, %v1297
        %1299 = vmatmul.f32.gmra.mxu0 %v1099
        %v1300 = vpop.f32.mrf.mxu0
        %v1301 = vadd.f32 0.0, %v1300
        %1302 = vmatmul.f32.gmra.mxu0 %v1101
        %v1303 = vpop.f32.mrf.mxu0
        %v1304 = vadd.f32 0.0, %v1303
        %1305 = vmatmul.f32.gmra.mxu0 %v1103
        %v1306 = vpop.f32.mrf.mxu0
        %v1307 = vadd.f32 0.0, %v1306
        %1308 = vmatmul.f32.gmra.mxu0 %v1105
        %v1309 = vpop.f32.mrf.mxu0
        %v1310 = vadd.f32 0.0, %v1309
        %1311 = vmatmul.f32.gmra.mxu0 %v1107
        %v1312 = vpop.f32.mrf.mxu0
        %v1313 = vadd.f32 0.0, %v1312
        %1314 = vdwg.mxu0
        %1315 = vmatpush.msra.mxu0 0.0
        %1316 = vmatpush.msra.mxu0 0.0
        %1317 = vmatpush.msra.mxu0 0.0
        %1318 = vmatpush.msra.mxu0 0.0
        %1319 = vmatpush.msra.mxu0 0.0
        %1320 = vmatpush.msra.mxu0 0.0
        %1321 = vmatpush.msra.mxu0 0.0
        %1322 = vmatpush.msra.mxu0 0.0
        %1323 = vmatpush.msra.mxu0 0.0
        %1324 = vmatpush.msra.mxu0 0.0
        %1325 = vmatpush.msra.mxu0 0.0
        %1326 = vmatpush.msra.mxu0 0.0
        %1327 = vmatpush.msra.mxu0 %v1129
        %1328 = vmatpush.msra.mxu0 %v1128
        %1329 = vmatpush.msra.mxu0 %v1127
        %1330 = vmatpush.msra.mxu0 %v1126
        %1331 = vmatmul.f32.gmra.mxu0 %v1131
        %v1332 = vpop.f32.mrf.mxu0
        %v1333 = vadd.f32 %v1232, %v1332
        %1334 = vmatmul.f32.gmra.mxu0 %v1134
        %v1335 = vpop.f32.mrf.mxu0
        %v1336 = vadd.f32 %v1235, %v1335
        %1337 = vmatmul.f32.gmra.mxu0 %v1137
        %v1338 = vpop.f32.mrf.mxu0
        %v1339 = vadd.f32 %v1238, %v1338
        %1340 = vmatmul.f32.gmra.mxu0 %v1140
        %v1341 = vpop.f32.mrf.mxu0
        %v1342 = vadd.f32 %v1241, %v1341
        %1343 = vmatmul.f32.gmra.mxu0 %v1143
        %v1344 = vpop.f32.mrf.mxu0
        %v1345 = vadd.f32 %v1244, %v1344
        %1346 = vmatmul.f32.gmra.mxu0 %v1146
        %v1347 = vpop.f32.mrf.mxu0
        %v1348 = vadd.f32 %v1247, %v1347
        %1349 = vmatmul.f32.gmra.mxu0 %v1149
        %v1350 = vpop.f32.mrf.mxu0
        %v1351 = vadd.f32 %v1250, %v1350
        %1352 = vmatmul.f32.gmra.mxu0 %v1152
        %v1353 = vpop.f32.mrf.mxu0
        %v1354 = vadd.f32 %v1253, %v1353
        %1355 = vmatmul.f32.gmra.mxu0 %v1155
        %v1356 = vpop.f32.mrf.mxu0
        %v1357 = vadd.f32 %v1256, %v1356
        %1358 = vmatmul.f32.gmra.mxu0 %v1158
        %v1359 = vpop.f32.mrf.mxu0
        %v1360 = vadd.f32 %v1259, %v1359
        %1361 = vmatmul.f32.gmra.mxu0 %v1161
        %v1362 = vpop.f32.mrf.mxu0
        %v1363 = vadd.f32 %v1262, %v1362
        %1364 = vmatmul.f32.gmra.mxu0 %v1164
        %v1365 = vpop.f32.mrf.mxu0
        %v1366 = vadd.f32 %v1265, %v1365
        %1367 = vmatmul.f32.gmra.mxu0 %v1167
        %v1368 = vpop.f32.mrf.mxu0
        %v1369 = vadd.f32 %v1268, %v1368
        %1370 = vmatmul.f32.gmra.mxu0 %v1170
        %v1371 = vpop.f32.mrf.mxu0
        %v1372 = vadd.f32 %v1271, %v1371
        %1373 = vmatmul.f32.gmra.mxu0 %v1173
        %v1374 = vpop.f32.mrf.mxu0
        %v1375 = vadd.f32 %v1274, %v1374
        %1376 = vmatmul.f32.gmra.mxu0 %v1176
        %v1377 = vpop.f32.mrf.mxu0
        %v1378 = vadd.f32 %v1277, %v1377
        %1379 = vmatmul.f32.gmra.mxu0 %v1179
        %v1380 = vpop.f32.mrf.mxu0
        %v1381 = vadd.f32 %v1280, %v1380
        %1382 = vmatmul.f32.gmra.mxu0 %v1182
        %v1383 = vpop.f32.mrf.mxu0
        %v1384 = vadd.f32 %v1283, %v1383
        %1385 = vmatmul.f32.gmra.mxu0 %v1185
        %v1386 = vpop.f32.mrf.mxu0
        %v1387 = vadd.f32 %v1286, %v1386
        %1388 = vmatmul.f32.gmra.mxu0 %v1188
        %v1389 = vpop.f32.mrf.mxu0
        %v1390 = vadd.f32 %v1289, %v1389
        %1391 = vmatmul.f32.gmra.mxu0 %v1191
        %v1392 = vpop.f32.mrf.mxu0
        %v1393 = vadd.f32 %v1292, %v1392
        %1394 = vmatmul.f32.gmra.mxu0 %v1194
        %v1395 = vpop.f32.mrf.mxu0
        %v1396 = vadd.f32 %v1295, %v1395
        %1397 = vmatmul.f32.gmra.mxu0 %v1197
        %v1398 = vpop.f32.mrf.mxu0
        %v1399 = vadd.f32 %v1298, %v1398
        %1400 = vmatmul.f32.gmra.mxu0 %v1200
        %v1401 = vpop.f32.mrf.mxu0
        %v1402 = vadd.f32 %v1301, %v1401
        %1403 = vmatmul.f32.gmra.mxu0 %v1203
        %v1404 = vpop.f32.mrf.mxu0
        %v1405 = vadd.f32 %v1304, %v1404
        %1406 = vmatmul.f32.gmra.mxu0 %v1206
        %v1407 = vpop.f32.mrf.mxu0
        %v1408 = vadd.f32 %v1307, %v1407
        %1409 = vmatmul.f32.gmra.mxu0 %v1209
        %v1410 = vpop.f32.mrf.mxu0
        %v1411 = vadd.f32 %v1310, %v1410
        %1412 = vmatmul.f32.gmra.mxu0 %v1212
        %v1413 = vpop.f32.mrf.mxu0
        %v1414 = vadd.f32 %v1313, %v1413
        %1415 = vdwg.mxu0
        %v1416 = vadd.f32 %v1025, %v1333
        %v1417 = vadd.f32 %v1026, %v1336
        %v1418 = vadd.f32 %v1027, %v1339
        %v1419 = vadd.f32 %v1028, %v1342
        %v1420 = vadd.f32 %v1029, %v1345
        %v1421 = vadd.f32 %v1030, %v1348
        %v1422 = vadd.f32 %v1031, %v1351
        %v1423 = vadd.f32 %v1032, %v1354
        %v1424 = vadd.f32 %v1033, %v1357
        %v1425 = vadd.f32 %v1034, %v1360
        %v1426 = vadd.f32 %v1035, %v1363
        %v1427 = vadd.f32 %v1036, %v1366
        %v1428 = vadd.f32 %v1037, %v1369
        %v1429 = vadd.f32 %v1038, %v1372
        %v1430 = vadd.f32 %v1039, %v1375
        %v1431 = vadd.f32 %v1040, %v1378
        %v1432 = vadd.f32 %v1041, %v1381
        %v1433 = vadd.f32 %v1042, %v1384
        %v1434 = vadd.f32 %v1043, %v1387
        %v1435 = vadd.f32 %v1044, %v1390
        %v1436 = vadd.f32 %v1045, %v1393
        %v1437 = vadd.f32 %v1046, %v1396
        %v1438 = vadd.f32 %v1047, %v1399
        %v1439 = vadd.f32 %v1048, %v1402
        %v1440 = vadd.f32 %v1049, %v1405
        %v1441 = vadd.f32 %v1050, %v1408
        %v1442 = vadd.f32 %v1051, %v1411
        %v1443 = vadd.f32 %v1052, %v1414
        %1444 = vst.msk [vmem:[#allocation2] sm:$0xff] %vm549, %v1416
        %1445 = vst.msk [vmem:[#allocation2 + $0x8] sm:$0xff] %vm549, %v1417
        %1446 = vst.msk [vmem:[#allocation2 + $0x10] sm:$0xff] %vm549, %v1418
        %1447 = vst.msk [vmem:[#allocation2 + $0x18] sm:$0xff] %vm549, %v1419
        %1448 = vst.msk [vmem:[#allocation2 + $0x20] sm:$0xff] %vm549, %v1420
        %1449 = vst.msk [vmem:[#allocation2 + $0x28] sm:$0xff] %vm549, %v1421
        %1450 = vst.msk [vmem:[#allocation2 + $0x30] sm:$0xff] %vm549, %v1422
        %1451 = vst.msk [vmem:[#allocation2 + $0x38] sm:$0xff] %vm549, %v1423
        %1452 = vst.msk [vmem:[#allocation2 + $0x40] sm:$0xff] %vm549, %v1424
        %1453 = vst.msk [vmem:[#allocation2 + $0x48] sm:$0xff] %vm549, %v1425
        %1454 = vst.msk [vmem:[#allocation2 + $0x50] sm:$0xff] %vm549, %v1426
        %1455 = vst.msk [vmem:[#allocation2 + $0x58] sm:$0xff] %vm549, %v1427
        %1456 = vst.msk [vmem:[#allocation2 + $0x60] sm:$0xff] %vm549, %v1428
        %1457 = vst.msk [vmem:[#allocation2 + $0x68] sm:$0xff] %vm549, %v1429
        %1458 = vst.msk [vmem:[#allocation2 + $0x70] sm:$0xff] %vm549, %v1430
        %1459 = vst.msk [vmem:[#allocation2 + $0x78] sm:$0xff] %vm549, %v1431
        %1460 = vst.msk [vmem:[#allocation2 + $0x80] sm:$0xff] %vm549, %v1432
        %1461 = vst.msk [vmem:[#allocation2 + $0x88] sm:$0xff] %vm549, %v1433
        %1462 = vst.msk [vmem:[#allocation2 + $0x90] sm:$0xff] %vm549, %v1434
        %1463 = vst.msk [vmem:[#allocation2 + $0x98] sm:$0xff] %vm549, %v1435
        %1464 = vst.msk [vmem:[#allocation2 + $0xa0] sm:$0xff] %vm549, %v1436
        %1465 = vst.msk [vmem:[#allocation2 + $0xa8] sm:$0xff] %vm549, %v1437
        %1466 = vst.msk [vmem:[#allocation2 + $0xb0] sm:$0xff] %vm549, %v1438
        %1467 = vst.msk [vmem:[#allocation2 + $0xb8] sm:$0xff] %vm549, %v1439
        %1468 = vst.msk [vmem:[#allocation2 + $0xc0] sm:$0xff] %vm549, %v1440
        %1469 = vst.msk [vmem:[#allocation2 + $0xc8] sm:$0xff] %vm549, %v1441
        %1470 = vst.msk [vmem:[#allocation2 + $0xd0] sm:$0xff] %vm549, %v1442
        %1471 = vst.msk [vmem:[#allocation2 + $0xd8] sm:$0xff] %vm549, %v1443
        %v1472 = vld [vmem:[#allocation2] sm:$0xff]
        %v1473 = vld [vmem:[#allocation2 + $0x8] sm:$0xff]
        %v1474 = vld [vmem:[#allocation2 + $0x10] sm:$0xff]
        %v1475 = vld [vmem:[#allocation2 + $0x18] sm:$0xff]
        %v1476 = vld [vmem:[#allocation2 + $0x20] sm:$0xff]
        %v1477 = vld [vmem:[#allocation2 + $0x28] sm:$0xff]
        %v1478 = vld [vmem:[#allocation2 + $0x30] sm:$0xff]
        %v1479 = vld [vmem:[#allocation2 + $0x38] sm:$0xff]
        %v1480 = vld [vmem:[#allocation2 + $0x40] sm:$0xff]
        %v1481 = vld [vmem:[#allocation2 + $0x48] sm:$0xff]
        %v1482 = vld [vmem:[#allocation2 + $0x50] sm:$0xff]
        %v1483 = vld [vmem:[#allocation2 + $0x58] sm:$0xff]
        %v1484 = vld [vmem:[#allocation2 + $0x60] sm:$0xff]
        %v1485 = vld [vmem:[#allocation2 + $0x68] sm:$0xff]
        %v1486 = vld [vmem:[#allocation2 + $0x70] sm:$0xff]
        %v1487 = vld [vmem:[#allocation2 + $0x78] sm:$0xff]
        %v1488 = vld [vmem:[#allocation2 + $0x80] sm:$0xff]
        %v1489 = vld [vmem:[#allocation2 + $0x88] sm:$0xff]
        %v1490 = vld [vmem:[#allocation2 + $0x90] sm:$0xff]
        %v1491 = vld [vmem:[#allocation2 + $0x98] sm:$0xff]
        %v1492 = vld [vmem:[#allocation2 + $0xa0] sm:$0xff]
        %v1493 = vld [vmem:[#allocation2 + $0xa8] sm:$0xff]
        %v1494 = vld [vmem:[#allocation2 + $0xb0] sm:$0xff]
        %v1495 = vld [vmem:[#allocation2 + $0xb8] sm:$0xff]
        %v1496 = vld [vmem:[#allocation2 + $0xc0] sm:$0xff]
        %v1497 = vld [vmem:[#allocation2 + $0xc8] sm:$0xff]
        %v1498 = vld [vmem:[#allocation2 + $0xd0] sm:$0xff]
        %v1499 = vld [vmem:[#allocation2 + $0xd8] sm:$0xff]
        %v1500 = vld [vmem:[%s180 + $0x60] sm:$0xff]
        %v1501 = vld [vmem:[%s180 + $0x68] sm:$0xff]
        %v1502 = vld [vmem:[%s180 + $0x70] sm:$0xff]
        %v1503 = vld [vmem:[%s180 + $0x78] sm:$0xff]
        %v1504 = vld [vmem:[%s180 + $0x80] sm:$0xff]
        %v1505 = vld [vmem:[%s180 + $0x88] sm:$0xff]
        %v1506 = vld [vmem:[%s180 + $0x90] sm:$0xff]
        %v1507 = vld [vmem:[%s180 + $0x98] sm:$0xff]
        %v1508 = vld [vmem:[%s180 + $0xa0] sm:$0xff]
        %v1509 = vld [vmem:[%s180 + $0xa8] sm:$0xff]
        %v1510 = vld [vmem:[%s180 + $0xb0] sm:$0xff]
        %v1511 = vld [vmem:[%s180 + $0xb8] sm:$0xff]
        %v1512 = vld [vmem:[%s180 + $0xc0] sm:$0xff]
        %v1513 = vld [vmem:[%s180 + $0xc8] sm:$0xff]
        %v1514 = vld [vmem:[%s180 + $0xd0] sm:$0xff]
        %v1515 = vld [vmem:[%s180 + $0xd8] sm:$0xff]
        %v1516 = vld [vmem:[%s180 + $0xe0] sm:$0xff]
        %v1517 = vld [vmem:[%s180 + $0xe8] sm:$0xff]
        %v1518 = vld [vmem:[%s180 + $0xf0] sm:$0xff]
        %v1519 = vld [vmem:[%s180 + $0xf8] sm:$0xff]
        %v1520 = vld [vmem:[%s180 + $0x100] sm:$0xff]
        %v1521 = vld [vmem:[%s180 + $0x108] sm:$0xff]
        %v1522 = vld [vmem:[%s180 + $0x110] sm:$0xff]
        %v1523 = vld [vmem:[%s180 + $0x118] sm:$0xff]
        %v1524 = vld [vmem:[%s180 + $0x120] sm:$0xff]
        %v1525 = vld [vmem:[%s180 + $0x128] sm:$0xff]
        %v1526 = vld [vmem:[%s180 + $0x130] sm:$0xff]
        %v1527 = vld [vmem:[%s180 + $0x138] sm:$0xff]
        %v1528 = vld [vmem:[%s180 + $0x140] sm:$0xff]
        %v1529 = vld [vmem:[%s180 + $0x148] sm:$0xff]
        %v1530 = vld [vmem:[%s180 + $0x150] sm:$0xff]
        %v1531 = vld [vmem:[%s180 + $0x158] sm:$0xff]
        %v1532 = vld [vmem:[%s180 + $0x160] sm:$0xff]
        %v1533 = vld [vmem:[%s180 + $0x168] sm:$0xff]
        %v1534 = vld [vmem:[%s180 + $0x170] sm:$0xff]
        %v1535 = vld [vmem:[%s180 + $0x178] sm:$0xff]
        %v1536 = vld [vmem:[%s180 + $0x180] sm:$0xff]
        %v1537 = vld [vmem:[%s180 + $0x188] sm:$0xff]
        %v1538 = vld [vmem:[%s180 + $0x190] sm:$0xff]
        %v1539 = vld [vmem:[%s180 + $0x198] sm:$0xff]
        %v1540 = vld [vmem:[%s180 + $0x1a0] sm:$0xff]
        %v1541 = vld [vmem:[%s180 + $0x1a8] sm:$0xff]
        %v1542 = vld [vmem:[%s180 + $0x1b0] sm:$0xff]
        %v1543 = vld [vmem:[%s180 + $0x1b8] sm:$0xff]
        %v1544 = vld [vmem:[%s180 + $0x1c0] sm:$0xff]
        %v1545 = vld [vmem:[%s180 + $0x1c8] sm:$0xff]
        %v1546 = vld [vmem:[%s180 + $0x1d0] sm:$0xff]
        %v1547 = vld [vmem:[%s180 + $0x1d8] sm:$0xff]
        %v1548 = vld [vmem:[%s180 + $0x1e0] sm:$0xff]
        %v1549 = vld [vmem:[%s180 + $0x1e8] sm:$0xff]
        %v1550 = vld [vmem:[%s180 + $0x1f0] sm:$0xff]
        %v1551 = vld [vmem:[%s180 + $0x1f8] sm:$0xff]
        %v1552 = vld [vmem:[%s180 + $0x200] sm:$0xff]
        %v1553 = vld [vmem:[%s180 + $0x208] sm:$0xff]
        %v1554 = vld [vmem:[%s180 + $0x210] sm:$0xff]
        %v1555 = vld [vmem:[%s180 + $0x218] sm:$0xff]
        %s1556 = scalar_lea.vmem %s1, 480
        %v1557 = vld [vmem:[%s1556] sm:$0xff]
        %v1558 = vld [vmem:[%s1556 + $0x8] sm:$0xff]
        %v1559 = vld [vmem:[%s1556 + $0x10] sm:$0xff]
        %v1560 = vld [vmem:[%s1556 + $0x18] sm:$0xff]
        %v1561 = vld [vmem:[%s1556 + $0x20] sm:$0xff]
        %v1562 = vld [vmem:[%s1556 + $0x28] sm:$0xff]
        %v1563 = vld [vmem:[%s1556 + $0x30] sm:$0xff]
        %v1564 = vld [vmem:[%s1556 + $0x38] sm:$0xff]
        %v1565 = vld [vmem:[%s1556 + $0x40] sm:$0xff]
        %v1566 = vld [vmem:[%s1556 + $0x48] sm:$0xff]
        %v1567 = vld [vmem:[%s1556 + $0x50] sm:$0xff]
        %v1568 = vld [vmem:[%s1556 + $0x58] sm:$0xff]
        %v1569 = vld [vmem:[%s1556 + $0x60] sm:$0xff]
        %v1570 = vld [vmem:[%s1556 + $0x68] sm:$0xff]
        %v1571 = vld [vmem:[%s1556 + $0x70] sm:$0xff]
        %v1572 = vld [vmem:[%s1556 + $0x78] sm:$0xff]
        %v1573 = vld [vmem:[%s1556 + $0x80] sm:$0xff]
        %v1574 = vld [vmem:[%s1556 + $0x88] sm:$0xff]
        %v1575 = vld [vmem:[%s1556 + $0x90] sm:$0xff]
        %v1576 = vld [vmem:[%s1556 + $0x98] sm:$0xff]
        %v1578 = vsel %vm262, %v1501, 0
        %v1581 = vsel %vm262, %v1503, 0
        %v1584 = vsel %vm262, %v1505, 0
        %v1587 = vsel %vm262, %v1507, 0
        %v1590 = vsel %vm262, %v1509, 0
        %v1593 = vsel %vm262, %v1511, 0
        %v1596 = vsel %vm262, %v1513, 0
        %v1599 = vsel %vm262, %v1515, 0
        %v1602 = vsel %vm262, %v1517, 0
        %v1605 = vsel %vm262, %v1519, 0
        %v1608 = vsel %vm262, %v1521, 0
        %v1611 = vsel %vm262, %v1523, 0
        %v1614 = vsel %vm262, %v1525, 0
        %v1617 = vsel %vm262, %v1527, 0
        %v1620 = vsel %vm262, %v1529, 0
        %v1623 = vsel %vm262, %v1531, 0
        %v1626 = vsel %vm262, %v1533, 0
        %v1629 = vsel %vm262, %v1535, 0
        %v1632 = vsel %vm262, %v1537, 0
        %v1635 = vsel %vm262, %v1539, 0
        %v1638 = vsel %vm262, %v1541, 0
        %v1641 = vsel %vm262, %v1543, 0
        %v1644 = vsel %vm262, %v1545, 0
        %v1647 = vsel %vm262, %v1547, 0
        %v1650 = vsel %vm262, %v1549, 0
        %v1653 = vsel %vm262, %v1551, 0
        %v1656 = vsel %vm262, %v1553, 0
        %v1659 = vsel %vm262, %v1555, 0
        %1661 = vmatpush.msra.mxu0 %v1572
        %1662 = vmatpush.msra.mxu0 %v1571
        %1663 = vmatpush.msra.mxu0 %v1570
        %1664 = vmatpush.msra.mxu0 %v1569
        %1665 = vmatpush.msra.mxu0 %v1568
        %1666 = vmatpush.msra.mxu0 %v1567
        %1667 = vmatpush.msra.mxu0 %v1566
        %1668 = vmatpush.msra.mxu0 %v1565
        %1669 = vmatpush.msra.mxu0 %v1564
        %1670 = vmatpush.msra.mxu0 %v1563
        %1671 = vmatpush.msra.mxu0 %v1562
        %1672 = vmatpush.msra.mxu0 %v1561
        %1673 = vmatpush.msra.mxu0 %v1560
        %1674 = vmatpush.msra.mxu0 %v1559
        %1675 = vmatpush.msra.mxu0 %v1558
        %1676 = vmatpush.msra.mxu0 %v1557
        %1677 = vmatmul.f32.gmra.mxu0 %v1500
        %v1678 = vpop.f32.mrf.mxu0
        %v1679 = vadd.f32 0.0, %v1678
        %1680 = vmatmul.f32.gmra.mxu0 %v1502
        %v1681 = vpop.f32.mrf.mxu0
        %v1682 = vadd.f32 0.0, %v1681
        %1683 = vmatmul.f32.gmra.mxu0 %v1504
        %v1684 = vpop.f32.mrf.mxu0
        %v1685 = vadd.f32 0.0, %v1684
        %1686 = vmatmul.f32.gmra.mxu0 %v1506
        %v1687 = vpop.f32.mrf.mxu0
        %v1688 = vadd.f32 0.0, %v1687
        %1689 = vmatmul.f32.gmra.mxu0 %v1508
        %v1690 = vpop.f32.mrf.mxu0
        %v1691 = vadd.f32 0.0, %v1690
        %1692 = vmatmul.f32.gmra.mxu0 %v1510
        %v1693 = vpop.f32.mrf.mxu0
        %v1694 = vadd.f32 0.0, %v1693
        %1695 = vmatmul.f32.gmra.mxu0 %v1512
        %v1696 = vpop.f32.mrf.mxu0
        %v1697 = vadd.f32 0.0, %v1696
        %1698 = vmatmul.f32.gmra.mxu0 %v1514
        %v1699 = vpop.f32.mrf.mxu0
        %v1700 = vadd.f32 0.0, %v1699
        %1701 = vmatmul.f32.gmra.mxu0 %v1516
        %v1702 = vpop.f32.mrf.mxu0
        %v1703 = vadd.f32 0.0, %v1702
        %1704 = vmatmul.f32.gmra.mxu0 %v1518
        %v1705 = vpop.f32.mrf.mxu0
        %v1706 = vadd.f32 0.0, %v1705
        %1707 = vmatmul.f32.gmra.mxu0 %v1520
        %v1708 = vpop.f32.mrf.mxu0
        %v1709 = vadd.f32 0.0, %v1708
        %1710 = vmatmul.f32.gmra.mxu0 %v1522
        %v1711 = vpop.f32.mrf.mxu0
        %v1712 = vadd.f32 0.0, %v1711
        %1713 = vmatmul.f32.gmra.mxu0 %v1524
        %v1714 = vpop.f32.mrf.mxu0
        %v1715 = vadd.f32 0.0, %v1714
        %1716 = vmatmul.f32.gmra.mxu0 %v1526
        %v1717 = vpop.f32.mrf.mxu0
        %v1718 = vadd.f32 0.0, %v1717
        %1719 = vmatmul.f32.gmra.mxu0 %v1528
        %v1720 = vpop.f32.mrf.mxu0
        %v1721 = vadd.f32 0.0, %v1720
        %1722 = vmatmul.f32.gmra.mxu0 %v1530
        %v1723 = vpop.f32.mrf.mxu0
        %v1724 = vadd.f32 0.0, %v1723
        %1725 = vmatmul.f32.gmra.mxu0 %v1532
        %v1726 = vpop.f32.mrf.mxu0
        %v1727 = vadd.f32 0.0, %v1726
        %1728 = vmatmul.f32.gmra.mxu0 %v1534
        %v1729 = vpop.f32.mrf.mxu0
        %v1730 = vadd.f32 0.0, %v1729
        %1731 = vmatmul.f32.gmra.mxu0 %v1536
        %v1732 = vpop.f32.mrf.mxu0
        %v1733 = vadd.f32 0.0, %v1732
        %1734 = vmatmul.f32.gmra.mxu0 %v1538
        %v1735 = vpop.f32.mrf.mxu0
        %v1736 = vadd.f32 0.0, %v1735
        %1737 = vmatmul.f32.gmra.mxu0 %v1540
        %v1738 = vpop.f32.mrf.mxu0
        %v1739 = vadd.f32 0.0, %v1738
        %1740 = vmatmul.f32.gmra.mxu0 %v1542
        %v1741 = vpop.f32.mrf.mxu0
        %v1742 = vadd.f32 0.0, %v1741
        %1743 = vmatmul.f32.gmra.mxu0 %v1544
        %v1744 = vpop.f32.mrf.mxu0
        %v1745 = vadd.f32 0.0, %v1744
        %1746 = vmatmul.f32.gmra.mxu0 %v1546
        %v1747 = vpop.f32.mrf.mxu0
        %v1748 = vadd.f32 0.0, %v1747
        %1749 = vmatmul.f32.gmra.mxu0 %v1548
        %v1750 = vpop.f32.mrf.mxu0
        %v1751 = vadd.f32 0.0, %v1750
        %1752 = vmatmul.f32.gmra.mxu0 %v1550
        %v1753 = vpop.f32.mrf.mxu0
        %v1754 = vadd.f32 0.0, %v1753
        %1755 = vmatmul.f32.gmra.mxu0 %v1552
        %v1756 = vpop.f32.mrf.mxu0
        %v1757 = vadd.f32 0.0, %v1756
        %1758 = vmatmul.f32.gmra.mxu0 %v1554
        %v1759 = vpop.f32.mrf.mxu0
        %v1760 = vadd.f32 0.0, %v1759
        %1761 = vdwg.mxu0
        %1762 = vmatpush.msra.mxu0 0.0
        %1763 = vmatpush.msra.mxu0 0.0
        %1764 = vmatpush.msra.mxu0 0.0
        %1765 = vmatpush.msra.mxu0 0.0
        %1766 = vmatpush.msra.mxu0 0.0
        %1767 = vmatpush.msra.mxu0 0.0
        %1768 = vmatpush.msra.mxu0 0.0
        %1769 = vmatpush.msra.mxu0 0.0
        %1770 = vmatpush.msra.mxu0 0.0
        %1771 = vmatpush.msra.mxu0 0.0
        %1772 = vmatpush.msra.mxu0 0.0
        %1773 = vmatpush.msra.mxu0 0.0
        %1774 = vmatpush.msra.mxu0 %v1576
        %1775 = vmatpush.msra.mxu0 %v1575
        %1776 = vmatpush.msra.mxu0 %v1574
        %1777 = vmatpush.msra.mxu0 %v1573
        %1778 = vmatmul.f32.gmra.mxu0 %v1578
        %v1779 = vpop.f32.mrf.mxu0
        %v1780 = vadd.f32 %v1679, %v1779
        %1781 = vmatmul.f32.gmra.mxu0 %v1581
        %v1782 = vpop.f32.mrf.mxu0
        %v1783 = vadd.f32 %v1682, %v1782
        %1784 = vmatmul.f32.gmra.mxu0 %v1584
        %v1785 = vpop.f32.mrf.mxu0
        %v1786 = vadd.f32 %v1685, %v1785
        %1787 = vmatmul.f32.gmra.mxu0 %v1587
        %v1788 = vpop.f32.mrf.mxu0
        %v1789 = vadd.f32 %v1688, %v1788
        %1790 = vmatmul.f32.gmra.mxu0 %v1590
        %v1791 = vpop.f32.mrf.mxu0
        %v1792 = vadd.f32 %v1691, %v1791
        %1793 = vmatmul.f32.gmra.mxu0 %v1593
        %v1794 = vpop.f32.mrf.mxu0
        %v1795 = vadd.f32 %v1694, %v1794
        %1796 = vmatmul.f32.gmra.mxu0 %v1596
        %v1797 = vpop.f32.mrf.mxu0
        %v1798 = vadd.f32 %v1697, %v1797
        %1799 = vmatmul.f32.gmra.mxu0 %v1599
        %v1800 = vpop.f32.mrf.mxu0
        %v1801 = vadd.f32 %v1700, %v1800
        %1802 = vmatmul.f32.gmra.mxu0 %v1602
        %v1803 = vpop.f32.mrf.mxu0
        %v1804 = vadd.f32 %v1703, %v1803
        %1805 = vmatmul.f32.gmra.mxu0 %v1605
        %v1806 = vpop.f32.mrf.mxu0
        %v1807 = vadd.f32 %v1706, %v1806
        %1808 = vmatmul.f32.gmra.mxu0 %v1608
        %v1809 = vpop.f32.mrf.mxu0
        %v1810 = vadd.f32 %v1709, %v1809
        %1811 = vmatmul.f32.gmra.mxu0 %v1611
        %v1812 = vpop.f32.mrf.mxu0
        %v1813 = vadd.f32 %v1712, %v1812
        %1814 = vmatmul.f32.gmra.mxu0 %v1614
        %v1815 = vpop.f32.mrf.mxu0
        %v1816 = vadd.f32 %v1715, %v1815
        %1817 = vmatmul.f32.gmra.mxu0 %v1617
        %v1818 = vpop.f32.mrf.mxu0
        %v1819 = vadd.f32 %v1718, %v1818
        %1820 = vmatmul.f32.gmra.mxu0 %v1620
        %v1821 = vpop.f32.mrf.mxu0
        %v1822 = vadd.f32 %v1721, %v1821
        %1823 = vmatmul.f32.gmra.mxu0 %v1623
        %v1824 = vpop.f32.mrf.mxu0
        %v1825 = vadd.f32 %v1724, %v1824
        %1826 = vmatmul.f32.gmra.mxu0 %v1626
        %v1827 = vpop.f32.mrf.mxu0
        %v1828 = vadd.f32 %v1727, %v1827
        %1829 = vmatmul.f32.gmra.mxu0 %v1629
        %v1830 = vpop.f32.mrf.mxu0
        %v1831 = vadd.f32 %v1730, %v1830
        %1832 = vmatmul.f32.gmra.mxu0 %v1632
        %v1833 = vpop.f32.mrf.mxu0
        %v1834 = vadd.f32 %v1733, %v1833
        %1835 = vmatmul.f32.gmra.mxu0 %v1635
        %v1836 = vpop.f32.mrf.mxu0
        %v1837 = vadd.f32 %v1736, %v1836
        %1838 = vmatmul.f32.gmra.mxu0 %v1638
        %v1839 = vpop.f32.mrf.mxu0
        %v1840 = vadd.f32 %v1739, %v1839
        %1841 = vmatmul.f32.gmra.mxu0 %v1641
        %v1842 = vpop.f32.mrf.mxu0
        %v1843 = vadd.f32 %v1742, %v1842
        %1844 = vmatmul.f32.gmra.mxu0 %v1644
        %v1845 = vpop.f32.mrf.mxu0
        %v1846 = vadd.f32 %v1745, %v1845
        %1847 = vmatmul.f32.gmra.mxu0 %v1647
        %v1848 = vpop.f32.mrf.mxu0
        %v1849 = vadd.f32 %v1748, %v1848
        %1850 = vmatmul.f32.gmra.mxu0 %v1650
        %v1851 = vpop.f32.mrf.mxu0
        %v1852 = vadd.f32 %v1751, %v1851
        %1853 = vmatmul.f32.gmra.mxu0 %v1653
        %v1854 = vpop.f32.mrf.mxu0
        %v1855 = vadd.f32 %v1754, %v1854
        %1856 = vmatmul.f32.gmra.mxu0 %v1656
        %v1857 = vpop.f32.mrf.mxu0
        %v1858 = vadd.f32 %v1757, %v1857
        %1859 = vmatmul.f32.gmra.mxu0 %v1659
        %v1860 = vpop.f32.mrf.mxu0
        %v1861 = vadd.f32 %v1760, %v1860
        %1862 = vdwg.mxu0
        %v1863 = vadd.f32 %v1472, %v1780
        %v1864 = vadd.f32 %v1473, %v1783
        %v1865 = vadd.f32 %v1474, %v1786
        %v1866 = vadd.f32 %v1475, %v1789
        %v1867 = vadd.f32 %v1476, %v1792
        %v1868 = vadd.f32 %v1477, %v1795
        %v1869 = vadd.f32 %v1478, %v1798
        %v1870 = vadd.f32 %v1479, %v1801
        %v1871 = vadd.f32 %v1480, %v1804
        %v1872 = vadd.f32 %v1481, %v1807
        %v1873 = vadd.f32 %v1482, %v1810
        %v1874 = vadd.f32 %v1483, %v1813
        %v1875 = vadd.f32 %v1484, %v1816
        %v1876 = vadd.f32 %v1485, %v1819
        %v1877 = vadd.f32 %v1486, %v1822
        %v1878 = vadd.f32 %v1487, %v1825
        %v1879 = vadd.f32 %v1488, %v1828
        %v1880 = vadd.f32 %v1489, %v1831
        %v1881 = vadd.f32 %v1490, %v1834
        %v1882 = vadd.f32 %v1491, %v1837
        %v1883 = vadd.f32 %v1492, %v1840
        %v1884 = vadd.f32 %v1493, %v1843
        %v1885 = vadd.f32 %v1494, %v1846
        %v1886 = vadd.f32 %v1495, %v1849
        %v1887 = vadd.f32 %v1496, %v1852
        %v1888 = vadd.f32 %v1497, %v1855
        %v1889 = vadd.f32 %v1498, %v1858
        %v1890 = vadd.f32 %v1499, %v1861
        %1891 = vst.msk [vmem:[#allocation2] sm:$0xff] %vm549, %v1863
        %1892 = vst.msk [vmem:[#allocation2 + $0x8] sm:$0xff] %vm549, %v1864
        %1893 = vst.msk [vmem:[#allocation2 + $0x10] sm:$0xff] %vm549, %v1865
        %1894 = vst.msk [vmem:[#allocation2 + $0x18] sm:$0xff] %vm549, %v1866
        %1895 = vst.msk [vmem:[#allocation2 + $0x20] sm:$0xff] %vm549, %v1867
        %1896 = vst.msk [vmem:[#allocation2 + $0x28] sm:$0xff] %vm549, %v1868
        %1897 = vst.msk [vmem:[#allocation2 + $0x30] sm:$0xff] %vm549, %v1869
        %1898 = vst.msk [vmem:[#allocation2 + $0x38] sm:$0xff] %vm549, %v1870
        %1899 = vst.msk [vmem:[#allocation2 + $0x40] sm:$0xff] %vm549, %v1871
        %1900 = vst.msk [vmem:[#allocation2 + $0x48] sm:$0xff] %vm549, %v1872
        %1901 = vst.msk [vmem:[#allocation2 + $0x50] sm:$0xff] %vm549, %v1873
        %1902 = vst.msk [vmem:[#allocation2 + $0x58] sm:$0xff] %vm549, %v1874
        %1903 = vst.msk [vmem:[#allocation2 + $0x60] sm:$0xff] %vm549, %v1875
        %1904 = vst.msk [vmem:[#allocation2 + $0x68] sm:$0xff] %vm549, %v1876
        %1905 = vst.msk [vmem:[#allocation2 + $0x70] sm:$0xff] %vm549, %v1877
        %1906 = vst.msk [vmem:[#allocation2 + $0x78] sm:$0xff] %vm549, %v1878
        %1907 = vst.msk [vmem:[#allocation2 + $0x80] sm:$0xff] %vm549, %v1879
        %1908 = vst.msk [vmem:[#allocation2 + $0x88] sm:$0xff] %vm549, %v1880
        %1909 = vst.msk [vmem:[#allocation2 + $0x90] sm:$0xff] %vm549, %v1881
        %1910 = vst.msk [vmem:[#allocation2 + $0x98] sm:$0xff] %vm549, %v1882
        %1911 = vst.msk [vmem:[#allocation2 + $0xa0] sm:$0xff] %vm549, %v1883
        %1912 = vst.msk [vmem:[#allocation2 + $0xa8] sm:$0xff] %vm549, %v1884
        %1913 = vst.msk [vmem:[#allocation2 + $0xb0] sm:$0xff] %vm549, %v1885
        %1914 = vst.msk [vmem:[#allocation2 + $0xb8] sm:$0xff] %vm549, %v1886
        %1915 = vst.msk [vmem:[#allocation2 + $0xc0] sm:$0xff] %vm549, %v1887
        %1916 = vst.msk [vmem:[#allocation2 + $0xc8] sm:$0xff] %vm549, %v1888
        %1917 = vst.msk [vmem:[#allocation2 + $0xd0] sm:$0xff] %vm549, %v1889
        %1918 = vst.msk [vmem:[#allocation2 + $0xd8] sm:$0xff] %vm549, %v1890
        %v1919 = vld [vmem:[#allocation2] sm:$0xff]
        %v1920 = vld [vmem:[#allocation2 + $0x8] sm:$0xff]
        %v1921 = vld [vmem:[#allocation2 + $0x10] sm:$0xff]
        %v1922 = vld [vmem:[#allocation2 + $0x18] sm:$0xff]
        %v1923 = vld [vmem:[#allocation2 + $0x20] sm:$0xff]
        %v1924 = vld [vmem:[#allocation2 + $0x28] sm:$0xff]
        %v1925 = vld [vmem:[#allocation2 + $0x30] sm:$0xff]
        %v1926 = vld [vmem:[#allocation2 + $0x38] sm:$0xff]
        %v1927 = vld [vmem:[#allocation2 + $0x40] sm:$0xff]
        %v1928 = vld [vmem:[#allocation2 + $0x48] sm:$0xff]
        %v1929 = vld [vmem:[#allocation2 + $0x50] sm:$0xff]
        %v1930 = vld [vmem:[#allocation2 + $0x58] sm:$0xff]
        %v1931 = vld [vmem:[#allocation2 + $0x60] sm:$0xff]
        %v1932 = vld [vmem:[#allocation2 + $0x68] sm:$0xff]
        %v1933 = vld [vmem:[#allocation2 + $0x70] sm:$0xff]
        %v1934 = vld [vmem:[#allocation2 + $0x78] sm:$0xff]
        %v1935 = vld [vmem:[#allocation2 + $0x80] sm:$0xff]
        %v1936 = vld [vmem:[#allocation2 + $0x88] sm:$0xff]
        %v1937 = vld [vmem:[#allocation2 + $0x90] sm:$0xff]
        %v1938 = vld [vmem:[#allocation2 + $0x98] sm:$0xff]
        %v1939 = vld [vmem:[#allocation2 + $0xa0] sm:$0xff]
        %v1940 = vld [vmem:[#allocation2 + $0xa8] sm:$0xff]
        %v1941 = vld [vmem:[#allocation2 + $0xb0] sm:$0xff]
        %v1942 = vld [vmem:[#allocation2 + $0xb8] sm:$0xff]
        %v1943 = vld [vmem:[#allocation2 + $0xc0] sm:$0xff]
        %v1944 = vld [vmem:[#allocation2 + $0xc8] sm:$0xff]
        %v1945 = vld [vmem:[#allocation2 + $0xd0] sm:$0xff]
        %v1946 = vld [vmem:[#allocation2 + $0xd8] sm:$0xff]
        %v1947 = vld [vmem:[%s180 + $0x80] sm:$0xff]
        %v1948 = vld [vmem:[%s180 + $0x88] sm:$0xff]
        %v1949 = vld [vmem:[%s180 + $0x90] sm:$0xff]
        %v1950 = vld [vmem:[%s180 + $0x98] sm:$0xff]
        %v1951 = vld [vmem:[%s180 + $0xa0] sm:$0xff]
        %v1952 = vld [vmem:[%s180 + $0xa8] sm:$0xff]
        %v1953 = vld [vmem:[%s180 + $0xb0] sm:$0xff]
        %v1954 = vld [vmem:[%s180 + $0xb8] sm:$0xff]
        %v1955 = vld [vmem:[%s180 + $0xc0] sm:$0xff]
        %v1956 = vld [vmem:[%s180 + $0xc8] sm:$0xff]
        %v1957 = vld [vmem:[%s180 + $0xd0] sm:$0xff]
        %v1958 = vld [vmem:[%s180 + $0xd8] sm:$0xff]
        %v1959 = vld [vmem:[%s180 + $0xe0] sm:$0xff]
        %v1960 = vld [vmem:[%s180 + $0xe8] sm:$0xff]
        %v1961 = vld [vmem:[%s180 + $0xf0] sm:$0xff]
        %v1962 = vld [vmem:[%s180 + $0xf8] sm:$0xff]
        %v1963 = vld [vmem:[%s180 + $0x100] sm:$0xff]
        %v1964 = vld [vmem:[%s180 + $0x108] sm:$0xff]
        %v1965 = vld [vmem:[%s180 + $0x110] sm:$0xff]
        %v1966 = vld [vmem:[%s180 + $0x118] sm:$0xff]
        %v1967 = vld [vmem:[%s180 + $0x120] sm:$0xff]
        %v1968 = vld [vmem:[%s180 + $0x128] sm:$0xff]
        %v1969 = vld [vmem:[%s180 + $0x130] sm:$0xff]
        %v1970 = vld [vmem:[%s180 + $0x138] sm:$0xff]
        %v1971 = vld [vmem:[%s180 + $0x140] sm:$0xff]
        %v1972 = vld [vmem:[%s180 + $0x148] sm:$0xff]
        %v1973 = vld [vmem:[%s180 + $0x150] sm:$0xff]
        %v1974 = vld [vmem:[%s180 + $0x158] sm:$0xff]
        %v1975 = vld [vmem:[%s180 + $0x160] sm:$0xff]
        %v1976 = vld [vmem:[%s180 + $0x168] sm:$0xff]
        %v1977 = vld [vmem:[%s180 + $0x170] sm:$0xff]
        %v1978 = vld [vmem:[%s180 + $0x178] sm:$0xff]
        %v1979 = vld [vmem:[%s180 + $0x180] sm:$0xff]
        %v1980 = vld [vmem:[%s180 + $0x188] sm:$0xff]
        %v1981 = vld [vmem:[%s180 + $0x190] sm:$0xff]
        %v1982 = vld [vmem:[%s180 + $0x198] sm:$0xff]
        %v1983 = vld [vmem:[%s180 + $0x1a0] sm:$0xff]
        %v1984 = vld [vmem:[%s180 + $0x1a8] sm:$0xff]
        %v1985 = vld [vmem:[%s180 + $0x1b0] sm:$0xff]
        %v1986 = vld [vmem:[%s180 + $0x1b8] sm:$0xff]
        %v1987 = vld [vmem:[%s180 + $0x1c0] sm:$0xff]
        %v1988 = vld [vmem:[%s180 + $0x1c8] sm:$0xff]
        %v1989 = vld [vmem:[%s180 + $0x1d0] sm:$0xff]
        %v1990 = vld [vmem:[%s180 + $0x1d8] sm:$0xff]
        %v1991 = vld [vmem:[%s180 + $0x1e0] sm:$0xff]
        %v1992 = vld [vmem:[%s180 + $0x1e8] sm:$0xff]
        %v1993 = vld [vmem:[%s180 + $0x1f0] sm:$0xff]
        %v1994 = vld [vmem:[%s180 + $0x1f8] sm:$0xff]
        %v1995 = vld [vmem:[%s180 + $0x200] sm:$0xff]
        %v1996 = vld [vmem:[%s180 + $0x208] sm:$0xff]
        %v1997 = vld [vmem:[%s180 + $0x210] sm:$0xff]
        %v1998 = vld [vmem:[%s180 + $0x218] sm:$0xff]
        %v1999 = vld [vmem:[%s180 + $0x220] sm:$0xff]
        %v2000 = vld [vmem:[%s180 + $0x228] sm:$0xff]
        %v2001 = vld [vmem:[%s180 + $0x230] sm:$0xff]
        %v2002 = vld [vmem:[%s180 + $0x238] sm:$0xff]
        %s2003 = scalar_lea.vmem %s1, 640
        %v2004 = vld [vmem:[%s2003] sm:$0xff]
        %v2005 = vld [vmem:[%s2003 + $0x8] sm:$0xff]
        %v2006 = vld [vmem:[%s2003 + $0x10] sm:$0xff]
        %v2007 = vld [vmem:[%s2003 + $0x18] sm:$0xff]
        %v2008 = vld [vmem:[%s2003 + $0x20] sm:$0xff]
        %v2009 = vld [vmem:[%s2003 + $0x28] sm:$0xff]
        %v2010 = vld [vmem:[%s2003 + $0x30] sm:$0xff]
        %v2011 = vld [vmem:[%s2003 + $0x38] sm:$0xff]
        %v2012 = vld [vmem:[%s2003 + $0x40] sm:$0xff]
        %v2013 = vld [vmem:[%s2003 + $0x48] sm:$0xff]
        %v2014 = vld [vmem:[%s2003 + $0x50] sm:$0xff]
        %v2015 = vld [vmem:[%s2003 + $0x58] sm:$0xff]
        %v2016 = vld [vmem:[%s2003 + $0x60] sm:$0xff]
        %v2017 = vld [vmem:[%s2003 + $0x68] sm:$0xff]
        %v2018 = vld [vmem:[%s2003 + $0x70] sm:$0xff]
        %v2019 = vld [vmem:[%s2003 + $0x78] sm:$0xff]
        %v2020 = vld [vmem:[%s2003 + $0x80] sm:$0xff]
        %v2021 = vld [vmem:[%s2003 + $0x88] sm:$0xff]
        %v2022 = vld [vmem:[%s2003 + $0x90] sm:$0xff]
        %v2023 = vld [vmem:[%s2003 + $0x98] sm:$0xff]
        %v2025 = vsel %vm262, %v1948, 0
        %v2028 = vsel %vm262, %v1950, 0
        %v2031 = vsel %vm262, %v1952, 0
        %v2034 = vsel %vm262, %v1954, 0
        %v2037 = vsel %vm262, %v1956, 0
        %v2040 = vsel %vm262, %v1958, 0
        %v2043 = vsel %vm262, %v1960, 0
        %v2046 = vsel %vm262, %v1962, 0
        %v2049 = vsel %vm262, %v1964, 0
        %v2052 = vsel %vm262, %v1966, 0
        %v2055 = vsel %vm262, %v1968, 0
        %v2058 = vsel %vm262, %v1970, 0
        %v2061 = vsel %vm262, %v1972, 0
        %v2064 = vsel %vm262, %v1974, 0
        %v2067 = vsel %vm262, %v1976, 0
        %v2070 = vsel %vm262, %v1978, 0
        %v2073 = vsel %vm262, %v1980, 0
        %v2076 = vsel %vm262, %v1982, 0
        %v2079 = vsel %vm262, %v1984, 0
        %v2082 = vsel %vm262, %v1986, 0
        %v2085 = vsel %vm262, %v1988, 0
        %v2088 = vsel %vm262, %v1990, 0
        %v2091 = vsel %vm262, %v1992, 0
        %v2094 = vsel %vm262, %v1994, 0
        %v2097 = vsel %vm262, %v1996, 0
        %v2100 = vsel %vm262, %v1998, 0
        %v2103 = vsel %vm262, %v2000, 0
        %v2106 = vsel %vm262, %v2002, 0
        %2108 = vmatpush.msra.mxu0 %v2019
        %2109 = vmatpush.msra.mxu0 %v2018
        %2110 = vmatpush.msra.mxu0 %v2017
        %2111 = vmatpush.msra.mxu0 %v2016
        %2112 = vmatpush.msra.mxu0 %v2015
        %2113 = vmatpush.msra.mxu0 %v2014
        %2114 = vmatpush.msra.mxu0 %v2013
        %2115 = vmatpush.msra.mxu0 %v2012
        %2116 = vmatpush.msra.mxu0 %v2011
        %2117 = vmatpush.msra.mxu0 %v2010
        %2118 = vmatpush.msra.mxu0 %v2009
        %2119 = vmatpush.msra.mxu0 %v2008
        %2120 = vmatpush.msra.mxu0 %v2007
        %2121 = vmatpush.msra.mxu0 %v2006
        %2122 = vmatpush.msra.mxu0 %v2005
        %2123 = vmatpush.msra.mxu0 %v2004
        %2124 = vmatmul.f32.gmra.mxu0 %v1947
        %v2125 = vpop.f32.mrf.mxu0
        %v2126 = vadd.f32 0.0, %v2125
        %2127 = vmatmul.f32.gmra.mxu0 %v1949
        %v2128 = vpop.f32.mrf.mxu0
        %v2129 = vadd.f32 0.0, %v2128
        %2130 = vmatmul.f32.gmra.mxu0 %v1951
        %v2131 = vpop.f32.mrf.mxu0
        %v2132 = vadd.f32 0.0, %v2131
        %2133 = vmatmul.f32.gmra.mxu0 %v1953
        %v2134 = vpop.f32.mrf.mxu0
        %v2135 = vadd.f32 0.0, %v2134
        %2136 = vmatmul.f32.gmra.mxu0 %v1955
        %v2137 = vpop.f32.mrf.mxu0
        %v2138 = vadd.f32 0.0, %v2137
        %2139 = vmatmul.f32.gmra.mxu0 %v1957
        %v2140 = vpop.f32.mrf.mxu0
        %v2141 = vadd.f32 0.0, %v2140
        %2142 = vmatmul.f32.gmra.mxu0 %v1959
        %v2143 = vpop.f32.mrf.mxu0
        %v2144 = vadd.f32 0.0, %v2143
        %2145 = vmatmul.f32.gmra.mxu0 %v1961
        %v2146 = vpop.f32.mrf.mxu0
        %v2147 = vadd.f32 0.0, %v2146
        %2148 = vmatmul.f32.gmra.mxu0 %v1963
        %v2149 = vpop.f32.mrf.mxu0
        %v2150 = vadd.f32 0.0, %v2149
        %2151 = vmatmul.f32.gmra.mxu0 %v1965
        %v2152 = vpop.f32.mrf.mxu0
        %v2153 = vadd.f32 0.0, %v2152
        %2154 = vmatmul.f32.gmra.mxu0 %v1967
        %v2155 = vpop.f32.mrf.mxu0
        %v2156 = vadd.f32 0.0, %v2155
        %2157 = vmatmul.f32.gmra.mxu0 %v1969
        %v2158 = vpop.f32.mrf.mxu0
        %v2159 = vadd.f32 0.0, %v2158
        %2160 = vmatmul.f32.gmra.mxu0 %v1971
        %v2161 = vpop.f32.mrf.mxu0
        %v2162 = vadd.f32 0.0, %v2161
        %2163 = vmatmul.f32.gmra.mxu0 %v1973
        %v2164 = vpop.f32.mrf.mxu0
        %v2165 = vadd.f32 0.0, %v2164
        %2166 = vmatmul.f32.gmra.mxu0 %v1975
        %v2167 = vpop.f32.mrf.mxu0
        %v2168 = vadd.f32 0.0, %v2167
        %2169 = vmatmul.f32.gmra.mxu0 %v1977
        %v2170 = vpop.f32.mrf.mxu0
        %v2171 = vadd.f32 0.0, %v2170
        %2172 = vmatmul.f32.gmra.mxu0 %v1979
        %v2173 = vpop.f32.mrf.mxu0
        %v2174 = vadd.f32 0.0, %v2173
        %2175 = vmatmul.f32.gmra.mxu0 %v1981
        %v2176 = vpop.f32.mrf.mxu0
        %v2177 = vadd.f32 0.0, %v2176
        %2178 = vmatmul.f32.gmra.mxu0 %v1983
        %v2179 = vpop.f32.mrf.mxu0
        %v2180 = vadd.f32 0.0, %v2179
        %2181 = vmatmul.f32.gmra.mxu0 %v1985
        %v2182 = vpop.f32.mrf.mxu0
        %v2183 = vadd.f32 0.0, %v2182
        %2184 = vmatmul.f32.gmra.mxu0 %v1987
        %v2185 = vpop.f32.mrf.mxu0
        %v2186 = vadd.f32 0.0, %v2185
        %2187 = vmatmul.f32.gmra.mxu0 %v1989
        %v2188 = vpop.f32.mrf.mxu0
        %v2189 = vadd.f32 0.0, %v2188
        %2190 = vmatmul.f32.gmra.mxu0 %v1991
        %v2191 = vpop.f32.mrf.mxu0
        %v2192 = vadd.f32 0.0, %v2191
        %2193 = vmatmul.f32.gmra.mxu0 %v1993
        %v2194 = vpop.f32.mrf.mxu0
        %v2195 = vadd.f32 0.0, %v2194
        %2196 = vmatmul.f32.gmra.mxu0 %v1995
        %v2197 = vpop.f32.mrf.mxu0
        %v2198 = vadd.f32 0.0, %v2197
        %2199 = vmatmul.f32.gmra.mxu0 %v1997
        %v2200 = vpop.f32.mrf.mxu0
        %v2201 = vadd.f32 0.0, %v2200
        %2202 = vmatmul.f32.gmra.mxu0 %v1999
        %v2203 = vpop.f32.mrf.mxu0
        %v2204 = vadd.f32 0.0, %v2203
        %2205 = vmatmul.f32.gmra.mxu0 %v2001
        %v2206 = vpop.f32.mrf.mxu0
        %v2207 = vadd.f32 0.0, %v2206
        %2208 = vdwg.mxu0
        %2209 = vmatpush.msra.mxu0 0.0
        %2210 = vmatpush.msra.mxu0 0.0
        %2211 = vmatpush.msra.mxu0 0.0
        %2212 = vmatpush.msra.mxu0 0.0
        %2213 = vmatpush.msra.mxu0 0.0
        %2214 = vmatpush.msra.mxu0 0.0
        %2215 = vmatpush.msra.mxu0 0.0
        %2216 = vmatpush.msra.mxu0 0.0
        %2217 = vmatpush.msra.mxu0 0.0
        %2218 = vmatpush.msra.mxu0 0.0
        %2219 = vmatpush.msra.mxu0 0.0
        %2220 = vmatpush.msra.mxu0 0.0
        %2221 = vmatpush.msra.mxu0 %v2023
        %2222 = vmatpush.msra.mxu0 %v2022
        %2223 = vmatpush.msra.mxu0 %v2021
        %2224 = vmatpush.msra.mxu0 %v2020
        %2225 = vmatmul.f32.gmra.mxu0 %v2025
        %v2226 = vpop.f32.mrf.mxu0
        %v2227 = vadd.f32 %v2126, %v2226
        %2228 = vmatmul.f32.gmra.mxu0 %v2028
        %v2229 = vpop.f32.mrf.mxu0
        %v2230 = vadd.f32 %v2129, %v2229
        %2231 = vmatmul.f32.gmra.mxu0 %v2031
        %v2232 = vpop.f32.mrf.mxu0
        %v2233 = vadd.f32 %v2132, %v2232
        %2234 = vmatmul.f32.gmra.mxu0 %v2034
        %v2235 = vpop.f32.mrf.mxu0
        %v2236 = vadd.f32 %v2135, %v2235
        %2237 = vmatmul.f32.gmra.mxu0 %v2037
        %v2238 = vpop.f32.mrf.mxu0
        %v2239 = vadd.f32 %v2138, %v2238
        %2240 = vmatmul.f32.gmra.mxu0 %v2040
        %v2241 = vpop.f32.mrf.mxu0
        %v2242 = vadd.f32 %v2141, %v2241
        %2243 = vmatmul.f32.gmra.mxu0 %v2043
        %v2244 = vpop.f32.mrf.mxu0
        %v2245 = vadd.f32 %v2144, %v2244
        %2246 = vmatmul.f32.gmra.mxu0 %v2046
        %v2247 = vpop.f32.mrf.mxu0
        %v2248 = vadd.f32 %v2147, %v2247
        %2249 = vmatmul.f32.gmra.mxu0 %v2049
        %v2250 = vpop.f32.mrf.mxu0
        %v2251 = vadd.f32 %v2150, %v2250
        %2252 = vmatmul.f32.gmra.mxu0 %v2052
        %v2253 = vpop.f32.mrf.mxu0
        %v2254 = vadd.f32 %v2153, %v2253
        %2255 = vmatmul.f32.gmra.mxu0 %v2055
        %v2256 = vpop.f32.mrf.mxu0
        %v2257 = vadd.f32 %v2156, %v2256
        %2258 = vmatmul.f32.gmra.mxu0 %v2058
        %v2259 = vpop.f32.mrf.mxu0
        %v2260 = vadd.f32 %v2159, %v2259
        %2261 = vmatmul.f32.gmra.mxu0 %v2061
        %v2262 = vpop.f32.mrf.mxu0
        %v2263 = vadd.f32 %v2162, %v2262
        %2264 = vmatmul.f32.gmra.mxu0 %v2064
        %v2265 = vpop.f32.mrf.mxu0
        %v2266 = vadd.f32 %v2165, %v2265
        %2267 = vmatmul.f32.gmra.mxu0 %v2067
        %v2268 = vpop.f32.mrf.mxu0
        %v2269 = vadd.f32 %v2168, %v2268
        %2270 = vmatmul.f32.gmra.mxu0 %v2070
        %v2271 = vpop.f32.mrf.mxu0
        %v2272 = vadd.f32 %v2171, %v2271
        %2273 = vmatmul.f32.gmra.mxu0 %v2073
        %v2274 = vpop.f32.mrf.mxu0
        %v2275 = vadd.f32 %v2174, %v2274
        %2276 = vmatmul.f32.gmra.mxu0 %v2076
        %v2277 = vpop.f32.mrf.mxu0
        %v2278 = vadd.f32 %v2177, %v2277
        %2279 = vmatmul.f32.gmra.mxu0 %v2079
        %v2280 = vpop.f32.mrf.mxu0
        %v2281 = vadd.f32 %v2180, %v2280
        %2282 = vmatmul.f32.gmra.mxu0 %v2082
        %v2283 = vpop.f32.mrf.mxu0
        %v2284 = vadd.f32 %v2183, %v2283
        %2285 = vmatmul.f32.gmra.mxu0 %v2085
        %v2286 = vpop.f32.mrf.mxu0
        %v2287 = vadd.f32 %v2186, %v2286
        %2288 = vmatmul.f32.gmra.mxu0 %v2088
        %v2289 = vpop.f32.mrf.mxu0
        %v2290 = vadd.f32 %v2189, %v2289
        %2291 = vmatmul.f32.gmra.mxu0 %v2091
        %v2292 = vpop.f32.mrf.mxu0
        %v2293 = vadd.f32 %v2192, %v2292
        %2294 = vmatmul.f32.gmra.mxu0 %v2094
        %v2295 = vpop.f32.mrf.mxu0
        %v2296 = vadd.f32 %v2195, %v2295
        %2297 = vmatmul.f32.gmra.mxu0 %v2097
        %v2298 = vpop.f32.mrf.mxu0
        %v2299 = vadd.f32 %v2198, %v2298
        %2300 = vmatmul.f32.gmra.mxu0 %v2100
        %v2301 = vpop.f32.mrf.mxu0
        %v2302 = vadd.f32 %v2201, %v2301
        %2303 = vmatmul.f32.gmra.mxu0 %v2103
        %v2304 = vpop.f32.mrf.mxu0
        %v2305 = vadd.f32 %v2204, %v2304
        %2306 = vmatmul.f32.gmra.mxu0 %v2106
        %v2307 = vpop.f32.mrf.mxu0
        %v2308 = vadd.f32 %v2207, %v2307
        %2309 = vdwg.mxu0
        %v2310 = vadd.f32 %v1919, %v2227
        %v2311 = vadd.f32 %v1920, %v2230
        %v2312 = vadd.f32 %v1921, %v2233
        %v2313 = vadd.f32 %v1922, %v2236
        %v2314 = vadd.f32 %v1923, %v2239
        %v2315 = vadd.f32 %v1924, %v2242
        %v2316 = vadd.f32 %v1925, %v2245
        %v2317 = vadd.f32 %v1926, %v2248
        %v2318 = vadd.f32 %v1927, %v2251
        %v2319 = vadd.f32 %v1928, %v2254
        %v2320 = vadd.f32 %v1929, %v2257
        %v2321 = vadd.f32 %v1930, %v2260
        %v2322 = vadd.f32 %v1931, %v2263
        %v2323 = vadd.f32 %v1932, %v2266
        %v2324 = vadd.f32 %v1933, %v2269
        %v2325 = vadd.f32 %v1934, %v2272
        %v2326 = vadd.f32 %v1935, %v2275
        %v2327 = vadd.f32 %v1936, %v2278
        %v2328 = vadd.f32 %v1937, %v2281
        %v2329 = vadd.f32 %v1938, %v2284
        %v2330 = vadd.f32 %v1939, %v2287
        %v2331 = vadd.f32 %v1940, %v2290
        %v2332 = vadd.f32 %v1941, %v2293
        %v2333 = vadd.f32 %v1942, %v2296
        %v2334 = vadd.f32 %v1943, %v2299
        %v2335 = vadd.f32 %v1944, %v2302
        %v2336 = vadd.f32 %v1945, %v2305
        %v2337 = vadd.f32 %v1946, %v2308
        %2338 = vst.msk [vmem:[#allocation2] sm:$0xff] %vm549, %v2310
        %2339 = vst.msk [vmem:[#allocation2 + $0x8] sm:$0xff] %vm549, %v2311
        %2340 = vst.msk [vmem:[#allocation2 + $0x10] sm:$0xff] %vm549, %v2312
        %2341 = vst.msk [vmem:[#allocation2 + $0x18] sm:$0xff] %vm549, %v2313
        %2342 = vst.msk [vmem:[#allocation2 + $0x20] sm:$0xff] %vm549, %v2314
        %2343 = vst.msk [vmem:[#allocation2 + $0x28] sm:$0xff] %vm549, %v2315
        %2344 = vst.msk [vmem:[#allocation2 + $0x30] sm:$0xff] %vm549, %v2316
        %2345 = vst.msk [vmem:[#allocation2 + $0x38] sm:$0xff] %vm549, %v2317
        %2346 = vst.msk [vmem:[#allocation2 + $0x40] sm:$0xff] %vm549, %v2318
        %2347 = vst.msk [vmem:[#allocation2 + $0x48] sm:$0xff] %vm549, %v2319
        %2348 = vst.msk [vmem:[#allocation2 + $0x50] sm:$0xff] %vm549, %v2320
        %2349 = vst.msk [vmem:[#allocation2 + $0x58] sm:$0xff] %vm549, %v2321
        %2350 = vst.msk [vmem:[#allocation2 + $0x60] sm:$0xff] %vm549, %v2322
        %2351 = vst.msk [vmem:[#allocation2 + $0x68] sm:$0xff] %vm549, %v2323
        %2352 = vst.msk [vmem:[#allocation2 + $0x70] sm:$0xff] %vm549, %v2324
        %2353 = vst.msk [vmem:[#allocation2 + $0x78] sm:$0xff] %vm549, %v2325
        %2354 = vst.msk [vmem:[#allocation2 + $0x80] sm:$0xff] %vm549, %v2326
        %2355 = vst.msk [vmem:[#allocation2 + $0x88] sm:$0xff] %vm549, %v2327
        %2356 = vst.msk [vmem:[#allocation2 + $0x90] sm:$0xff] %vm549, %v2328
        %2357 = vst.msk [vmem:[#allocation2 + $0x98] sm:$0xff] %vm549, %v2329
        %2358 = vst.msk [vmem:[#allocation2 + $0xa0] sm:$0xff] %vm549, %v2330
        %2359 = vst.msk [vmem:[#allocation2 + $0xa8] sm:$0xff] %vm549, %v2331
        %2360 = vst.msk [vmem:[#allocation2 + $0xb0] sm:$0xff] %vm549, %v2332
        %2361 = vst.msk [vmem:[#allocation2 + $0xb8] sm:$0xff] %vm549, %v2333
        %2362 = vst.msk [vmem:[#allocation2 + $0xc0] sm:$0xff] %vm549, %v2334
        %2363 = vst.msk [vmem:[#allocation2 + $0xc8] sm:$0xff] %vm549, %v2335
        %2364 = vst.msk [vmem:[#allocation2 + $0xd0] sm:$0xff] %vm549, %v2336
        %2365 = vst.msk [vmem:[#allocation2 + $0xd8] sm:$0xff] %vm549, %v2337
        %v2366 = vld [vmem:[#allocation3] sm:$0x1]
        %v2367 = vld [vmem:[#allocation2] ss:$2 sm:$0xff]
        %s2368 = scalar_lea.vmem [#allocation2], 16
        %v2369 = vld [vmem:[%s2368] ss:$2 sm:$0xff]
        %s2370 = scalar_lea.vmem [#allocation2], 32
        %v2371 = vld [vmem:[%s2370] ss:$2 sm:$0xff]
        %s2372 = scalar_lea.vmem [#allocation2], 48
        %v2373 = vld [vmem:[%s2372] ss:$2 sm:$0xff]
        %s2374 = scalar_lea.vmem [#allocation2], 64
        %v2375 = vld [vmem:[%s2374] ss:$2 sm:$0xff]
        %s2376 = scalar_lea.vmem [#allocation2], 80
        %v2377 = vld [vmem:[%s2376] ss:$2 sm:$0xff]
        %s2378 = scalar_lea.vmem [#allocation2], 96
        %v2379 = vld [vmem:[%s2378] ss:$2 sm:$0xff]
        %s2380 = scalar_lea.vmem [#allocation2], 112
        %v2381 = vld [vmem:[%s2380] ss:$2 sm:$0xff]
        %s2382 = scalar_lea.vmem [#allocation2], 128
        %v2383 = vld [vmem:[%s2382] ss:$2 sm:$0xff]
        %s2384 = scalar_lea.vmem [#allocation2], 144
        %v2385 = vld [vmem:[%s2384] ss:$2 sm:$0xff]
        %s2386 = scalar_lea.vmem [#allocation2], 160
        %v2387 = vld [vmem:[%s2386] ss:$2 sm:$0xff]
        %s2388 = scalar_lea.vmem [#allocation2], 176
        %v2389 = vld [vmem:[%s2388] ss:$2 sm:$0xff]
        %s2390 = scalar_lea.vmem [#allocation2], 192
        %v2391 = vld [vmem:[%s2390] ss:$2 sm:$0xff]
        %s2392 = scalar_lea.vmem [#allocation2], 208
        %v2393 = vld [vmem:[%s2392] ss:$2 sm:$0xff]
        %s2394 = scalar_lea.vmem [#allocation2], 1
        %v2395 = vld [vmem:[%s2394] ss:$2 sm:$0xff]
        %s2396 = scalar_lea.vmem [#allocation2], 17
        %v2397 = vld [vmem:[%s2396] ss:$2 sm:$0xff]
        %s2398 = scalar_lea.vmem [#allocation2], 33
        %v2399 = vld [vmem:[%s2398] ss:$2 sm:$0xff]
        %s2400 = scalar_lea.vmem [#allocation2], 49
        %v2401 = vld [vmem:[%s2400] ss:$2 sm:$0xff]
        %s2402 = scalar_lea.vmem [#allocation2], 65
        %v2403 = vld [vmem:[%s2402] ss:$2 sm:$0xff]
        %s2404 = scalar_lea.vmem [#allocation2], 81
        %v2405 = vld [vmem:[%s2404] ss:$2 sm:$0xff]
        %s2406 = scalar_lea.vmem [#allocation2], 97
        %v2407 = vld [vmem:[%s2406] ss:$2 sm:$0xff]
        %s2408 = scalar_lea.vmem [#allocation2], 113
        %v2409 = vld [vmem:[%s2408] ss:$2 sm:$0xff]
        %s2410 = scalar_lea.vmem [#allocation2], 129
        %v2411 = vld [vmem:[%s2410] ss:$2 sm:$0xff]
        %s2412 = scalar_lea.vmem [#allocation2], 145
        %v2413 = vld [vmem:[%s2412] ss:$2 sm:$0xff]
        %s2414 = scalar_lea.vmem [#allocation2], 161
        %v2415 = vld [vmem:[%s2414] ss:$2 sm:$0xff]
        %s2416 = scalar_lea.vmem [#allocation2], 177
        %v2417 = vld [vmem:[%s2416] ss:$2 sm:$0xff]
        %s2418 = scalar_lea.vmem [#allocation2], 193
        %v2419 = vld [vmem:[%s2418] ss:$2 sm:$0xff]
        %s2420 = scalar_lea.vmem [#allocation2], 209
        %v2421 = vld [vmem:[%s2420] ss:$2 sm:$0xff]
        %v2422 = vmax.f32 %v2367, %v2395
        %v2423 = vmax.f32 %v2369, %v2397
        %v2424 = vmax.f32 %v2371, %v2399
        %v2425 = vmax.f32 %v2373, %v2401
        %v2426 = vmax.f32 %v2375, %v2403
        %v2427 = vmax.f32 %v2377, %v2405
        %v2428 = vmax.f32 %v2379, %v2407
        %v2429 = vmax.f32 %v2381, %v2409
        %v2430 = vmax.f32 %v2383, %v2411
        %v2431 = vmax.f32 %v2385, %v2413
        %v2432 = vmax.f32 %v2387, %v2415
        %v2433 = vmax.f32 %v2389, %v2417
        %v2434 = vmax.f32 %v2391, %v2419
        %v2435 = vmax.f32 %v2393, %v2421
        %v2436 = vmax.f32 %v2422, %v2423
        %v2437 = vmax.f32 %v2424, %v2425
        %v2438 = vmax.f32 %v2426, %v2427
        %v2439 = vmax.f32 %v2428, %v2429
        %v2440 = vmax.f32 %v2430, %v2431
        %v2441 = vmax.f32 %v2432, %v2433
        %v2442 = vmax.f32 %v2434, %v2435
        %v2444 = vperm.slane %v2366, 0
        %v2446 = vadd.f32 %v2436, %v2444
        %v2447 = vadd.f32 %v2437, %v2444
        %v2448 = vadd.f32 %v2438, %v2444
        %v2449 = vadd.f32 %v2439, %v2444
        %v2450 = vadd.f32 %v2440, %v2444
        %v2451 = vadd.f32 %v2441, %v2444
        %v2452 = vadd.f32 %v2442, %v2444
        %v2453 = vmax.f32 %v2446, 0.0
        %v2454 = vmax.f32 %v2447, 0.0
        %v2455 = vmax.f32 %v2448, 0.0
        %v2456 = vmax.f32 %v2449, 0.0
        %v2457 = vmax.f32 %v2450, 0.0
        %v2458 = vmax.f32 %v2451, 0.0
        %v2459 = vmax.f32 %v2452, 0.0
        %vm2460 = vcmask 522240
        %2461 = vst.msk [vmem:[%s185] sm:$0x7f] %vm2460, %v2453
        %2462 = vst.msk [vmem:[%s185 + $0x8] sm:$0x7f] %vm2460, %v2454
        %2463 = vst.msk [vmem:[%s185 + $0x10] sm:$0x7f] %vm2460, %v2455
        %2464 = vst.msk [vmem:[%s185 + $0x18] sm:$0x7f] %vm2460, %v2456
        %2465 = vst.msk [vmem:[%s185 + $0x20] sm:$0x7f] %vm2460, %v2457
        %2466 = vst.msk [vmem:[%s185 + $0x28] sm:$0x7f] %vm2460, %v2458
        %2467 = vst.msk [vmem:[%s185 + $0x30] sm:$0x7f] %vm2460, %v2459
        %p2468 = scmp.lt.s32.totalorder %s15, 1
        %s2469 = scalar_select %p2468, %s15, 1
        %s2470 = smul.addr %s2469, 7
        %s2471 = smul.addr %s2470, 8
        %s2472 = scalar_lea.vmem %s3, %s2471
        // Predicated region
        $region37: #{cnn_forward.5} parent=31 // pred_check
          %p2473 = pneg %p101
        $region38: #{cnn_forward.5} parent=31 // pred_check_branch
          %2475 = sbr.rel (%p2473) target = $region40
        $region39: #{cnn_forward.5} parent=31 // pred_region
          _
        $region40: #{cnn_forward.5} parent=31 // pred_fallthru
          _
      $region32: #{cnn_forward.5} parent=5 // pred_fallthru
        _
      %p2476 = scmp.le.s32.totalorder 2, %s10
      // Predicated region
      $region41: #{cnn_forward.5} parent=5 // pred_check
        %p2477 = pneg %p2476
      $region42: #{cnn_forward.5} parent=5 // pred_check_branch
        %2479 = sbr.rel (%p2477) target = $region44
      $region43: #{cnn_forward.5} parent=5 // pred_region
        %s2480 = ssub.s32 %s10, 2
        // Predicated region
        $region45: #{cnn_forward.5} parent=43 // pred_check
          %p2481 = pneg %p107
        $region46: #{cnn_forward.5} parent=43 // pred_check_branch
          %2483 = sbr.rel (%p2481) target = $region48
        $region47: #{cnn_forward.5} parent=43 // pred_region
          %p2484 = scmp.lt.s32.totalorder %s16, 1
          %s2485 = scalar_select %p2484, %s16, 1
          %s2486 = smul.addr %s2485, 7
          %s2487 = smul.addr %s2486, 8
          %s2488 = scalar_lea.vmem %s3, %s2487
        $region48: #{cnn_forward.5} parent=43 // pred_fallthru
          _
      $region44: #{cnn_forward.5} parent=5 // pred_fallthru
        _
    $region6: #{cnn_forward.5} parent=1 // loop_footer
      %s14 = sadd.s32 1, %s10
    $region7: #{cnn_forward.5} parent=1 // loop_footer_branch
      %9 = sbr.rel target = $region3
    $region8: #{cnn_forward.5} parent=1 // loop_exit
      _
    %2489 = vsyncpa [#allocation4], 1
    %s2490 = scalar_lea.sflag [#allocation4], 1
    %2491 = vsyncpa %s2490, 1

// kernel: cnn_forward.6
$region0: #{cnn_forward.6}
  #allocation0 [shape = 'u32[]', space=smem, size = 0x4, offset = 0x4, fixed_abs, tag = 'smem constant byte address 0x4 - core index']
  #allocation1 [shape = 'u32[72,128]{1,0:T(1,128)}', space=vmem, size = 0x9000, scoped, tag = 'internal scratch']
  %s0 = inlined_call_operand.vmem [shape: f32[2,3136], index: 0, kind: input, shape index: {}]
  %s1 = inlined_call_operand.hbm [shape: f32[3136,1024], index: 1, kind: input, shape index: {}]
  %s2 = inlined_call_operand.hbm [shape: f32[1,1024], index: 2, kind: input, shape index: {}]
  %s3 = inlined_call_operand.vmem [shape: f32[2,1024], index: 3, kind: output, shape index: {}]
  %s4 = sld [smem:[#allocation0]]
  $region53: #{cnn_forward.6} parent=0
    _
  %s6 = ssub.s32 1, %s4
  %s7 = scalar_select 0, %s6, %s4
  $region1: #{cnn_forward.6} parent=0
    #allocation2 [shape = 'u8[6422528]{0}', space=vmem, size = 0x620000, scoped, tag = 'input window, operand 1']
    #allocation3 [shape = 's32[2]{0}', space=sflag, size = 0x8, scoped, tag = 'scoped memory for cnn_forward.6']
    #allocation4 [shape = 'u8[2048]{0}', space=vmem, size = 0x800, scoped, tag = 'input window, operand 2']
    #allocation5 [shape = 's32[2]{0}', space=sflag, size = 0x8, scoped, tag = 'scoped memory for cnn_forward.6']
    %8 = vsyncpa [#allocation3], 0
    %s9 = scalar_lea.sflag [#allocation3], 1
    %10 = vsyncpa %s9, 0
    %11 = vsyncpa [#allocation5], 0
    %s12 = scalar_lea.sflag [#allocation5], 1
    %13 = vsyncpa %s12, 0
    loop: start=0, step=1, limit=6
    $region2: #{cnn_forward.6} parent=1 // loop_pre_header
      _
    $region3: #{cnn_forward.6} parent=1 // loop_header
      %s15 = sphi 0, %s19
      %p16 = scmp.ge.s32.totalorder %s15, 6
      %s22 = sphi 0, %s34
      %s23 = sphi 0, %s30
      %s24 = sphi 0, %s22
      %s25 = sphi 0, %s23
      %s26 = sphi 0, %s24
      %s27 = sphi 0, %s25
      %s37 = sphi 0, %s39
      %s40 = sphi 0, %s37
      %s41 = sphi 0, %s40
      %s57 = sphi 0, %s41
      %s63 = sphi 0, %s65
      %s66 = sphi 0, %s63
      %s67 = sphi 0, %s66
      %s83 = sphi 0, %s67
      %s89 = sphi 0, %s91
      %s92 = sphi 0, %s89
      %s93 = sphi 0, %s92
      %s109 = sphi 0, %s93
      %s117 = sphi 0, %s119
      %s120 = sphi 0, %s117
      %s121 = sphi 0, %s120
      %s137 = sphi 0, %s121
    $region4: #{cnn_forward.6} parent=1 // loop_header_branch
      %18 = sbr.rel (%p16) target = $region8
    $region5: #{cnn_forward.6} parent=1 // loop_body
      %s20 = ssub.s32 %s15, 1
      %s21 = ssub.s32 %s15, 2
      %s28 = sadd.s32 1, %s23
      %p29 = scmp.ge.s32.totalorder %s28, 1
      %s30 = scalar_select %p29, 0, %s28
      %s31 = sadd.s32 1, %s22
      %s32 = scalar_select %p29, %s31, %s22
      %p33 = scmp.ge.s32.totalorder %s32, 4
      %s34 = scalar_select %p33, 0, %s32
      %s35 = ssub.s32 %s23, %s30
      %p36 = scmp.eq.s32.totalorder %s35, 0
      %s38 = sadd.s32 %s37, 1
      %s39 = scalar_select %p36, %s37, %s38
      %p42 = pneg %p36
      %p43 = scmp.eq.s32.totalorder %s15, 3
      %p44 = por %p42, %p43
      %p45 = scmp.ne.s32.totalorder %s37, %s40
      %p46 = scmp.eq.s32.totalorder %s15, 0
      %p47 = por %p45, %p46
      %p48 = scmp.ne.s32.totalorder %s37, %s40
      %p49 = scmp.eq.s32.totalorder %s20, 3
      %p50 = por %p48, %p49
      %p51 = scmp.ne.s32.totalorder %s40, %s41
      %p52 = scmp.eq.s32.totalorder %s20, 0
      %p53 = por %p51, %p52
      %p54 = scmp.ne.s32.totalorder %s40, %s41
      %p55 = scmp.eq.s32.totalorder %s21, 3
      %p56 = por %p54, %p55
      %p58 = scmp.ne.s32.totalorder %s41, %s57
      %p59 = scmp.eq.s32.totalorder %s21, 0
      %p60 = por %p58, %p59
      %s61 = ssub.s32 %s22, %s34
      %p62 = scmp.eq.s32.totalorder %s61, 0
      %s64 = sadd.s32 %s63, 1
      %s65 = scalar_select %p62, %s63, %s64
      %p68 = pneg %p62
      %p69 = scmp.eq.s32.totalorder %s15, 3
      %p70 = por %p68, %p69
      %p71 = scmp.ne.s32.totalorder %s63, %s66
      %p72 = scmp.eq.s32.totalorder %s15, 0
      %p73 = por %p71, %p72
      %p74 = scmp.ne.s32.totalorder %s63, %s66
      %p75 = scmp.eq.s32.totalorder %s20, 3
      %p76 = por %p74, %p75
      %p77 = scmp.ne.s32.totalorder %s66, %s67
      %p78 = scmp.eq.s32.totalorder %s20, 0
      %p79 = por %p77, %p78
      %p80 = scmp.ne.s32.totalorder %s66, %s67
      %p81 = scmp.eq.s32.totalorder %s21, 3
      %p82 = por %p80, %p81
      %p84 = scmp.ne.s32.totalorder %s67, %s83
      %p85 = scmp.eq.s32.totalorder %s21, 0
      %p86 = por %p84, %p85
      %s87 = ssub.s32 %s22, %s34
      %p88 = scmp.eq.s32.totalorder %s87, 0
      %s90 = sadd.s32 %s89, 1
      %s91 = scalar_select %p88, %s89, %s90
      %p94 = pneg %p88
      %p95 = scmp.eq.s32.totalorder %s15, 3
      %p96 = por %p94, %p95
      %p97 = scmp.ne.s32.totalorder %s89, %s92
      %p98 = scmp.eq.s32.totalorder %s15, 0
      %p99 = por %p97, %p98
      %p100 = scmp.ne.s32.totalorder %s89, %s92
      %p101 = scmp.eq.s32.totalorder %s20, 3
      %p102 = por %p100, %p101
      %p103 = scmp.ne.s32.totalorder %s92, %s93
      %p104 = scmp.eq.s32.totalorder %s20, 0
      %p105 = por %p103, %p104
      %p106 = scmp.ne.s32.totalorder %s92, %s93
      %p107 = scmp.eq.s32.totalorder %s21, 3
      %p108 = por %p106, %p107
      %p110 = scmp.ne.s32.totalorder %s93, %s109
      %p111 = scmp.eq.s32.totalorder %s21, 0
      %p112 = por %p110, %p111
      %s113 = ssub.s32 %s23, %s30
      %s114 = ssub.s32 %s22, %s34
      %s115 = sor.u32 %s113, %s114
      %p116 = scmp.eq.s32.totalorder %s115, 0
      %s118 = sadd.s32 %s117, 1
      %s119 = scalar_select %p116, %s117, %s118
      %p122 = pneg %p116
      %p123 = scmp.eq.s32.totalorder %s15, 3
      %p124 = por %p122, %p123
      %p125 = scmp.ne.s32.totalorder %s117, %s120
      %p126 = scmp.eq.s32.totalorder %s15, 0
      %p127 = por %p125, %p126
      %p128 = scmp.ne.s32.totalorder %s117, %s120
      %p129 = scmp.eq.s32.totalorder %s20, 3
      %p130 = por %p128, %p129
      %p131 = scmp.ne.s32.totalorder %s120, %s121
      %p132 = scmp.eq.s32.totalorder %s20, 0
      %p133 = por %p131, %p132
      %p134 = scmp.ne.s32.totalorder %s120, %s121
      %p135 = scmp.eq.s32.totalorder %s21, 3
      %p136 = por %p134, %p135
      %p138 = scmp.ne.s32.totalorder %s121, %s137
      %p139 = scmp.eq.s32.totalorder %s21, 0
      %p140 = por %p138, %p139
      %p141 = scmp.le.s32.totalorder 1, %s15
      %p142 = scmp.lt.s32.totalorder %s15, 5
      %p143 = pnand %p141, %p142
      %p144 = pneg %p143
      // Predicated region
      $region9: #{cnn_forward.6} parent=5 // pred_check
        _
      $region10: #{cnn_forward.6} parent=5 // pred_check_branch
        %146 = sbr.rel (%p143) target = $region12
      $region11: #{cnn_forward.6} parent=5 // pred_region
        %s147 = ssub.s32 %s15, 1
        // Predicated region
        $region13: #{cnn_forward.6} parent=11 // pred_check
          %p148 = pneg %p53
        $region14: #{cnn_forward.6} parent=11 // pred_check_branch
          %150 = sbr.rel (%p148) target = $region16
        $region15: #{cnn_forward.6} parent=11 // pred_region
          %p151 = scmp.lt.s32.totalorder %s25, 0
          %s152 = scalar_select %p151, %s25, 0
          %s153 = smul.addr %s152, 25
          %s154 = smul.addr %s153, 2
          %s155 = scalar_lea.vmem %s0, %s154
        $region16: #{cnn_forward.6} parent=11 // pred_fallthru
          _
      $region12: #{cnn_forward.6} parent=5 // pred_fallthru
        _
      %p156 = scmp.lt.s32.totalorder %s15, 4
      // Predicated region
      $region17: #{cnn_forward.6} parent=5 // pred_check
        %p157 = pneg %p156
      $region18: #{cnn_forward.6} parent=5 // pred_check_branch
        %159 = sbr.rel (%p157) target = $region20
      $region19: #{cnn_forward.6} parent=5 // pred_region
        // Predicated region
        $region21: #{cnn_forward.6} parent=19 // pred_check
          %p160 = pneg %p73
        $region22: #{cnn_forward.6} parent=19 // pred_check_branch
          %162 = sbr.rel (%p160) target = $region24
        $region23: #{cnn_forward.6} parent=19 // pred_region
          %s163 = sand.u32 %s63, 1
          %s164 = scalar_lea.sflag [#allocation3], %s163
          %s165 = sand.u32 %s63, 1
          %s166 = smul.addr %s165, 6272
          %s167 = scalar_lea.vmem [#allocation2], %s166
          %s168 = smul.u32 2, %s22
          %170 = vsyncadd %s164, 0
          %s171 = smul.addr %s168, 8
          %s172 = scalar_lea.hbm %s1, %s171
          %s173 = sshll.u32 %s172, 4
          %s174 = int_to_ptr.hbm [resolvable:$true] %s173
          %s175 = sshll.u32 %s167, 4
          %s176 = int_to_ptr.vmem [resolvable:$true] %s175
          %181 = dma.hbm_to_vmem [thread:$0]  %s174, 100352, %s176, %s164, 1024, 256, 16
        $region24: #{cnn_forward.6} parent=19 // pred_fallthru
          _
        // Predicated region
        $region25: #{cnn_forward.6} parent=19 // pred_check
          %p182 = pneg %p99
        $region26: #{cnn_forward.6} parent=19 // pred_check_branch
          %184 = sbr.rel (%p182) target = $region28
        $region27: #{cnn_forward.6} parent=19 // pred_region
          %s185 = sand.u32 %s89, 1
          %s186 = scalar_lea.sflag [#allocation5], %s185
          %s187 = sand.u32 %s89, 1
          %s188 = smul.addr %s187, 2
          %s189 = scalar_lea.vmem [#allocation4], %s188
          %s190 = smul.u32 2, %s22
          %192 = vsyncadd %s186, 0
          %s193 = scalar_lea.hbm %s2, %s190
          %s195 = sshll.u32 %s193, 4
          %s196 = int_to_ptr.hbm [resolvable:$true] %s195
          %s197 = sshll.u32 %s189, 4
          %s198 = int_to_ptr.vmem [resolvable:$true] %s197
          %200 = dma.hbm_to_vmem [thread:$0]  %s196, 32, %s198, %s186
        $region28: #{cnn_forward.6} parent=19 // pred_fallthru
          _
      $region20: #{cnn_forward.6} parent=5 // pred_fallthru
        _
      %p201 = scmp.le.s32.totalorder 1, %s15
      %p202 = scmp.lt.s32.totalorder %s15, 5
      %p203 = pnand %p201, %p202
      %p204 = pneg %p203
      // Predicated region
      $region29: #{cnn_forward.6} parent=5 // pred_check
        _
      $region30: #{cnn_forward.6} parent=5 // pred_check_branch
        %206 = sbr.rel (%p203) target = $region32
      $region31: #{cnn_forward.6} parent=5 // pred_region
        %s207 = ssub.s32 %s15, 1
        %s208 = sand.u32 %s66, 1
        %s209 = scalar_lea.sflag [#allocation3], %s208
        %s210 = sand.u32 %s66, 1
        %s211 = smul.addr %s210, 6272
        %s212 = scalar_lea.vmem [#allocation2], %s211
        // Predicated region
        $region33: #{cnn_forward.6} parent=31 // pred_check
          %p213 = pneg %p79
        $region34: #{cnn_forward.6} parent=31 // pred_check_branch
          %215 = sbr.rel (%p213) target = $region36
        $region35: #{cnn_forward.6} parent=31 // pred_region
          %217 = dma.done %s209, 100352
        $region36: #{cnn_forward.6} parent=31 // pred_fallthru
          _
        %s218 = sand.u32 %s92, 1
        %s219 = scalar_lea.sflag [#allocation5], %s218
        %s220 = sand.u32 %s92, 1
        %s221 = smul.addr %s220, 2
        %s222 = scalar_lea.vmem [#allocation4], %s221
        // Predicated region
        $region37: #{cnn_forward.6} parent=31 // pred_check
          %p223 = pneg %p105
        $region38: #{cnn_forward.6} parent=31 // pred_check_branch
          %225 = sbr.rel (%p223) target = $region40
        $region39: #{cnn_forward.6} parent=31 // pred_region
          %227 = dma.done %s219, 32
        $region40: #{cnn_forward.6} parent=31 // pred_fallthru
          _
        %p228 = scmp.lt.s32.totalorder %s25, 0
        %s229 = scalar_select %p228, %s25, 0
        %s230 = smul.addr %s229, 25
        %s231 = smul.addr %s230, 2
        %s232 = scalar_lea.vmem %s0, %s231
        %p233 = pneg %p53
        %p234 = pneg %p50
        %s235 = sand.u32 %s66, 1
        %s236 = scalar_lea.sflag [#allocation3], %s235
        %s237 = sand.u32 %s66, 1
        %s238 = smul.addr %s237, 6272
        %s239 = scalar_lea.vmem [#allocation2], %s238
        %p240 = pneg %p79
        %p241 = pneg %p76
        %s242 = sand.u32 %s92, 1
        %s243 = scalar_lea.sflag [#allocation5], %s242
        %s244 = sand.u32 %s92, 1
        %s245 = smul.addr %s244, 2
        %s246 = scalar_lea.vmem [#allocation4], %s245
        %p247 = pneg %p105
        %p248 = pneg %p102
        %p249 = pneg %p133
        %p250 = pneg %p130
        %s251 = smul.u32 2, %s24
        %p252 = scmp.lt.s32.totalorder %s25, 0
        %s253 = scalar_select %p252, %s25, 0
        %p254 = scmp.lt.s32.totalorder %s251, 7
        %s255 = scalar_select %p254, %s251, 7
        %s256 = smul.addr %s253, 8
        %s257 = sadd.s32 %s255, %s256
        %s258 = smul.addr %s257, 2
        %s259 = scalar_lea.vmem %s3, %s258
        %p260 = scmp.lt.s32.totalorder %s25, 0
        %s261 = scalar_select %p260, %s25, 0
        %s262 = smul.addr %s261, 25
        %s263 = smul.addr %s262, 2
        %s264 = scalar_lea.vmem %s0, %s263
        %s265 = smul.u32 2, %s24
        %s266 = smul.u32 2, %s24
        %s267 = smul.u32 2, %s24
        %p268 = scmp.lt.s32.totalorder %s25, 0
        %s269 = scalar_select %p268, %s25, 0
        %p270 = scmp.lt.s32.totalorder %s267, 7
        %s271 = scalar_select %p270, %s267, 7
        %s272 = smul.addr %s269, 8
        %s273 = sadd.s32 %s271, %s272
        %s274 = smul.addr %s273, 2
        %s275 = scalar_lea.vmem %s3, %s274
        %s276 = smul.u32 2, %s24
        %v277 = vld [vmem:[%s264] sm:$0xff]
        %v278 = vld [vmem:[%s264 + $0x8] sm:$0xff]
        %v279 = vld [vmem:[%s264 + $0x10] sm:$0xff]
        %v280 = vld [vmem:[%s264 + $0x18] sm:$0xff]
        %v281 = vld [vmem:[%s264 + $0x20] sm:$0xff]
        %v282 = vld [vmem:[%s264 + $0x28] sm:$0xff]
        %v283 = vld [vmem:[%s264 + $0x30] sm:$0x3]
        %v284 = vld [vmem:[%s212] sm:$0xff]
        %v285 = vld [vmem:[%s212 + $0x8] sm:$0xff]
        %v286 = vld [vmem:[%s212 + $0x10] sm:$0xff]
        %v287 = vld [vmem:[%s212 + $0x18] sm:$0xff]
        %v288 = vld [vmem:[%s212 + $0x20] sm:$0xff]
        %v289 = vld [vmem:[%s212 + $0x28] sm:$0xff]
        %v290 = vld [vmem:[%s212 + $0x30] sm:$0xff]
        %v291 = vld [vmem:[%s212 + $0x38] sm:$0xff]
        %v292 = vld [vmem:[%s212 + $0x40] sm:$0xff]
        %v293 = vld [vmem:[%s212 + $0x48] sm:$0xff]
        %v294 = vld [vmem:[%s212 + $0x50] sm:$0xff]
        %v295 = vld [vmem:[%s212 + $0x58] sm:$0xff]
        %v296 = vld [vmem:[%s212 + $0x60] sm:$0xff]
        %v297 = vld [vmem:[%s212 + $0x68] sm:$0xff]
        %v298 = vld [vmem:[%s212 + $0x70] sm:$0xff]
        %v299 = vld [vmem:[%s212 + $0x78] sm:$0xff]
        %v300 = vld [vmem:[%s212 + $0x80] sm:$0xff]
        %v301 = vld [vmem:[%s212 + $0x88] sm:$0xff]
        %v302 = vld [vmem:[%s212 + $0x90] sm:$0xff]
        %v303 = vld [vmem:[%s212 + $0x98] sm:$0xff]
        %v304 = vld [vmem:[%s212 + $0xa0] sm:$0xff]
        %v305 = vld [vmem:[%s212 + $0xa8] sm:$0xff]
        %v306 = vld [vmem:[%s212 + $0xb0] sm:$0xff]
        %v307 = vld [vmem:[%s212 + $0xb8] sm:$0xff]
        %v308 = vld [vmem:[%s212 + $0xc0] sm:$0xff]
        %v309 = vld [vmem:[%s212 + $0xc8] sm:$0xff]
        %v310 = vld [vmem:[%s212 + $0xd0] sm:$0xff]
        %v311 = vld [vmem:[%s212 + $0xd8] sm:$0xff]
        %v312 = vld [vmem:[%s212 + $0xe0] sm:$0xff]
        %v313 = vld [vmem:[%s212 + $0xe8] sm:$0xff]
        %v314 = vld [vmem:[%s212 + $0xf0] sm:$0xff]
        %v315 = vld [vmem:[%s212 + $0xf8] sm:$0xff]
        %v316 = vld [vmem:[%s212 + $0x100] sm:$0xff]
        %v317 = vld [vmem:[%s212 + $0x108] sm:$0xff]
        %v318 = vld [vmem:[%s212 + $0x110] sm:$0xff]
        %v319 = vld [vmem:[%s212 + $0x118] sm:$0xff]
        %v320 = vld [vmem:[%s212 + $0x120] sm:$0xff]
        %v321 = vld [vmem:[%s212 + $0x128] sm:$0xff]
        %v322 = vld [vmem:[%s212 + $0x130] sm:$0xff]
        %v323 = vld [vmem:[%s212 + $0x138] sm:$0xff]
        %v324 = vld [vmem:[%s212 + $0x140] sm:$0xff]
        %v325 = vld [vmem:[%s212 + $0x148] sm:$0xff]
        %v326 = vld [vmem:[%s212 + $0x150] sm:$0xff]
        %v327 = vld [vmem:[%s212 + $0x158] sm:$0xff]
        %v328 = vld [vmem:[%s212 + $0x160] sm:$0xff]
        %v329 = vld [vmem:[%s212 + $0x168] sm:$0xff]
        %v330 = vld [vmem:[%s212 + $0x170] sm:$0xff]
        %v331 = vld [vmem:[%s212 + $0x178] sm:$0xff]
        %v332 = vld [vmem:[%s212 + $0x180] sm:$0xff]
        %v333 = vld [vmem:[%s212 + $0x188] sm:$0xff]
        %v334 = vld [vmem:[%s212 + $0x190] sm:$0xff]
        %v335 = vld [vmem:[%s212 + $0x198] sm:$0xff]
        %v336 = vld [vmem:[%s212 + $0x1a0] sm:$0xff]
        %v337 = vld [vmem:[%s212 + $0x1a8] sm:$0xff]
        %v338 = vld [vmem:[%s212 + $0x1b0] sm:$0xff]
        %v339 = vld [vmem:[%s212 + $0x1b8] sm:$0xff]
        %v340 = vld [vmem:[%s212 + $0x1c0] sm:$0xff]
        %v341 = vld [vmem:[%s212 + $0x1c8] sm:$0xff]
        %v342 = vld [vmem:[%s212 + $0x1d0] sm:$0xff]
        %v343 = vld [vmem:[%s212 + $0x1d8] sm:$0xff]
        %v344 = vld [vmem:[%s212 + $0x1e0] sm:$0xff]
        %v345 = vld [vmem:[%s212 + $0x1e8] sm:$0xff]
        %v346 = vld [vmem:[%s212 + $0x1f0] sm:$0xff]
        %v347 = vld [vmem:[%s212 + $0x1f8] sm:$0xff]
        %v348 = vld [vmem:[%s212 + $0x200] sm:$0xff]
        %v349 = vld [vmem:[%s212 + $0x208] sm:$0xff]
        %v350 = vld [vmem:[%s212 + $0x210] sm:$0xff]
        %v351 = vld [vmem:[%s212 + $0x218] sm:$0xff]
        %v352 = vld [vmem:[%s212 + $0x220] sm:$0xff]
        %v353 = vld [vmem:[%s212 + $0x228] sm:$0xff]
        %v354 = vld [vmem:[%s212 + $0x230] sm:$0xff]
        %v355 = vld [vmem:[%s212 + $0x238] sm:$0xff]
        %v356 = vld [vmem:[%s212 + $0x240] sm:$0xff]
        %v357 = vld [vmem:[%s212 + $0x248] sm:$0xff]
        %v358 = vld [vmem:[%s212 + $0x250] sm:$0xff]
        %v359 = vld [vmem:[%s212 + $0x258] sm:$0xff]
        %v360 = vld [vmem:[%s212 + $0x260] sm:$0xff]
        %v361 = vld [vmem:[%s212 + $0x268] sm:$0xff]
        %v362 = vld [vmem:[%s212 + $0x270] sm:$0xff]
        %v363 = vld [vmem:[%s212 + $0x278] sm:$0xff]
        %v364 = vld [vmem:[%s212 + $0x280] sm:$0xff]
        %v365 = vld [vmem:[%s212 + $0x288] sm:$0xff]
        %v366 = vld [vmem:[%s212 + $0x290] sm:$0xff]
        %v367 = vld [vmem:[%s212 + $0x298] sm:$0xff]
        %v368 = vld [vmem:[%s212 + $0x2a0] sm:$0xff]
        %v369 = vld [vmem:[%s212 + $0x2a8] sm:$0xff]
        %v370 = vld [vmem:[%s212 + $0x2b0] sm:$0xff]
        %v371 = vld [vmem:[%s212 + $0x2b8] sm:$0xff]
        %v372 = vld [vmem:[%s212 + $0x2c0] sm:$0xff]
        %v373 = vld [vmem:[%s212 + $0x2c8] sm:$0xff]
        %v374 = vld [vmem:[%s212 + $0x2d0] sm:$0xff]
        %v375 = vld [vmem:[%s212 + $0x2d8] sm:$0xff]
        %v376 = vld [vmem:[%s212 + $0x2e0] sm:$0xff]
        %v377 = vld [vmem:[%s212 + $0x2e8] sm:$0xff]
        %v378 = vld [vmem:[%s212 + $0x2f0] sm:$0xff]
        %v379 = vld [vmem:[%s212 + $0x2f8] sm:$0xff]
        %v380 = vld [vmem:[%s212 + $0x300] sm:$0xff]
        %v381 = vld [vmem:[%s212 + $0x308] sm:$0xff]
        %v382 = vld [vmem:[%s212 + $0x310] sm:$0xff]
        %v383 = vld [vmem:[%s212 + $0x318] sm:$0xff]
        %v384 = vld [vmem:[%s212 + $0x320] sm:$0xff]
        %v385 = vld [vmem:[%s212 + $0x328] sm:$0xff]
        %v386 = vld [vmem:[%s212 + $0x330] sm:$0xff]
        %v387 = vld [vmem:[%s212 + $0x338] sm:$0xff]
        %v388 = vld [vmem:[%s212 + $0x340] sm:$0xff]
        %v389 = vld [vmem:[%s212 + $0x348] sm:$0xff]
        %v390 = vld [vmem:[%s212 + $0x350] sm:$0xff]
        %v391 = vld [vmem:[%s212 + $0x358] sm:$0xff]
        %v392 = vld [vmem:[%s212 + $0x360] sm:$0xff]
        %v393 = vld [vmem:[%s212 + $0x368] sm:$0xff]
        %v394 = vld [vmem:[%s212 + $0x370] sm:$0xff]
        %v395 = vld [vmem:[%s212 + $0x378] sm:$0xff]
        %v396 = vld [vmem:[%s212 + $0x380] sm:$0xff]
        %v397 = vld [vmem:[%s212 + $0x388] sm:$0xff]
        %v398 = vld [vmem:[%s212 + $0x390] sm:$0xff]
        %v399 = vld [vmem:[%s212 + $0x398] sm:$0xff]
        %v400 = vld [vmem:[%s212 + $0x3a0] sm:$0xff]
        %v401 = vld [vmem:[%s212 + $0x3a8] sm:$0xff]
        %v402 = vld [vmem:[%s212 + $0x3b0] sm:$0xff]
        %v403 = vld [vmem:[%s212 + $0x3b8] sm:$0xff]
        %v404 = vld [vmem:[%s212 + $0x3c0] sm:$0xff]
        %v405 = vld [vmem:[%s212 + $0x3c8] sm:$0xff]
        %v406 = vld [vmem:[%s212 + $0x3d0] sm:$0xff]
        %v407 = vld [vmem:[%s212 + $0x3d8] sm:$0xff]
        %v408 = vld [vmem:[%s212 + $0x3e0] sm:$0xff]
        %v409 = vld [vmem:[%s212 + $0x3e8] sm:$0xff]
        %v410 = vld [vmem:[%s212 + $0x3f0] sm:$0xff]
        %v411 = vld [vmem:[%s212 + $0x3f8] sm:$0xff]
        %v412 = vld [vmem:[%s212 + $0x400] sm:$0xff]
        %v413 = vld [vmem:[%s212 + $0x408] sm:$0xff]
        %v414 = vld [vmem:[%s212 + $0x410] sm:$0xff]
        %v415 = vld [vmem:[%s212 + $0x418] sm:$0xff]
        %v416 = vld [vmem:[%s212 + $0x420] sm:$0xff]
        %v417 = vld [vmem:[%s212 + $0x428] sm:$0xff]
        %v418 = vld [vmem:[%s212 + $0x430] sm:$0xff]
        %v419 = vld [vmem:[%s212 + $0x438] sm:$0xff]
        %v420 = vld [vmem:[%s212 + $0x440] sm:$0xff]
        %v421 = vld [vmem:[%s212 + $0x448] sm:$0xff]
        %v422 = vld [vmem:[%s212 + $0x450] sm:$0xff]
        %v423 = vld [vmem:[%s212 + $0x458] sm:$0xff]
        %v424 = vld [vmem:[%s212 + $0x460] sm:$0xff]
        %v425 = vld [vmem:[%s212 + $0x468] sm:$0xff]
        %v426 = vld [vmem:[%s212 + $0x470] sm:$0xff]
        %v427 = vld [vmem:[%s212 + $0x478] sm:$0xff]
        %v428 = vld [vmem:[%s212 + $0x480] sm:$0xff]
        %v429 = vld [vmem:[%s212 + $0x488] sm:$0xff]
        %v430 = vld [vmem:[%s212 + $0x490] sm:$0xff]
        %v431 = vld [vmem:[%s212 + $0x498] sm:$0xff]
        %v432 = vld [vmem:[%s212 + $0x4a0] sm:$0xff]
        %v433 = vld [vmem:[%s212 + $0x4a8] sm:$0xff]
        %v434 = vld [vmem:[%s212 + $0x4b0] sm:$0xff]
        %v435 = vld [vmem:[%s212 + $0x4b8] sm:$0xff]
        %v436 = vld [vmem:[%s212 + $0x4c0] sm:$0xff]
        %v437 = vld [vmem:[%s212 + $0x4c8] sm:$0xff]
        %v438 = vld [vmem:[%s212 + $0x4d0] sm:$0xff]
        %v439 = vld [vmem:[%s212 + $0x4d8] sm:$0xff]
        %v440 = vld [vmem:[%s212 + $0x4e0] sm:$0xff]
        %v441 = vld [vmem:[%s212 + $0x4e8] sm:$0xff]
        %v442 = vld [vmem:[%s212 + $0x4f0] sm:$0xff]
        %v443 = vld [vmem:[%s212 + $0x4f8] sm:$0xff]
        %v444 = vld [vmem:[%s212 + $0x500] sm:$0xff]
        %v445 = vld [vmem:[%s212 + $0x508] sm:$0xff]
        %v446 = vld [vmem:[%s212 + $0x510] sm:$0xff]
        %v447 = vld [vmem:[%s212 + $0x518] sm:$0xff]
        %v448 = vld [vmem:[%s212 + $0x520] sm:$0xff]
        %v449 = vld [vmem:[%s212 + $0x528] sm:$0xff]
        %v450 = vld [vmem:[%s212 + $0x530] sm:$0xff]
        %v451 = vld [vmem:[%s212 + $0x538] sm:$0xff]
        %v452 = vld [vmem:[%s212 + $0x540] sm:$0xff]
        %v453 = vld [vmem:[%s212 + $0x548] sm:$0xff]
        %v454 = vld [vmem:[%s212 + $0x550] sm:$0xff]
        %v455 = vld [vmem:[%s212 + $0x558] sm:$0xff]
        %v456 = vld [vmem:[%s212 + $0x560] sm:$0xff]
        %v457 = vld [vmem:[%s212 + $0x568] sm:$0xff]
        %v458 = vld [vmem:[%s212 + $0x570] sm:$0xff]
        %v459 = vld [vmem:[%s212 + $0x578] sm:$0xff]
        %v460 = vld [vmem:[%s212 + $0x580] sm:$0xff]
        %v461 = vld [vmem:[%s212 + $0x588] sm:$0xff]
        %v462 = vld [vmem:[%s212 + $0x590] sm:$0xff]
        %v463 = vld [vmem:[%s212 + $0x598] sm:$0xff]
        %v464 = vld [vmem:[%s212 + $0x5a0] sm:$0xff]
        %v465 = vld [vmem:[%s212 + $0x5a8] sm:$0xff]
        %v466 = vld [vmem:[%s212 + $0x5b0] sm:$0xff]
        %v467 = vld [vmem:[%s212 + $0x5b8] sm:$0xff]
        %v468 = vld [vmem:[%s212 + $0x5c0] sm:$0xff]
        %v469 = vld [vmem:[%s212 + $0x5c8] sm:$0xff]
        %v470 = vld [vmem:[%s212 + $0x5d0] sm:$0xff]
        %v471 = vld [vmem:[%s212 + $0x5d8] sm:$0xff]
        %v472 = vld [vmem:[%s212 + $0x5e0] sm:$0xff]
        %v473 = vld [vmem:[%s212 + $0x5e8] sm:$0xff]
        %v474 = vld [vmem:[%s212 + $0x5f0] sm:$0xff]
        %v475 = vld [vmem:[%s212 + $0x5f8] sm:$0xff]
        %v476 = vld [vmem:[%s212 + $0x600] sm:$0xff]
        %v477 = vld [vmem:[%s212 + $0x608] sm:$0xff]
        %v478 = vld [vmem:[%s212 + $0x610] sm:$0xff]
        %v479 = vld [vmem:[%s212 + $0x618] sm:$0xff]
        %v480 = vld [vmem:[%s212 + $0x620] sm:$0xff]
        %v481 = vld [vmem:[%s212 + $0x628] sm:$0xff]
        %v482 = vld [vmem:[%s212 + $0x630] sm:$0xff]
        %v483 = vld [vmem:[%s212 + $0x638] sm:$0xff]
        %v484 = vld [vmem:[%s212 + $0x640] sm:$0xff]
        %v485 = vld [vmem:[%s212 + $0x648] sm:$0xff]
        %v486 = vld [vmem:[%s212 + $0x650] sm:$0xff]
        %v487 = vld [vmem:[%s212 + $0x658] sm:$0xff]
        %v488 = vld [vmem:[%s212 + $0x660] sm:$0xff]
        %v489 = vld [vmem:[%s212 + $0x668] sm:$0xff]
        %v490 = vld [vmem:[%s212 + $0x670] sm:$0xff]
        %v491 = vld [vmem:[%s212 + $0x678] sm:$0xff]
        %v492 = vld [vmem:[%s212 + $0x680] sm:$0xff]
        %v493 = vld [vmem:[%s212 + $0x688] sm:$0xff]
        %v494 = vld [vmem:[%s212 + $0x690] sm:$0xff]
        %v495 = vld [vmem:[%s212 + $0x698] sm:$0xff]
        %v496 = vld [vmem:[%s212 + $0x6a0] sm:$0xff]
        %v497 = vld [vmem:[%s212 + $0x6a8] sm:$0xff]
        %v498 = vld [vmem:[%s212 + $0x6b0] sm:$0xff]
        %v499 = vld [vmem:[%s212 + $0x6b8] sm:$0xff]
        %v500 = vld [vmem:[%s212 + $0x6c0] sm:$0xff]
        %v501 = vld [vmem:[%s212 + $0x6c8] sm:$0xff]
        %v502 = vld [vmem:[%s212 + $0x6d0] sm:$0xff]
        %v503 = vld [vmem:[%s212 + $0x6d8] sm:$0xff]
        %v504 = vld [vmem:[%s212 + $0x6e0] sm:$0xff]
        %v505 = vld [vmem:[%s212 + $0x6e8] sm:$0xff]
        %v506 = vld [vmem:[%s212 + $0x6f0] sm:$0xff]
        %v507 = vld [vmem:[%s212 + $0x6f8] sm:$0xff]
        %v508 = vld [vmem:[%s212 + $0x700] sm:$0xff]
        %v509 = vld [vmem:[%s212 + $0x708] sm:$0xff]
        %v510 = vld [vmem:[%s212 + $0x710] sm:$0xff]
        %v511 = vld [vmem:[%s212 + $0x718] sm:$0xff]
        %v512 = vld [vmem:[%s212 + $0x720] sm:$0xff]
        %v513 = vld [vmem:[%s212 + $0x728] sm:$0xff]
        %v514 = vld [vmem:[%s212 + $0x730] sm:$0xff]
        %v515 = vld [vmem:[%s212 + $0x738] sm:$0xff]
        %v516 = vld [vmem:[%s212 + $0x740] sm:$0xff]
        %v517 = vld [vmem:[%s212 + $0x748] sm:$0xff]
        %v518 = vld [vmem:[%s212 + $0x750] sm:$0xff]
        %v519 = vld [vmem:[%s212 + $0x758] sm:$0xff]
        %v520 = vld [vmem:[%s212 + $0x760] sm:$0xff]
        %v521 = vld [vmem:[%s212 + $0x768] sm:$0xff]
        %v522 = vld [vmem:[%s212 + $0x770] sm:$0xff]
        %v523 = vld [vmem:[%s212 + $0x778] sm:$0xff]
        %v524 = vld [vmem:[%s212 + $0x780] sm:$0xff]
        %v525 = vld [vmem:[%s212 + $0x788] sm:$0xff]
        %v526 = vld [vmem:[%s212 + $0x790] sm:$0xff]
        %v527 = vld [vmem:[%s212 + $0x798] sm:$0xff]
        %v528 = vld [vmem:[%s212 + $0x7a0] sm:$0xff]
        %v529 = vld [vmem:[%s212 + $0x7a8] sm:$0xff]
        %v530 = vld [vmem:[%s212 + $0x7b0] sm:$0xff]
        %v531 = vld [vmem:[%s212 + $0x7b8] sm:$0xff]
        %v532 = vld [vmem:[%s212 + $0x7c0] sm:$0xff]
        %v533 = vld [vmem:[%s212 + $0x7c8] sm:$0xff]
        %v534 = vld [vmem:[%s212 + $0x7d0] sm:$0xff]
        %v535 = vld [vmem:[%s212 + $0x7d8] sm:$0xff]
        %v536 = vld [vmem:[%s212 + $0x7e0] sm:$0xff]
        %v537 = vld [vmem:[%s212 + $0x7e8] sm:$0xff]
        %v538 = vld [vmem:[%s212 + $0x7f0] sm:$0xff]
        %v539 = vld [vmem:[%s212 + $0x7f8] sm:$0xff]
        %v540 = vld [vmem:[%s212 + $0x800] sm:$0xff]
        %v541 = vld [vmem:[%s212 + $0x808] sm:$0xff]
        %v542 = vld [vmem:[%s212 + $0x810] sm:$0xff]
        %v543 = vld [vmem:[%s212 + $0x818] sm:$0xff]
        %v544 = vld [vmem:[%s212 + $0x820] sm:$0xff]
        %v545 = vld [vmem:[%s212 + $0x828] sm:$0xff]
        %v546 = vld [vmem:[%s212 + $0x830] sm:$0xff]
        %v547 = vld [vmem:[%s212 + $0x838] sm:$0xff]
        %v548 = vld [vmem:[%s212 + $0x840] sm:$0xff]
        %v549 = vld [vmem:[%s212 + $0x848] sm:$0xff]
        %v550 = vld [vmem:[%s212 + $0x850] sm:$0xff]
        %v551 = vld [vmem:[%s212 + $0x858] sm:$0xff]
        %v552 = vld [vmem:[%s212 + $0x860] sm:$0xff]
        %v553 = vld [vmem:[%s212 + $0x868] sm:$0xff]
        %v554 = vld [vmem:[%s212 + $0x870] sm:$0xff]
        %v555 = vld [vmem:[%s212 + $0x878] sm:$0xff]
        %v556 = vld [vmem:[%s212 + $0x880] sm:$0xff]
        %v557 = vld [vmem:[%s212 + $0x888] sm:$0xff]
        %v558 = vld [vmem:[%s212 + $0x890] sm:$0xff]
        %v559 = vld [vmem:[%s212 + $0x898] sm:$0xff]
        %v560 = vld [vmem:[%s212 + $0x8a0] sm:$0xff]
        %v561 = vld [vmem:[%s212 + $0x8a8] sm:$0xff]
        %v562 = vld [vmem:[%s212 + $0x8b0] sm:$0xff]
        %v563 = vld [vmem:[%s212 + $0x8b8] sm:$0xff]
        %v564 = vld [vmem:[%s212 + $0x8c0] sm:$0xff]
        %v565 = vld [vmem:[%s212 + $0x8c8] sm:$0xff]
        %v566 = vld [vmem:[%s212 + $0x8d0] sm:$0xff]
        %v567 = vld [vmem:[%s212 + $0x8d8] sm:$0xff]
        %v568 = vld [vmem:[%s212 + $0x8e0] sm:$0xff]
        %v569 = vld [vmem:[%s212 + $0x8e8] sm:$0xff]
        %v570 = vld [vmem:[%s212 + $0x8f0] sm:$0xff]
        %v571 = vld [vmem:[%s212 + $0x8f8] sm:$0xff]
        %v572 = vld [vmem:[%s212 + $0x900] sm:$0xff]
        %v573 = vld [vmem:[%s212 + $0x908] sm:$0xff]
        %v574 = vld [vmem:[%s212 + $0x910] sm:$0xff]
        %v575 = vld [vmem:[%s212 + $0x918] sm:$0xff]
        %v576 = vld [vmem:[%s212 + $0x920] sm:$0xff]
        %v577 = vld [vmem:[%s212 + $0x928] sm:$0xff]
        %v578 = vld [vmem:[%s212 + $0x930] sm:$0xff]
        %v579 = vld [vmem:[%s212 + $0x938] sm:$0xff]
        %v580 = vld [vmem:[%s212 + $0x940] sm:$0xff]
        %v581 = vld [vmem:[%s212 + $0x948] sm:$0xff]
        %v582 = vld [vmem:[%s212 + $0x950] sm:$0xff]
        %v583 = vld [vmem:[%s212 + $0x958] sm:$0xff]
        %v584 = vld [vmem:[%s212 + $0x960] sm:$0xff]
        %v585 = vld [vmem:[%s212 + $0x968] sm:$0xff]
        %v586 = vld [vmem:[%s212 + $0x970] sm:$0xff]
        %v587 = vld [vmem:[%s212 + $0x978] sm:$0xff]
        %v588 = vld [vmem:[%s212 + $0x980] sm:$0xff]
        %v589 = vld [vmem:[%s212 + $0x988] sm:$0xff]
        %v590 = vld [vmem:[%s212 + $0x990] sm:$0xff]
        %v591 = vld [vmem:[%s212 + $0x998] sm:$0xff]
        %v592 = vld [vmem:[%s212 + $0x9a0] sm:$0xff]
        %v593 = vld [vmem:[%s212 + $0x9a8] sm:$0xff]
        %v594 = vld [vmem:[%s212 + $0x9b0] sm:$0xff]
        %v595 = vld [vmem:[%s212 + $0x9b8] sm:$0xff]
        %v596 = vld [vmem:[%s212 + $0x9c0] sm:$0xff]
        %v597 = vld [vmem:[%s212 + $0x9c8] sm:$0xff]
        %v598 = vld [vmem:[%s212 + $0x9d0] sm:$0xff]
        %v599 = vld [vmem:[%s212 + $0x9d8] sm:$0xff]
        %v600 = vld [vmem:[%s212 + $0x9e0] sm:$0xff]
        %v601 = vld [vmem:[%s212 + $0x9e8] sm:$0xff]
        %v602 = vld [vmem:[%s212 + $0x9f0] sm:$0xff]
        %v603 = vld [vmem:[%s212 + $0x9f8] sm:$0xff]
        %v604 = vld [vmem:[%s212 + $0xa00] sm:$0xff]
        %v605 = vld [vmem:[%s212 + $0xa08] sm:$0xff]
        %v606 = vld [vmem:[%s212 + $0xa10] sm:$0xff]
        %v607 = vld [vmem:[%s212 + $0xa18] sm:$0xff]
        %v608 = vld [vmem:[%s212 + $0xa20] sm:$0xff]
        %v609 = vld [vmem:[%s212 + $0xa28] sm:$0xff]
        %v610 = vld [vmem:[%s212 + $0xa30] sm:$0xff]
        %v611 = vld [vmem:[%s212 + $0xa38] sm:$0xff]
        %v612 = vld [vmem:[%s212 + $0xa40] sm:$0xff]
        %v613 = vld [vmem:[%s212 + $0xa48] sm:$0xff]
        %v614 = vld [vmem:[%s212 + $0xa50] sm:$0xff]
        %v615 = vld [vmem:[%s212 + $0xa58] sm:$0xff]
        %v616 = vld [vmem:[%s212 + $0xa60] sm:$0xff]
        %v617 = vld [vmem:[%s212 + $0xa68] sm:$0xff]
        %v618 = vld [vmem:[%s212 + $0xa70] sm:$0xff]
        %v619 = vld [vmem:[%s212 + $0xa78] sm:$0xff]
        %v620 = vld [vmem:[%s212 + $0xa80] sm:$0xff]
        %v621 = vld [vmem:[%s212 + $0xa88] sm:$0xff]
        %v622 = vld [vmem:[%s212 + $0xa90] sm:$0xff]
        %v623 = vld [vmem:[%s212 + $0xa98] sm:$0xff]
        %v624 = vld [vmem:[%s212 + $0xaa0] sm:$0xff]
        %v625 = vld [vmem:[%s212 + $0xaa8] sm:$0xff]
        %v626 = vld [vmem:[%s212 + $0xab0] sm:$0xff]
        %v627 = vld [vmem:[%s212 + $0xab8] sm:$0xff]
        %v628 = vld [vmem:[%s212 + $0xac0] sm:$0xff]
        %v629 = vld [vmem:[%s212 + $0xac8] sm:$0xff]
        %v630 = vld [vmem:[%s212 + $0xad0] sm:$0xff]
        %v631 = vld [vmem:[%s212 + $0xad8] sm:$0xff]
        %v632 = vld [vmem:[%s212 + $0xae0] sm:$0xff]
        %v633 = vld [vmem:[%s212 + $0xae8] sm:$0xff]
        %v634 = vld [vmem:[%s212 + $0xaf0] sm:$0xff]
        %v635 = vld [vmem:[%s212 + $0xaf8] sm:$0xff]
        %v636 = vld [vmem:[%s212 + $0xb00] sm:$0xff]
        %v637 = vld [vmem:[%s212 + $0xb08] sm:$0xff]
        %v638 = vld [vmem:[%s212 + $0xb10] sm:$0xff]
        %v639 = vld [vmem:[%s212 + $0xb18] sm:$0xff]
        %v640 = vld [vmem:[%s212 + $0xb20] sm:$0xff]
        %v641 = vld [vmem:[%s212 + $0xb28] sm:$0xff]
        %v642 = vld [vmem:[%s212 + $0xb30] sm:$0xff]
        %v643 = vld [vmem:[%s212 + $0xb38] sm:$0xff]
        %v644 = vld [vmem:[%s212 + $0xb40] sm:$0xff]
        %v645 = vld [vmem:[%s212 + $0xb48] sm:$0xff]
        %v646 = vld [vmem:[%s212 + $0xb50] sm:$0xff]
        %v647 = vld [vmem:[%s212 + $0xb58] sm:$0xff]
        %v648 = vld [vmem:[%s212 + $0xb60] sm:$0xff]
        %v649 = vld [vmem:[%s212 + $0xb68] sm:$0xff]
        %v650 = vld [vmem:[%s212 + $0xb70] sm:$0xff]
        %v651 = vld [vmem:[%s212 + $0xb78] sm:$0xff]
        %v652 = vld [vmem:[%s212 + $0xb80] sm:$0xff]
        %v653 = vld [vmem:[%s212 + $0xb88] sm:$0xff]
        %v654 = vld [vmem:[%s212 + $0xb90] sm:$0xff]
        %v655 = vld [vmem:[%s212 + $0xb98] sm:$0xff]
        %v656 = vld [vmem:[%s212 + $0xba0] sm:$0xff]
        %v657 = vld [vmem:[%s212 + $0xba8] sm:$0xff]
        %v658 = vld [vmem:[%s212 + $0xbb0] sm:$0xff]
        %v659 = vld [vmem:[%s212 + $0xbb8] sm:$0xff]
        %v660 = vld [vmem:[%s212 + $0xbc0] sm:$0xff]
        %v661 = vld [vmem:[%s212 + $0xbc8] sm:$0xff]
        %v662 = vld [vmem:[%s212 + $0xbd0] sm:$0xff]
        %v663 = vld [vmem:[%s212 + $0xbd8] sm:$0xff]
        %v664 = vld [vmem:[%s212 + $0xbe0] sm:$0xff]
        %v665 = vld [vmem:[%s212 + $0xbe8] sm:$0xff]
        %v666 = vld [vmem:[%s212 + $0xbf0] sm:$0xff]
        %v667 = vld [vmem:[%s212 + $0xbf8] sm:$0xff]
        %v668 = vld [vmem:[%s212 + $0xc00] sm:$0xff]
        %v669 = vld [vmem:[%s212 + $0xc08] sm:$0xff]
        %v670 = vld [vmem:[%s212 + $0xc10] sm:$0xff]
        %v671 = vld [vmem:[%s212 + $0xc18] sm:$0xff]
        %v672 = vld [vmem:[%s212 + $0xc20] sm:$0xff]
        %v673 = vld [vmem:[%s212 + $0xc28] sm:$0xff]
        %v674 = vld [vmem:[%s212 + $0xc30] sm:$0xff]
        %v675 = vld [vmem:[%s212 + $0xc38] sm:$0xff]
        %v676 = vld [vmem:[%s212 + $0xc40] sm:$0xff]
        %v677 = vld [vmem:[%s212 + $0xc48] sm:$0xff]
        %v678 = vld [vmem:[%s212 + $0xc50] sm:$0xff]
        %v679 = vld [vmem:[%s212 + $0xc58] sm:$0xff]
        %v680 = vld [vmem:[%s212 + $0xc60] sm:$0xff]
        %v681 = vld [vmem:[%s212 + $0xc68] sm:$0xff]
        %v682 = vld [vmem:[%s212 + $0xc70] sm:$0xff]
        %v683 = vld [vmem:[%s212 + $0xc78] sm:$0xff]
        %v684 = vld [vmem:[%s212 + $0xc80] sm:$0xff]
        %v685 = vld [vmem:[%s212 + $0xc88] sm:$0xff]
        %v686 = vld [vmem:[%s212 + $0xc90] sm:$0xff]
        %v687 = vld [vmem:[%s212 + $0xc98] sm:$0xff]
        %v688 = vld [vmem:[%s212 + $0xca0] sm:$0xff]
        %v689 = vld [vmem:[%s212 + $0xca8] sm:$0xff]
        %v690 = vld [vmem:[%s212 + $0xcb0] sm:$0xff]
        %v691 = vld [vmem:[%s212 + $0xcb8] sm:$0xff]
        %v692 = vld [vmem:[%s212 + $0xcc0] sm:$0xff]
        %v693 = vld [vmem:[%s212 + $0xcc8] sm:$0xff]
        %v694 = vld [vmem:[%s212 + $0xcd0] sm:$0xff]
        %v695 = vld [vmem:[%s212 + $0xcd8] sm:$0xff]
        %v696 = vld [vmem:[%s212 + $0xce0] sm:$0xff]
        %v697 = vld [vmem:[%s212 + $0xce8] sm:$0xff]
        %v698 = vld [vmem:[%s212 + $0xcf0] sm:$0xff]
        %v699 = vld [vmem:[%s212 + $0xcf8] sm:$0xff]
        %v700 = vld [vmem:[%s212 + $0xd00] sm:$0xff]
        %v701 = vld [vmem:[%s212 + $0xd08] sm:$0xff]
        %v702 = vld [vmem:[%s212 + $0xd10] sm:$0xff]
        %v703 = vld [vmem:[%s212 + $0xd18] sm:$0xff]
        %v704 = vld [vmem:[%s212 + $0xd20] sm:$0xff]
        %v705 = vld [vmem:[%s212 + $0xd28] sm:$0xff]
        %v706 = vld [vmem:[%s212 + $0xd30] sm:$0xff]
        %v707 = vld [vmem:[%s212 + $0xd38] sm:$0xff]
        %v708 = vld [vmem:[%s212 + $0xd40] sm:$0xff]
        %v709 = vld [vmem:[%s212 + $0xd48] sm:$0xff]
        %v710 = vld [vmem:[%s212 + $0xd50] sm:$0xff]
        %v711 = vld [vmem:[%s212 + $0xd58] sm:$0xff]
        %v712 = vld [vmem:[%s212 + $0xd60] sm:$0xff]
        %v713 = vld [vmem:[%s212 + $0xd68] sm:$0xff]
        %v714 = vld [vmem:[%s212 + $0xd70] sm:$0xff]
        %v715 = vld [vmem:[%s212 + $0xd78] sm:$0xff]
        %v716 = vld [vmem:[%s212 + $0xd80] sm:$0xff]
        %v717 = vld [vmem:[%s212 + $0xd88] sm:$0xff]
        %v718 = vld [vmem:[%s212 + $0xd90] sm:$0xff]
        %v719 = vld [vmem:[%s212 + $0xd98] sm:$0xff]
        %v720 = vld [vmem:[%s212 + $0xda0] sm:$0xff]
        %v721 = vld [vmem:[%s212 + $0xda8] sm:$0xff]
        %v722 = vld [vmem:[%s212 + $0xdb0] sm:$0xff]
        %v723 = vld [vmem:[%s212 + $0xdb8] sm:$0xff]
        %v724 = vld [vmem:[%s212 + $0xdc0] sm:$0xff]
        %v725 = vld [vmem:[%s212 + $0xdc8] sm:$0xff]
        %v726 = vld [vmem:[%s212 + $0xdd0] sm:$0xff]
        %v727 = vld [vmem:[%s212 + $0xdd8] sm:$0xff]
        %v728 = vld [vmem:[%s212 + $0xde0] sm:$0xff]
        %v729 = vld [vmem:[%s212 + $0xde8] sm:$0xff]
        %v730 = vld [vmem:[%s212 + $0xdf0] sm:$0xff]
        %v731 = vld [vmem:[%s212 + $0xdf8] sm:$0xff]
        %v732 = vld [vmem:[%s212 + $0xe00] sm:$0xff]
        %v733 = vld [vmem:[%s212 + $0xe08] sm:$0xff]
        %v734 = vld [vmem:[%s212 + $0xe10] sm:$0xff]
        %v735 = vld [vmem:[%s212 + $0xe18] sm:$0xff]
        %v736 = vld [vmem:[%s212 + $0xe20] sm:$0xff]
        %v737 = vld [vmem:[%s212 + $0xe28] sm:$0xff]
        %v738 = vld [vmem:[%s212 + $0xe30] sm:$0xff]
        %v739 = vld [vmem:[%s212 + $0xe38] sm:$0xff]
        %v740 = vld [vmem:[%s212 + $0xe40] sm:$0xff]
        %v741 = vld [vmem:[%s212 + $0xe48] sm:$0xff]
        %v742 = vld [vmem:[%s212 + $0xe50] sm:$0xff]
        %v743 = vld [vmem:[%s212 + $0xe58] sm:$0xff]
        %v744 = vld [vmem:[%s212 + $0xe60] sm:$0xff]
        %v745 = vld [vmem:[%s212 + $0xe68] sm:$0xff]
        %v746 = vld [vmem:[%s212 + $0xe70] sm:$0xff]
        %v747 = vld [vmem:[%s212 + $0xe78] sm:$0xff]
        %v748 = vld [vmem:[%s212 + $0xe80] sm:$0xff]
        %v749 = vld [vmem:[%s212 + $0xe88] sm:$0xff]
        %v750 = vld [vmem:[%s212 + $0xe90] sm:$0xff]
        %v751 = vld [vmem:[%s212 + $0xe98] sm:$0xff]
        %v752 = vld [vmem:[%s212 + $0xea0] sm:$0xff]
        %v753 = vld [vmem:[%s212 + $0xea8] sm:$0xff]
        %v754 = vld [vmem:[%s212 + $0xeb0] sm:$0xff]
        %v755 = vld [vmem:[%s212 + $0xeb8] sm:$0xff]
        %v756 = vld [vmem:[%s212 + $0xec0] sm:$0xff]
        %v757 = vld [vmem:[%s212 + $0xec8] sm:$0xff]
        %v758 = vld [vmem:[%s212 + $0xed0] sm:$0xff]
        %v759 = vld [vmem:[%s212 + $0xed8] sm:$0xff]
        %v760 = vld [vmem:[%s212 + $0xee0] sm:$0xff]
        %v761 = vld [vmem:[%s212 + $0xee8] sm:$0xff]
        %v762 = vld [vmem:[%s212 + $0xef0] sm:$0xff]
        %v763 = vld [vmem:[%s212 + $0xef8] sm:$0xff]
        %v764 = vld [vmem:[%s212 + $0xf00] sm:$0xff]
        %v765 = vld [vmem:[%s212 + $0xf08] sm:$0xff]
        %v766 = vld [vmem:[%s212 + $0xf10] sm:$0xff]
        %v767 = vld [vmem:[%s212 + $0xf18] sm:$0xff]
        %v768 = vld [vmem:[%s212 + $0xf20] sm:$0xff]
        %v769 = vld [vmem:[%s212 + $0xf28] sm:$0xff]
        %v770 = vld [vmem:[%s212 + $0xf30] sm:$0xff]
        %v771 = vld [vmem:[%s212 + $0xf38] sm:$0xff]
        %v772 = vld [vmem:[%s212 + $0xf40] sm:$0xff]
        %v773 = vld [vmem:[%s212 + $0xf48] sm:$0xff]
        %v774 = vld [vmem:[%s212 + $0xf50] sm:$0xff]
        %v775 = vld [vmem:[%s212 + $0xf58] sm:$0xff]
        %v776 = vld [vmem:[%s212 + $0xf60] sm:$0xff]
        %v777 = vld [vmem:[%s212 + $0xf68] sm:$0xff]
        %v778 = vld [vmem:[%s212 + $0xf70] sm:$0xff]
        %v779 = vld [vmem:[%s212 + $0xf78] sm:$0xff]
        %v780 = vld [vmem:[%s212 + $0xf80] sm:$0xff]
        %v781 = vld [vmem:[%s212 + $0xf88] sm:$0xff]
        %v782 = vld [vmem:[%s212 + $0xf90] sm:$0xff]
        %v783 = vld [vmem:[%s212 + $0xf98] sm:$0xff]
        %v784 = vld [vmem:[%s212 + $0xfa0] sm:$0xff]
        %v785 = vld [vmem:[%s212 + $0xfa8] sm:$0xff]
        %v786 = vld [vmem:[%s212 + $0xfb0] sm:$0xff]
        %v787 = vld [vmem:[%s212 + $0xfb8] sm:$0xff]
        %v788 = vld [vmem:[%s212 + $0xfc0] sm:$0xff]
        %v789 = vld [vmem:[%s212 + $0xfc8] sm:$0xff]
        %v790 = vld [vmem:[%s212 + $0xfd0] sm:$0xff]
        %v791 = vld [vmem:[%s212 + $0xfd8] sm:$0xff]
        %v792 = vld [vmem:[%s212 + $0xfe0] sm:$0xff]
        %v793 = vld [vmem:[%s212 + $0xfe8] sm:$0xff]
        %v794 = vld [vmem:[%s212 + $0xff0] sm:$0xff]
        %v795 = vld [vmem:[%s212 + $0xff8] sm:$0xff]
        %v796 = vld [vmem:[%s212 + $0x1000] sm:$0xff]
        %v797 = vld [vmem:[%s212 + $0x1008] sm:$0xff]
        %v798 = vld [vmem:[%s212 + $0x1010] sm:$0xff]
        %v799 = vld [vmem:[%s212 + $0x1018] sm:$0xff]
        %v800 = vld [vmem:[%s212 + $0x1020] sm:$0xff]
        %v801 = vld [vmem:[%s212 + $0x1028] sm:$0xff]
        %v802 = vld [vmem:[%s212 + $0x1030] sm:$0xff]
        %v803 = vld [vmem:[%s212 + $0x1038] sm:$0xff]
        %v804 = vld [vmem:[%s212 + $0x1040] sm:$0xff]
        %v805 = vld [vmem:[%s212 + $0x1048] sm:$0xff]
        %v806 = vld [vmem:[%s212 + $0x1050] sm:$0xff]
        %v807 = vld [vmem:[%s212 + $0x1058] sm:$0xff]
        %v808 = vld [vmem:[%s212 + $0x1060] sm:$0xff]
        %v809 = vld [vmem:[%s212 + $0x1068] sm:$0xff]
        %v810 = vld [vmem:[%s212 + $0x1070] sm:$0xff]
        %v811 = vld [vmem:[%s212 + $0x1078] sm:$0xff]
        %v812 = vld [vmem:[%s212 + $0x1080] sm:$0xff]
        %v813 = vld [vmem:[%s212 + $0x1088] sm:$0xff]
        %v814 = vld [vmem:[%s212 + $0x1090] sm:$0xff]
        %v815 = vld [vmem:[%s212 + $0x1098] sm:$0xff]
        %v816 = vld [vmem:[%s212 + $0x10a0] sm:$0xff]
        %v817 = vld [vmem:[%s212 + $0x10a8] sm:$0xff]
        %v818 = vld [vmem:[%s212 + $0x10b0] sm:$0xff]
        %v819 = vld [vmem:[%s212 + $0x10b8] sm:$0xff]
        %v820 = vld [vmem:[%s212 + $0x10c0] sm:$0xff]
        %v821 = vld [vmem:[%s212 + $0x10c8] sm:$0xff]
        %v822 = vld [vmem:[%s212 + $0x10d0] sm:$0xff]
        %v823 = vld [vmem:[%s212 + $0x10d8] sm:$0xff]
        %v824 = vld [vmem:[%s212 + $0x10e0] sm:$0xff]
        %v825 = vld [vmem:[%s212 + $0x10e8] sm:$0xff]
        %v826 = vld [vmem:[%s212 + $0x10f0] sm:$0xff]
        %v827 = vld [vmem:[%s212 + $0x10f8] sm:$0xff]
        %v828 = vld [vmem:[%s212 + $0x1100] sm:$0xff]
        %v829 = vld [vmem:[%s212 + $0x1108] sm:$0xff]
        %v830 = vld [vmem:[%s212 + $0x1110] sm:$0xff]
        %v831 = vld [vmem:[%s212 + $0x1118] sm:$0xff]
        %v832 = vld [vmem:[%s212 + $0x1120] sm:$0xff]
        %v833 = vld [vmem:[%s212 + $0x1128] sm:$0xff]
        %v834 = vld [vmem:[%s212 + $0x1130] sm:$0xff]
        %v835 = vld [vmem:[%s212 + $0x1138] sm:$0xff]
        %v836 = vld [vmem:[%s212 + $0x1140] sm:$0xff]
        %v837 = vld [vmem:[%s212 + $0x1148] sm:$0xff]
        %v838 = vld [vmem:[%s212 + $0x1150] sm:$0xff]
        %v839 = vld [vmem:[%s212 + $0x1158] sm:$0xff]
        %v840 = vld [vmem:[%s212 + $0x1160] sm:$0xff]
        %v841 = vld [vmem:[%s212 + $0x1168] sm:$0xff]
        %v842 = vld [vmem:[%s212 + $0x1170] sm:$0xff]
        %v843 = vld [vmem:[%s212 + $0x1178] sm:$0xff]
        %v844 = vld [vmem:[%s212 + $0x1180] sm:$0xff]
        %v845 = vld [vmem:[%s212 + $0x1188] sm:$0xff]
        %v846 = vld [vmem:[%s212 + $0x1190] sm:$0xff]
        %v847 = vld [vmem:[%s212 + $0x1198] sm:$0xff]
        %v848 = vld [vmem:[%s212 + $0x11a0] sm:$0xff]
        %v849 = vld [vmem:[%s212 + $0x11a8] sm:$0xff]
        %v850 = vld [vmem:[%s212 + $0x11b0] sm:$0xff]
        %v851 = vld [vmem:[%s212 + $0x11b8] sm:$0xff]
        %v852 = vld [vmem:[%s212 + $0x11c0] sm:$0xff]
        %v853 = vld [vmem:[%s212 + $0x11c8] sm:$0xff]
        %v854 = vld [vmem:[%s212 + $0x11d0] sm:$0xff]
        %v855 = vld [vmem:[%s212 + $0x11d8] sm:$0xff]
        %v856 = vld [vmem:[%s212 + $0x11e0] sm:$0xff]
        %v857 = vld [vmem:[%s212 + $0x11e8] sm:$0xff]
        %v858 = vld [vmem:[%s212 + $0x11f0] sm:$0xff]
        %v859 = vld [vmem:[%s212 + $0x11f8] sm:$0xff]
        %v860 = vld [vmem:[%s212 + $0x1200] sm:$0xff]
        %v861 = vld [vmem:[%s212 + $0x1208] sm:$0xff]
        %v862 = vld [vmem:[%s212 + $0x1210] sm:$0xff]
        %v863 = vld [vmem:[%s212 + $0x1218] sm:$0xff]
        %v864 = vld [vmem:[%s212 + $0x1220] sm:$0xff]
        %v865 = vld [vmem:[%s212 + $0x1228] sm:$0xff]
        %v866 = vld [vmem:[%s212 + $0x1230] sm:$0xff]
        %v867 = vld [vmem:[%s212 + $0x1238] sm:$0xff]
        %v868 = vld [vmem:[%s212 + $0x1240] sm:$0xff]
        %v869 = vld [vmem:[%s212 + $0x1248] sm:$0xff]
        %v870 = vld [vmem:[%s212 + $0x1250] sm:$0xff]
        %v871 = vld [vmem:[%s212 + $0x1258] sm:$0xff]
        %v872 = vld [vmem:[%s212 + $0x1260] sm:$0xff]
        %v873 = vld [vmem:[%s212 + $0x1268] sm:$0xff]
        %v874 = vld [vmem:[%s212 + $0x1270] sm:$0xff]
        %v875 = vld [vmem:[%s212 + $0x1278] sm:$0xff]
        %v876 = vld [vmem:[%s212 + $0x1280] sm:$0xff]
        %v877 = vld [vmem:[%s212 + $0x1288] sm:$0xff]
        %v878 = vld [vmem:[%s212 + $0x1290] sm:$0xff]
        %v879 = vld [vmem:[%s212 + $0x1298] sm:$0xff]
        %v880 = vld [vmem:[%s212 + $0x12a0] sm:$0xff]
        %v881 = vld [vmem:[%s212 + $0x12a8] sm:$0xff]
        %v882 = vld [vmem:[%s212 + $0x12b0] sm:$0xff]
        %v883 = vld [vmem:[%s212 + $0x12b8] sm:$0xff]
        %v884 = vld [vmem:[%s212 + $0x12c0] sm:$0xff]
        %v885 = vld [vmem:[%s212 + $0x12c8] sm:$0xff]
        %v886 = vld [vmem:[%s212 + $0x12d0] sm:$0xff]
        %v887 = vld [vmem:[%s212 + $0x12d8] sm:$0xff]
        %v888 = vld [vmem:[%s212 + $0x12e0] sm:$0xff]
        %v889 = vld [vmem:[%s212 + $0x12e8] sm:$0xff]
        %v890 = vld [vmem:[%s212 + $0x12f0] sm:$0xff]
        %v891 = vld [vmem:[%s212 + $0x12f8] sm:$0xff]
        %v892 = vld [vmem:[%s212 + $0x1300] sm:$0xff]
        %v893 = vld [vmem:[%s212 + $0x1308] sm:$0xff]
        %v894 = vld [vmem:[%s212 + $0x1310] sm:$0xff]
        %v895 = vld [vmem:[%s212 + $0x1318] sm:$0xff]
        %v896 = vld [vmem:[%s212 + $0x1320] sm:$0xff]
        %v897 = vld [vmem:[%s212 + $0x1328] sm:$0xff]
        %v898 = vld [vmem:[%s212 + $0x1330] sm:$0xff]
        %v899 = vld [vmem:[%s212 + $0x1338] sm:$0xff]
        %v900 = vld [vmem:[%s212 + $0x1340] sm:$0xff]
        %v901 = vld [vmem:[%s212 + $0x1348] sm:$0xff]
        %v902 = vld [vmem:[%s212 + $0x1350] sm:$0xff]
        %v903 = vld [vmem:[%s212 + $0x1358] sm:$0xff]
        %v904 = vld [vmem:[%s212 + $0x1360] sm:$0xff]
        %v905 = vld [vmem:[%s212 + $0x1368] sm:$0xff]
        %v906 = vld [vmem:[%s212 + $0x1370] sm:$0xff]
        %v907 = vld [vmem:[%s212 + $0x1378] sm:$0xff]
        %v908 = vld [vmem:[%s212 + $0x1380] sm:$0xff]
        %v909 = vld [vmem:[%s212 + $0x1388] sm:$0xff]
        %v910 = vld [vmem:[%s212 + $0x1390] sm:$0xff]
        %v911 = vld [vmem:[%s212 + $0x1398] sm:$0xff]
        %v912 = vld [vmem:[%s212 + $0x13a0] sm:$0xff]
        %v913 = vld [vmem:[%s212 + $0x13a8] sm:$0xff]
        %v914 = vld [vmem:[%s212 + $0x13b0] sm:$0xff]
        %v915 = vld [vmem:[%s212 + $0x13b8] sm:$0xff]
        %v916 = vld [vmem:[%s212 + $0x13c0] sm:$0xff]
        %v917 = vld [vmem:[%s212 + $0x13c8] sm:$0xff]
        %v918 = vld [vmem:[%s212 + $0x13d0] sm:$0xff]
        %v919 = vld [vmem:[%s212 + $0x13d8] sm:$0xff]
        %v920 = vld [vmem:[%s212 + $0x13e0] sm:$0xff]
        %v921 = vld [vmem:[%s212 + $0x13e8] sm:$0xff]
        %v922 = vld [vmem:[%s212 + $0x13f0] sm:$0xff]
        %v923 = vld [vmem:[%s212 + $0x13f8] sm:$0xff]
        %v924 = vld [vmem:[%s212 + $0x1400] sm:$0xff]
        %v925 = vld [vmem:[%s212 + $0x1408] sm:$0xff]
        %v926 = vld [vmem:[%s212 + $0x1410] sm:$0xff]
        %v927 = vld [vmem:[%s212 + $0x1418] sm:$0xff]
        %v928 = vld [vmem:[%s212 + $0x1420] sm:$0xff]
        %v929 = vld [vmem:[%s212 + $0x1428] sm:$0xff]
        %v930 = vld [vmem:[%s212 + $0x1430] sm:$0xff]
        %v931 = vld [vmem:[%s212 + $0x1438] sm:$0xff]
        %v932 = vld [vmem:[%s212 + $0x1440] sm:$0xff]
        %v933 = vld [vmem:[%s212 + $0x1448] sm:$0xff]
        %v934 = vld [vmem:[%s212 + $0x1450] sm:$0xff]
        %v935 = vld [vmem:[%s212 + $0x1458] sm:$0xff]
        %v936 = vld [vmem:[%s212 + $0x1460] sm:$0xff]
        %v937 = vld [vmem:[%s212 + $0x1468] sm:$0xff]
        %v938 = vld [vmem:[%s212 + $0x1470] sm:$0xff]
        %v939 = vld [vmem:[%s212 + $0x1478] sm:$0xff]
        %v940 = vld [vmem:[%s212 + $0x1480] sm:$0xff]
        %v941 = vld [vmem:[%s212 + $0x1488] sm:$0xff]
        %v942 = vld [vmem:[%s212 + $0x1490] sm:$0xff]
        %v943 = vld [vmem:[%s212 + $0x1498] sm:$0xff]
        %v944 = vld [vmem:[%s212 + $0x14a0] sm:$0xff]
        %v945 = vld [vmem:[%s212 + $0x14a8] sm:$0xff]
        %v946 = vld [vmem:[%s212 + $0x14b0] sm:$0xff]
        %v947 = vld [vmem:[%s212 + $0x14b8] sm:$0xff]
        %v948 = vld [vmem:[%s212 + $0x14c0] sm:$0xff]
        %v949 = vld [vmem:[%s212 + $0x14c8] sm:$0xff]
        %v950 = vld [vmem:[%s212 + $0x14d0] sm:$0xff]
        %v951 = vld [vmem:[%s212 + $0x14d8] sm:$0xff]
        %v952 = vld [vmem:[%s212 + $0x14e0] sm:$0xff]
        %v953 = vld [vmem:[%s212 + $0x14e8] sm:$0xff]
        %v954 = vld [vmem:[%s212 + $0x14f0] sm:$0xff]
        %v955 = vld [vmem:[%s212 + $0x14f8] sm:$0xff]
        %v956 = vld [vmem:[%s212 + $0x1500] sm:$0xff]
        %v957 = vld [vmem:[%s212 + $0x1508] sm:$0xff]
        %v958 = vld [vmem:[%s212 + $0x1510] sm:$0xff]
        %v959 = vld [vmem:[%s212 + $0x1518] sm:$0xff]
        %v960 = vld [vmem:[%s212 + $0x1520] sm:$0xff]
        %v961 = vld [vmem:[%s212 + $0x1528] sm:$0xff]
        %v962 = vld [vmem:[%s212 + $0x1530] sm:$0xff]
        %v963 = vld [vmem:[%s212 + $0x1538] sm:$0xff]
        %v964 = vld [vmem:[%s212 + $0x1540] sm:$0xff]
        %v965 = vld [vmem:[%s212 + $0x1548] sm:$0xff]
        %v966 = vld [vmem:[%s212 + $0x1550] sm:$0xff]
        %v967 = vld [vmem:[%s212 + $0x1558] sm:$0xff]
        %v968 = vld [vmem:[%s212 + $0x1560] sm:$0xff]
        %v969 = vld [vmem:[%s212 + $0x1568] sm:$0xff]
        %v970 = vld [vmem:[%s212 + $0x1570] sm:$0xff]
        %v971 = vld [vmem:[%s212 + $0x1578] sm:$0xff]
        %v972 = vld [vmem:[%s212 + $0x1580] sm:$0xff]
        %v973 = vld [vmem:[%s212 + $0x1588] sm:$0xff]
        %v974 = vld [vmem:[%s212 + $0x1590] sm:$0xff]
        %v975 = vld [vmem:[%s212 + $0x1598] sm:$0xff]
        %v976 = vld [vmem:[%s212 + $0x15a0] sm:$0xff]
        %v977 = vld [vmem:[%s212 + $0x15a8] sm:$0xff]
        %v978 = vld [vmem:[%s212 + $0x15b0] sm:$0xff]
        %v979 = vld [vmem:[%s212 + $0x15b8] sm:$0xff]
        %v980 = vld [vmem:[%s212 + $0x15c0] sm:$0xff]
        %v981 = vld [vmem:[%s212 + $0x15c8] sm:$0xff]
        %v982 = vld [vmem:[%s212 + $0x15d0] sm:$0xff]
        %v983 = vld [vmem:[%s212 + $0x15d8] sm:$0xff]
        %v984 = vld [vmem:[%s212 + $0x15e0] sm:$0xff]
        %v985 = vld [vmem:[%s212 + $0x15e8] sm:$0xff]
        %v986 = vld [vmem:[%s212 + $0x15f0] sm:$0xff]
        %v987 = vld [vmem:[%s212 + $0x15f8] sm:$0xff]
        %v988 = vld [vmem:[%s212 + $0x1600] sm:$0xff]
        %v989 = vld [vmem:[%s212 + $0x1608] sm:$0xff]
        %v990 = vld [vmem:[%s212 + $0x1610] sm:$0xff]
        %v991 = vld [vmem:[%s212 + $0x1618] sm:$0xff]
        %v992 = vld [vmem:[%s212 + $0x1620] sm:$0xff]
        %v993 = vld [vmem:[%s212 + $0x1628] sm:$0xff]
        %v994 = vld [vmem:[%s212 + $0x1630] sm:$0xff]
        %v995 = vld [vmem:[%s212 + $0x1638] sm:$0xff]
        %v996 = vld [vmem:[%s212 + $0x1640] sm:$0xff]
        %v997 = vld [vmem:[%s212 + $0x1648] sm:$0xff]
        %v998 = vld [vmem:[%s212 + $0x1650] sm:$0xff]
        %v999 = vld [vmem:[%s212 + $0x1658] sm:$0xff]
        %v1000 = vld [vmem:[%s212 + $0x1660] sm:$0xff]
        %v1001 = vld [vmem:[%s212 + $0x1668] sm:$0xff]
        %v1002 = vld [vmem:[%s212 + $0x1670] sm:$0xff]
        %v1003 = vld [vmem:[%s212 + $0x1678] sm:$0xff]
        %v1004 = vld [vmem:[%s212 + $0x1680] sm:$0xff]
        %v1005 = vld [vmem:[%s212 + $0x1688] sm:$0xff]
        %v1006 = vld [vmem:[%s212 + $0x1690] sm:$0xff]
        %v1007 = vld [vmem:[%s212 + $0x1698] sm:$0xff]
        %v1008 = vld [vmem:[%s212 + $0x16a0] sm:$0xff]
        %v1009 = vld [vmem:[%s212 + $0x16a8] sm:$0xff]
        %v1010 = vld [vmem:[%s212 + $0x16b0] sm:$0xff]
        %v1011 = vld [vmem:[%s212 + $0x16b8] sm:$0xff]
        %v1012 = vld [vmem:[%s212 + $0x16c0] sm:$0xff]
        %v1013 = vld [vmem:[%s212 + $0x16c8] sm:$0xff]
        %v1014 = vld [vmem:[%s212 + $0x16d0] sm:$0xff]
        %v1015 = vld [vmem:[%s212 + $0x16d8] sm:$0xff]
        %v1016 = vld [vmem:[%s212 + $0x16e0] sm:$0xff]
        %v1017 = vld [vmem:[%s212 + $0x16e8] sm:$0xff]
        %v1018 = vld [vmem:[%s212 + $0x16f0] sm:$0xff]
        %v1019 = vld [vmem:[%s212 + $0x16f8] sm:$0xff]
        %v1020 = vld [vmem:[%s212 + $0x1700] sm:$0xff]
        %v1021 = vld [vmem:[%s212 + $0x1708] sm:$0xff]
        %v1022 = vld [vmem:[%s212 + $0x1710] sm:$0xff]
        %v1023 = vld [vmem:[%s212 + $0x1718] sm:$0xff]
        %v1024 = vld [vmem:[%s212 + $0x1720] sm:$0xff]
        %v1025 = vld [vmem:[%s212 + $0x1728] sm:$0xff]
        %v1026 = vld [vmem:[%s212 + $0x1730] sm:$0xff]
        %v1027 = vld [vmem:[%s212 + $0x1738] sm:$0xff]
        %v1028 = vld [vmem:[%s212 + $0x1740] sm:$0xff]
        %v1029 = vld [vmem:[%s212 + $0x1748] sm:$0xff]
        %v1030 = vld [vmem:[%s212 + $0x1750] sm:$0xff]
        %v1031 = vld [vmem:[%s212 + $0x1758] sm:$0xff]
        %v1032 = vld [vmem:[%s212 + $0x1760] sm:$0xff]
        %v1033 = vld [vmem:[%s212 + $0x1768] sm:$0xff]
        %v1034 = vld [vmem:[%s212 + $0x1770] sm:$0xff]
        %v1035 = vld [vmem:[%s212 + $0x1778] sm:$0xff]
        %v1036 = vld [vmem:[%s212 + $0x1780] sm:$0xff]
        %v1037 = vld [vmem:[%s212 + $0x1788] sm:$0xff]
        %v1038 = vld [vmem:[%s212 + $0x1790] sm:$0xff]
        %v1039 = vld [vmem:[%s212 + $0x1798] sm:$0xff]
        %v1040 = vld [vmem:[%s212 + $0x17a0] sm:$0xff]
        %v1041 = vld [vmem:[%s212 + $0x17a8] sm:$0xff]
        %v1042 = vld [vmem:[%s212 + $0x17b0] sm:$0xff]
        %v1043 = vld [vmem:[%s212 + $0x17b8] sm:$0xff]
        %v1044 = vld [vmem:[%s212 + $0x17c0] sm:$0xff]
        %v1045 = vld [vmem:[%s212 + $0x17c8] sm:$0xff]
        %v1046 = vld [vmem:[%s212 + $0x17d0] sm:$0xff]
        %v1047 = vld [vmem:[%s212 + $0x17d8] sm:$0xff]
        %v1048 = vld [vmem:[%s212 + $0x17e0] sm:$0xff]
        %v1049 = vld [vmem:[%s212 + $0x17e8] sm:$0xff]
        %v1050 = vld [vmem:[%s212 + $0x17f0] sm:$0xff]
        %v1051 = vld [vmem:[%s212 + $0x17f8] sm:$0xff]
        %v1052 = vld [vmem:[%s212 + $0x1800] sm:$0xff]
        %v1053 = vld [vmem:[%s212 + $0x1808] sm:$0xff]
        %v1054 = vld [vmem:[%s212 + $0x1810] sm:$0xff]
        %v1055 = vld [vmem:[%s212 + $0x1818] sm:$0xff]
        %v1056 = vld [vmem:[%s212 + $0x1820] sm:$0xff]
        %v1057 = vld [vmem:[%s212 + $0x1828] sm:$0xff]
        %v1058 = vld [vmem:[%s212 + $0x1830] sm:$0xff]
        %v1059 = vld [vmem:[%s212 + $0x1838] sm:$0xff]
        %v1060 = vld [vmem:[%s212 + $0x1840] sm:$0xff]
        %v1061 = vld [vmem:[%s212 + $0x1848] sm:$0xff]
        %v1062 = vld [vmem:[%s212 + $0x1850] sm:$0xff]
        %v1063 = vld [vmem:[%s212 + $0x1858] sm:$0xff]
        %v1064 = vld [vmem:[%s212 + $0x1860] sm:$0xff]
        %v1065 = vld [vmem:[%s212 + $0x1868] sm:$0xff]
        %v1066 = vld [vmem:[%s212 + $0x1870] sm:$0xff]
        %v1067 = vld [vmem:[%s212 + $0x1878] sm:$0xff]
        %v1068 = vld [vmem:[%s222] sm:$0x3]
        %v1070 = vperm.slane %v1068, 0
        %v1071 = vperm.slane %v1068, 1
        %1081 = vst [vmem:[#allocation1] ss:$4 sm:$0xff] %v277
        %s1082 = scalar_lea.vmem [#allocation1], 32
        %1083 = vst [vmem:[%s1082] ss:$4 sm:$0xff] %v278
        %v1084 = vld.sshfl [vmem:[#allocation1] sm:$0xff pattern:$0x73625140]
        %v1085 = vld.sshfl [vmem:[#allocation1 + $0x8] sm:$0xff pattern:$0x73625140]
        %v1086 = vld.sshfl [vmem:[#allocation1 + $0x10] sm:$0xff pattern:$0x73625140]
        %v1087 = vld.sshfl [vmem:[#allocation1 + $0x18] sm:$0xff pattern:$0x73625140]
        %v1088 = vld.sshfl [vmem:[#allocation1 + $0x20] sm:$0xff pattern:$0x73625140]
        %v1089 = vld.sshfl [vmem:[#allocation1 + $0x28] sm:$0xff pattern:$0x73625140]
        %v1090 = vld.sshfl [vmem:[#allocation1 + $0x30] sm:$0xff pattern:$0x73625140]
        %v1091 = vld.sshfl [vmem:[#allocation1 + $0x38] sm:$0xff pattern:$0x73625140]
        %1092 = vst [vmem:[#allocation1] ss:$4 sm:$0xff] %v279
        %1093 = vst [vmem:[%s1082] ss:$4 sm:$0xff] %v280
        %v1094 = vld.sshfl [vmem:[#allocation1] sm:$0xff pattern:$0x73625140]
        %v1095 = vld.sshfl [vmem:[#allocation1 + $0x8] sm:$0xff pattern:$0x73625140]
        %v1096 = vld.sshfl [vmem:[#allocation1 + $0x10] sm:$0xff pattern:$0x73625140]
        %v1097 = vld.sshfl [vmem:[#allocation1 + $0x18] sm:$0xff pattern:$0x73625140]
        %v1098 = vld.sshfl [vmem:[#allocation1 + $0x20] sm:$0xff pattern:$0x73625140]
        %v1099 = vld.sshfl [vmem:[#allocation1 + $0x28] sm:$0xff pattern:$0x73625140]
        %v1100 = vld.sshfl [vmem:[#allocation1 + $0x30] sm:$0xff pattern:$0x73625140]
        %v1101 = vld.sshfl [vmem:[#allocation1 + $0x38] sm:$0xff pattern:$0x73625140]
        %1102 = vst [vmem:[#allocation1] ss:$4 sm:$0xff] %v281
        %1103 = vst [vmem:[%s1082] ss:$4 sm:$0xff] %v282
        %v1104 = vld.sshfl [vmem:[#allocation1] sm:$0xff pattern:$0x73625140]
        %v1105 = vld.sshfl [vmem:[#allocation1 + $0x8] sm:$0xff pattern:$0x73625140]
        %v1106 = vld.sshfl [vmem:[#allocation1 + $0x10] sm:$0xff pattern:$0x73625140]
        %v1107 = vld.sshfl [vmem:[#allocation1 + $0x18] sm:$0xff pattern:$0x73625140]
        %v1108 = vld.sshfl [vmem:[#allocation1 + $0x20] sm:$0xff pattern:$0x73625140]
        %v1109 = vld.sshfl [vmem:[#allocation1 + $0x28] sm:$0xff pattern:$0x73625140]
        %v1110 = vld.sshfl [vmem:[#allocation1 + $0x30] sm:$0xff pattern:$0x73625140]
        %v1111 = vld.sshfl [vmem:[#allocation1 + $0x38] sm:$0xff pattern:$0x73625140]
        %1112 = vst [vmem:[#allocation1] ss:$4 sm:$0xff] %v283
        %v1113 = vld.sshfl [vmem:[#allocation1] sm:$0xff pattern:$0x73625140]
        %vm1138 = vcmask 523264
        %v1139 = vsel %vm1138, %v1113, 0
        %1141 = vmatpush.msra.mxu0 %v314
        %1142 = vmatpush.msra.mxu0 %v312
        %1143 = vmatpush.msra.mxu0 %v310
        %1144 = vmatpush.msra.mxu0 %v308
        %1145 = vmatpush.msra.mxu0 %v306
        %1146 = vmatpush.msra.mxu0 %v304
        %1147 = vmatpush.msra.mxu0 %v302
        %1148 = vmatpush.msra.mxu0 %v300
        %1149 = vmatpush.msra.mxu0 %v298
        %1150 = vmatpush.msra.mxu0 %v296
        %1151 = vmatpush.msra.mxu0 %v294
        %1152 = vmatpush.msra.mxu0 %v292
        %1153 = vmatpush.msra.mxu0 %v290
        %1154 = vmatpush.msra.mxu0 %v288
        %1155 = vmatpush.msra.mxu0 %v286
        %1156 = vmatpush.msra.mxu0 %v284
        %1157 = vmatmul.f32.gmra.mxu0 %v1084
        %v1158 = vpop.f32.mrf.mxu0
        %v1159 = vadd.f32 %v1070, %v1158
        %1160 = vdwg.mxu0
        %1161 = vmatpush.msra.mxu0 %v346
        %1162 = vmatpush.msra.mxu0 %v344
        %1163 = vmatpush.msra.mxu0 %v342
        %1164 = vmatpush.msra.mxu0 %v340
        %1165 = vmatpush.msra.mxu0 %v338
        %1166 = vmatpush.msra.mxu0 %v336
        %1167 = vmatpush.msra.mxu0 %v334
        %1168 = vmatpush.msra.mxu0 %v332
        %1169 = vmatpush.msra.mxu0 %v330
        %1170 = vmatpush.msra.mxu0 %v328
        %1171 = vmatpush.msra.mxu0 %v326
        %1172 = vmatpush.msra.mxu0 %v324
        %1173 = vmatpush.msra.mxu0 %v322
        %1174 = vmatpush.msra.mxu0 %v320
        %1175 = vmatpush.msra.mxu0 %v318
        %1176 = vmatpush.msra.mxu0 %v316
        %1177 = vmatmul.f32.gmra.mxu0 %v1085
        %v1178 = vpop.f32.mrf.mxu0
        %v1179 = vadd.f32 %v1159, %v1178
        %1180 = vdwg.mxu0
        %1181 = vmatpush.msra.mxu0 %v378
        %1182 = vmatpush.msra.mxu0 %v376
        %1183 = vmatpush.msra.mxu0 %v374
        %1184 = vmatpush.msra.mxu0 %v372
        %1185 = vmatpush.msra.mxu0 %v370
        %1186 = vmatpush.msra.mxu0 %v368
        %1187 = vmatpush.msra.mxu0 %v366
        %1188 = vmatpush.msra.mxu0 %v364
        %1189 = vmatpush.msra.mxu0 %v362
        %1190 = vmatpush.msra.mxu0 %v360
        %1191 = vmatpush.msra.mxu0 %v358
        %1192 = vmatpush.msra.mxu0 %v356
        %1193 = vmatpush.msra.mxu0 %v354
        %1194 = vmatpush.msra.mxu0 %v352
        %1195 = vmatpush.msra.mxu0 %v350
        %1196 = vmatpush.msra.mxu0 %v348
        %1197 = vmatmul.f32.gmra.mxu0 %v1086
        %v1198 = vpop.f32.mrf.mxu0
        %v1199 = vadd.f32 %v1179, %v1198
        %1200 = vdwg.mxu0
        %1201 = vmatpush.msra.mxu0 %v410
        %1202 = vmatpush.msra.mxu0 %v408
        %1203 = vmatpush.msra.mxu0 %v406
        %1204 = vmatpush.msra.mxu0 %v404
        %1205 = vmatpush.msra.mxu0 %v402
        %1206 = vmatpush.msra.mxu0 %v400
        %1207 = vmatpush.msra.mxu0 %v398
        %1208 = vmatpush.msra.mxu0 %v396
        %1209 = vmatpush.msra.mxu0 %v394
        %1210 = vmatpush.msra.mxu0 %v392
        %1211 = vmatpush.msra.mxu0 %v390
        %1212 = vmatpush.msra.mxu0 %v388
        %1213 = vmatpush.msra.mxu0 %v386
        %1214 = vmatpush.msra.mxu0 %v384
        %1215 = vmatpush.msra.mxu0 %v382
        %1216 = vmatpush.msra.mxu0 %v380
        %1217 = vmatmul.f32.gmra.mxu0 %v1087
        %v1218 = vpop.f32.mrf.mxu0
        %v1219 = vadd.f32 %v1199, %v1218
        %1220 = vdwg.mxu0
        %1221 = vmatpush.msra.mxu0 %v442
        %1222 = vmatpush.msra.mxu0 %v440
        %1223 = vmatpush.msra.mxu0 %v438
        %1224 = vmatpush.msra.mxu0 %v436
        %1225 = vmatpush.msra.mxu0 %v434
        %1226 = vmatpush.msra.mxu0 %v432
        %1227 = vmatpush.msra.mxu0 %v430
        %1228 = vmatpush.msra.mxu0 %v428
        %1229 = vmatpush.msra.mxu0 %v426
        %1230 = vmatpush.msra.mxu0 %v424
        %1231 = vmatpush.msra.mxu0 %v422
        %1232 = vmatpush.msra.mxu0 %v420
        %1233 = vmatpush.msra.mxu0 %v418
        %1234 = vmatpush.msra.mxu0 %v416
        %1235 = vmatpush.msra.mxu0 %v414
        %1236 = vmatpush.msra.mxu0 %v412
        %1237 = vmatmul.f32.gmra.mxu0 %v1088
        %v1238 = vpop.f32.mrf.mxu0
        %v1239 = vadd.f32 %v1219, %v1238
        %1240 = vdwg.mxu0
        %1241 = vmatpush.msra.mxu0 %v474
        %1242 = vmatpush.msra.mxu0 %v472
        %1243 = vmatpush.msra.mxu0 %v470
        %1244 = vmatpush.msra.mxu0 %v468
        %1245 = vmatpush.msra.mxu0 %v466
        %1246 = vmatpush.msra.mxu0 %v464
        %1247 = vmatpush.msra.mxu0 %v462
        %1248 = vmatpush.msra.mxu0 %v460
        %1249 = vmatpush.msra.mxu0 %v458
        %1250 = vmatpush.msra.mxu0 %v456
        %1251 = vmatpush.msra.mxu0 %v454
        %1252 = vmatpush.msra.mxu0 %v452
        %1253 = vmatpush.msra.mxu0 %v450
        %1254 = vmatpush.msra.mxu0 %v448
        %1255 = vmatpush.msra.mxu0 %v446
        %1256 = vmatpush.msra.mxu0 %v444
        %1257 = vmatmul.f32.gmra.mxu0 %v1089
        %v1258 = vpop.f32.mrf.mxu0
        %v1259 = vadd.f32 %v1239, %v1258
        %1260 = vdwg.mxu0
        %1261 = vmatpush.msra.mxu0 %v506
        %1262 = vmatpush.msra.mxu0 %v504
        %1263 = vmatpush.msra.mxu0 %v502
        %1264 = vmatpush.msra.mxu0 %v500
        %1265 = vmatpush.msra.mxu0 %v498
        %1266 = vmatpush.msra.mxu0 %v496
        %1267 = vmatpush.msra.mxu0 %v494
        %1268 = vmatpush.msra.mxu0 %v492
        %1269 = vmatpush.msra.mxu0 %v490
        %1270 = vmatpush.msra.mxu0 %v488
        %1271 = vmatpush.msra.mxu0 %v486
        %1272 = vmatpush.msra.mxu0 %v484
        %1273 = vmatpush.msra.mxu0 %v482
        %1274 = vmatpush.msra.mxu0 %v480
        %1275 = vmatpush.msra.mxu0 %v478
        %1276 = vmatpush.msra.mxu0 %v476
        %1277 = vmatmul.f32.gmra.mxu0 %v1090
        %v1278 = vpop.f32.mrf.mxu0
        %v1279 = vadd.f32 %v1259, %v1278
        %1280 = vdwg.mxu0
        %1281 = vmatpush.msra.mxu0 %v538
        %1282 = vmatpush.msra.mxu0 %v536
        %1283 = vmatpush.msra.mxu0 %v534
        %1284 = vmatpush.msra.mxu0 %v532
        %1285 = vmatpush.msra.mxu0 %v530
        %1286 = vmatpush.msra.mxu0 %v528
        %1287 = vmatpush.msra.mxu0 %v526
        %1288 = vmatpush.msra.mxu0 %v524
        %1289 = vmatpush.msra.mxu0 %v522
        %1290 = vmatpush.msra.mxu0 %v520
        %1291 = vmatpush.msra.mxu0 %v518
        %1292 = vmatpush.msra.mxu0 %v516
        %1293 = vmatpush.msra.mxu0 %v514
        %1294 = vmatpush.msra.mxu0 %v512
        %1295 = vmatpush.msra.mxu0 %v510
        %1296 = vmatpush.msra.mxu0 %v508
        %1297 = vmatmul.f32.gmra.mxu0 %v1091
        %v1298 = vpop.f32.mrf.mxu0
        %v1299 = vadd.f32 %v1279, %v1298
        %1300 = vdwg.mxu0
        %1301 = vmatpush.msra.mxu0 %v570
        %1302 = vmatpush.msra.mxu0 %v568
        %1303 = vmatpush.msra.mxu0 %v566
        %1304 = vmatpush.msra.mxu0 %v564
        %1305 = vmatpush.msra.mxu0 %v562
        %1306 = vmatpush.msra.mxu0 %v560
        %1307 = vmatpush.msra.mxu0 %v558
        %1308 = vmatpush.msra.mxu0 %v556
        %1309 = vmatpush.msra.mxu0 %v554
        %1310 = vmatpush.msra.mxu0 %v552
        %1311 = vmatpush.msra.mxu0 %v550
        %1312 = vmatpush.msra.mxu0 %v548
        %1313 = vmatpush.msra.mxu0 %v546
        %1314 = vmatpush.msra.mxu0 %v544
        %1315 = vmatpush.msra.mxu0 %v542
        %1316 = vmatpush.msra.mxu0 %v540
        %1317 = vmatmul.f32.gmra.mxu0 %v1094
        %v1318 = vpop.f32.mrf.mxu0
        %v1319 = vadd.f32 %v1299, %v1318
        %1320 = vdwg.mxu0
        %1321 = vmatpush.msra.mxu0 %v602
        %1322 = vmatpush.msra.mxu0 %v600
        %1323 = vmatpush.msra.mxu0 %v598
        %1324 = vmatpush.msra.mxu0 %v596
        %1325 = vmatpush.msra.mxu0 %v594
        %1326 = vmatpush.msra.mxu0 %v592
        %1327 = vmatpush.msra.mxu0 %v590
        %1328 = vmatpush.msra.mxu0 %v588
        %1329 = vmatpush.msra.mxu0 %v586
        %1330 = vmatpush.msra.mxu0 %v584
        %1331 = vmatpush.msra.mxu0 %v582
        %1332 = vmatpush.msra.mxu0 %v580
        %1333 = vmatpush.msra.mxu0 %v578
        %1334 = vmatpush.msra.mxu0 %v576
        %1335 = vmatpush.msra.mxu0 %v574
        %1336 = vmatpush.msra.mxu0 %v572
        %1337 = vmatmul.f32.gmra.mxu0 %v1095
        %v1338 = vpop.f32.mrf.mxu0
        %v1339 = vadd.f32 %v1319, %v1338
        %1340 = vdwg.mxu0
        %1341 = vmatpush.msra.mxu0 %v634
        %1342 = vmatpush.msra.mxu0 %v632
        %1343 = vmatpush.msra.mxu0 %v630
        %1344 = vmatpush.msra.mxu0 %v628
        %1345 = vmatpush.msra.mxu0 %v626
        %1346 = vmatpush.msra.mxu0 %v624
        %1347 = vmatpush.msra.mxu0 %v622
        %1348 = vmatpush.msra.mxu0 %v620
        %1349 = vmatpush.msra.mxu0 %v618
        %1350 = vmatpush.msra.mxu0 %v616
        %1351 = vmatpush.msra.mxu0 %v614
        %1352 = vmatpush.msra.mxu0 %v612
        %1353 = vmatpush.msra.mxu0 %v610
        %1354 = vmatpush.msra.mxu0 %v608
        %1355 = vmatpush.msra.mxu0 %v606
        %1356 = vmatpush.msra.mxu0 %v604
        %1357 = vmatmul.f32.gmra.mxu0 %v1096
        %v1358 = vpop.f32.mrf.mxu0
        %v1359 = vadd.f32 %v1339, %v1358
        %1360 = vdwg.mxu0
        %1361 = vmatpush.msra.mxu0 %v666
        %1362 = vmatpush.msra.mxu0 %v664
        %1363 = vmatpush.msra.mxu0 %v662
        %1364 = vmatpush.msra.mxu0 %v660
        %1365 = vmatpush.msra.mxu0 %v658
        %1366 = vmatpush.msra.mxu0 %v656
        %1367 = vmatpush.msra.mxu0 %v654
        %1368 = vmatpush.msra.mxu0 %v652
        %1369 = vmatpush.msra.mxu0 %v650
        %1370 = vmatpush.msra.mxu0 %v648
        %1371 = vmatpush.msra.mxu0 %v646
        %1372 = vmatpush.msra.mxu0 %v644
        %1373 = vmatpush.msra.mxu0 %v642
        %1374 = vmatpush.msra.mxu0 %v640
        %1375 = vmatpush.msra.mxu0 %v638
        %1376 = vmatpush.msra.mxu0 %v636
        %1377 = vmatmul.f32.gmra.mxu0 %v1097
        %v1378 = vpop.f32.mrf.mxu0
        %v1379 = vadd.f32 %v1359, %v1378
        %1380 = vdwg.mxu0
        %1381 = vmatpush.msra.mxu0 %v698
        %1382 = vmatpush.msra.mxu0 %v696
        %1383 = vmatpush.msra.mxu0 %v694
        %1384 = vmatpush.msra.mxu0 %v692
        %1385 = vmatpush.msra.mxu0 %v690
        %1386 = vmatpush.msra.mxu0 %v688
        %1387 = vmatpush.msra.mxu0 %v686
        %1388 = vmatpush.msra.mxu0 %v684
        %1389 = vmatpush.msra.mxu0 %v682
        %1390 = vmatpush.msra.mxu0 %v680
        %1391 = vmatpush.msra.mxu0 %v678
        %1392 = vmatpush.msra.mxu0 %v676
        %1393 = vmatpush.msra.mxu0 %v674
        %1394 = vmatpush.msra.mxu0 %v672
        %1395 = vmatpush.msra.mxu0 %v670
        %1396 = vmatpush.msra.mxu0 %v668
        %1397 = vmatmul.f32.gmra.mxu0 %v1098
        %v1398 = vpop.f32.mrf.mxu0
        %v1399 = vadd.f32 %v1379, %v1398
        %1400 = vdwg.mxu0
        %1401 = vmatpush.msra.mxu0 %v730
        %1402 = vmatpush.msra.mxu0 %v728
        %1403 = vmatpush.msra.mxu0 %v726
        %1404 = vmatpush.msra.mxu0 %v724
        %1405 = vmatpush.msra.mxu0 %v722
        %1406 = vmatpush.msra.mxu0 %v720
        %1407 = vmatpush.msra.mxu0 %v718
        %1408 = vmatpush.msra.mxu0 %v716
        %1409 = vmatpush.msra.mxu0 %v714
        %1410 = vmatpush.msra.mxu0 %v712
        %1411 = vmatpush.msra.mxu0 %v710
        %1412 = vmatpush.msra.mxu0 %v708
        %1413 = vmatpush.msra.mxu0 %v706
        %1414 = vmatpush.msra.mxu0 %v704
        %1415 = vmatpush.msra.mxu0 %v702
        %1416 = vmatpush.msra.mxu0 %v700
        %1417 = vmatmul.f32.gmra.mxu0 %v1099
        %v1418 = vpop.f32.mrf.mxu0
        %v1419 = vadd.f32 %v1399, %v1418
        %1420 = vdwg.mxu0
        %1421 = vmatpush.msra.mxu0 %v762
        %1422 = vmatpush.msra.mxu0 %v760
        %1423 = vmatpush.msra.mxu0 %v758
        %1424 = vmatpush.msra.mxu0 %v756
        %1425 = vmatpush.msra.mxu0 %v754
        %1426 = vmatpush.msra.mxu0 %v752
        %1427 = vmatpush.msra.mxu0 %v750
        %1428 = vmatpush.msra.mxu0 %v748
        %1429 = vmatpush.msra.mxu0 %v746
        %1430 = vmatpush.msra.mxu0 %v744
        %1431 = vmatpush.msra.mxu0 %v742
        %1432 = vmatpush.msra.mxu0 %v740
        %1433 = vmatpush.msra.mxu0 %v738
        %1434 = vmatpush.msra.mxu0 %v736
        %1435 = vmatpush.msra.mxu0 %v734
        %1436 = vmatpush.msra.mxu0 %v732
        %1437 = vmatmul.f32.gmra.mxu0 %v1100
        %v1438 = vpop.f32.mrf.mxu0
        %v1439 = vadd.f32 %v1419, %v1438
        %1440 = vdwg.mxu0
        %1441 = vmatpush.msra.mxu0 %v794
        %1442 = vmatpush.msra.mxu0 %v792
        %1443 = vmatpush.msra.mxu0 %v790
        %1444 = vmatpush.msra.mxu0 %v788
        %1445 = vmatpush.msra.mxu0 %v786
        %1446 = vmatpush.msra.mxu0 %v784
        %1447 = vmatpush.msra.mxu0 %v782
        %1448 = vmatpush.msra.mxu0 %v780
        %1449 = vmatpush.msra.mxu0 %v778
        %1450 = vmatpush.msra.mxu0 %v776
        %1451 = vmatpush.msra.mxu0 %v774
        %1452 = vmatpush.msra.mxu0 %v772
        %1453 = vmatpush.msra.mxu0 %v770
        %1454 = vmatpush.msra.mxu0 %v768
        %1455 = vmatpush.msra.mxu0 %v766
        %1456 = vmatpush.msra.mxu0 %v764
        %1457 = vmatmul.f32.gmra.mxu0 %v1101
        %v1458 = vpop.f32.mrf.mxu0
        %v1459 = vadd.f32 %v1439, %v1458
        %1460 = vdwg.mxu0
        %1461 = vmatpush.msra.mxu0 %v826
        %1462 = vmatpush.msra.mxu0 %v824
        %1463 = vmatpush.msra.mxu0 %v822
        %1464 = vmatpush.msra.mxu0 %v820
        %1465 = vmatpush.msra.mxu0 %v818
        %1466 = vmatpush.msra.mxu0 %v816
        %1467 = vmatpush.msra.mxu0 %v814
        %1468 = vmatpush.msra.mxu0 %v812
        %1469 = vmatpush.msra.mxu0 %v810
        %1470 = vmatpush.msra.mxu0 %v808
        %1471 = vmatpush.msra.mxu0 %v806
        %1472 = vmatpush.msra.mxu0 %v804
        %1473 = vmatpush.msra.mxu0 %v802
        %1474 = vmatpush.msra.mxu0 %v800
        %1475 = vmatpush.msra.mxu0 %v798
        %1476 = vmatpush.msra.mxu0 %v796
        %1477 = vmatmul.f32.gmra.mxu0 %v1104
        %v1478 = vpop.f32.mrf.mxu0
        %v1479 = vadd.f32 %v1459, %v1478
        %1480 = vdwg.mxu0
        %1481 = vmatpush.msra.mxu0 %v858
        %1482 = vmatpush.msra.mxu0 %v856
        %1483 = vmatpush.msra.mxu0 %v854
        %1484 = vmatpush.msra.mxu0 %v852
        %1485 = vmatpush.msra.mxu0 %v850
        %1486 = vmatpush.msra.mxu0 %v848
        %1487 = vmatpush.msra.mxu0 %v846
        %1488 = vmatpush.msra.mxu0 %v844
        %1489 = vmatpush.msra.mxu0 %v842
        %1490 = vmatpush.msra.mxu0 %v840
        %1491 = vmatpush.msra.mxu0 %v838
        %1492 = vmatpush.msra.mxu0 %v836
        %1493 = vmatpush.msra.mxu0 %v834
        %1494 = vmatpush.msra.mxu0 %v832
        %1495 = vmatpush.msra.mxu0 %v830
        %1496 = vmatpush.msra.mxu0 %v828
        %1497 = vmatmul.f32.gmra.mxu0 %v1105
        %v1498 = vpop.f32.mrf.mxu0
        %v1499 = vadd.f32 %v1479, %v1498
        %1500 = vdwg.mxu0
        %1501 = vmatpush.msra.mxu0 %v890
        %1502 = vmatpush.msra.mxu0 %v888
        %1503 = vmatpush.msra.mxu0 %v886
        %1504 = vmatpush.msra.mxu0 %v884
        %1505 = vmatpush.msra.mxu0 %v882
        %1506 = vmatpush.msra.mxu0 %v880
        %1507 = vmatpush.msra.mxu0 %v878
        %1508 = vmatpush.msra.mxu0 %v876
        %1509 = vmatpush.msra.mxu0 %v874
        %1510 = vmatpush.msra.mxu0 %v872
        %1511 = vmatpush.msra.mxu0 %v870
        %1512 = vmatpush.msra.mxu0 %v868
        %1513 = vmatpush.msra.mxu0 %v866
        %1514 = vmatpush.msra.mxu0 %v864
        %1515 = vmatpush.msra.mxu0 %v862
        %1516 = vmatpush.msra.mxu0 %v860
        %1517 = vmatmul.f32.gmra.mxu0 %v1106
        %v1518 = vpop.f32.mrf.mxu0
        %v1519 = vadd.f32 %v1499, %v1518
        %1520 = vdwg.mxu0
        %1521 = vmatpush.msra.mxu0 %v922
        %1522 = vmatpush.msra.mxu0 %v920
        %1523 = vmatpush.msra.mxu0 %v918
        %1524 = vmatpush.msra.mxu0 %v916
        %1525 = vmatpush.msra.mxu0 %v914
        %1526 = vmatpush.msra.mxu0 %v912
        %1527 = vmatpush.msra.mxu0 %v910
        %1528 = vmatpush.msra.mxu0 %v908
        %1529 = vmatpush.msra.mxu0 %v906
        %1530 = vmatpush.msra.mxu0 %v904
        %1531 = vmatpush.msra.mxu0 %v902
        %1532 = vmatpush.msra.mxu0 %v900
        %1533 = vmatpush.msra.mxu0 %v898
        %1534 = vmatpush.msra.mxu0 %v896
        %1535 = vmatpush.msra.mxu0 %v894
        %1536 = vmatpush.msra.mxu0 %v892
        %1537 = vmatmul.f32.gmra.mxu0 %v1107
        %v1538 = vpop.f32.mrf.mxu0
        %v1539 = vadd.f32 %v1519, %v1538
        %1540 = vdwg.mxu0
        %1541 = vmatpush.msra.mxu0 %v954
        %1542 = vmatpush.msra.mxu0 %v952
        %1543 = vmatpush.msra.mxu0 %v950
        %1544 = vmatpush.msra.mxu0 %v948
        %1545 = vmatpush.msra.mxu0 %v946
        %1546 = vmatpush.msra.mxu0 %v944
        %1547 = vmatpush.msra.mxu0 %v942
        %1548 = vmatpush.msra.mxu0 %v940
        %1549 = vmatpush.msra.mxu0 %v938
        %1550 = vmatpush.msra.mxu0 %v936
        %1551 = vmatpush.msra.mxu0 %v934
        %1552 = vmatpush.msra.mxu0 %v932
        %1553 = vmatpush.msra.mxu0 %v930
        %1554 = vmatpush.msra.mxu0 %v928
        %1555 = vmatpush.msra.mxu0 %v926
        %1556 = vmatpush.msra.mxu0 %v924
        %1557 = vmatmul.f32.gmra.mxu0 %v1108
        %v1558 = vpop.f32.mrf.mxu0
        %v1559 = vadd.f32 %v1539, %v1558
        %1560 = vdwg.mxu0
        %1561 = vmatpush.msra.mxu0 %v986
        %1562 = vmatpush.msra.mxu0 %v984
        %1563 = vmatpush.msra.mxu0 %v982
        %1564 = vmatpush.msra.mxu0 %v980
        %1565 = vmatpush.msra.mxu0 %v978
        %1566 = vmatpush.msra.mxu0 %v976
        %1567 = vmatpush.msra.mxu0 %v974
        %1568 = vmatpush.msra.mxu0 %v972
        %1569 = vmatpush.msra.mxu0 %v970
        %1570 = vmatpush.msra.mxu0 %v968
        %1571 = vmatpush.msra.mxu0 %v966
        %1572 = vmatpush.msra.mxu0 %v964
        %1573 = vmatpush.msra.mxu0 %v962
        %1574 = vmatpush.msra.mxu0 %v960
        %1575 = vmatpush.msra.mxu0 %v958
        %1576 = vmatpush.msra.mxu0 %v956
        %1577 = vmatmul.f32.gmra.mxu0 %v1109
        %v1578 = vpop.f32.mrf.mxu0
        %v1579 = vadd.f32 %v1559, %v1578
        %1580 = vdwg.mxu0
        %1581 = vmatpush.msra.mxu0 %v1018
        %1582 = vmatpush.msra.mxu0 %v1016
        %1583 = vmatpush.msra.mxu0 %v1014
        %1584 = vmatpush.msra.mxu0 %v1012
        %1585 = vmatpush.msra.mxu0 %v1010
        %1586 = vmatpush.msra.mxu0 %v1008
        %1587 = vmatpush.msra.mxu0 %v1006
        %1588 = vmatpush.msra.mxu0 %v1004
        %1589 = vmatpush.msra.mxu0 %v1002
        %1590 = vmatpush.msra.mxu0 %v1000
        %1591 = vmatpush.msra.mxu0 %v998
        %1592 = vmatpush.msra.mxu0 %v996
        %1593 = vmatpush.msra.mxu0 %v994
        %1594 = vmatpush.msra.mxu0 %v992
        %1595 = vmatpush.msra.mxu0 %v990
        %1596 = vmatpush.msra.mxu0 %v988
        %1597 = vmatmul.f32.gmra.mxu0 %v1110
        %v1598 = vpop.f32.mrf.mxu0
        %v1599 = vadd.f32 %v1579, %v1598
        %1600 = vdwg.mxu0
        %1601 = vmatpush.msra.mxu0 %v1050
        %1602 = vmatpush.msra.mxu0 %v1048
        %1603 = vmatpush.msra.mxu0 %v1046
        %1604 = vmatpush.msra.mxu0 %v1044
        %1605 = vmatpush.msra.mxu0 %v1042
        %1606 = vmatpush.msra.mxu0 %v1040
        %1607 = vmatpush.msra.mxu0 %v1038
        %1608 = vmatpush.msra.mxu0 %v1036
        %1609 = vmatpush.msra.mxu0 %v1034
        %1610 = vmatpush.msra.mxu0 %v1032
        %1611 = vmatpush.msra.mxu0 %v1030
        %1612 = vmatpush.msra.mxu0 %v1028
        %1613 = vmatpush.msra.mxu0 %v1026
        %1614 = vmatpush.msra.mxu0 %v1024
        %1615 = vmatpush.msra.mxu0 %v1022
        %1616 = vmatpush.msra.mxu0 %v1020
        %1617 = vmatmul.f32.gmra.mxu0 %v1111
        %v1618 = vpop.f32.mrf.mxu0
        %v1619 = vadd.f32 %v1599, %v1618
        %1620 = vdwg.mxu0
        %1621 = vmatpush.msra.mxu0 0.0
        %1622 = vmatpush.msra.mxu0 0.0
        %1623 = vmatpush.msra.mxu0 0.0
        %1624 = vmatpush.msra.mxu0 0.0
        %1625 = vmatpush.msra.mxu0 0.0
        %1626 = vmatpush.msra.mxu0 0.0
        %1627 = vmatpush.msra.mxu0 0.0
        %1628 = vmatpush.msra.mxu0 0.0
        %1629 = vmatpush.msra.mxu0 %v1066
        %1630 = vmatpush.msra.mxu0 %v1064
        %1631 = vmatpush.msra.mxu0 %v1062
        %1632 = vmatpush.msra.mxu0 %v1060
        %1633 = vmatpush.msra.mxu0 %v1058
        %1634 = vmatpush.msra.mxu0 %v1056
        %1635 = vmatpush.msra.mxu0 %v1054
        %1636 = vmatpush.msra.mxu0 %v1052
        %1637 = vmatmul.f32.gmra.mxu0 %v1139
        %v1638 = vpop.f32.mrf.mxu0
        %v1639 = vadd.f32 %v1619, %v1638
        %1640 = vdwg.mxu0
        %1641 = vmatpush.msra.mxu0 %v315
        %1642 = vmatpush.msra.mxu0 %v313
        %1643 = vmatpush.msra.mxu0 %v311
        %1644 = vmatpush.msra.mxu0 %v309
        %1645 = vmatpush.msra.mxu0 %v307
        %1646 = vmatpush.msra.mxu0 %v305
        %1647 = vmatpush.msra.mxu0 %v303
        %1648 = vmatpush.msra.mxu0 %v301
        %1649 = vmatpush.msra.mxu0 %v299
        %1650 = vmatpush.msra.mxu0 %v297
        %1651 = vmatpush.msra.mxu0 %v295
        %1652 = vmatpush.msra.mxu0 %v293
        %1653 = vmatpush.msra.mxu0 %v291
        %1654 = vmatpush.msra.mxu0 %v289
        %1655 = vmatpush.msra.mxu0 %v287
        %1656 = vmatpush.msra.mxu0 %v285
        %1657 = vmatmul.f32.gmra.mxu0 %v1084
        %v1658 = vpop.f32.mrf.mxu0
        %v1659 = vadd.f32 %v1071, %v1658
        %1660 = vdwg.mxu0
        %1661 = vmatpush.msra.mxu0 %v347
        %1662 = vmatpush.msra.mxu0 %v345
        %1663 = vmatpush.msra.mxu0 %v343
        %1664 = vmatpush.msra.mxu0 %v341
        %1665 = vmatpush.msra.mxu0 %v339
        %1666 = vmatpush.msra.mxu0 %v337
        %1667 = vmatpush.msra.mxu0 %v335
        %1668 = vmatpush.msra.mxu0 %v333
        %1669 = vmatpush.msra.mxu0 %v331
        %1670 = vmatpush.msra.mxu0 %v329
        %1671 = vmatpush.msra.mxu0 %v327
        %1672 = vmatpush.msra.mxu0 %v325
        %1673 = vmatpush.msra.mxu0 %v323
        %1674 = vmatpush.msra.mxu0 %v321
        %1675 = vmatpush.msra.mxu0 %v319
        %1676 = vmatpush.msra.mxu0 %v317
        %1677 = vmatmul.f32.gmra.mxu0 %v1085
        %v1678 = vpop.f32.mrf.mxu0
        %v1679 = vadd.f32 %v1659, %v1678
        %1680 = vdwg.mxu0
        %1681 = vmatpush.msra.mxu0 %v379
        %1682 = vmatpush.msra.mxu0 %v377
        %1683 = vmatpush.msra.mxu0 %v375
        %1684 = vmatpush.msra.mxu0 %v373
        %1685 = vmatpush.msra.mxu0 %v371
        %1686 = vmatpush.msra.mxu0 %v369
        %1687 = vmatpush.msra.mxu0 %v367
        %1688 = vmatpush.msra.mxu0 %v365
        %1689 = vmatpush.msra.mxu0 %v363
        %1690 = vmatpush.msra.mxu0 %v361
        %1691 = vmatpush.msra.mxu0 %v359
        %1692 = vmatpush.msra.mxu0 %v357
        %1693 = vmatpush.msra.mxu0 %v355
        %1694 = vmatpush.msra.mxu0 %v353
        %1695 = vmatpush.msra.mxu0 %v351
        %1696 = vmatpush.msra.mxu0 %v349
        %1697 = vmatmul.f32.gmra.mxu0 %v1086
        %v1698 = vpop.f32.mrf.mxu0
        %v1699 = vadd.f32 %v1679, %v1698
        %1700 = vdwg.mxu0
        %1701 = vmatpush.msra.mxu0 %v411
        %1702 = vmatpush.msra.mxu0 %v409
        %1703 = vmatpush.msra.mxu0 %v407
        %1704 = vmatpush.msra.mxu0 %v405
        %1705 = vmatpush.msra.mxu0 %v403
        %1706 = vmatpush.msra.mxu0 %v401
        %1707 = vmatpush.msra.mxu0 %v399
        %1708 = vmatpush.msra.mxu0 %v397
        %1709 = vmatpush.msra.mxu0 %v395
        %1710 = vmatpush.msra.mxu0 %v393
        %1711 = vmatpush.msra.mxu0 %v391
        %1712 = vmatpush.msra.mxu0 %v389
        %1713 = vmatpush.msra.mxu0 %v387
        %1714 = vmatpush.msra.mxu0 %v385
        %1715 = vmatpush.msra.mxu0 %v383
        %1716 = vmatpush.msra.mxu0 %v381
        %1717 = vmatmul.f32.gmra.mxu0 %v1087
        %v1718 = vpop.f32.mrf.mxu0
        %v1719 = vadd.f32 %v1699, %v1718
        %1720 = vdwg.mxu0
        %1721 = vmatpush.msra.mxu0 %v443
        %1722 = vmatpush.msra.mxu0 %v441
        %1723 = vmatpush.msra.mxu0 %v439
        %1724 = vmatpush.msra.mxu0 %v437
        %1725 = vmatpush.msra.mxu0 %v435
        %1726 = vmatpush.msra.mxu0 %v433
        %1727 = vmatpush.msra.mxu0 %v431
        %1728 = vmatpush.msra.mxu0 %v429
        %1729 = vmatpush.msra.mxu0 %v427
        %1730 = vmatpush.msra.mxu0 %v425
        %1731 = vmatpush.msra.mxu0 %v423
        %1732 = vmatpush.msra.mxu0 %v421
        %1733 = vmatpush.msra.mxu0 %v419
        %1734 = vmatpush.msra.mxu0 %v417
        %1735 = vmatpush.msra.mxu0 %v415
        %1736 = vmatpush.msra.mxu0 %v413
        %1737 = vmatmul.f32.gmra.mxu0 %v1088
        %v1738 = vpop.f32.mrf.mxu0
        %v1739 = vadd.f32 %v1719, %v1738
        %1740 = vdwg.mxu0
        %1741 = vmatpush.msra.mxu0 %v475
        %1742 = vmatpush.msra.mxu0 %v473
        %1743 = vmatpush.msra.mxu0 %v471
        %1744 = vmatpush.msra.mxu0 %v469
        %1745 = vmatpush.msra.mxu0 %v467
        %1746 = vmatpush.msra.mxu0 %v465
        %1747 = vmatpush.msra.mxu0 %v463
        %1748 = vmatpush.msra.mxu0 %v461
        %1749 = vmatpush.msra.mxu0 %v459
        %1750 = vmatpush.msra.mxu0 %v457
        %1751 = vmatpush.msra.mxu0 %v455
        %1752 = vmatpush.msra.mxu0 %v453
        %1753 = vmatpush.msra.mxu0 %v451
        %1754 = vmatpush.msra.mxu0 %v449
        %1755 = vmatpush.msra.mxu0 %v447
        %1756 = vmatpush.msra.mxu0 %v445
        %1757 = vmatmul.f32.gmra.mxu0 %v1089
        %v1758 = vpop.f32.mrf.mxu0
        %v1759 = vadd.f32 %v1739, %v1758
        %1760 = vdwg.mxu0
        %1761 = vmatpush.msra.mxu0 %v507
        %1762 = vmatpush.msra.mxu0 %v505
        %1763 = vmatpush.msra.mxu0 %v503
        %1764 = vmatpush.msra.mxu0 %v501
        %1765 = vmatpush.msra.mxu0 %v499
        %1766 = vmatpush.msra.mxu0 %v497
        %1767 = vmatpush.msra.mxu0 %v495
        %1768 = vmatpush.msra.mxu0 %v493
        %1769 = vmatpush.msra.mxu0 %v491
        %1770 = vmatpush.msra.mxu0 %v489
        %1771 = vmatpush.msra.mxu0 %v487
        %1772 = vmatpush.msra.mxu0 %v485
        %1773 = vmatpush.msra.mxu0 %v483
        %1774 = vmatpush.msra.mxu0 %v481
        %1775 = vmatpush.msra.mxu0 %v479
        %1776 = vmatpush.msra.mxu0 %v477
        %1777 = vmatmul.f32.gmra.mxu0 %v1090
        %v1778 = vpop.f32.mrf.mxu0
        %v1779 = vadd.f32 %v1759, %v1778
        %1780 = vdwg.mxu0
        %1781 = vmatpush.msra.mxu0 %v539
        %1782 = vmatpush.msra.mxu0 %v537
        %1783 = vmatpush.msra.mxu0 %v535
        %1784 = vmatpush.msra.mxu0 %v533
        %1785 = vmatpush.msra.mxu0 %v531
        %1786 = vmatpush.msra.mxu0 %v529
        %1787 = vmatpush.msra.mxu0 %v527
        %1788 = vmatpush.msra.mxu0 %v525
        %1789 = vmatpush.msra.mxu0 %v523
        %1790 = vmatpush.msra.mxu0 %v521
        %1791 = vmatpush.msra.mxu0 %v519
        %1792 = vmatpush.msra.mxu0 %v517
        %1793 = vmatpush.msra.mxu0 %v515
        %1794 = vmatpush.msra.mxu0 %v513
        %1795 = vmatpush.msra.mxu0 %v511
        %1796 = vmatpush.msra.mxu0 %v509
        %1797 = vmatmul.f32.gmra.mxu0 %v1091
        %v1798 = vpop.f32.mrf.mxu0
        %v1799 = vadd.f32 %v1779, %v1798
        %1800 = vdwg.mxu0
        %1801 = vmatpush.msra.mxu0 %v571
        %1802 = vmatpush.msra.mxu0 %v569
        %1803 = vmatpush.msra.mxu0 %v567
        %1804 = vmatpush.msra.mxu0 %v565
        %1805 = vmatpush.msra.mxu0 %v563
        %1806 = vmatpush.msra.mxu0 %v561
        %1807 = vmatpush.msra.mxu0 %v559
        %1808 = vmatpush.msra.mxu0 %v557
        %1809 = vmatpush.msra.mxu0 %v555
        %1810 = vmatpush.msra.mxu0 %v553
        %1811 = vmatpush.msra.mxu0 %v551
        %1812 = vmatpush.msra.mxu0 %v549
        %1813 = vmatpush.msra.mxu0 %v547
        %1814 = vmatpush.msra.mxu0 %v545
        %1815 = vmatpush.msra.mxu0 %v543
        %1816 = vmatpush.msra.mxu0 %v541
        %1817 = vmatmul.f32.gmra.mxu0 %v1094
        %v1818 = vpop.f32.mrf.mxu0
        %v1819 = vadd.f32 %v1799, %v1818
        %1820 = vdwg.mxu0
        %1821 = vmatpush.msra.mxu0 %v603
        %1822 = vmatpush.msra.mxu0 %v601
        %1823 = vmatpush.msra.mxu0 %v599
        %1824 = vmatpush.msra.mxu0 %v597
        %1825 = vmatpush.msra.mxu0 %v595
        %1826 = vmatpush.msra.mxu0 %v593
        %1827 = vmatpush.msra.mxu0 %v591
        %1828 = vmatpush.msra.mxu0 %v589
        %1829 = vmatpush.msra.mxu0 %v587
        %1830 = vmatpush.msra.mxu0 %v585
        %1831 = vmatpush.msra.mxu0 %v583
        %1832 = vmatpush.msra.mxu0 %v581
        %1833 = vmatpush.msra.mxu0 %v579
        %1834 = vmatpush.msra.mxu0 %v577
        %1835 = vmatpush.msra.mxu0 %v575
        %1836 = vmatpush.msra.mxu0 %v573
        %1837 = vmatmul.f32.gmra.mxu0 %v1095
        %v1838 = vpop.f32.mrf.mxu0
        %v1839 = vadd.f32 %v1819, %v1838
        %1840 = vdwg.mxu0
        %1841 = vmatpush.msra.mxu0 %v635
        %1842 = vmatpush.msra.mxu0 %v633
        %1843 = vmatpush.msra.mxu0 %v631
        %1844 = vmatpush.msra.mxu0 %v629
        %1845 = vmatpush.msra.mxu0 %v627
        %1846 = vmatpush.msra.mxu0 %v625
        %1847 = vmatpush.msra.mxu0 %v623
        %1848 = vmatpush.msra.mxu0 %v621
        %1849 = vmatpush.msra.mxu0 %v619
        %1850 = vmatpush.msra.mxu0 %v617
        %1851 = vmatpush.msra.mxu0 %v615
        %1852 = vmatpush.msra.mxu0 %v613
        %1853 = vmatpush.msra.mxu0 %v611
        %1854 = vmatpush.msra.mxu0 %v609
        %1855 = vmatpush.msra.mxu0 %v607
        %1856 = vmatpush.msra.mxu0 %v605
        %1857 = vmatmul.f32.gmra.mxu0 %v1096
        %v1858 = vpop.f32.mrf.mxu0
        %v1859 = vadd.f32 %v1839, %v1858
        %1860 = vdwg.mxu0
        %1861 = vmatpush.msra.mxu0 %v667
        %1862 = vmatpush.msra.mxu0 %v665
        %1863 = vmatpush.msra.mxu0 %v663
        %1864 = vmatpush.msra.mxu0 %v661
        %1865 = vmatpush.msra.mxu0 %v659
        %1866 = vmatpush.msra.mxu0 %v657
        %1867 = vmatpush.msra.mxu0 %v655
        %1868 = vmatpush.msra.mxu0 %v653
        %1869 = vmatpush.msra.mxu0 %v651
        %1870 = vmatpush.msra.mxu0 %v649
        %1871 = vmatpush.msra.mxu0 %v647
        %1872 = vmatpush.msra.mxu0 %v645
        %1873 = vmatpush.msra.mxu0 %v643
        %1874 = vmatpush.msra.mxu0 %v641
        %1875 = vmatpush.msra.mxu0 %v639
        %1876 = vmatpush.msra.mxu0 %v637
        %1877 = vmatmul.f32.gmra.mxu0 %v1097
        %v1878 = vpop.f32.mrf.mxu0
        %v1879 = vadd.f32 %v1859, %v1878
        %1880 = vdwg.mxu0
        %1881 = vmatpush.msra.mxu0 %v699
        %1882 = vmatpush.msra.mxu0 %v697
        %1883 = vmatpush.msra.mxu0 %v695
        %1884 = vmatpush.msra.mxu0 %v693
        %1885 = vmatpush.msra.mxu0 %v691
        %1886 = vmatpush.msra.mxu0 %v689
        %1887 = vmatpush.msra.mxu0 %v687
        %1888 = vmatpush.msra.mxu0 %v685
        %1889 = vmatpush.msra.mxu0 %v683
        %1890 = vmatpush.msra.mxu0 %v681
        %1891 = vmatpush.msra.mxu0 %v679
        %1892 = vmatpush.msra.mxu0 %v677
        %1893 = vmatpush.msra.mxu0 %v675
        %1894 = vmatpush.msra.mxu0 %v673
        %1895 = vmatpush.msra.mxu0 %v671
        %1896 = vmatpush.msra.mxu0 %v669
        %1897 = vmatmul.f32.gmra.mxu0 %v1098
        %v1898 = vpop.f32.mrf.mxu0
        %v1899 = vadd.f32 %v1879, %v1898
        %1900 = vdwg.mxu0
        %1901 = vmatpush.msra.mxu0 %v731
        %1902 = vmatpush.msra.mxu0 %v729
        %1903 = vmatpush.msra.mxu0 %v727
        %1904 = vmatpush.msra.mxu0 %v725
        %1905 = vmatpush.msra.mxu0 %v723
        %1906 = vmatpush.msra.mxu0 %v721
        %1907 = vmatpush.msra.mxu0 %v719
        %1908 = vmatpush.msra.mxu0 %v717
        %1909 = vmatpush.msra.mxu0 %v715
        %1910 = vmatpush.msra.mxu0 %v713
        %1911 = vmatpush.msra.mxu0 %v711
        %1912 = vmatpush.msra.mxu0 %v709
        %1913 = vmatpush.msra.mxu0 %v707
        %1914 = vmatpush.msra.mxu0 %v705
        %1915 = vmatpush.msra.mxu0 %v703
        %1916 = vmatpush.msra.mxu0 %v701
        %1917 = vmatmul.f32.gmra.mxu0 %v1099
        %v1918 = vpop.f32.mrf.mxu0
        %v1919 = vadd.f32 %v1899, %v1918
        %1920 = vdwg.mxu0
        %1921 = vmatpush.msra.mxu0 %v763
        %1922 = vmatpush.msra.mxu0 %v761
        %1923 = vmatpush.msra.mxu0 %v759
        %1924 = vmatpush.msra.mxu0 %v757
        %1925 = vmatpush.msra.mxu0 %v755
        %1926 = vmatpush.msra.mxu0 %v753
        %1927 = vmatpush.msra.mxu0 %v751
        %1928 = vmatpush.msra.mxu0 %v749
        %1929 = vmatpush.msra.mxu0 %v747
        %1930 = vmatpush.msra.mxu0 %v745
        %1931 = vmatpush.msra.mxu0 %v743
        %1932 = vmatpush.msra.mxu0 %v741
        %1933 = vmatpush.msra.mxu0 %v739
        %1934 = vmatpush.msra.mxu0 %v737
        %1935 = vmatpush.msra.mxu0 %v735
        %1936 = vmatpush.msra.mxu0 %v733
        %1937 = vmatmul.f32.gmra.mxu0 %v1100
        %v1938 = vpop.f32.mrf.mxu0
        %v1939 = vadd.f32 %v1919, %v1938
        %1940 = vdwg.mxu0
        %1941 = vmatpush.msra.mxu0 %v795
        %1942 = vmatpush.msra.mxu0 %v793
        %1943 = vmatpush.msra.mxu0 %v791
        %1944 = vmatpush.msra.mxu0 %v789
        %1945 = vmatpush.msra.mxu0 %v787
        %1946 = vmatpush.msra.mxu0 %v785
        %1947 = vmatpush.msra.mxu0 %v783
        %1948 = vmatpush.msra.mxu0 %v781
        %1949 = vmatpush.msra.mxu0 %v779
        %1950 = vmatpush.msra.mxu0 %v777
        %1951 = vmatpush.msra.mxu0 %v775
        %1952 = vmatpush.msra.mxu0 %v773
        %1953 = vmatpush.msra.mxu0 %v771
        %1954 = vmatpush.msra.mxu0 %v769
        %1955 = vmatpush.msra.mxu0 %v767
        %1956 = vmatpush.msra.mxu0 %v765
        %1957 = vmatmul.f32.gmra.mxu0 %v1101
        %v1958 = vpop.f32.mrf.mxu0
        %v1959 = vadd.f32 %v1939, %v1958
        %1960 = vdwg.mxu0
        %1961 = vmatpush.msra.mxu0 %v827
        %1962 = vmatpush.msra.mxu0 %v825
        %1963 = vmatpush.msra.mxu0 %v823
        %1964 = vmatpush.msra.mxu0 %v821
        %1965 = vmatpush.msra.mxu0 %v819
        %1966 = vmatpush.msra.mxu0 %v817
        %1967 = vmatpush.msra.mxu0 %v815
        %1968 = vmatpush.msra.mxu0 %v813
        %1969 = vmatpush.msra.mxu0 %v811
        %1970 = vmatpush.msra.mxu0 %v809
        %1971 = vmatpush.msra.mxu0 %v807
        %1972 = vmatpush.msra.mxu0 %v805
        %1973 = vmatpush.msra.mxu0 %v803
        %1974 = vmatpush.msra.mxu0 %v801
        %1975 = vmatpush.msra.mxu0 %v799
        %1976 = vmatpush.msra.mxu0 %v797
        %1977 = vmatmul.f32.gmra.mxu0 %v1104
        %v1978 = vpop.f32.mrf.mxu0
        %v1979 = vadd.f32 %v1959, %v1978
        %1980 = vdwg.mxu0
        %1981 = vmatpush.msra.mxu0 %v859
        %1982 = vmatpush.msra.mxu0 %v857
        %1983 = vmatpush.msra.mxu0 %v855
        %1984 = vmatpush.msra.mxu0 %v853
        %1985 = vmatpush.msra.mxu0 %v851
        %1986 = vmatpush.msra.mxu0 %v849
        %1987 = vmatpush.msra.mxu0 %v847
        %1988 = vmatpush.msra.mxu0 %v845
        %1989 = vmatpush.msra.mxu0 %v843
        %1990 = vmatpush.msra.mxu0 %v841
        %1991 = vmatpush.msra.mxu0 %v839
        %1992 = vmatpush.msra.mxu0 %v837
        %1993 = vmatpush.msra.mxu0 %v835
        %1994 = vmatpush.msra.mxu0 %v833
        %1995 = vmatpush.msra.mxu0 %v831
        %1996 = vmatpush.msra.mxu0 %v829
        %1997 = vmatmul.f32.gmra.mxu0 %v1105
        %v1998 = vpop.f32.mrf.mxu0
        %v1999 = vadd.f32 %v1979, %v1998
        %2000 = vdwg.mxu0
        %2001 = vmatpush.msra.mxu0 %v891
        %2002 = vmatpush.msra.mxu0 %v889
        %2003 = vmatpush.msra.mxu0 %v887
        %2004 = vmatpush.msra.mxu0 %v885
        %2005 = vmatpush.msra.mxu0 %v883
        %2006 = vmatpush.msra.mxu0 %v881
        %2007 = vmatpush.msra.mxu0 %v879
        %2008 = vmatpush.msra.mxu0 %v877
        %2009 = vmatpush.msra.mxu0 %v875
        %2010 = vmatpush.msra.mxu0 %v873
        %2011 = vmatpush.msra.mxu0 %v871
        %2012 = vmatpush.msra.mxu0 %v869
        %2013 = vmatpush.msra.mxu0 %v867
        %2014 = vmatpush.msra.mxu0 %v865
        %2015 = vmatpush.msra.mxu0 %v863
        %2016 = vmatpush.msra.mxu0 %v861
        %2017 = vmatmul.f32.gmra.mxu0 %v1106
        %v2018 = vpop.f32.mrf.mxu0
        %v2019 = vadd.f32 %v1999, %v2018
        %2020 = vdwg.mxu0
        %2021 = vmatpush.msra.mxu0 %v923
        %2022 = vmatpush.msra.mxu0 %v921
        %2023 = vmatpush.msra.mxu0 %v919
        %2024 = vmatpush.msra.mxu0 %v917
        %2025 = vmatpush.msra.mxu0 %v915
        %2026 = vmatpush.msra.mxu0 %v913
        %2027 = vmatpush.msra.mxu0 %v911
        %2028 = vmatpush.msra.mxu0 %v909
        %2029 = vmatpush.msra.mxu0 %v907
        %2030 = vmatpush.msra.mxu0 %v905
        %2031 = vmatpush.msra.mxu0 %v903
        %2032 = vmatpush.msra.mxu0 %v901
        %2033 = vmatpush.msra.mxu0 %v899
        %2034 = vmatpush.msra.mxu0 %v897
        %2035 = vmatpush.msra.mxu0 %v895
        %2036 = vmatpush.msra.mxu0 %v893
        %2037 = vmatmul.f32.gmra.mxu0 %v1107
        %v2038 = vpop.f32.mrf.mxu0
        %v2039 = vadd.f32 %v2019, %v2038
        %2040 = vdwg.mxu0
        %2041 = vmatpush.msra.mxu0 %v955
        %2042 = vmatpush.msra.mxu0 %v953
        %2043 = vmatpush.msra.mxu0 %v951
        %2044 = vmatpush.msra.mxu0 %v949
        %2045 = vmatpush.msra.mxu0 %v947
        %2046 = vmatpush.msra.mxu0 %v945
        %2047 = vmatpush.msra.mxu0 %v943
        %2048 = vmatpush.msra.mxu0 %v941
        %2049 = vmatpush.msra.mxu0 %v939
        %2050 = vmatpush.msra.mxu0 %v937
        %2051 = vmatpush.msra.mxu0 %v935
        %2052 = vmatpush.msra.mxu0 %v933
        %2053 = vmatpush.msra.mxu0 %v931
        %2054 = vmatpush.msra.mxu0 %v929
        %2055 = vmatpush.msra.mxu0 %v927
        %2056 = vmatpush.msra.mxu0 %v925
        %2057 = vmatmul.f32.gmra.mxu0 %v1108
        %v2058 = vpop.f32.mrf.mxu0
        %v2059 = vadd.f32 %v2039, %v2058
        %2060 = vdwg.mxu0
        %2061 = vmatpush.msra.mxu0 %v987
        %2062 = vmatpush.msra.mxu0 %v985
        %2063 = vmatpush.msra.mxu0 %v983
        %2064 = vmatpush.msra.mxu0 %v981
        %2065 = vmatpush.msra.mxu0 %v979
        %2066 = vmatpush.msra.mxu0 %v977
        %2067 = vmatpush.msra.mxu0 %v975
        %2068 = vmatpush.msra.mxu0 %v973
        %2069 = vmatpush.msra.mxu0 %v971
        %2070 = vmatpush.msra.mxu0 %v969
        %2071 = vmatpush.msra.mxu0 %v967
        %2072 = vmatpush.msra.mxu0 %v965
        %2073 = vmatpush.msra.mxu0 %v963
        %2074 = vmatpush.msra.mxu0 %v961
        %2075 = vmatpush.msra.mxu0 %v959
        %2076 = vmatpush.msra.mxu0 %v957
        %2077 = vmatmul.f32.gmra.mxu0 %v1109
        %v2078 = vpop.f32.mrf.mxu0
        %v2079 = vadd.f32 %v2059, %v2078
        %2080 = vdwg.mxu0
        %2081 = vmatpush.msra.mxu0 %v1019
        %2082 = vmatpush.msra.mxu0 %v1017
        %2083 = vmatpush.msra.mxu0 %v1015
        %2084 = vmatpush.msra.mxu0 %v1013
        %2085 = vmatpush.msra.mxu0 %v1011
        %2086 = vmatpush.msra.mxu0 %v1009
        %2087 = vmatpush.msra.mxu0 %v1007
        %2088 = vmatpush.msra.mxu0 %v1005
        %2089 = vmatpush.msra.mxu0 %v1003
        %2090 = vmatpush.msra.mxu0 %v1001
        %2091 = vmatpush.msra.mxu0 %v999
        %2092 = vmatpush.msra.mxu0 %v997
        %2093 = vmatpush.msra.mxu0 %v995
        %2094 = vmatpush.msra.mxu0 %v993
        %2095 = vmatpush.msra.mxu0 %v991
        %2096 = vmatpush.msra.mxu0 %v989
        %2097 = vmatmul.f32.gmra.mxu0 %v1110
        %v2098 = vpop.f32.mrf.mxu0
        %v2099 = vadd.f32 %v2079, %v2098
        %2100 = vdwg.mxu0
        %2101 = vmatpush.msra.mxu0 %v1051
        %2102 = vmatpush.msra.mxu0 %v1049
        %2103 = vmatpush.msra.mxu0 %v1047
        %2104 = vmatpush.msra.mxu0 %v1045
        %2105 = vmatpush.msra.mxu0 %v1043
        %2106 = vmatpush.msra.mxu0 %v1041
        %2107 = vmatpush.msra.mxu0 %v1039
        %2108 = vmatpush.msra.mxu0 %v1037
        %2109 = vmatpush.msra.mxu0 %v1035
        %2110 = vmatpush.msra.mxu0 %v1033
        %2111 = vmatpush.msra.mxu0 %v1031
        %2112 = vmatpush.msra.mxu0 %v1029
        %2113 = vmatpush.msra.mxu0 %v1027
        %2114 = vmatpush.msra.mxu0 %v1025
        %2115 = vmatpush.msra.mxu0 %v1023
        %2116 = vmatpush.msra.mxu0 %v1021
        %2117 = vmatmul.f32.gmra.mxu0 %v1111
        %v2118 = vpop.f32.mrf.mxu0
        %v2119 = vadd.f32 %v2099, %v2118
        %2120 = vdwg.mxu0
        %2121 = vmatpush.msra.mxu0 0.0
        %2122 = vmatpush.msra.mxu0 0.0
        %2123 = vmatpush.msra.mxu0 0.0
        %2124 = vmatpush.msra.mxu0 0.0
        %2125 = vmatpush.msra.mxu0 0.0
        %2126 = vmatpush.msra.mxu0 0.0
        %2127 = vmatpush.msra.mxu0 0.0
        %2128 = vmatpush.msra.mxu0 0.0
        %2129 = vmatpush.msra.mxu0 %v1067
        %2130 = vmatpush.msra.mxu0 %v1065
        %2131 = vmatpush.msra.mxu0 %v1063
        %2132 = vmatpush.msra.mxu0 %v1061
        %2133 = vmatpush.msra.mxu0 %v1059
        %2134 = vmatpush.msra.mxu0 %v1057
        %2135 = vmatpush.msra.mxu0 %v1055
        %2136 = vmatpush.msra.mxu0 %v1053
        %2137 = vmatmul.f32.gmra.mxu0 %v1139
        %v2138 = vpop.f32.mrf.mxu0
        %v2139 = vadd.f32 %v2119, %v2138
        %2140 = vdwg.mxu0
        %v2141 = vmax.f32 %v1639, 0.0
        %v2142 = vmax.f32 %v2139, 0.0
        %v2145 = vrot.slane %v2142, 6
        %vm2146 = vcmask 1041408
        %v2147 = vsel %vm2146, %v2141, %v2145
        %2149 = vst [vmem:[%s275] sm:$0xf] %v2147
        %s2150 = smul.u32 2, %s24
        %p2151 = scmp.lt.s32.totalorder %s25, 0
        %s2152 = scalar_select %p2151, %s25, 0
        %p2153 = scmp.lt.s32.totalorder %s2150, 7
        %s2154 = scalar_select %p2153, %s2150, 7
        %s2155 = smul.addr %s2152, 8
        %s2156 = sadd.s32 %s2154, %s2155
        %s2157 = smul.addr %s2156, 2
        %s2158 = scalar_lea.vmem %s3, %s2157
        // Predicated region
        $region41: #{cnn_forward.6} parent=31 // pred_check
          %p2159 = pneg %p130
        $region42: #{cnn_forward.6} parent=31 // pred_check_branch
          %2161 = sbr.rel (%p2159) target = $region44
        $region43: #{cnn_forward.6} parent=31 // pred_region
          %s2162 = smul.u32 2, %s24
        $region44: #{cnn_forward.6} parent=31 // pred_fallthru
          _
      $region32: #{cnn_forward.6} parent=5 // pred_fallthru
        _
      %p2163 = scmp.le.s32.totalorder 2, %s15
      // Predicated region
      $region45: #{cnn_forward.6} parent=5 // pred_check
        %p2164 = pneg %p2163
      $region46: #{cnn_forward.6} parent=5 // pred_check_branch
        %2166 = sbr.rel (%p2164) target = $region48
      $region47: #{cnn_forward.6} parent=5 // pred_region
        %s2167 = ssub.s32 %s15, 2
        // Predicated region
        $region49: #{cnn_forward.6} parent=47 // pred_check
          %p2168 = pneg %p136
        $region50: #{cnn_forward.6} parent=47 // pred_check_branch
          %2170 = sbr.rel (%p2168) target = $region52
        $region51: #{cnn_forward.6} parent=47 // pred_region
          %s2171 = smul.u32 2, %s26
          %p2172 = scmp.lt.s32.totalorder %s27, 0
          %s2173 = scalar_select %p2172, %s27, 0
          %p2174 = scmp.lt.s32.totalorder %s2171, 7
          %s2175 = scalar_select %p2174, %s2171, 7
          %s2176 = smul.addr %s2173, 8
          %s2177 = sadd.s32 %s2175, %s2176
          %s2178 = smul.addr %s2177, 2
          %s2179 = scalar_lea.vmem %s3, %s2178
        $region52: #{cnn_forward.6} parent=47 // pred_fallthru
          _
      $region48: #{cnn_forward.6} parent=5 // pred_fallthru
        _
    $region6: #{cnn_forward.6} parent=1 // loop_footer
      %s19 = sadd.s32 1, %s15
    $region7: #{cnn_forward.6} parent=1 // loop_footer_branch
      %14 = sbr.rel target = $region3
    $region8: #{cnn_forward.6} parent=1 // loop_exit
      _
    %2180 = vsyncpa [#allocation3], 1
    %s2181 = scalar_lea.sflag [#allocation3], 1
    %2182 = vsyncpa %s2181, 1
    %2183 = vsyncpa [#allocation5], 1
    %s2184 = scalar_lea.sflag [#allocation5], 1
    %2185 = vsyncpa %s2184, 1

</llo_original>
